<compile_context>
chip_gen: v7x
topology: tpu7x:2x2x1
jax: 0.10.0
libtpu: 0.0.40
codegen_flags: <defaults>
</compile_context>

<pallas_src>
import jax
import jax.numpy as jnp
from jax.experimental import pallas as pl
from jax.experimental.pallas import tpu as pltpu


_VMEM_LIMIT = 32 * 1024 * 1024
_CP = pltpu.CompilerParams(dimension_semantics=("parallel",),
                           vmem_limit_bytes=_VMEM_LIMIT)
_ROW_TILE = 256   # rows (B*H*W) per matmul grid step; sweep 256-1024 at real scale


def _silu(y):
    # SiLU with the reciprocal on the EUP (approx) instead of the VPU divide.
    return y * pl.reciprocal(1.0 + jnp.exp(-y), approx=True)


# ---------------------------------------------------------------------------
# Fused 1x1-conv (+BN +SiLU) kernels: row-tiled matmuls, bf16 MXU, f32 accumulate
# ---------------------------------------------------------------------------
def _matmul_bn_silu_kernel(x_ref, w_ref, s_ref, b_ref, o_ref):
    y = jnp.dot(x_ref[...].astype(jnp.bfloat16), w_ref[...].astype(jnp.bfloat16),
                preferred_element_type=jnp.float32)
    y = y * s_ref[...] + b_ref[...]          # folded BatchNorm (eval mode)
    o_ref[...] = _silu(y)


def _matmul2_bn_silu_kernel(a_ref, b_ref, wa_ref, wb_ref, s_ref, bias_ref, o_ref):
    # concat([a, b], axis=-1) @ [[wa],[wb]]  fused (avoids an HBM concat pass)
    y = jnp.dot(a_ref[...].astype(jnp.bfloat16), wa_ref[...].astype(jnp.bfloat16),
                preferred_element_type=jnp.float32)
    y = y + jnp.dot(b_ref[...].astype(jnp.bfloat16), wb_ref[...].astype(jnp.bfloat16),
                    preferred_element_type=jnp.float32)
    y = y * s_ref[...] + bias_ref[...]
    o_ref[...] = _silu(y)


def _pad_rows(a, n_padded):
    n = a.shape[0]
    return a if n == n_padded else jnp.pad(a, ((0, n_padded - n), (0, 0)))


def linear_bn_silu(x2d, w, scale, bias, tm=_ROW_TILE):
    N, K = x2d.shape
    M = w.shape[1]
    tm = min(tm, N)
    n_pad = -(-N // tm) * tm
    xq = _pad_rows(x2d, n_pad)
    out = pl.pallas_call(
        _matmul_bn_silu_kernel,
        out_shape=jax.ShapeDtypeStruct((n_pad, M), jnp.float32),
        grid=(n_pad // tm,),
        in_specs=[pl.BlockSpec((tm, K), lambda i: (i, 0)),
                  pl.BlockSpec((K, M), lambda i: (0, 0)),
                  pl.BlockSpec((1, M), lambda i: (0, 0)),
                  pl.BlockSpec((1, M), lambda i: (0, 0))],
        out_specs=pl.BlockSpec((tm, M), lambda i: (i, 0)),
        compiler_params=_CP,
    )(xq, w, scale, bias)
    return out[:N] if n_pad != N else out


def linear2_bn_silu(a2d, b2d, wa, wb, scale, bias, tm=_ROW_TILE):
    N, Ka = a2d.shape
    Kb = b2d.shape[1]
    M = wa.shape[1]
    tm = min(tm, N)
    n_pad = -(-N // tm) * tm
    aq, bq = _pad_rows(a2d, n_pad), _pad_rows(b2d, n_pad)
    out = pl.pallas_call(
        _matmul2_bn_silu_kernel,
        out_shape=jax.ShapeDtypeStruct((n_pad, M), jnp.float32),
        grid=(n_pad // tm,),
        in_specs=[pl.BlockSpec((tm, Ka), lambda i: (i, 0)),
                  pl.BlockSpec((tm, Kb), lambda i: (i, 0)),
                  pl.BlockSpec((Ka, M), lambda i: (0, 0)),
                  pl.BlockSpec((Kb, M), lambda i: (0, 0)),
                  pl.BlockSpec((1, M), lambda i: (0, 0)),
                  pl.BlockSpec((1, M), lambda i: (0, 0))],
        out_specs=pl.BlockSpec((tm, M), lambda i: (i, 0)),
        compiler_params=_CP,
    )(aq, bq, wa, wb, scale, bias)
    return out[:N] if n_pad != N else out


# ---------------------------------------------------------------------------
# Dense 3x3 conv (+BN +SiLU): in-VMEM im2col (no HBM im2col materialization)
# ---------------------------------------------------------------------------
def _conv3x3_bn_silu_kernel(x_ref, w_ref, s_ref, b_ref, o_ref, xp, col):
    _, H, W, Cin = x_ref.shape
    Cout = o_ref.shape[-1]
    # zero-pad into VMEM scratch ("same" padding, no XLA pad pass)
    xp[...] = jnp.zeros_like(xp)
    xp[1:H + 1, 1:W + 1, :] = x_ref[0, :, :, :]
    # build the (H*W, 9*Cin) patch matrix in VMEM
    for t in range(9):
        dh, dw = divmod(t, 3)
        col[:, t * Cin:(t + 1) * Cin] = xp[dh:dh + H, dw:dw + W, :].reshape(H * W, Cin)
    y = jnp.dot(col[...].astype(jnp.bfloat16), w_ref[...].astype(jnp.bfloat16),
                preferred_element_type=jnp.float32)
    y = y * s_ref[...] + b_ref[...]
    o_ref[0, :, :, :] = _silu(y).reshape(H, W, Cout)


def conv3x3_bn_silu(x, p):
    B, H, W, Cin = x.shape
    Cout = p['w'].shape[-1]
    return pl.pallas_call(
        _conv3x3_bn_silu_kernel,
        out_shape=jax.ShapeDtypeStruct((B, H, W, Cout), jnp.float32),
        grid=(B,),
        in_specs=[pl.BlockSpec((1, H, W, Cin), lambda b: (b, 0, 0, 0)),
                  pl.BlockSpec((9 * Cin, Cout), lambda b: (0, 0)),
                  pl.BlockSpec((1, Cout), lambda b: (0, 0)),
                  pl.BlockSpec((1, Cout), lambda b: (0, 0))],
        out_specs=pl.BlockSpec((1, H, W, Cout), lambda b: (b, 0, 0, 0)),
        scratch_shapes=[pltpu.VMEM((H + 2, W + 2, Cin), jnp.float32),
                        pltpu.VMEM((H * W, 9 * Cin), jnp.float32)],
        compiler_params=_CP,
    )(x, p['w'], p['scale'], p['bias'])


# ---------------------------------------------------------------------------
# WTConv2d (wt_levels=1, stride=1, k=3, db1): base depthwise conv kernel +
# one fused wavelet-path kernel (WT -> dwconv -> scale -> IWT -> +base -> interleave)
# ---------------------------------------------------------------------------
def _dwconv3x3_scale_kernel(x_ref, w_ref, b_ref, s_ref, o_ref, xp):
    # base path: depthwise 3x3 ("same", bias=True) followed by _ScaleModule
    _, H, W, C = x_ref.shape
    xp[...] = jnp.zeros_like(xp)
    xp[1:H + 1, 1:W + 1, :] = x_ref[0, :, :, :]
    acc = jnp.zeros((H, W, C), jnp.float32)
    for t in range(9):
        dh, dw = divmod(t, 3)
        acc = acc + xp[dh:dh + H, dw:dw + W, :] * w_ref[t, :, :, :]
    o_ref[0, :, :, :] = (acc + b_ref[...]) * s_ref[...]


def _wavelet_path_kernel(x_ref, base_ref, w_ref, s_ref, o_ref, subp):
    # Blocks are the polyphase view (Hh, 2, Wh, 2C):
    #   dim1 = row parity (h = 2i+p), lane halves = column parity (w = 2j+q).
    Hh, _, Wh, C2 = x_ref.shape
    C = C2 // 2
    xe = x_ref[:, 0, :, :]                       # rows h = 2i
    xo = x_ref[:, 1, :, :]                       # rows h = 2i+1
    x00, x01 = xe[:, :, :C], xe[:, :, C:]
    x10, x11 = xo[:, :, :C], xo[:, :, C:]
    # Haar (db1) analysis, stride 2 (create_wavelet_filter dec filters)
    ll = 0.5 * (x00 + x01 + x10 + x11)
    lh = 0.5 * (x00 + x01 - x10 - x11)
    hl = 0.5 * (x00 - x01 + x10 - x11)
    hh = 0.5 * (x00 - x01 - x10 + x11)
    # depthwise 3x3 "same" conv on the 4C sub-band stack (bias=False) + 0.1 scale.
    # NOTE: sub-bands are stored sub-band-major ([LL|LH|HL|HH] x C); wav_w follows
    # the same convention (synthetic weights here; a real checkpoint would need a
    # channel permutation to PyTorch's per-channel-interleaved order).
    subp[...] = jnp.zeros_like(subp)
    subp[1:Hh + 1, 1:Wh + 1, 0 * C:1 * C] = ll
    subp[1:Hh + 1, 1:Wh + 1, 1 * C:2 * C] = lh
    subp[1:Hh + 1, 1:Wh + 1, 2 * C:3 * C] = hl
    subp[1:Hh + 1, 1:Wh + 1, 3 * C:4 * C] = hh
    tag = jnp.zeros((Hh, Wh, 4 * C), jnp.float32)
    for t in range(9):
        dh, dw = divmod(t, 3)
        tag = tag + subp[dh:dh + Hh, dw:dw + Wh, :] * w_ref[t, :, :, :]
    tag = tag * s_ref[...]
    z0, z1 = tag[:, :, 0 * C:1 * C], tag[:, :, 1 * C:2 * C]
    z2, z3 = tag[:, :, 2 * C:3 * C], tag[:, :, 3 * C:4 * C]
    # Haar synthesis (conv_transpose2d, stride 2) fused with the base residual add,
    # written directly into the interleaved polyphase output layout.
    be, bo = base_ref[:, 0, :, :], base_ref[:, 1, :, :]
    b00, b01 = be[:, :, :C], be[:, :, C:]
    b10, b11 = bo[:, :, :C], bo[:, :, C:]
    o_ref[:, 0, :, 0 * C:1 * C] = b00 + 0.5 * (z0 + z1 + z2 + z3)
    o_ref[:, 0, :, 1 * C:2 * C] = b01 + 0.5 * (z0 + z1 - z2 - z3)
    o_ref[:, 1, :, 0 * C:1 * C] = b10 + 0.5 * (z0 - z1 + z2 - z3)
    o_ref[:, 1, :, 1 * C:2 * C] = b11 + 0.5 * (z0 - z1 - z2 + z3)


def wtconv2d(x, p):
    B, H, W, C = x.shape
    assert H % 2 == 0 and W % 2 == 0  # TODO(synk): odd-size padding path of WTConv2d
    Hh, Wh = H // 2, W // 2

    base = pl.pallas_call(
        _dwconv3x3_scale_kernel,
        out_shape=jax.ShapeDtypeStruct((B, H, W, C), jnp.float32),
        grid=(B,),
        in_specs=[pl.BlockSpec((1, H, W, C), lambda b: (b, 0, 0, 0)),
                  pl.BlockSpec((9, 1, 1, C), lambda b: (0, 0, 0, 0)),
                  pl.BlockSpec((1, 1, C), lambda b: (0, 0, 0)),
                  pl.BlockSpec((1, 1, C), lambda b: (0, 0, 0))],
        out_specs=pl.BlockSpec((1, H, W, C), lambda b: (b, 0, 0, 0)),
        scratch_shapes=[pltpu.VMEM((H + 2, W + 2, C), jnp.float32)],
        compiler_params=_CP,
    )(x, p['base_w'], p['base_b'], p['base_scale'])

    # Free (layout-preserving) polyphase views: (B,H,W,C) <-> (B*Hh, 2, Wh, 2C)
    x4 = x.reshape(B * Hh, 2, Wh, 2 * C)
    b4 = base.reshape(B * Hh, 2, Wh, 2 * C)
    out4 = pl.pallas_call(
        _wavelet_path_kernel,
        out_shape=jax.ShapeDtypeStruct((B * Hh, 2, Wh, 2 * C), jnp.float32),
        grid=(B,),
        in_specs=[pl.BlockSpec((Hh, 2, Wh, 2 * C), lambda b: (b, 0, 0, 0)),
                  pl.BlockSpec((Hh, 2, Wh, 2 * C), lambda b: (b, 0, 0, 0)),
                  pl.BlockSpec((9, 1, 1, 4 * C), lambda b: (0, 0, 0, 0)),
                  pl.BlockSpec((1, 1, 4 * C), lambda b: (0, 0, 0))],
        out_specs=pl.BlockSpec((Hh, 2, Wh, 2 * C), lambda b: (b, 0, 0, 0)),
        scratch_shapes=[pltpu.VMEM((Hh + 2, Wh + 2, 4 * C), jnp.float32)],
        compiler_params=_CP,
    )(x4, b4, p['wav_w'], p['wav_scale'])
    return out4.reshape(B, H, W, C)


# ---------------------------------------------------------------------------
# C2f_WT forward
# ---------------------------------------------------------------------------
def c2f_wt_forward(x_nchw, p):
    """C2f_WT.forward. Input/output are NCHW (PyTorch convention)."""
    x = jnp.transpose(x_nchw, (0, 2, 3, 1)).astype(jnp.float32)     # -> NHWC
    B, H, W, Cin = x.shape
    c = p['c']
    # cv1: Conv(c1, 2c, 1) + BN + SiLU   (rows = B*H*W, tiled grid)
    y = linear_bn_silu(x.reshape(B * H * W, Cin),
                       p['cv1']['w'], p['cv1']['scale'], p['cv1']['bias'])
    y1 = y[:, c:].reshape(B, H, W, c)                                # chunk(2)[1]
    # Bottleneck_WT (shortcut=False): Conv(c, c, 3) -> WTConv2d(c, c, 3)
    t = conv3x3_bn_silu(y1, p['m0_cv1'])
    y2 = wtconv2d(t, p['m0_cv2'])
    # cv2 on concat([y0, y1, y2]) == concat([y, y2]); concat fused into the kernel.
    out = linear2_bn_silu(y, y2.reshape(B * H * W, c),
                          p['cv2']['w'][:2 * c], p['cv2']['w'][2 * c:],
                          p['cv2']['scale'], p['cv2']['bias'])
    out = out.reshape(B, H, W, -1)
    return jnp.transpose(out, (0, 3, 1, 2))                          # -> NCHW


# ---------------------------------------------------------------------------
# deterministic synthetic parameters (c1=4, c2=8, n=1, e=0.5)
# ---------------------------------------------------------------------------
def init_params(key, c1, c2, n=1, e=0.5):
    c = int(c2 * e)
    kit = iter(jax.random.split(key, 16))

    def bn(C):
        k1, k2, k3, k4 = jax.random.split(next(kit), 4)
        gamma = jax.random.uniform(k1, (C,), minval=0.5, maxval=1.5)
        beta = 0.1 * jax.random.normal(k2, (C,))
        mean = 0.1 * jax.random.normal(k3, (C,))
        var = jax.random.uniform(k4, (C,), minval=0.5, maxval=1.5)
        scale = gamma / jnp.sqrt(var + 1e-5)       # BatchNorm2d eval, eps=1e-5
        bias = beta - mean * scale
        return (scale.reshape(1, C).astype(jnp.float32),
                bias.reshape(1, C).astype(jnp.float32))

    def wgt(shape, fan_in):
        return (jax.random.normal(next(kit), shape) / jnp.sqrt(fan_in)).astype(jnp.float32)

    p = {'c': c, 'n': n}
    s, b = bn(2 * c)
    p['cv1'] = {'w': wgt((c1, 2 * c), c1), 'scale': s, 'bias': b}
    s, b = bn(c2)
    p['cv2'] = {'w': wgt(((2 + n) * c, c2), (2 + n) * c), 'scale': s, 'bias': b}
    s, b = bn(c)
    p['m0_cv1'] = {'w': wgt((9 * c, c), 9 * c), 'scale': s, 'bias': b}
    C = c
    p['m0_cv2'] = {
        'base_w': wgt((9, 1, 1, C), 9),                                   # depthwise 3x3, bias=True
        'base_b': (0.1 * jax.random.normal(next(kit), (1, 1, C))).astype(jnp.float32),
        'base_scale': jnp.ones((1, 1, C), jnp.float32),                   # _ScaleModule init 1.0
        'wav_w': wgt((9, 1, 1, 4 * C), 9),                                # depthwise 3x3 on 4C subbands
        'wav_scale': 0.1 * jnp.ones((1, 1, 4 * C), jnp.float32),          # _ScaleModule init 0.1
    }
    return p


if __name__ == "__main__":
    key = jax.random.PRNGKey(0)
    kx, kp = jax.random.split(key)
    x = jax.random.normal(kx, (2, 4, 16, 16), dtype=jnp.float32)   # NCHW, like PyTorch
    params = init_params(kp, c1=4, c2=8, n=1)
    fwd = jax.jit(lambda inp: c2f_wt_forward(inp, params))
    out = jax.block_until_ready(fwd(x))
    assert out.shape == (2, 8, 16, 16), out.shape
    assert bool(jnp.all(jnp.isfinite(out)))
    print("KERNEL_OK")
</pallas_src>

<mosaic_0001>
module attributes {stable_mosaic.version = 11 : i64} {
  func.func @_matmul_bn_silu_kernel(%arg0: i32, %arg1: memref<256x4xf32, #tpu.memory_space<vmem>>, %arg2: memref<4x8xf32, #tpu.memory_space<vmem>>, %arg3: memref<1x8xf32, #tpu.memory_space<vmem>>, %arg4: memref<1x8xf32, #tpu.memory_space<vmem>>, %arg5: memref<256x8xf32, #tpu.memory_space<vmem>>) attributes {dimension_semantics = [#tpu.dimension_semantics<parallel>], iteration_bounds = array<i64: 2>, scalar_prefetch = 0 : i64, scratch_operands = 0 : i64, tpu.core_type = #tpu.core_type<tc>, window_params = [{transform_indices = @transform_0, window_bounds = array<i64: 256, 4>}, {pipeline_mode = #tpu.pipeline_mode<synchronous>, transform_indices = @transform_1, window_bounds = array<i64: 4, 8>}, {pipeline_mode = #tpu.pipeline_mode<synchronous>, transform_indices = @transform_2, window_bounds = array<i64: 1, 8>}, {pipeline_mode = #tpu.pipeline_mode<synchronous>, transform_indices = @transform_3, window_bounds = array<i64: 1, 8>}, {transform_indices = @transform_4, window_bounds = array<i64: 256, 8>}]} {
    %c0 = arith.constant 0 : index
    %c0_0 = arith.constant 0 : index
    %0 = vector.load %arg1[%c0, %c0_0] : memref<256x4xf32, #tpu.memory_space<vmem>>, vector<256x4xf32>
    %1 = arith.truncf %0 : vector<256x4xf32> to vector<256x4xbf16>
    %c0_1 = arith.constant 0 : index
    %c0_2 = arith.constant 0 : index
    %2 = vector.load %arg2[%c0_1, %c0_2] : memref<4x8xf32, #tpu.memory_space<vmem>>, vector<4x8xf32>
    %3 = arith.truncf %2 : vector<4x8xf32> to vector<4x8xbf16>
    %cst = arith.constant dense<0.000000e+00> : vector<256x8xf32>
    %4 = tpu.matmul %1, %3, %cst {dimension_numbers = #tpu.dot_dimension_numbers<[1], [0], [0], [1], [0, 0, 1, 1], [], []>} : vector<256x4xbf16>, vector<4x8xbf16>, vector<256x8xf32> -> vector<256x8xf32>
    %c0_3 = arith.constant 0 : index
    %c0_4 = arith.constant 0 : index
    %5 = vector.load %arg3[%c0_3, %c0_4] : memref<1x8xf32, #tpu.memory_space<vmem>>, vector<1x8xf32>
    %6 = vector.broadcast %5 : vector<1x8xf32> to vector<256x8xf32>
    %7 = arith.mulf %4, %6 : vector<256x8xf32>
    %c0_5 = arith.constant 0 : index
    %c0_6 = arith.constant 0 : index
    %8 = vector.load %arg4[%c0_5, %c0_6] : memref<1x8xf32, #tpu.memory_space<vmem>>, vector<1x8xf32>
    %9 = vector.broadcast %8 : vector<1x8xf32> to vector<256x8xf32>
    %10 = arith.addf %7, %9 : vector<256x8xf32>
    %cst_7 = arith.constant 0.000000e+00 : f32
    %11 = vector.broadcast %cst_7 : f32 to vector<256x8xf32>
    %12 = arith.subf %11, %10 : vector<256x8xf32>
    %13 = math.exp %12 : vector<256x8xf32>
    %cst_8 = arith.constant 1.000000e+00 : f32
    %14 = vector.broadcast %cst_8 : f32 to vector<256x8xf32>
    %15 = arith.addf %14, %13 : vector<256x8xf32>
    %16 = tpu.reciprocal %15 {approx = true} : vector<256x8xf32> -> vector<256x8xf32>
    %17 = arith.mulf %10, %16 : vector<256x8xf32>
    %c0_9 = arith.constant 0 : index
    %c0_10 = arith.constant 0 : index
    %18 = vector.load %arg5[%c0_9, %c0_10] : memref<256x8xf32, #tpu.memory_space<vmem>>, vector<256x8xf32>
    tpu.vector_store %arg5[%c0_9, %c0_10], %17 {strides = array<i32>} : memref<256x8xf32, #tpu.memory_space<vmem>>, vector<256x8xf32>,
    return
  }
  func.func @transform_0(%arg0: i32) -> (i32, i32) {
    %c0_i32 = arith.constant 0 : i32
    %c0_i32_0 = arith.constant 0 : i32
    return %arg0, %c0_i32 : i32, i32
  }
  func.func @transform_1(%arg0: i32) -> (i32, i32) {
    %c0_i32 = arith.constant 0 : i32
    %c0_i32_0 = arith.constant 0 : i32
    %c0_i32_1 = arith.constant 0 : i32
    return %c0_i32, %c0_i32_0 : i32, i32
  }
  func.func @transform_2(%arg0: i32) -> (i32, i32) {
    %c0_i32 = arith.constant 0 : i32
    %c0_i32_0 = arith.constant 0 : i32
    %c0_i32_1 = arith.constant 0 : i32
    return %c0_i32, %c0_i32_0 : i32, i32
  }
  func.func @transform_3(%arg0: i32) -> (i32, i32) {
    %c0_i32 = arith.constant 0 : i32
    %c0_i32_0 = arith.constant 0 : i32
    %c0_i32_1 = arith.constant 0 : i32
    return %c0_i32, %c0_i32_0 : i32, i32
  }
  func.func @transform_4(%arg0: i32) -> (i32, i32) {
    %c0_i32 = arith.constant 0 : i32
    %c0_i32_0 = arith.constant 0 : i32
    return %arg0, %c0_i32 : i32, i32
  }
}

module attributes {stable_mosaic.version = 11 : i64} {
  func.func @_conv3x3_bn_silu_kernel(%arg0: i32, %arg1: memref<1x16x16x4xf32, #tpu.memory_space<vmem>>, %arg2: memref<36x4xf32, #tpu.memory_space<vmem>>, %arg3: memref<1x4xf32, #tpu.memory_space<vmem>>, %arg4: memref<1x4xf32, #tpu.memory_space<vmem>>, %arg5: memref<1x16x16x4xf32, #tpu.memory_space<vmem>>, %arg6: memref<18x18x4xf32, #tpu.memory_space<vmem>>, %arg7: memref<256x36xf32, #tpu.memory_space<vmem>>) attributes {dimension_semantics = [#tpu.dimension_semantics<parallel>], iteration_bounds = array<i64: 2>, scalar_prefetch = 0 : i64, scratch_operands = 2 : i64, tpu.core_type = #tpu.core_type<tc>, window_params = [{transform_indices = @transform_0, window_bounds = array<i64: 1, 16, 16, 4>}, {pipeline_mode = #tpu.pipeline_mode<synchronous>, transform_indices = @transform_1, window_bounds = array<i64: 36, 4>}, {pipeline_mode = #tpu.pipeline_mode<synchronous>, transform_indices = @transform_2, window_bounds = array<i64: 1, 4>}, {pipeline_mode = #tpu.pipeline_mode<synchronous>, transform_indices = @transform_3, window_bounds = array<i64: 1, 4>}, {transform_indices = @transform_4, window_bounds = array<i64: 1, 16, 16, 4>}]} {
    %cst = arith.constant 0.000000e+00 : f32
    %0 = vector.broadcast %cst : f32 to vector<18x18x4xf32>
    %c0 = arith.constant 0 : index
    %c0_0 = arith.constant 0 : index
    %c0_1 = arith.constant 0 : index
    %1 = vector.load %arg6[%c0, %c0_0, %c0_1] : memref<18x18x4xf32, #tpu.memory_space<vmem>>, vector<18x18x4xf32>
    tpu.vector_store %arg6[%c0, %c0_0, %c0_1], %0 {strides = array<i32>} : memref<18x18x4xf32, #tpu.memory_space<vmem>>, vector<18x18x4xf32>,
    %c0_2 = arith.constant 0 : index
    %c0_3 = arith.constant 0 : index
    %c0_4 = arith.constant 0 : index
    %c0_5 = arith.constant 0 : index
    %2 = vector.load %arg1[%c0_2, %c0_3, %c0_4, %c0_5] : memref<1x16x16x4xf32, #tpu.memory_space<vmem>>, vector<1x16x16x4xf32>
    %3 = vector.shape_cast %2 : vector<1x16x16x4xf32> to vector<16x16x4xf32>
    %c1 = arith.constant 1 : index
    %c1_6 = arith.constant 1 : index
    %c0_7 = arith.constant 0 : index
    %4 = vector.load %arg6[%c1, %c1_6, %c0_7] : memref<18x18x4xf32, #tpu.memory_space<vmem>>, vector<16x16x4xf32>
    tpu.vector_store %arg6[%c1, %c1_6, %c0_7], %3 {strides = array<i32>} : memref<18x18x4xf32, #tpu.memory_space<vmem>>, vector<16x16x4xf32>,
    %c0_8 = arith.constant 0 : index
    %c0_9 = arith.constant 0 : index
    %c0_10 = arith.constant 0 : index
    %5 = vector.load %arg6[%c0_8, %c0_9, %c0_10] : memref<18x18x4xf32, #tpu.memory_space<vmem>>, vector<16x16x4xf32>
    %6 = vector.shape_cast %5 : vector<16x16x4xf32> to vector<256x4xf32>
    %c0_11 = arith.constant 0 : index
    %c0_12 = arith.constant 0 : index
    %7 = vector.load %arg7[%c0_11, %c0_12] : memref<256x36xf32, #tpu.memory_space<vmem>>, vector<256x4xf32>
    tpu.vector_store %arg7[%c0_11, %c0_12], %6 {strides = array<i32>} : memref<256x36xf32, #tpu.memory_space<vmem>>, vector<256x4xf32>,
    %c0_13 = arith.constant 0 : index
    %c1_14 = arith.constant 1 : index
    %c0_15 = arith.constant 0 : index
    %8 = vector.load %arg6[%c0_13, %c1_14, %c0_15] : memref<18x18x4xf32, #tpu.memory_space<vmem>>, vector<16x16x4xf32>
    %9 = vector.shape_cast %8 : vector<16x16x4xf32> to vector<256x4xf32>
    %c0_16 = arith.constant 0 : index
    %c4 = arith.constant 4 : index
    %10 = vector.load %arg7[%c0_16, %c4] : memref<256x36xf32, #tpu.memory_space<vmem>>, vector<256x4xf32>
    tpu.vector_store %arg7[%c0_16, %c4], %9 {strides = array<i32>} : memref<256x36xf32, #tpu.memory_space<vmem>>, vector<256x4xf32>,
    %c0_17 = arith.constant 0 : index
    %c2 = arith.constant 2 : index
    %c0_18 = arith.constant 0 : index
    %11 = vector.load %arg6[%c0_17, %c2, %c0_18] : memref<18x18x4xf32, #tpu.memory_space<vmem>>, vector<16x16x4xf32>
    %12 = vector.shape_cast %11 : vector<16x16x4xf32> to vector<256x4xf32>
    %c0_19 = arith.constant 0 : index
    %c8 = arith.constant 8 : index
    %13 = vector.load %arg7[%c0_19, %c8] : memref<256x36xf32, #tpu.memory_space<vmem>>, vector<256x4xf32>
    tpu.vector_store %arg7[%c0_19, %c8], %12 {strides = array<i32>} : memref<256x36xf32, #tpu.memory_space<vmem>>, vector<256x4xf32>,
    %c1_20 = arith.constant 1 : index
    %c0_21 = arith.constant 0 : index
    %c0_22 = arith.constant 0 : index
    %14 = vector.load %arg6[%c1_20, %c0_21, %c0_22] : memref<18x18x4xf32, #tpu.memory_space<vmem>>, vector<16x16x4xf32>
    %15 = vector.shape_cast %14 : vector<16x16x4xf32> to vector<256x4xf32>
    %c0_23 = arith.constant 0 : index
    %c12 = arith.constant 12 : index
    %16 = vector.load %arg7[%c0_23, %c12] : memref<256x36xf32, #tpu.memory_space<vmem>>, vector<256x4xf32>
    tpu.vector_store %arg7[%c0_23, %c12], %15 {strides = array<i32>} : memref<256x36xf32, #tpu.memory_space<vmem>>, vector<256x4xf32>,
    %c1_24 = arith.constant 1 : index
    %c1_25 = arith.constant 1 : index
    %c0_26 = arith.constant 0 : index
    %17 = vector.load %arg6[%c1_24, %c1_25, %c0_26] : memref<18x18x4xf32, #tpu.memory_space<vmem>>, vector<16x16x4xf32>
    %18 = vector.shape_cast %17 : vector<16x16x4xf32> to vector<256x4xf32>
    %c0_27 = arith.constant 0 : index
    %c16 = arith.constant 16 : index
    %19 = vector.load %arg7[%c0_27, %c16] : memref<256x36xf32, #tpu.memory_space<vmem>>, vector<256x4xf32>
    tpu.vector_store %arg7[%c0_27, %c16], %18 {strides = array<i32>} : memref<256x36xf32, #tpu.memory_space<vmem>>, vector<256x4xf32>,
    %c1_28 = arith.constant 1 : index
    %c2_29 = arith.constant 2 : index
    %c0_30 = arith.constant 0 : index
    %20 = vector.load %arg6[%c1_28, %c2_29, %c0_30] : memref<18x18x4xf32, #tpu.memory_space<vmem>>, vector<16x16x4xf32>
    %21 = vector.shape_cast %20 : vector<16x16x4xf32> to vector<256x4xf32>
    %c0_31 = arith.constant 0 : index
    %c20 = arith.constant 20 : index
    %22 = vector.load %arg7[%c0_31, %c20] : memref<256x36xf32, #tpu.memory_space<vmem>>, vector<256x4xf32>
    tpu.vector_store %arg7[%c0_31, %c20], %21 {strides = array<i32>} : memref<256x36xf32, #tpu.memory_space<vmem>>, vector<256x4xf32>,
    %c2_32 = arith.constant 2 : index
    %c0_33 = arith.constant 0 : index
    %c0_34 = arith.constant 0 : index
    %23 = vector.load %arg6[%c2_32, %c0_33, %c0_34] : memref<18x18x4xf32, #tpu.memory_space<vmem>>, vector<16x16x4xf32>
    %24 = vector.shape_cast %23 : vector<16x16x4xf32> to vector<256x4xf32>
    %c0_35 = arith.constant 0 : index
    %c24 = arith.constant 24 : index
    %25 = vector.load %arg7[%c0_35, %c24] : memref<256x36xf32, #tpu.memory_space<vmem>>, vector<256x4xf32>
    tpu.vector_store %arg7[%c0_35, %c24], %24 {strides = array<i32>} : memref<256x36xf32, #tpu.memory_space<vmem>>, vector<256x4xf32>,
    %c2_36 = arith.constant 2 : index
    %c1_37 = arith.constant 1 : index
    %c0_38 = arith.constant 0 : index
    %26 = vector.load %arg6[%c2_36, %c1_37, %c0_38] : memref<18x18x4xf32, #tpu.memory_space<vmem>>, vector<16x16x4xf32>
    %27 = vector.shape_cast %26 : vector<16x16x4xf32> to vector<256x4xf32>
    %c0_39 = arith.constant 0 : index
    %c28 = arith.constant 28 : index
    %28 = vector.load %arg7[%c0_39, %c28] : memref<256x36xf32, #tpu.memory_space<vmem>>, vector<256x4xf32>
    tpu.vector_store %arg7[%c0_39, %c28], %27 {strides = array<i32>} : memref<256x36xf32, #tpu.memory_space<vmem>>, vector<256x4xf32>,
    %c2_40 = arith.constant 2 : index
    %c2_41 = arith.constant 2 : index
    %c0_42 = arith.constant 0 : index
    %29 = vector.load %arg6[%c2_40, %c2_41, %c0_42] : memref<18x18x4xf32, #tpu.memory_space<vmem>>, vector<16x16x4xf32>
    %30 = vector.shape_cast %29 : vector<16x16x4xf32> to vector<256x4xf32>
    %c0_43 = arith.constant 0 : index
    %c32 = arith.constant 32 : index
    %31 = vector.load %arg7[%c0_43, %c32] : memref<256x36xf32, #tpu.memory_space<vmem>>, vector<256x4xf32>
    tpu.vector_store %arg7[%c0_43, %c32], %30 {strides = array<i32>} : memref<256x36xf32, #tpu.memory_space<vmem>>, vector<256x4xf32>,
    %c0_44 = arith.constant 0 : index
    %c0_45 = arith.constant 0 : index
    %32 = vector.load %arg7[%c0_44, %c0_45] : memref<256x36xf32, #tpu.memory_space<vmem>>, vector<256x36xf32>
    %33 = arith.truncf %32 : vector<256x36xf32> to vector<256x36xbf16>
    %c0_46 = arith.constant 0 : index
    %c0_47 = arith.constant 0 : index
    %34 = vector.load %arg2[%c0_46, %c0_47] : memref<36x4xf32, #tpu.memory_space<vmem>>, vector<36x4xf32>
    %35 = arith.truncf %34 : vector<36x4xf32> to vector<36x4xbf16>
    %cst_48 = arith.constant dense<0.000000e+00> : vector<256x4xf32>
    %36 = tpu.matmul %33, %35, %cst_48 {dimension_numbers = #tpu.dot_dimension_numbers<[1], [0], [0], [1], [0, 0, 1, 1], [], []>} : vector<256x36xbf16>, vector<36x4xbf16>, vector<256x4xf32> -> vector<256x4xf32>
    %c0_49 = arith.constant 0 : index
    %c0_50 = arith.constant 0 : index
    %37 = vector.load %arg3[%c0_49, %c0_50] : memref<1x4xf32, #tpu.memory_space<vmem>>, vector<1x4xf32>
    %38 = vector.broadcast %37 : vector<1x4xf32> to vector<256x4xf32>
    %39 = arith.mulf %36, %38 : vector<256x4xf32>
    %c0_51 = arith.constant 0 : index
    %c0_52 = arith.constant 0 : index
    %40 = vector.load %arg4[%c0_51, %c0_52] : memref<1x4xf32, #tpu.memory_space<vmem>>, vector<1x4xf32>
    %41 = vector.broadcast %40 : vector<1x4xf32> to vector<256x4xf32>
    %42 = arith.addf %39, %41 : vector<256x4xf32>
    %cst_53 = arith.constant 0.000000e+00 : f32
    %43 = vector.broadcast %cst_53 : f32 to vector<256x4xf32>
    %44 = arith.subf %43, %42 : vector<256x4xf32>
    %45 = math.exp %44 : vector<256x4xf32>
    %cst_54 = arith.constant 1.000000e+00 : f32
    %46 = vector.broadcast %cst_54 : f32 to vector<256x4xf32>
    %47 = arith.addf %46, %45 : vector<256x4xf32>
    %48 = tpu.reciprocal %47 {approx = true} : vector<256x4xf32> -> vector<256x4xf32>
    %49 = arith.mulf %42, %48 : vector<256x4xf32>
    %50 = vector.shape_cast %49 : vector<256x4xf32> to vector<16x16x4xf32>
    %c0_55 = arith.constant 0 : index
    %c0_56 = arith.constant 0 : index
    %c0_57 = arith.constant 0 : index
    %c0_58 = arith.constant 0 : index
    %51 = vector.load %arg5[%c0_55, %c0_56, %c0_57, %c0_58] : memref<1x16x16x4xf32, #tpu.memory_space<vmem>>, vector<1x16x16x4xf32>
    %52 = vector.shape_cast %51 : vector<1x16x16x4xf32> to vector<16x16x4xf32>
    %53 = vector.shape_cast %50 : vector<16x16x4xf32> to vector<1x16x16x4xf32>
    tpu.vector_store %arg5[%c0_55, %c0_56, %c0_57, %c0_58], %53 {strides = array<i32>} : memref<1x16x16x4xf32, #tpu.memory_space<vmem>>, vector<1x16x16x4xf32>,
    return
  }
  func.func @transform_0(%arg0: i32) -> (i32, i32, i32, i32) {
    %c0_i32 = arith.constant 0 : i32
    %c0_i32_0 = arith.constant 0 : i32
    %c0_i32_1 = arith.constant 0 : i32
    %c0_i32_2 = arith.constant 0 : i32
    return %arg0, %c0_i32, %c0_i32_0, %c0_i32_1 : i32, i32, i32, i32
  }
  func.func @transform_1(%arg0: i32) -> (i32, i32) {
    %c0_i32 = arith.constant 0 : i32
    %c0_i32_0 = arith.constant 0 : i32
    %c0_i32_1 = arith.constant 0 : i32
    return %c0_i32, %c0_i32_0 : i32, i32
  }
  func.func @transform_2(%arg0: i32) -> (i32, i32) {
    %c0_i32 = arith.constant 0 : i32
    %c0_i32_0 = arith.constant 0 : i32
    %c0_i32_1 = arith.constant 0 : i32
    return %c0_i32, %c0_i32_0 : i32, i32
  }
  func.func @transform_3(%arg0: i32) -> (i32, i32) {
    %c0_i32 = arith.constant 0 : i32
    %c0_i32_0 = arith.constant 0 : i32
    %c0_i32_1 = arith.constant 0 : i32
    return %c0_i32, %c0_i32_0 : i32, i32
  }
  func.func @transform_4(%arg0: i32) -> (i32, i32, i32, i32) {
    %c0_i32 = arith.constant 0 : i32
    %c0_i32_0 = arith.constant 0 : i32
    %c0_i32_1 = arith.constant 0 : i32
    %c0_i32_2 = arith.constant 0 : i32
    return %arg0, %c0_i32, %c0_i32_0, %c0_i32_1 : i32, i32, i32, i32
  }
}

module attributes {stable_mosaic.version = 11 : i64} {
  func.func @_dwconv3x3_scale_kernel(%arg0: i32, %arg1: memref<1x16x16x4xf32, #tpu.memory_space<vmem>>, %arg2: memref<9x1x1x4xf32, #tpu.memory_space<vmem>>, %arg3: memref<1x1x4xf32, #tpu.memory_space<vmem>>, %arg4: memref<1x1x4xf32, #tpu.memory_space<vmem>>, %arg5: memref<1x16x16x4xf32, #tpu.memory_space<vmem>>, %arg6: memref<18x18x4xf32, #tpu.memory_space<vmem>>) attributes {dimension_semantics = [#tpu.dimension_semantics<parallel>], iteration_bounds = array<i64: 2>, scalar_prefetch = 0 : i64, scratch_operands = 1 : i64, tpu.core_type = #tpu.core_type<tc>, window_params = [{transform_indices = @transform_0, window_bounds = array<i64: 1, 16, 16, 4>}, {pipeline_mode = #tpu.pipeline_mode<synchronous>, transform_indices = @transform_1, window_bounds = array<i64: 9, 1, 1, 4>}, {pipeline_mode = #tpu.pipeline_mode<synchronous>, transform_indices = @transform_2, window_bounds = array<i64: 1, 1, 4>}, {pipeline_mode = #tpu.pipeline_mode<synchronous>, transform_indices = @transform_3, window_bounds = array<i64: 1, 1, 4>}, {transform_indices = @transform_4, window_bounds = array<i64: 1, 16, 16, 4>}]} {
    %cst = arith.constant 0.000000e+00 : f32
    %0 = vector.broadcast %cst : f32 to vector<18x18x4xf32>
    %c0 = arith.constant 0 : index
    %c0_0 = arith.constant 0 : index
    %c0_1 = arith.constant 0 : index
    %1 = vector.load %arg6[%c0, %c0_0, %c0_1] : memref<18x18x4xf32, #tpu.memory_space<vmem>>, vector<18x18x4xf32>
    tpu.vector_store %arg6[%c0, %c0_0, %c0_1], %0 {strides = array<i32>} : memref<18x18x4xf32, #tpu.memory_space<vmem>>, vector<18x18x4xf32>,
    %c0_2 = arith.constant 0 : index
    %c0_3 = arith.constant 0 : index
    %c0_4 = arith.constant 0 : index
    %c0_5 = arith.constant 0 : index
    %2 = vector.load %arg1[%c0_2, %c0_3, %c0_4, %c0_5] : memref<1x16x16x4xf32, #tpu.memory_space<vmem>>, vector<1x16x16x4xf32>
    %3 = vector.shape_cast %2 : vector<1x16x16x4xf32> to vector<16x16x4xf32>
    %c1 = arith.constant 1 : index
    %c1_6 = arith.constant 1 : index
    %c0_7 = arith.constant 0 : index
    %4 = vector.load %arg6[%c1, %c1_6, %c0_7] : memref<18x18x4xf32, #tpu.memory_space<vmem>>, vector<16x16x4xf32>
    tpu.vector_store %arg6[%c1, %c1_6, %c0_7], %3 {strides = array<i32>} : memref<18x18x4xf32, #tpu.memory_space<vmem>>, vector<16x16x4xf32>,
    %cst_8 = arith.constant 0.000000e+00 : f32
    %5 = vector.broadcast %cst_8 : f32 to vector<16x16x4xf32>
    %c0_9 = arith.constant 0 : index
    %c0_10 = arith.constant 0 : index
    %c0_11 = arith.constant 0 : index
    %6 = vector.load %arg6[%c0_9, %c0_10, %c0_11] : memref<18x18x4xf32, #tpu.memory_space<vmem>>, vector<16x16x4xf32>
    %c0_12 = arith.constant 0 : index
    %c0_13 = arith.constant 0 : index
    %c0_14 = arith.constant 0 : index
    %c0_15 = arith.constant 0 : index
    %7 = vector.load %arg2[%c0_12, %c0_13, %c0_14, %c0_15] : memref<9x1x1x4xf32, #tpu.memory_space<vmem>>, vector<1x1x1x4xf32>
    %8 = vector.shape_cast %7 : vector<1x1x1x4xf32> to vector<1x1x4xf32>
    %9 = vector.broadcast %8 : vector<1x1x4xf32> to vector<16x16x4xf32>
    %10 = arith.mulf %6, %9 : vector<16x16x4xf32>
    %11 = arith.addf %5, %10 : vector<16x16x4xf32>
    %c0_16 = arith.constant 0 : index
    %c1_17 = arith.constant 1 : index
    %c0_18 = arith.constant 0 : index
    %12 = vector.load %arg6[%c0_16, %c1_17, %c0_18] : memref<18x18x4xf32, #tpu.memory_space<vmem>>, vector<16x16x4xf32>
    %c1_19 = arith.constant 1 : index
    %c0_20 = arith.constant 0 : index
    %c0_21 = arith.constant 0 : index
    %c0_22 = arith.constant 0 : index
    %13 = vector.load %arg2[%c1_19, %c0_20, %c0_21, %c0_22] : memref<9x1x1x4xf32, #tpu.memory_space<vmem>>, vector<1x1x1x4xf32>
    %14 = vector.shape_cast %13 : vector<1x1x1x4xf32> to vector<1x1x4xf32>
    %15 = vector.broadcast %14 : vector<1x1x4xf32> to vector<16x16x4xf32>
    %16 = arith.mulf %12, %15 : vector<16x16x4xf32>
    %17 = arith.addf %11, %16 : vector<16x16x4xf32>
    %c0_23 = arith.constant 0 : index
    %c2 = arith.constant 2 : index
    %c0_24 = arith.constant 0 : index
    %18 = vector.load %arg6[%c0_23, %c2, %c0_24] : memref<18x18x4xf32, #tpu.memory_space<vmem>>, vector<16x16x4xf32>
    %c2_25 = arith.constant 2 : index
    %c0_26 = arith.constant 0 : index
    %c0_27 = arith.constant 0 : index
    %c0_28 = arith.constant 0 : index
    %19 = vector.load %arg2[%c2_25, %c0_26, %c0_27, %c0_28] : memref<9x1x1x4xf32, #tpu.memory_space<vmem>>, vector<1x1x1x4xf32>
    %20 = vector.shape_cast %19 : vector<1x1x1x4xf32> to vector<1x1x4xf32>
    %21 = vector.broadcast %20 : vector<1x1x4xf32> to vector<16x16x4xf32>
    %22 = arith.mulf %18, %21 : vector<16x16x4xf32>
    %23 = arith.addf %17, %22 : vector<16x16x4xf32>
    %c1_29 = arith.constant 1 : index
    %c0_30 = arith.constant 0 : index
    %c0_31 = arith.constant 0 : index
    %24 = vector.load %arg6[%c1_29, %c0_30, %c0_31] : memref<18x18x4xf32, #tpu.memory_space<vmem>>, vector<16x16x4xf32>
    %c3 = arith.constant 3 : index
    %c0_32 = arith.constant 0 : index
    %c0_33 = arith.constant 0 : index
    %c0_34 = arith.constant 0 : index
    %25 = vector.load %arg2[%c3, %c0_32, %c0_33, %c0_34] : memref<9x1x1x4xf32, #tpu.memory_space<vmem>>, vector<1x1x1x4xf32>
    %26 = vector.shape_cast %25 : vector<1x1x1x4xf32> to vector<1x1x4xf32>
    %27 = vector.broadcast %26 : vector<1x1x4xf32> to vector<16x16x4xf32>
    %28 = arith.mulf %24, %27 : vector<16x16x4xf32>
    %29 = arith.addf %23, %28 : vector<16x16x4xf32>
    %c1_35 = arith.constant 1 : index
    %c1_36 = arith.constant 1 : index
    %c0_37 = arith.constant 0 : index
    %30 = vector.load %arg6[%c1_35, %c1_36, %c0_37] : memref<18x18x4xf32, #tpu.memory_space<vmem>>, vector<16x16x4xf32>
    %c4 = arith.constant 4 : index
    %c0_38 = arith.constant 0 : index
    %c0_39 = arith.constant 0 : index
    %c0_40 = arith.constant 0 : index
    %31 = vector.load %arg2[%c4, %c0_38, %c0_39, %c0_40] : memref<9x1x1x4xf32, #tpu.memory_space<vmem>>, vector<1x1x1x4xf32>
    %32 = vector.shape_cast %31 : vector<1x1x1x4xf32> to vector<1x1x4xf32>
    %33 = vector.broadcast %32 : vector<1x1x4xf32> to vector<16x16x4xf32>
    %34 = arith.mulf %30, %33 : vector<16x16x4xf32>
    %35 = arith.addf %29, %34 : vector<16x16x4xf32>
    %c1_41 = arith.constant 1 : index
    %c2_42 = arith.constant 2 : index
    %c0_43 = arith.constant 0 : index
    %36 = vector.load %arg6[%c1_41, %c2_42, %c0_43] : memref<18x18x4xf32, #tpu.memory_space<vmem>>, vector<16x16x4xf32>
    %c5 = arith.constant 5 : index
    %c0_44 = arith.constant 0 : index
    %c0_45 = arith.constant 0 : index
    %c0_46 = arith.constant 0 : index
    %37 = vector.load %arg2[%c5, %c0_44, %c0_45, %c0_46] : memref<9x1x1x4xf32, #tpu.memory_space<vmem>>, vector<1x1x1x4xf32>
    %38 = vector.shape_cast %37 : vector<1x1x1x4xf32> to vector<1x1x4xf32>
    %39 = vector.broadcast %38 : vector<1x1x4xf32> to vector<16x16x4xf32>
    %40 = arith.mulf %36, %39 : vector<16x16x4xf32>
    %41 = arith.addf %35, %40 : vector<16x16x4xf32>
    %c2_47 = arith.constant 2 : index
    %c0_48 = arith.constant 0 : index
    %c0_49 = arith.constant 0 : index
    %42 = vector.load %arg6[%c2_47, %c0_48, %c0_49] : memref<18x18x4xf32, #tpu.memory_space<vmem>>, vector<16x16x4xf32>
    %c6 = arith.constant 6 : index
    %c0_50 = arith.constant 0 : index
    %c0_51 = arith.constant 0 : index
    %c0_52 = arith.constant 0 : index
    %43 = vector.load %arg2[%c6, %c0_50, %c0_51, %c0_52] : memref<9x1x1x4xf32, #tpu.memory_space<vmem>>, vector<1x1x1x4xf32>
    %44 = vector.shape_cast %43 : vector<1x1x1x4xf32> to vector<1x1x4xf32>
    %45 = vector.broadcast %44 : vector<1x1x4xf32> to vector<16x16x4xf32>
    %46 = arith.mulf %42, %45 : vector<16x16x4xf32>
    %47 = arith.addf %41, %46 : vector<16x16x4xf32>
    %c2_53 = arith.constant 2 : index
    %c1_54 = arith.constant 1 : index
    %c0_55 = arith.constant 0 : index
    %48 = vector.load %arg6[%c2_53, %c1_54, %c0_55] : memref<18x18x4xf32, #tpu.memory_space<vmem>>, vector<16x16x4xf32>
    %c7 = arith.constant 7 : index
    %c0_56 = arith.constant 0 : index
    %c0_57 = arith.constant 0 : index
    %c0_58 = arith.constant 0 : index
    %49 = vector.load %arg2[%c7, %c0_56, %c0_57, %c0_58] : memref<9x1x1x4xf32, #tpu.memory_space<vmem>>, vector<1x1x1x4xf32>
    %50 = vector.shape_cast %49 : vector<1x1x1x4xf32> to vector<1x1x4xf32>
    %51 = vector.broadcast %50 : vector<1x1x4xf32> to vector<16x16x4xf32>
    %52 = arith.mulf %48, %51 : vector<16x16x4xf32>
    %53 = arith.addf %47, %52 : vector<16x16x4xf32>
    %c2_59 = arith.constant 2 : index
    %c2_60 = arith.constant 2 : index
    %c0_61 = arith.constant 0 : index
    %54 = vector.load %arg6[%c2_59, %c2_60, %c0_61] : memref<18x18x4xf32, #tpu.memory_space<vmem>>, vector<16x16x4xf32>
    %c8 = arith.constant 8 : index
    %c0_62 = arith.constant 0 : index
    %c0_63 = arith.constant 0 : index
    %c0_64 = arith.constant 0 : index
    %55 = vector.load %arg2[%c8, %c0_62, %c0_63, %c0_64] : memref<9x1x1x4xf32, #tpu.memory_space<vmem>>, vector<1x1x1x4xf32>
    %56 = vector.shape_cast %55 : vector<1x1x1x4xf32> to vector<1x1x4xf32>
    %57 = vector.broadcast %56 : vector<1x1x4xf32> to vector<16x16x4xf32>
    %58 = arith.mulf %54, %57 : vector<16x16x4xf32>
    %59 = arith.addf %53, %58 : vector<16x16x4xf32>
    %c0_65 = arith.constant 0 : index
    %c0_66 = arith.constant 0 : index
    %c0_67 = arith.constant 0 : index
    %60 = vector.load %arg3[%c0_65, %c0_66, %c0_67] : memref<1x1x4xf32, #tpu.memory_space<vmem>>, vector<1x1x4xf32>
    %61 = vector.broadcast %60 : vector<1x1x4xf32> to vector<16x16x4xf32>
    %62 = arith.addf %59, %61 : vector<16x16x4xf32>
    %c0_68 = arith.constant 0 : index
    %c0_69 = arith.constant 0 : index
    %c0_70 = arith.constant 0 : index
    %63 = vector.load %arg4[%c0_68, %c0_69, %c0_70] : memref<1x1x4xf32, #tpu.memory_space<vmem>>, vector<1x1x4xf32>
    %64 = vector.broadcast %63 : vector<1x1x4xf32> to vector<16x16x4xf32>
    %65 = arith.mulf %62, %64 : vector<16x16x4xf32>
    %c0_71 = arith.constant 0 : index
    %c0_72 = arith.constant 0 : index
    %c0_73 = arith.constant 0 : index
    %c0_74 = arith.constant 0 : index
    %66 = vector.load %arg5[%c0_71, %c0_72, %c0_73, %c0_74] : memref<1x16x16x4xf32, #tpu.memory_space<vmem>>, vector<1x16x16x4xf32>
    %67 = vector.shape_cast %66 : vector<1x16x16x4xf32> to vector<16x16x4xf32>
    %68 = vector.shape_cast %65 : vector<16x16x4xf32> to vector<1x16x16x4xf32>
    tpu.vector_store %arg5[%c0_71, %c0_72, %c0_73, %c0_74], %68 {strides = array<i32>} : memref<1x16x16x4xf32, #tpu.memory_space<vmem>>, vector<1x16x16x4xf32>,
    return
  }
  func.func @transform_0(%arg0: i32) -> (i32, i32, i32, i32) {
    %c0_i32 = arith.constant 0 : i32
    %c0_i32_0 = arith.constant 0 : i32
    %c0_i32_1 = arith.constant 0 : i32
    %c0_i32_2 = arith.constant 0 : i32
    return %arg0, %c0_i32, %c0_i32_0, %c0_i32_1 : i32, i32, i32, i32
  }
  func.func @transform_1(%arg0: i32) -> (i32, i32, i32, i32) {
    %c0_i32 = arith.constant 0 : i32
    %c0_i32_0 = arith.constant 0 : i32
    %c0_i32_1 = arith.constant 0 : i32
    %c0_i32_2 = arith.constant 0 : i32
    %c0_i32_3 = arith.constant 0 : i32
    return %c0_i32, %c0_i32_0, %c0_i32_1, %c0_i32_2 : i32, i32, i32, i32
  }
  func.func @transform_2(%arg0: i32) -> (i32, i32, i32) {
    %c0_i32 = arith.constant 0 : i32
    %c0_i32_0 = arith.constant 0 : i32
    %c0_i32_1 = arith.constant 0 : i32
    %c0_i32_2 = arith.constant 0 : i32
    return %c0_i32, %c0_i32_0, %c0_i32_1 : i32, i32, i32
  }
  func.func @transform_3(%arg0: i32) -> (i32, i32, i32) {
    %c0_i32 = arith.constant 0 : i32
    %c0_i32_0 = arith.constant 0 : i32
    %c0_i32_1 = arith.constant 0 : i32
    %c0_i32_2 = arith.constant 0 : i32
    return %c0_i32, %c0_i32_0, %c0_i32_1 : i32, i32, i32
  }
  func.func @transform_4(%arg0: i32) -> (i32, i32, i32, i32) {
    %c0_i32 = arith.constant 0 : i32
    %c0_i32_0 = arith.constant 0 : i32
    %c0_i32_1 = arith.constant 0 : i32
    %c0_i32_2 = arith.constant 0 : i32
    return %arg0, %c0_i32, %c0_i32_0, %c0_i32_1 : i32, i32, i32, i32
  }
}

module attributes {stable_mosaic.version = 11 : i64} {
  func.func @_wavelet_path_kernel(%arg0: i32, %arg1: memref<8x2x8x8xf32, #tpu.memory_space<vmem>>, %arg2: memref<8x2x8x8xf32, #tpu.memory_space<vmem>>, %arg3: memref<9x1x1x16xf32, #tpu.memory_space<vmem>>, %arg4: memref<1x1x16xf32, #tpu.memory_space<vmem>>, %arg5: memref<8x2x8x8xf32, #tpu.memory_space<vmem>>, %arg6: memref<10x10x16xf32, #tpu.memory_space<vmem>>) attributes {dimension_semantics = [#tpu.dimension_semantics<parallel>], iteration_bounds = array<i64: 2>, scalar_prefetch = 0 : i64, scratch_operands = 1 : i64, tpu.core_type = #tpu.core_type<tc>, window_params = [{transform_indices = @transform_0, window_bounds = array<i64: 8, 2, 8, 8>}, {transform_indices = @transform_1, window_bounds = array<i64: 8, 2, 8, 8>}, {pipeline_mode = #tpu.pipeline_mode<synchronous>, transform_indices = @transform_2, window_bounds = array<i64: 9, 1, 1, 16>}, {pipeline_mode = #tpu.pipeline_mode<synchronous>, transform_indices = @transform_3, window_bounds = array<i64: 1, 1, 16>}, {transform_indices = @transform_4, window_bounds = array<i64: 8, 2, 8, 8>}]} {
    %c0 = arith.constant 0 : index
    %c0_0 = arith.constant 0 : index
    %c0_1 = arith.constant 0 : index
    %c0_2 = arith.constant 0 : index
    %0 = vector.load %arg1[%c0, %c0_0, %c0_1, %c0_2] : memref<8x2x8x8xf32, #tpu.memory_space<vmem>>, vector<8x1x8x8xf32>
    %1 = vector.shape_cast %0 : vector<8x1x8x8xf32> to vector<8x8x8xf32>
    %c0_3 = arith.constant 0 : index
    %c1 = arith.constant 1 : index
    %c0_4 = arith.constant 0 : index
    %c0_5 = arith.constant 0 : index
    %2 = vector.load %arg1[%c0_3, %c1, %c0_4, %c0_5] : memref<8x2x8x8xf32, #tpu.memory_space<vmem>>, vector<8x1x8x8xf32>
    %3 = vector.shape_cast %2 : vector<8x1x8x8xf32> to vector<8x8x8xf32>
    %4 = vector.extract_strided_slice %1 {offsets = [0, 0, 0], sizes = [8, 8, 4], strides = [1, 1, 1]} : vector<8x8x8xf32> to vector<8x8x4xf32>
    %5 = vector.extract_strided_slice %1 {offsets = [0, 0, 4], sizes = [8, 8, 4], strides = [1, 1, 1]} : vector<8x8x8xf32> to vector<8x8x4xf32>
    %6 = vector.extract_strided_slice %3 {offsets = [0, 0, 0], sizes = [8, 8, 4], strides = [1, 1, 1]} : vector<8x8x8xf32> to vector<8x8x4xf32>
    %7 = vector.extract_strided_slice %3 {offsets = [0, 0, 4], sizes = [8, 8, 4], strides = [1, 1, 1]} : vector<8x8x8xf32> to vector<8x8x4xf32>
    %8 = arith.addf %4, %5 : vector<8x8x4xf32>
    %9 = arith.addf %8, %6 : vector<8x8x4xf32>
    %10 = arith.addf %9, %7 : vector<8x8x4xf32>
    %cst = arith.constant 5.000000e-01 : f32
    %11 = vector.broadcast %cst : f32 to vector<8x8x4xf32>
    %12 = arith.mulf %11, %10 : vector<8x8x4xf32>
    %13 = arith.addf %4, %5 : vector<8x8x4xf32>
    %14 = arith.subf %13, %6 : vector<8x8x4xf32>
    %15 = arith.subf %14, %7 : vector<8x8x4xf32>
    %cst_6 = arith.constant 5.000000e-01 : f32
    %16 = vector.broadcast %cst_6 : f32 to vector<8x8x4xf32>
    %17 = arith.mulf %16, %15 : vector<8x8x4xf32>
    %18 = arith.subf %4, %5 : vector<8x8x4xf32>
    %19 = arith.addf %18, %6 : vector<8x8x4xf32>
    %20 = arith.subf %19, %7 : vector<8x8x4xf32>
    %cst_7 = arith.constant 5.000000e-01 : f32
    %21 = vector.broadcast %cst_7 : f32 to vector<8x8x4xf32>
    %22 = arith.mulf %21, %20 : vector<8x8x4xf32>
    %23 = arith.subf %4, %5 : vector<8x8x4xf32>
    %24 = arith.subf %23, %6 : vector<8x8x4xf32>
    %25 = arith.addf %24, %7 : vector<8x8x4xf32>
    %cst_8 = arith.constant 5.000000e-01 : f32
    %26 = vector.broadcast %cst_8 : f32 to vector<8x8x4xf32>
    %27 = arith.mulf %26, %25 : vector<8x8x4xf32>
    %cst_9 = arith.constant 0.000000e+00 : f32
    %28 = vector.broadcast %cst_9 : f32 to vector<10x10x16xf32>
    %c0_10 = arith.constant 0 : index
    %c0_11 = arith.constant 0 : index
    %c0_12 = arith.constant 0 : index
    %29 = vector.load %arg6[%c0_10, %c0_11, %c0_12] : memref<10x10x16xf32, #tpu.memory_space<vmem>>, vector<10x10x16xf32>
    tpu.vector_store %arg6[%c0_10, %c0_11, %c0_12], %28 {strides = array<i32>} : memref<10x10x16xf32, #tpu.memory_space<vmem>>, vector<10x10x16xf32>,
    %c1_13 = arith.constant 1 : index
    %c1_14 = arith.constant 1 : index
    %c0_15 = arith.constant 0 : index
    %30 = vector.load %arg6[%c1_13, %c1_14, %c0_15] : memref<10x10x16xf32, #tpu.memory_space<vmem>>, vector<8x8x4xf32>
    tpu.vector_store %arg6[%c1_13, %c1_14, %c0_15], %12 {strides = array<i32>} : memref<10x10x16xf32, #tpu.memory_space<vmem>>, vector<8x8x4xf32>,
    %c1_16 = arith.constant 1 : index
    %c1_17 = arith.constant 1 : index
    %c4 = arith.constant 4 : index
    %31 = vector.load %arg6[%c1_16, %c1_17, %c4] : memref<10x10x16xf32, #tpu.memory_space<vmem>>, vector<8x8x4xf32>
    tpu.vector_store %arg6[%c1_16, %c1_17, %c4], %17 {strides = array<i32>} : memref<10x10x16xf32, #tpu.memory_space<vmem>>, vector<8x8x4xf32>,
    %c1_18 = arith.constant 1 : index
    %c1_19 = arith.constant 1 : index
    %c8 = arith.constant 8 : index
    %32 = vector.load %arg6[%c1_18, %c1_19, %c8] : memref<10x10x16xf32, #tpu.memory_space<vmem>>, vector<8x8x4xf32>
    tpu.vector_store %arg6[%c1_18, %c1_19, %c8], %22 {strides = array<i32>} : memref<10x10x16xf32, #tpu.memory_space<vmem>>, vector<8x8x4xf32>,
    %c1_20 = arith.constant 1 : index
    %c1_21 = arith.constant 1 : index
    %c12 = arith.constant 12 : index
    %33 = vector.load %arg6[%c1_20, %c1_21, %c12] : memref<10x10x16xf32, #tpu.memory_space<vmem>>, vector<8x8x4xf32>
    tpu.vector_store %arg6[%c1_20, %c1_21, %c12], %27 {strides = array<i32>} : memref<10x10x16xf32, #tpu.memory_space<vmem>>, vector<8x8x4xf32>,
    %cst_22 = arith.constant 0.000000e+00 : f32
    %34 = vector.broadcast %cst_22 : f32 to vector<8x8x16xf32>
    %c0_23 = arith.constant 0 : index
    %c0_24 = arith.constant 0 : index
    %c0_25 = arith.constant 0 : index
    %35 = vector.load %arg6[%c0_23, %c0_24, %c0_25] : memref<10x10x16xf32, #tpu.memory_space<vmem>>, vector<8x8x16xf32>
    %c0_26 = arith.constant 0 : index
    %c0_27 = arith.constant 0 : index
    %c0_28 = arith.constant 0 : index
    %c0_29 = arith.constant 0 : index
    %36 = vector.load %arg3[%c0_26, %c0_27, %c0_28, %c0_29] : memref<9x1x1x16xf32, #tpu.memory_space<vmem>>, vector<1x1x1x16xf32>
    %37 = vector.shape_cast %36 : vector<1x1x1x16xf32> to vector<1x1x16xf32>
    %38 = vector.broadcast %37 : vector<1x1x16xf32> to vector<8x8x16xf32>
    %39 = arith.mulf %35, %38 : vector<8x8x16xf32>
    %40 = arith.addf %34, %39 : vector<8x8x16xf32>
    %c0_30 = arith.constant 0 : index
    %c1_31 = arith.constant 1 : index
    %c0_32 = arith.constant 0 : index
    %41 = vector.load %arg6[%c0_30, %c1_31, %c0_32] : memref<10x10x16xf32, #tpu.memory_space<vmem>>, vector<8x8x16xf32>
    %c1_33 = arith.constant 1 : index
    %c0_34 = arith.constant 0 : index
    %c0_35 = arith.constant 0 : index
    %c0_36 = arith.constant 0 : index
    %42 = vector.load %arg3[%c1_33, %c0_34, %c0_35, %c0_36] : memref<9x1x1x16xf32, #tpu.memory_space<vmem>>, vector<1x1x1x16xf32>
    %43 = vector.shape_cast %42 : vector<1x1x1x16xf32> to vector<1x1x16xf32>
    %44 = vector.broadcast %43 : vector<1x1x16xf32> to vector<8x8x16xf32>
    %45 = arith.mulf %41, %44 : vector<8x8x16xf32>
    %46 = arith.addf %40, %45 : vector<8x8x16xf32>
    %c0_37 = arith.constant 0 : index
    %c2 = arith.constant 2 : index
    %c0_38 = arith.constant 0 : index
    %47 = vector.load %arg6[%c0_37, %c2, %c0_38] : memref<10x10x16xf32, #tpu.memory_space<vmem>>, vector<8x8x16xf32>
    %c2_39 = arith.constant 2 : index
    %c0_40 = arith.constant 0 : index
    %c0_41 = arith.constant 0 : index
    %c0_42 = arith.constant 0 : index
    %48 = vector.load %arg3[%c2_39, %c0_40, %c0_41, %c0_42] : memref<9x1x1x16xf32, #tpu.memory_space<vmem>>, vector<1x1x1x16xf32>
    %49 = vector.shape_cast %48 : vector<1x1x1x16xf32> to vector<1x1x16xf32>
    %50 = vector.broadcast %49 : vector<1x1x16xf32> to vector<8x8x16xf32>
    %51 = arith.mulf %47, %50 : vector<8x8x16xf32>
    %52 = arith.addf %46, %51 : vector<8x8x16xf32>
    %c1_43 = arith.constant 1 : index
    %c0_44 = arith.constant 0 : index
    %c0_45 = arith.constant 0 : index
    %53 = vector.load %arg6[%c1_43, %c0_44, %c0_45] : memref<10x10x16xf32, #tpu.memory_space<vmem>>, vector<8x8x16xf32>
    %c3 = arith.constant 3 : index
    %c0_46 = arith.constant 0 : index
    %c0_47 = arith.constant 0 : index
    %c0_48 = arith.constant 0 : index
    %54 = vector.load %arg3[%c3, %c0_46, %c0_47, %c0_48] : memref<9x1x1x16xf32, #tpu.memory_space<vmem>>, vector<1x1x1x16xf32>
    %55 = vector.shape_cast %54 : vector<1x1x1x16xf32> to vector<1x1x16xf32>
    %56 = vector.broadcast %55 : vector<1x1x16xf32> to vector<8x8x16xf32>
    %57 = arith.mulf %53, %56 : vector<8x8x16xf32>
    %58 = arith.addf %52, %57 : vector<8x8x16xf32>
    %c1_49 = arith.constant 1 : index
    %c1_50 = arith.constant 1 : index
    %c0_51 = arith.constant 0 : index
    %59 = vector.load %arg6[%c1_49, %c1_50, %c0_51] : memref<10x10x16xf32, #tpu.memory_space<vmem>>, vector<8x8x16xf32>
    %c4_52 = arith.constant 4 : index
    %c0_53 = arith.constant 0 : index
    %c0_54 = arith.constant 0 : index
    %c0_55 = arith.constant 0 : index
    %60 = vector.load %arg3[%c4_52, %c0_53, %c0_54, %c0_55] : memref<9x1x1x16xf32, #tpu.memory_space<vmem>>, vector<1x1x1x16xf32>
    %61 = vector.shape_cast %60 : vector<1x1x1x16xf32> to vector<1x1x16xf32>
    %62 = vector.broadcast %61 : vector<1x1x16xf32> to vector<8x8x16xf32>
    %63 = arith.mulf %59, %62 : vector<8x8x16xf32>
    %64 = arith.addf %58, %63 : vector<8x8x16xf32>
    %c1_56 = arith.constant 1 : index
    %c2_57 = arith.constant 2 : index
    %c0_58 = arith.constant 0 : index
    %65 = vector.load %arg6[%c1_56, %c2_57, %c0_58] : memref<10x10x16xf32, #tpu.memory_space<vmem>>, vector<8x8x16xf32>
    %c5 = arith.constant 5 : index
    %c0_59 = arith.constant 0 : index
    %c0_60 = arith.constant 0 : index
    %c0_61 = arith.constant 0 : index
    %66 = vector.load %arg3[%c5, %c0_59, %c0_60, %c0_61] : memref<9x1x1x16xf32, #tpu.memory_space<vmem>>, vector<1x1x1x16xf32>
    %67 = vector.shape_cast %66 : vector<1x1x1x16xf32> to vector<1x1x16xf32>
    %68 = vector.broadcast %67 : vector<1x1x16xf32> to vector<8x8x16xf32>
    %69 = arith.mulf %65, %68 : vector<8x8x16xf32>
    %70 = arith.addf %64, %69 : vector<8x8x16xf32>
    %c2_62 = arith.constant 2 : index
    %c0_63 = arith.constant 0 : index
    %c0_64 = arith.constant 0 : index
    %71 = vector.load %arg6[%c2_62, %c0_63, %c0_64] : memref<10x10x16xf32, #tpu.memory_space<vmem>>, vector<8x8x16xf32>
    %c6 = arith.constant 6 : index
    %c0_65 = arith.constant 0 : index
    %c0_66 = arith.constant 0 : index
    %c0_67 = arith.constant 0 : index
    %72 = vector.load %arg3[%c6, %c0_65, %c0_66, %c0_67] : memref<9x1x1x16xf32, #tpu.memory_space<vmem>>, vector<1x1x1x16xf32>
    %73 = vector.shape_cast %72 : vector<1x1x1x16xf32> to vector<1x1x16xf32>
    %74 = vector.broadcast %73 : vector<1x1x16xf32> to vector<8x8x16xf32>
    %75 = arith.mulf %71, %74 : vector<8x8x16xf32>
    %76 = arith.addf %70, %75 : vector<8x8x16xf32>
    %c2_68 = arith.constant 2 : index
    %c1_69 = arith.constant 1 : index
    %c0_70 = arith.constant 0 : index
    %77 = vector.load %arg6[%c2_68, %c1_69, %c0_70] : memref<10x10x16xf32, #tpu.memory_space<vmem>>, vector<8x8x16xf32>
    %c7 = arith.constant 7 : index
    %c0_71 = arith.constant 0 : index
    %c0_72 = arith.constant 0 : index
    %c0_73 = arith.constant 0 : index
    %78 = vector.load %arg3[%c7, %c0_71, %c0_72, %c0_73] : memref<9x1x1x16xf32, #tpu.memory_space<vmem>>, vector<1x1x1x16xf32>
    %79 = vector.shape_cast %78 : vector<1x1x1x16xf32> to vector<1x1x16xf32>
    %80 = vector.broadcast %79 : vector<1x1x16xf32> to vector<8x8x16xf32>
    %81 = arith.mulf %77, %80 : vector<8x8x16xf32>
    %82 = arith.addf %76, %81 : vector<8x8x16xf32>
    %c2_74 = arith.constant 2 : index
    %c2_75 = arith.constant 2 : index
    %c0_76 = arith.constant 0 : index
    %83 = vector.load %arg6[%c2_74, %c2_75, %c0_76] : memref<10x10x16xf32, #tpu.memory_space<vmem>>, vector<8x8x16xf32>
    %c8_77 = arith.constant 8 : index
    %c0_78 = arith.constant 0 : index
    %c0_79 = arith.constant 0 : index
    %c0_80 = arith.constant 0 : index
    %84 = vector.load %arg3[%c8_77, %c0_78, %c0_79, %c0_80] : memref<9x1x1x16xf32, #tpu.memory_space<vmem>>, vector<1x1x1x16xf32>
    %85 = vector.shape_cast %84 : vector<1x1x1x16xf32> to vector<1x1x16xf32>
    %86 = vector.broadcast %85 : vector<1x1x16xf32> to vector<8x8x16xf32>
    %87 = arith.mulf %83, %86 : vector<8x8x16xf32>
    %88 = arith.addf %82, %87 : vector<8x8x16xf32>
    %c0_81 = arith.constant 0 : index
    %c0_82 = arith.constant 0 : index
    %c0_83 = arith.constant 0 : index
    %89 = vector.load %arg4[%c0_81, %c0_82, %c0_83] : memref<1x1x16xf32, #tpu.memory_space<vmem>>, vector<1x1x16xf32>
    %90 = vector.broadcast %89 : vector<1x1x16xf32> to vector<8x8x16xf32>
    %91 = arith.mulf %88, %90 : vector<8x8x16xf32>
    %92 = vector.extract_strided_slice %91 {offsets = [0, 0, 0], sizes = [8, 8, 4], strides = [1, 1, 1]} : vector<8x8x16xf32> to vector<8x8x4xf32>
    %93 = vector.extract_strided_slice %91 {offsets = [0, 0, 4], sizes = [8, 8, 4], strides = [1, 1, 1]} : vector<8x8x16xf32> to vector<8x8x4xf32>
    %94 = vector.extract_strided_slice %91 {offsets = [0, 0, 8], sizes = [8, 8, 4], strides = [1, 1, 1]} : vector<8x8x16xf32> to vector<8x8x4xf32>
    %95 = vector.extract_strided_slice %91 {offsets = [0, 0, 12], sizes = [8, 8, 4], strides = [1, 1, 1]} : vector<8x8x16xf32> to vector<8x8x4xf32>
    %c0_84 = arith.constant 0 : index
    %c0_85 = arith.constant 0 : index
    %c0_86 = arith.constant 0 : index
    %c0_87 = arith.constant 0 : index
    %96 = vector.load %arg2[%c0_84, %c0_85, %c0_86, %c0_87] : memref<8x2x8x8xf32, #tpu.memory_space<vmem>>, vector<8x1x8x8xf32>
    %97 = vector.shape_cast %96 : vector<8x1x8x8xf32> to vector<8x8x8xf32>
    %c0_88 = arith.constant 0 : index
    %c1_89 = arith.constant 1 : index
    %c0_90 = arith.constant 0 : index
    %c0_91 = arith.constant 0 : index
    %98 = vector.load %arg2[%c0_88, %c1_89, %c0_90, %c0_91] : memref<8x2x8x8xf32, #tpu.memory_space<vmem>>, vector<8x1x8x8xf32>
    %99 = vector.shape_cast %98 : vector<8x1x8x8xf32> to vector<8x8x8xf32>
    %100 = vector.extract_strided_slice %97 {offsets = [0, 0, 0], sizes = [8, 8, 4], strides = [1, 1, 1]} : vector<8x8x8xf32> to vector<8x8x4xf32>
    %101 = vector.extract_strided_slice %97 {offsets = [0, 0, 4], sizes = [8, 8, 4], strides = [1, 1, 1]} : vector<8x8x8xf32> to vector<8x8x4xf32>
    %102 = vector.extract_strided_slice %99 {offsets = [0, 0, 0], sizes = [8, 8, 4], strides = [1, 1, 1]} : vector<8x8x8xf32> to vector<8x8x4xf32>
    %103 = vector.extract_strided_slice %99 {offsets = [0, 0, 4], sizes = [8, 8, 4], strides = [1, 1, 1]} : vector<8x8x8xf32> to vector<8x8x4xf32>
    %104 = arith.addf %92, %93 : vector<8x8x4xf32>
    %105 = arith.addf %104, %94 : vector<8x8x4xf32>
    %106 = arith.addf %105, %95 : vector<8x8x4xf32>
    %cst_92 = arith.constant 5.000000e-01 : f32
    %107 = vector.broadcast %cst_92 : f32 to vector<8x8x4xf32>
    %108 = arith.mulf %107, %106 : vector<8x8x4xf32>
    %109 = arith.addf %100, %108 : vector<8x8x4xf32>
    %c0_93 = arith.constant 0 : index
    %c0_94 = arith.constant 0 : index
    %c0_95 = arith.constant 0 : index
    %c0_96 = arith.constant 0 : index
    %110 = vector.load %arg5[%c0_93, %c0_94, %c0_95, %c0_96] : memref<8x2x8x8xf32, #tpu.memory_space<vmem>>, vector<8x1x8x4xf32>
    %111 = vector.shape_cast %110 : vector<8x1x8x4xf32> to vector<8x8x4xf32>
    %112 = vector.shape_cast %109 : vector<8x8x4xf32> to vector<8x1x8x4xf32>
    tpu.vector_store %arg5[%c0_93, %c0_94, %c0_95, %c0_96], %112 {strides = array<i32>} : memref<8x2x8x8xf32, #tpu.memory_space<vmem>>, vector<8x1x8x4xf32>,
    %113 = arith.addf %92, %93 : vector<8x8x4xf32>
    %114 = arith.subf %113, %94 : vector<8x8x4xf32>
    %115 = arith.subf %114, %95 : vector<8x8x4xf32>
    %cst_97 = arith.constant 5.000000e-01 : f32
    %116 = vector.broadcast %cst_97 : f32 to vector<8x8x4xf32>
    %117 = arith.mulf %116, %115 : vector<8x8x4xf32>
    %118 = arith.addf %101, %117 : vector<8x8x4xf32>
    %c0_98 = arith.constant 0 : index
    %c0_99 = arith.constant 0 : index
    %c0_100 = arith.constant 0 : index
    %c4_101 = arith.constant 4 : index
    %119 = vector.load %arg5[%c0_98, %c0_99, %c0_100, %c4_101] : memref<8x2x8x8xf32, #tpu.memory_space<vmem>>, vector<8x1x8x4xf32>
    %120 = vector.shape_cast %119 : vector<8x1x8x4xf32> to vector<8x8x4xf32>
    %121 = vector.shape_cast %118 : vector<8x8x4xf32> to vector<8x1x8x4xf32>
    tpu.vector_store %arg5[%c0_98, %c0_99, %c0_100, %c4_101], %121 {strides = array<i32>} : memref<8x2x8x8xf32, #tpu.memory_space<vmem>>, vector<8x1x8x4xf32>,
    %122 = arith.subf %92, %93 : vector<8x8x4xf32>
    %123 = arith.addf %122, %94 : vector<8x8x4xf32>
    %124 = arith.subf %123, %95 : vector<8x8x4xf32>
    %cst_102 = arith.constant 5.000000e-01 : f32
    %125 = vector.broadcast %cst_102 : f32 to vector<8x8x4xf32>
    %126 = arith.mulf %125, %124 : vector<8x8x4xf32>
    %127 = arith.addf %102, %126 : vector<8x8x4xf32>
    %c0_103 = arith.constant 0 : index
    %c1_104 = arith.constant 1 : index
    %c0_105 = arith.constant 0 : index
    %c0_106 = arith.constant 0 : index
    %128 = vector.load %arg5[%c0_103, %c1_104, %c0_105, %c0_106] : memref<8x2x8x8xf32, #tpu.memory_space<vmem>>, vector<8x1x8x4xf32>
    %129 = vector.shape_cast %128 : vector<8x1x8x4xf32> to vector<8x8x4xf32>
    %130 = vector.shape_cast %127 : vector<8x8x4xf32> to vector<8x1x8x4xf32>
    tpu.vector_store %arg5[%c0_103, %c1_104, %c0_105, %c0_106], %130 {strides = array<i32>} : memref<8x2x8x8xf32, #tpu.memory_space<vmem>>, vector<8x1x8x4xf32>,
    %131 = arith.subf %92, %93 : vector<8x8x4xf32>
    %132 = arith.subf %131, %94 : vector<8x8x4xf32>
    %133 = arith.addf %132, %95 : vector<8x8x4xf32>
    %cst_107 = arith.constant 5.000000e-01 : f32
    %134 = vector.broadcast %cst_107 : f32 to vector<8x8x4xf32>
    %135 = arith.mulf %134, %133 : vector<8x8x4xf32>
    %136 = arith.addf %103, %135 : vector<8x8x4xf32>
    %c0_108 = arith.constant 0 : index
    %c1_109 = arith.constant 1 : index
    %c0_110 = arith.constant 0 : index
    %c4_111 = arith.constant 4 : index
    %137 = vector.load %arg5[%c0_108, %c1_109, %c0_110, %c4_111] : memref<8x2x8x8xf32, #tpu.memory_space<vmem>>, vector<8x1x8x4xf32>
    %138 = vector.shape_cast %137 : vector<8x1x8x4xf32> to vector<8x8x4xf32>
    %139 = vector.shape_cast %136 : vector<8x8x4xf32> to vector<8x1x8x4xf32>
    tpu.vector_store %arg5[%c0_108, %c1_109, %c0_110, %c4_111], %139 {strides = array<i32>} : memref<8x2x8x8xf32, #tpu.memory_space<vmem>>, vector<8x1x8x4xf32>,
    return
  }
  func.func @transform_0(%arg0: i32) -> (i32, i32, i32, i32) {
    %c0_i32 = arith.constant 0 : i32
    %c0_i32_0 = arith.constant 0 : i32
    %c0_i32_1 = arith.constant 0 : i32
    %c0_i32_2 = arith.constant 0 : i32
    return %arg0, %c0_i32, %c0_i32_0, %c0_i32_1 : i32, i32, i32, i32
  }
  func.func @transform_1(%arg0: i32) -> (i32, i32, i32, i32) {
    %c0_i32 = arith.constant 0 : i32
    %c0_i32_0 = arith.constant 0 : i32
    %c0_i32_1 = arith.constant 0 : i32
    %c0_i32_2 = arith.constant 0 : i32
    return %arg0, %c0_i32, %c0_i32_0, %c0_i32_1 : i32, i32, i32, i32
  }
  func.func @transform_2(%arg0: i32) -> (i32, i32, i32, i32) {
    %c0_i32 = arith.constant 0 : i32
    %c0_i32_0 = arith.constant 0 : i32
    %c0_i32_1 = arith.constant 0 : i32
    %c0_i32_2 = arith.constant 0 : i32
    %c0_i32_3 = arith.constant 0 : i32
    return %c0_i32, %c0_i32_0, %c0_i32_1, %c0_i32_2 : i32, i32, i32, i32
  }
  func.func @transform_3(%arg0: i32) -> (i32, i32, i32) {
    %c0_i32 = arith.constant 0 : i32
    %c0_i32_0 = arith.constant 0 : i32
    %c0_i32_1 = arith.constant 0 : i32
    %c0_i32_2 = arith.constant 0 : i32
    return %c0_i32, %c0_i32_0, %c0_i32_1 : i32, i32, i32
  }
  func.func @transform_4(%arg0: i32) -> (i32, i32, i32, i32) {
    %c0_i32 = arith.constant 0 : i32
    %c0_i32_0 = arith.constant 0 : i32
    %c0_i32_1 = arith.constant 0 : i32
    %c0_i32_2 = arith.constant 0 : i32
    return %arg0, %c0_i32, %c0_i32_0, %c0_i32_1 : i32, i32, i32, i32
  }
}

module attributes {stable_mosaic.version = 11 : i64} {
  func.func @_matmul2_bn_silu_kernel(%arg0: i32, %arg1: memref<256x8xf32, #tpu.memory_space<vmem>>, %arg2: memref<256x4xf32, #tpu.memory_space<vmem>>, %arg3: memref<8x8xf32, #tpu.memory_space<vmem>>, %arg4: memref<4x8xf32, #tpu.memory_space<vmem>>, %arg5: memref<1x8xf32, #tpu.memory_space<vmem>>, %arg6: memref<1x8xf32, #tpu.memory_space<vmem>>, %arg7: memref<256x8xf32, #tpu.memory_space<vmem>>) attributes {dimension_semantics = [#tpu.dimension_semantics<parallel>], iteration_bounds = array<i64: 2>, scalar_prefetch = 0 : i64, scratch_operands = 0 : i64, tpu.core_type = #tpu.core_type<tc>, window_params = [{transform_indices = @transform_0, window_bounds = array<i64: 256, 8>}, {transform_indices = @transform_1, window_bounds = array<i64: 256, 4>}, {pipeline_mode = #tpu.pipeline_mode<synchronous>, transform_indices = @transform_2, window_bounds = array<i64: 8, 8>}, {pipeline_mode = #tpu.pipeline_mode<synchronous>, transform_indices = @transform_3, window_bounds = array<i64: 4, 8>}, {pipeline_mode = #tpu.pipeline_mode<synchronous>, transform_indices = @transform_4, window_bounds = array<i64: 1, 8>}, {pipeline_mode = #tpu.pipeline_mode<synchronous>, transform_indices = @transform_5, window_bounds = array<i64: 1, 8>}, {transform_indices = @transform_6, window_bounds = array<i64: 256, 8>}]} {
    %c0 = arith.constant 0 : index
    %c0_0 = arith.constant 0 : index
    %0 = vector.load %arg1[%c0, %c0_0] : memref<256x8xf32, #tpu.memory_space<vmem>>, vector<256x8xf32>
    %1 = arith.truncf %0 : vector<256x8xf32> to vector<256x8xbf16>
    %c0_1 = arith.constant 0 : index
    %c0_2 = arith.constant 0 : index
    %2 = vector.load %arg3[%c0_1, %c0_2] : memref<8x8xf32, #tpu.memory_space<vmem>>, vector<8x8xf32>
    %3 = arith.truncf %2 : vector<8x8xf32> to vector<8x8xbf16>
    %cst = arith.constant dense<0.000000e+00> : vector<256x8xf32>
    %4 = tpu.matmul %1, %3, %cst {dimension_numbers = #tpu.dot_dimension_numbers<[1], [0], [0], [1], [0, 0, 1, 1], [], []>} : vector<256x8xbf16>, vector<8x8xbf16>, vector<256x8xf32> -> vector<256x8xf32>
    %c0_3 = arith.constant 0 : index
    %c0_4 = arith.constant 0 : index
    %5 = vector.load %arg2[%c0_3, %c0_4] : memref<256x4xf32, #tpu.memory_space<vmem>>, vector<256x4xf32>
    %6 = arith.truncf %5 : vector<256x4xf32> to vector<256x4xbf16>
    %c0_5 = arith.constant 0 : index
    %c0_6 = arith.constant 0 : index
    %7 = vector.load %arg4[%c0_5, %c0_6] : memref<4x8xf32, #tpu.memory_space<vmem>>, vector<4x8xf32>
    %8 = arith.truncf %7 : vector<4x8xf32> to vector<4x8xbf16>
    %cst_7 = arith.constant dense<0.000000e+00> : vector<256x8xf32>
    %9 = tpu.matmul %6, %8, %cst_7 {dimension_numbers = #tpu.dot_dimension_numbers<[1], [0], [0], [1], [0, 0, 1, 1], [], []>} : vector<256x4xbf16>, vector<4x8xbf16>, vector<256x8xf32> -> vector<256x8xf32>
    %10 = arith.addf %4, %9 : vector<256x8xf32>
    %c0_8 = arith.constant 0 : index
    %c0_9 = arith.constant 0 : index
    %11 = vector.load %arg5[%c0_8, %c0_9] : memref<1x8xf32, #tpu.memory_space<vmem>>, vector<1x8xf32>
    %12 = vector.broadcast %11 : vector<1x8xf32> to vector<256x8xf32>
    %13 = arith.mulf %10, %12 : vector<256x8xf32>
    %c0_10 = arith.constant 0 : index
    %c0_11 = arith.constant 0 : index
    %14 = vector.load %arg6[%c0_10, %c0_11] : memref<1x8xf32, #tpu.memory_space<vmem>>, vector<1x8xf32>
    %15 = vector.broadcast %14 : vector<1x8xf32> to vector<256x8xf32>
    %16 = arith.addf %13, %15 : vector<256x8xf32>
    %cst_12 = arith.constant 0.000000e+00 : f32
    %17 = vector.broadcast %cst_12 : f32 to vector<256x8xf32>
    %18 = arith.subf %17, %16 : vector<256x8xf32>
    %19 = math.exp %18 : vector<256x8xf32>
    %cst_13 = arith.constant 1.000000e+00 : f32
    %20 = vector.broadcast %cst_13 : f32 to vector<256x8xf32>
    %21 = arith.addf %20, %19 : vector<256x8xf32>
    %22 = tpu.reciprocal %21 {approx = true} : vector<256x8xf32> -> vector<256x8xf32>
    %23 = arith.mulf %16, %22 : vector<256x8xf32>
    %c0_14 = arith.constant 0 : index
    %c0_15 = arith.constant 0 : index
    %24 = vector.load %arg7[%c0_14, %c0_15] : memref<256x8xf32, #tpu.memory_space<vmem>>, vector<256x8xf32>
    tpu.vector_store %arg7[%c0_14, %c0_15], %23 {strides = array<i32>} : memref<256x8xf32, #tpu.memory_space<vmem>>, vector<256x8xf32>,
    return
  }
  func.func @transform_0(%arg0: i32) -> (i32, i32) {
    %c0_i32 = arith.constant 0 : i32
    %c0_i32_0 = arith.constant 0 : i32
    return %arg0, %c0_i32 : i32, i32
  }
  func.func @transform_1(%arg0: i32) -> (i32, i32) {
    %c0_i32 = arith.constant 0 : i32
    %c0_i32_0 = arith.constant 0 : i32
    return %arg0, %c0_i32 : i32, i32
  }
  func.func @transform_2(%arg0: i32) -> (i32, i32) {
    %c0_i32 = arith.constant 0 : i32
    %c0_i32_0 = arith.constant 0 : i32
    %c0_i32_1 = arith.constant 0 : i32
    return %c0_i32, %c0_i32_0 : i32, i32
  }
  func.func @transform_3(%arg0: i32) -> (i32, i32) {
    %c0_i32 = arith.constant 0 : i32
    %c0_i32_0 = arith.constant 0 : i32
    %c0_i32_1 = arith.constant 0 : i32
    return %c0_i32, %c0_i32_0 : i32, i32
  }
  func.func @transform_4(%arg0: i32) -> (i32, i32) {
    %c0_i32 = arith.constant 0 : i32
    %c0_i32_0 = arith.constant 0 : i32
    %c0_i32_1 = arith.constant 0 : i32
    return %c0_i32, %c0_i32_0 : i32, i32
  }
  func.func @transform_5(%arg0: i32) -> (i32, i32) {
    %c0_i32 = arith.constant 0 : i32
    %c0_i32_0 = arith.constant 0 : i32
    %c0_i32_1 = arith.constant 0 : i32
    return %c0_i32, %c0_i32_0 : i32, i32
  }
  func.func @transform_6(%arg0: i32) -> (i32, i32) {
    %c0_i32 = arith.constant 0 : i32
    %c0_i32_0 = arith.constant 0 : i32
    return %arg0, %c0_i32 : i32, i32
  }
}

</mosaic_0001>

<llo_original>
// kernel: _lambda_.5
$region0: #{_lambda_.5}
  #allocation0 [shape = 'u32[]', space=smem, size = 0x4, offset = 0x4, fixed_abs, tag = 'smem constant byte address 0x4 - core index']
  #allocation1 [shape = 'u32[144,128]{1,0:T(1,128)}', space=vmem, size = 0x12000, scoped, tag = 'internal scratch']
  %s0 = inlined_call_operand.vmem [shape: f32[512,4], index: 0, kind: input, shape index: {}]
  %s1 = inlined_call_operand.vmem [shape: f32[4,8], index: 1, kind: input, shape index: {}]
  %s2 = inlined_call_operand.vmem [shape: f32[1,8], index: 2, kind: input, shape index: {}]
  %s3 = inlined_call_operand.vmem [shape: f32[1,8], index: 3, kind: input, shape index: {}]
  %s4 = inlined_call_operand.vmem [shape: f32[512,8], index: 4, kind: output, shape index: {}]
  %s5 = sld [smem:[#allocation0]]
  $region49: #{_lambda_.5} parent=0
    _
  %s7 = ssub.s32 1, %s5
  %s8 = scalar_select 0, %s7, %s5
  loop: start=0, step=1, limit=4
  $region2: #{_lambda_.5} parent=0 // loop_pre_header
    _
  $region3: #{_lambda_.5} parent=0 // loop_header
    %s10 = sphi 0, %s14
    %p11 = scmp.ge.s32.totalorder %s10, 4
    %s20 = sphi 0, %s22
    %s23 = sphi 0, %s20
    %s24 = sphi 0, %s23
    %s40 = sphi 0, %s24
    %s44 = sphi 0, %s44
    %s46 = sphi 0, %s44
    %s47 = sphi 0, %s46
    %s61 = sphi 0, %s47
    %s65 = sphi 0, %s65
    %s67 = sphi 0, %s65
    %s68 = sphi 0, %s67
    %s82 = sphi 0, %s68
    %s86 = sphi 0, %s86
    %s88 = sphi 0, %s86
    %s89 = sphi 0, %s88
    %s103 = sphi 0, %s89
    %s109 = sphi 0, %s111
    %s112 = sphi 0, %s109
    %s113 = sphi 0, %s112
    %s129 = sphi 0, %s113
  $region4: #{_lambda_.5} parent=0 // loop_header_branch
    %13 = sbr.rel (%p11) target = $region8
  $region5: #{_lambda_.5} parent=0 // loop_body
    %s15 = ssub.s32 %s10, 1
    %s16 = ssub.s32 %s10, 2
    %s17 = sadd.s32 %s10, 1
    %s18 = ssub.s32 %s10, %s17
    %p19 = scmp.eq.s32.totalorder %s18, 0
    %s21 = sadd.s32 %s20, 1
    %s22 = scalar_select %p19, %s20, %s21
    %p25 = pneg %p19
    %p26 = scmp.eq.s32.totalorder %s10, 1
    %p27 = por %p25, %p26
    %p28 = scmp.ne.s32.totalorder %s20, %s23
    %p29 = scmp.eq.s32.totalorder %s10, 0
    %p30 = por %p28, %p29
    %p31 = scmp.ne.s32.totalorder %s20, %s23
    %p32 = scmp.eq.s32.totalorder %s15, 1
    %p33 = por %p31, %p32
    %p34 = scmp.ne.s32.totalorder %s23, %s24
    %p35 = scmp.eq.s32.totalorder %s15, 0
    %p36 = por %p34, %p35
    %p37 = scmp.ne.s32.totalorder %s23, %s24
    %p38 = scmp.eq.s32.totalorder %s16, 1
    %p39 = por %p37, %p38
    %p41 = scmp.ne.s32.totalorder %s24, %s40
    %p42 = scmp.eq.s32.totalorder %s16, 0
    %p43 = por %p41, %p42
    %s45 = sadd.s32 %s44, 1
    %p48 = scmp.eq.s32.totalorder %s10, 1
    %p49 = scmp.ne.s32.totalorder %s44, %s46
    %p50 = scmp.eq.s32.totalorder %s10, 0
    %p51 = por %p49, %p50
    %p52 = scmp.ne.s32.totalorder %s44, %s46
    %p53 = scmp.eq.s32.totalorder %s15, 1
    %p54 = por %p52, %p53
    %p55 = scmp.ne.s32.totalorder %s46, %s47
    %p56 = scmp.eq.s32.totalorder %s15, 0
    %p57 = por %p55, %p56
    %p58 = scmp.ne.s32.totalorder %s46, %s47
    %p59 = scmp.eq.s32.totalorder %s16, 1
    %p60 = por %p58, %p59
    %p62 = scmp.ne.s32.totalorder %s47, %s61
    %p63 = scmp.eq.s32.totalorder %s16, 0
    %p64 = por %p62, %p63
    %s66 = sadd.s32 %s65, 1
    %p69 = scmp.eq.s32.totalorder %s10, 1
    %p70 = scmp.ne.s32.totalorder %s65, %s67
    %p71 = scmp.eq.s32.totalorder %s10, 0
    %p72 = por %p70, %p71
    %p73 = scmp.ne.s32.totalorder %s65, %s67
    %p74 = scmp.eq.s32.totalorder %s15, 1
    %p75 = por %p73, %p74
    %p76 = scmp.ne.s32.totalorder %s67, %s68
    %p77 = scmp.eq.s32.totalorder %s15, 0
    %p78 = por %p76, %p77
    %p79 = scmp.ne.s32.totalorder %s67, %s68
    %p80 = scmp.eq.s32.totalorder %s16, 1
    %p81 = por %p79, %p80
    %p83 = scmp.ne.s32.totalorder %s68, %s82
    %p84 = scmp.eq.s32.totalorder %s16, 0
    %p85 = por %p83, %p84
    %s87 = sadd.s32 %s86, 1
    %p90 = scmp.eq.s32.totalorder %s10, 1
    %p91 = scmp.ne.s32.totalorder %s86, %s88
    %p92 = scmp.eq.s32.totalorder %s10, 0
    %p93 = por %p91, %p92
    %p94 = scmp.ne.s32.totalorder %s86, %s88
    %p95 = scmp.eq.s32.totalorder %s15, 1
    %p96 = por %p94, %p95
    %p97 = scmp.ne.s32.totalorder %s88, %s89
    %p98 = scmp.eq.s32.totalorder %s15, 0
    %p99 = por %p97, %p98
    %p100 = scmp.ne.s32.totalorder %s88, %s89
    %p101 = scmp.eq.s32.totalorder %s16, 1
    %p102 = por %p100, %p101
    %p104 = scmp.ne.s32.totalorder %s89, %s103
    %p105 = scmp.eq.s32.totalorder %s16, 0
    %p106 = por %p104, %p105
    %s107 = ssub.s32 %s10, %s17
    %p108 = scmp.eq.s32.totalorder %s107, 0
    %s110 = sadd.s32 %s109, 1
    %s111 = scalar_select %p108, %s109, %s110
    %p114 = pneg %p108
    %p115 = scmp.eq.s32.totalorder %s10, 1
    %p116 = por %p114, %p115
    %p117 = scmp.ne.s32.totalorder %s109, %s112
    %p118 = scmp.eq.s32.totalorder %s10, 0
    %p119 = por %p117, %p118
    %p120 = scmp.ne.s32.totalorder %s109, %s112
    %p121 = scmp.eq.s32.totalorder %s15, 1
    %p122 = por %p120, %p121
    %p123 = scmp.ne.s32.totalorder %s112, %s113
    %p124 = scmp.eq.s32.totalorder %s15, 0
    %p125 = por %p123, %p124
    %p126 = scmp.ne.s32.totalorder %s112, %s113
    %p127 = scmp.eq.s32.totalorder %s16, 1
    %p128 = por %p126, %p127
    %p130 = scmp.ne.s32.totalorder %s113, %s129
    %p131 = scmp.eq.s32.totalorder %s16, 0
    %p132 = por %p130, %p131
    %p133 = scmp.le.s32.totalorder 1, %s10
    %p134 = scmp.lt.s32.totalorder %s10, 3
    %p135 = pnand %p133, %p134
    %p136 = pneg %p135
    // Predicated region
    $region9: #{_lambda_.5} parent=5 // pred_check
      _
    $region10: #{_lambda_.5} parent=5 // pred_check_branch
      %138 = sbr.rel (%p135) target = $region12
    $region11: #{_lambda_.5} parent=5 // pred_region
      %s139 = ssub.s32 %s10, 1
      // Predicated region
      $region13: #{_lambda_.5} parent=11 // pred_check
        %p140 = pneg %p57
      $region14: #{_lambda_.5} parent=11 // pred_check_branch
        %142 = sbr.rel (%p140) target = $region16
      $region15: #{_lambda_.5} parent=11 // pred_region
        _
      $region16: #{_lambda_.5} parent=11 // pred_fallthru
        _
      // Predicated region
      $region17: #{_lambda_.5} parent=11 // pred_check
        %p143 = pneg %p78
      $region18: #{_lambda_.5} parent=11 // pred_check_branch
        %145 = sbr.rel (%p143) target = $region20
      $region19: #{_lambda_.5} parent=11 // pred_region
        _
      $region20: #{_lambda_.5} parent=11 // pred_fallthru
        _
      // Predicated region
      $region21: #{_lambda_.5} parent=11 // pred_check
        %p146 = pneg %p99
      $region22: #{_lambda_.5} parent=11 // pred_check_branch
        %148 = sbr.rel (%p146) target = $region24
      $region23: #{_lambda_.5} parent=11 // pred_region
        _
      $region24: #{_lambda_.5} parent=11 // pred_fallthru
        _
    $region12: #{_lambda_.5} parent=5 // pred_fallthru
      _
    %p149 = scmp.lt.s32.totalorder %s10, 2
    // Predicated region
    $region25: #{_lambda_.5} parent=5 // pred_check
      %p150 = pneg %p149
    $region26: #{_lambda_.5} parent=5 // pred_check_branch
      %152 = sbr.rel (%p150) target = $region28
    $region27: #{_lambda_.5} parent=5 // pred_region
      // Predicated region
      $region29: #{_lambda_.5} parent=27 // pred_check
        %p153 = pneg %p30
      $region30: #{_lambda_.5} parent=27 // pred_check_branch
        %155 = sbr.rel (%p153) target = $region32
      $region31: #{_lambda_.5} parent=27 // pred_region
        %s156 = smul.u32 32, %s10
        %p157 = scmp.lt.s32.totalorder %s156, 63
        %s158 = scalar_select %p157, %s156, 63
        %s159 = smul.addr %s158, 8
        %s160 = scalar_lea.vmem %s0, %s159
        %s161 = smul.u32 32, %s10
      $region32: #{_lambda_.5} parent=27 // pred_fallthru
        _
    $region28: #{_lambda_.5} parent=5 // pred_fallthru
      _
    %p162 = scmp.le.s32.totalorder 1, %s10
    %p163 = scmp.lt.s32.totalorder %s10, 3
    %p164 = pnand %p162, %p163
    %p165 = pneg %p164
    // Predicated region
    $region33: #{_lambda_.5} parent=5 // pred_check
      _
    $region34: #{_lambda_.5} parent=5 // pred_check_branch
      %167 = sbr.rel (%p164) target = $region36
    $region35: #{_lambda_.5} parent=5 // pred_region
      %s168 = ssub.s32 %s10, 1
      %s169 = smul.u32 32, %s15
      %p170 = scmp.lt.s32.totalorder %s169, 63
      %s171 = scalar_select %p170, %s169, 63
      %s172 = smul.addr %s171, 8
      %s173 = scalar_lea.vmem %s0, %s172
      %p174 = pneg %p36
      %p175 = pneg %p33
      %p176 = pneg %p57
      %p177 = pneg %p54
      %p178 = pneg %p78
      %p179 = pneg %p75
      %p180 = pneg %p99
      %p181 = pneg %p96
      %p182 = pneg %p125
      %p183 = pneg %p122
      %s184 = smul.u32 32, %s15
      %p185 = scmp.lt.s32.totalorder %s184, 63
      %s186 = scalar_select %p185, %s184, 63
      %s187 = smul.addr %s186, 8
      %s188 = scalar_lea.vmem %s4, %s187
      %s189 = smul.u32 32, %s15
      %p190 = scmp.lt.s32.totalorder %s189, 63
      %s191 = scalar_select %p190, %s189, 63
      %s192 = smul.addr %s191, 8
      %s193 = scalar_lea.vmem %s0, %s192
      %s194 = smul.u32 32, %s15
      %s195 = smul.u32 32, %s15
      %p196 = scmp.lt.s32.totalorder %s195, 63
      %s197 = scalar_select %p196, %s195, 63
      %s198 = smul.addr %s197, 8
      %s199 = scalar_lea.vmem %s4, %s198
      %s200 = smul.u32 32, %s15
      %v202 = vld [vmem:[%s193] sm:$0xff]
      %v203 = vld [vmem:[%s193 + $0x8] sm:$0xff]
      %v204 = vld [vmem:[%s193 + $0x10] sm:$0xff]
      %v205 = vld [vmem:[%s193 + $0x18] sm:$0xff]
      %v206 = vld [vmem:[%s193 + $0x20] sm:$0xff]
      %v207 = vld [vmem:[%s193 + $0x28] sm:$0xff]
      %v208 = vld [vmem:[%s193 + $0x30] sm:$0xff]
      %v209 = vld [vmem:[%s193 + $0x38] sm:$0xff]
      %v210 = vld [vmem:[%s193 + $0x40] sm:$0xff]
      %v211 = vld [vmem:[%s193 + $0x48] sm:$0xff]
      %v212 = vld [vmem:[%s193 + $0x50] sm:$0xff]
      %v213 = vld [vmem:[%s193 + $0x58] sm:$0xff]
      %v214 = vld [vmem:[%s193 + $0x60] sm:$0xff]
      %v215 = vld [vmem:[%s193 + $0x68] sm:$0xff]
      %v216 = vld [vmem:[%s193 + $0x70] sm:$0xff]
      %v217 = vld [vmem:[%s193 + $0x78] sm:$0xff]
      %v218 = vld [vmem:[%s193 + $0x80] sm:$0xff]
      %v219 = vld [vmem:[%s193 + $0x88] sm:$0xff]
      %v220 = vld [vmem:[%s193 + $0x90] sm:$0xff]
      %v221 = vld [vmem:[%s193 + $0x98] sm:$0xff]
      %v222 = vld [vmem:[%s193 + $0xa0] sm:$0xff]
      %v223 = vld [vmem:[%s193 + $0xa8] sm:$0xff]
      %v224 = vld [vmem:[%s193 + $0xb0] sm:$0xff]
      %v225 = vld [vmem:[%s193 + $0xb8] sm:$0xff]
      %v226 = vld [vmem:[%s193 + $0xc0] sm:$0xff]
      %v227 = vld [vmem:[%s193 + $0xc8] sm:$0xff]
      %v228 = vld [vmem:[%s193 + $0xd0] sm:$0xff]
      %v229 = vld [vmem:[%s193 + $0xd8] sm:$0xff]
      %v230 = vld [vmem:[%s193 + $0xe0] sm:$0xff]
      %v231 = vld [vmem:[%s193 + $0xe8] sm:$0xff]
      %v232 = vld [vmem:[%s193 + $0xf0] sm:$0xff]
      %v233 = vld [vmem:[%s193 + $0xf8] sm:$0xff]
      %v234 = vpack.c.bf16 %v203, %v202
      %v235 = vpack.c.bf16 %v205, %v204
      %v236 = vpack.c.bf16 %v207, %v206
      %v237 = vpack.c.bf16 %v209, %v208
      %v238 = vpack.c.bf16 %v211, %v210
      %v239 = vpack.c.bf16 %v213, %v212
      %v240 = vpack.c.bf16 %v215, %v214
      %v241 = vpack.c.bf16 %v217, %v216
      %v242 = vpack.c.bf16 %v219, %v218
      %v243 = vpack.c.bf16 %v221, %v220
      %v244 = vpack.c.bf16 %v223, %v222
      %v245 = vpack.c.bf16 %v225, %v224
      %v246 = vpack.c.bf16 %v227, %v226
      %v247 = vpack.c.bf16 %v229, %v228
      %v248 = vpack.c.bf16 %v231, %v230
      %v249 = vpack.c.bf16 %v233, %v232
      %v250 = vld [vmem:[%s1] sm:$0xf]
      %v251 = vpack.c.bf16 %v250, %v250
      %vm252 = vcmask 31744
      %v254 = vsel %vm252, %v234, 0
      %v257 = vsel %vm252, %v235, 0
      %v260 = vsel %vm252, %v236, 0
      %v263 = vsel %vm252, %v237, 0
      %v266 = vsel %vm252, %v238, 0
      %v269 = vsel %vm252, %v239, 0
      %v272 = vsel %vm252, %v240, 0
      %v275 = vsel %vm252, %v241, 0
      %v278 = vsel %vm252, %v242, 0
      %v281 = vsel %vm252, %v243, 0
      %v284 = vsel %vm252, %v244, 0
      %v287 = vsel %vm252, %v245, 0
      %v290 = vsel %vm252, %v246, 0
      %v293 = vsel %vm252, %v247, 0
      %v296 = vsel %vm252, %v248, 0
      %v299 = vsel %vm252, %v249, 0
      %vm301 = vcmask 1041408
      %v303 = vsel %vm301, %v251, 0
      %305 = vmatprep.subr.bf16.mxu0 0
      %306 = vmatpush1.bf16.msra.mxu0 %v303
      %307 = vmatprep.subr.bf16.mxu0 0
      %308 = vmatpush1.bf16.msra.mxu0 0
      %309 = vmatprep.subr.bf16.mxu0 0
      %310 = vmatpush1.bf16.msra.mxu0 0
      %311 = vmatprep.subr.bf16.mxu0 0
      %312 = vmatpush1.bf16.msra.mxu0 0
      %313 = vmatprep.subr.bf16.mxu0 0
      %314 = vmatpush1.bf16.msra.mxu0 0
      %315 = vmatprep.subr.bf16.mxu0 0
      %316 = vmatpush1.bf16.msra.mxu0 0
      %317 = vmatprep.subr.bf16.mxu0 0
      %318 = vmatpush1.bf16.msra.mxu0 0
      %319 = vmatprep.subr.bf16.mxu0 0
      %320 = vmatpush1.bf16.msra.mxu0 0
      %321 = vmatprep.subr.bf16.mxu0 0
      %322 = vmatpush1.bf16.msra.mxu0 0
      %323 = vmatprep.subr.bf16.mxu0 0
      %324 = vmatpush1.bf16.msra.mxu0 0
      %325 = vmatprep.subr.bf16.mxu0 0
      %326 = vmatpush1.bf16.msra.mxu0 0
      %327 = vmatprep.subr.bf16.mxu0 0
      %328 = vmatpush1.bf16.msra.mxu0 0
      %329 = vmatprep.subr.bf16.mxu0 0
      %330 = vmatpush1.bf16.msra.mxu0 0
      %331 = vmatprep.subr.bf16.mxu0 0
      %332 = vmatpush1.bf16.msra.mxu0 0
      %333 = vmatprep.subr.bf16.mxu0 0
      %334 = vmatpush1.bf16.msra.mxu0 0
      %335 = vmatprep.subr.bf16.mxu0 0
      %336 = vmatpush1.bf16.msra.mxu0 0
      %337 = vmatprep.mubr.bf16.mxu0 0
      %338 = vmatmul.mubr.bf16.gmra.mrb[0].mxu0 %v254
      %v339 = vpop.f32.mrb[0].mxu0
      %v340 = vadd.f32 0.0, %v339
      %v341 = vpop.f32.mrb[0].mxu0
      %v342 = vpop.f32.mrb[0].mxu0
      %v343 = vadd.f32 0.0, %v342
      %v344 = vpop.f32.mrb[0].mxu0
      %345 = vmatprep.mubr.bf16.mxu0 0
      %346 = vmatmul.mubr.bf16.gmra.mrb[0].mxu0 %v257
      %v347 = vpop.f32.mrb[0].mxu0
      %v348 = vadd.f32 0.0, %v347
      %v349 = vpop.f32.mrb[0].mxu0
      %v350 = vpop.f32.mrb[0].mxu0
      %v351 = vadd.f32 0.0, %v350
      %v352 = vpop.f32.mrb[0].mxu0
      %353 = vmatprep.mubr.bf16.mxu0 0
      %354 = vmatmul.mubr.bf16.gmra.mrb[0].mxu0 %v260
      %v355 = vpop.f32.mrb[0].mxu0
      %v356 = vadd.f32 0.0, %v355
      %v357 = vpop.f32.mrb[0].mxu0
      %v358 = vpop.f32.mrb[0].mxu0
      %v359 = vadd.f32 0.0, %v358
      %v360 = vpop.f32.mrb[0].mxu0
      %361 = vmatprep.mubr.bf16.mxu0 0
      %362 = vmatmul.mubr.bf16.gmra.mrb[0].mxu0 %v263
      %v363 = vpop.f32.mrb[0].mxu0
      %v364 = vadd.f32 0.0, %v363
      %v365 = vpop.f32.mrb[0].mxu0
      %v366 = vpop.f32.mrb[0].mxu0
      %v367 = vadd.f32 0.0, %v366
      %v368 = vpop.f32.mrb[0].mxu0
      %369 = vmatprep.mubr.bf16.mxu0 0
      %370 = vmatmul.mubr.bf16.gmra.mrb[0].mxu0 %v266
      %v371 = vpop.f32.mrb[0].mxu0
      %v372 = vadd.f32 0.0, %v371
      %v373 = vpop.f32.mrb[0].mxu0
      %v374 = vpop.f32.mrb[0].mxu0
      %v375 = vadd.f32 0.0, %v374
      %v376 = vpop.f32.mrb[0].mxu0
      %377 = vmatprep.mubr.bf16.mxu0 0
      %378 = vmatmul.mubr.bf16.gmra.mrb[0].mxu0 %v269
      %v379 = vpop.f32.mrb[0].mxu0
      %v380 = vadd.f32 0.0, %v379
      %v381 = vpop.f32.mrb[0].mxu0
      %v382 = vpop.f32.mrb[0].mxu0
      %v383 = vadd.f32 0.0, %v382
      %v384 = vpop.f32.mrb[0].mxu0
      %385 = vmatprep.mubr.bf16.mxu0 0
      %386 = vmatmul.mubr.bf16.gmra.mrb[0].mxu0 %v272
      %v387 = vpop.f32.mrb[0].mxu0
      %v388 = vadd.f32 0.0, %v387
      %v389 = vpop.f32.mrb[0].mxu0
      %v390 = vpop.f32.mrb[0].mxu0
      %v391 = vadd.f32 0.0, %v390
      %v392 = vpop.f32.mrb[0].mxu0
      %393 = vmatprep.mubr.bf16.mxu0 0
      %394 = vmatmul.mubr.bf16.gmra.mrb[0].mxu0 %v275
      %v395 = vpop.f32.mrb[0].mxu0
      %v396 = vadd.f32 0.0, %v395
      %v397 = vpop.f32.mrb[0].mxu0
      %v398 = vpop.f32.mrb[0].mxu0
      %v399 = vadd.f32 0.0, %v398
      %v400 = vpop.f32.mrb[0].mxu0
      %401 = vmatprep.mubr.bf16.mxu0 0
      %402 = vmatmul.mubr.bf16.gmra.mrb[0].mxu0 %v278
      %v403 = vpop.f32.mrb[0].mxu0
      %v404 = vadd.f32 0.0, %v403
      %v405 = vpop.f32.mrb[0].mxu0
      %v406 = vpop.f32.mrb[0].mxu0
      %v407 = vadd.f32 0.0, %v406
      %v408 = vpop.f32.mrb[0].mxu0
      %409 = vmatprep.mubr.bf16.mxu0 0
      %410 = vmatmul.mubr.bf16.gmra.mrb[0].mxu0 %v281
      %v411 = vpop.f32.mrb[0].mxu0
      %v412 = vadd.f32 0.0, %v411
      %v413 = vpop.f32.mrb[0].mxu0
      %v414 = vpop.f32.mrb[0].mxu0
      %v415 = vadd.f32 0.0, %v414
      %v416 = vpop.f32.mrb[0].mxu0
      %417 = vmatprep.mubr.bf16.mxu0 0
      %418 = vmatmul.mubr.bf16.gmra.mrb[0].mxu0 %v284
      %v419 = vpop.f32.mrb[0].mxu0
      %v420 = vadd.f32 0.0, %v419
      %v421 = vpop.f32.mrb[0].mxu0
      %v422 = vpop.f32.mrb[0].mxu0
      %v423 = vadd.f32 0.0, %v422
      %v424 = vpop.f32.mrb[0].mxu0
      %425 = vmatprep.mubr.bf16.mxu0 0
      %426 = vmatmul.mubr.bf16.gmra.mrb[0].mxu0 %v287
      %v427 = vpop.f32.mrb[0].mxu0
      %v428 = vadd.f32 0.0, %v427
      %v429 = vpop.f32.mrb[0].mxu0
      %v430 = vpop.f32.mrb[0].mxu0
      %v431 = vadd.f32 0.0, %v430
      %v432 = vpop.f32.mrb[0].mxu0
      %433 = vmatprep.mubr.bf16.mxu0 0
      %434 = vmatmul.mubr.bf16.gmra.mrb[0].mxu0 %v290
      %v435 = vpop.f32.mrb[0].mxu0
      %v436 = vadd.f32 0.0, %v435
      %v437 = vpop.f32.mrb[0].mxu0
      %v438 = vpop.f32.mrb[0].mxu0
      %v439 = vadd.f32 0.0, %v438
      %v440 = vpop.f32.mrb[0].mxu0
      %441 = vmatprep.mubr.bf16.mxu0 0
      %442 = vmatmul.mubr.bf16.gmra.mrb[0].mxu0 %v293
      %v443 = vpop.f32.mrb[0].mxu0
      %v444 = vadd.f32 0.0, %v443
      %v445 = vpop.f32.mrb[0].mxu0
      %v446 = vpop.f32.mrb[0].mxu0
      %v447 = vadd.f32 0.0, %v446
      %v448 = vpop.f32.mrb[0].mxu0
      %449 = vmatprep.mubr.bf16.mxu0 0
      %450 = vmatmul.mubr.bf16.gmra.mrb[0].mxu0 %v296
      %v451 = vpop.f32.mrb[0].mxu0
      %v452 = vadd.f32 0.0, %v451
      %v453 = vpop.f32.mrb[0].mxu0
      %v454 = vpop.f32.mrb[0].mxu0
      %v455 = vadd.f32 0.0, %v454
      %v456 = vpop.f32.mrb[0].mxu0
      %457 = vmatprep.mubr.bf16.mxu0 0
      %458 = vmatmul.mubr.bf16.gmra.mrb[0].mxu0 %v299
      %v459 = vpop.f32.mrb[0].mxu0
      %v460 = vadd.f32 0.0, %v459
      %v461 = vpop.f32.mrb[0].mxu0
      %v462 = vpop.f32.mrb[0].mxu0
      %v463 = vadd.f32 0.0, %v462
      %v464 = vpop.f32.mrb[0].mxu0
      %465 = vdwg.mxu0
      %v466 = vld [vmem:[%s2] sm:$0x1]
      %v468 = vlaneseq
      %v469 = vshrl.u32 %v468, 7
      %v470 = vsub.s32 0, %v469
      %v471 = vrot.slane %v466, %v470
      %v473 = vmul.f32 %v340, %v471
      %v474 = vmul.f32 %v343, %v471
      %v475 = vmul.f32 %v348, %v471
      %v476 = vmul.f32 %v351, %v471
      %v477 = vmul.f32 %v356, %v471
      %v478 = vmul.f32 %v359, %v471
      %v479 = vmul.f32 %v364, %v471
      %v480 = vmul.f32 %v367, %v471
      %v481 = vmul.f32 %v372, %v471
      %v482 = vmul.f32 %v375, %v471
      %v483 = vmul.f32 %v380, %v471
      %v484 = vmul.f32 %v383, %v471
      %v485 = vmul.f32 %v388, %v471
      %v486 = vmul.f32 %v391, %v471
      %v487 = vmul.f32 %v396, %v471
      %v488 = vmul.f32 %v399, %v471
      %v489 = vmul.f32 %v404, %v471
      %v490 = vmul.f32 %v407, %v471
      %v491 = vmul.f32 %v412, %v471
      %v492 = vmul.f32 %v415, %v471
      %v493 = vmul.f32 %v420, %v471
      %v494 = vmul.f32 %v423, %v471
      %v495 = vmul.f32 %v428, %v471
      %v496 = vmul.f32 %v431, %v471
      %v497 = vmul.f32 %v436, %v471
      %v498 = vmul.f32 %v439, %v471
      %v499 = vmul.f32 %v444, %v471
      %v500 = vmul.f32 %v447, %v471
      %v501 = vmul.f32 %v452, %v471
      %v502 = vmul.f32 %v455, %v471
      %v503 = vmul.f32 %v460, %v471
      %v504 = vmul.f32 %v463, %v471
      %v505 = vld [vmem:[%s3] sm:$0x1]
      %v507 = vlaneseq
      %v508 = vshrl.u32 %v507, 7
      %v509 = vsub.s32 0, %v508
      %v510 = vrot.slane %v505, %v509
      %v512 = vadd.f32 %v473, %v510
      %v513 = vadd.f32 %v474, %v510
      %v514 = vadd.f32 %v475, %v510
      %v515 = vadd.f32 %v476, %v510
      %v516 = vadd.f32 %v477, %v510
      %v517 = vadd.f32 %v478, %v510
      %v518 = vadd.f32 %v479, %v510
      %v519 = vadd.f32 %v480, %v510
      %v520 = vadd.f32 %v481, %v510
      %v521 = vadd.f32 %v482, %v510
      %v522 = vadd.f32 %v483, %v510
      %v523 = vadd.f32 %v484, %v510
      %v524 = vadd.f32 %v485, %v510
      %v525 = vadd.f32 %v486, %v510
      %v526 = vadd.f32 %v487, %v510
      %v527 = vadd.f32 %v488, %v510
      %v528 = vadd.f32 %v489, %v510
      %v529 = vadd.f32 %v490, %v510
      %v530 = vadd.f32 %v491, %v510
      %v531 = vadd.f32 %v492, %v510
      %v532 = vadd.f32 %v493, %v510
      %v533 = vadd.f32 %v494, %v510
      %v534 = vadd.f32 %v495, %v510
      %v535 = vadd.f32 %v496, %v510
      %v536 = vadd.f32 %v497, %v510
      %v537 = vadd.f32 %v498, %v510
      %v538 = vadd.f32 %v499, %v510
      %v539 = vadd.f32 %v500, %v510
      %v540 = vadd.f32 %v501, %v510
      %v541 = vadd.f32 %v502, %v510
      %v542 = vadd.f32 %v503, %v510
      %v543 = vadd.f32 %v504, %v510
      %v544 = vsub.f32 0.0, %v512
      %v545 = vsub.f32 0.0, %v513
      %v546 = vsub.f32 0.0, %v514
      %v547 = vsub.f32 0.0, %v515
      %v548 = vsub.f32 0.0, %v516
      %v549 = vsub.f32 0.0, %v517
      %v550 = vsub.f32 0.0, %v518
      %v551 = vsub.f32 0.0, %v519
      %v552 = vsub.f32 0.0, %v520
      %v553 = vsub.f32 0.0, %v521
      %v554 = vsub.f32 0.0, %v522
      %v555 = vsub.f32 0.0, %v523
      %v556 = vsub.f32 0.0, %v524
      %v557 = vsub.f32 0.0, %v525
      %v558 = vsub.f32 0.0, %v526
      %v559 = vsub.f32 0.0, %v527
      %v560 = vsub.f32 0.0, %v528
      %v561 = vsub.f32 0.0, %v529
      %v562 = vsub.f32 0.0, %v530
      %v563 = vsub.f32 0.0, %v531
      %v564 = vsub.f32 0.0, %v532
      %v565 = vsub.f32 0.0, %v533
      %v566 = vsub.f32 0.0, %v534
      %v567 = vsub.f32 0.0, %v535
      %v568 = vsub.f32 0.0, %v536
      %v569 = vsub.f32 0.0, %v537
      %v570 = vsub.f32 0.0, %v538
      %v571 = vsub.f32 0.0, %v539
      %v572 = vsub.f32 0.0, %v540
      %v573 = vsub.f32 0.0, %v541
      %v574 = vsub.f32 0.0, %v542
      %v575 = vsub.f32 0.0, %v543
      %v576 = vmul.f32 %v544, 1.442695
      %v577 = vpow.pop %v576
      %v578 = vmul.f32 %v545, 1.442695
      %v579 = vpow.pop %v578
      %v580 = vmul.f32 %v546, 1.442695
      %v581 = vpow.pop %v580
      %v582 = vmul.f32 %v547, 1.442695
      %v583 = vpow.pop %v582
      %v584 = vmul.f32 %v548, 1.442695
      %v585 = vpow.pop %v584
      %v586 = vmul.f32 %v549, 1.442695
      %v587 = vpow.pop %v586
      %v588 = vmul.f32 %v550, 1.442695
      %v589 = vpow.pop %v588
      %v590 = vmul.f32 %v551, 1.442695
      %v591 = vpow.pop %v590
      %v592 = vmul.f32 %v552, 1.442695
      %v593 = vpow.pop %v592
      %v594 = vmul.f32 %v553, 1.442695
      %v595 = vpow.pop %v594
      %v596 = vmul.f32 %v554, 1.442695
      %v597 = vpow.pop %v596
      %v598 = vmul.f32 %v555, 1.442695
      %v599 = vpow.pop %v598
      %v600 = vmul.f32 %v556, 1.442695
      %v601 = vpow.pop %v600
      %v602 = vmul.f32 %v557, 1.442695
      %v603 = vpow.pop %v602
      %v604 = vmul.f32 %v558, 1.442695
      %v605 = vpow.pop %v604
      %v606 = vmul.f32 %v559, 1.442695
      %v607 = vpow.pop %v606
      %v608 = vmul.f32 %v560, 1.442695
      %v609 = vpow.pop %v608
      %v610 = vmul.f32 %v561, 1.442695
      %v611 = vpow.pop %v610
      %v612 = vmul.f32 %v562, 1.442695
      %v613 = vpow.pop %v612
      %v614 = vmul.f32 %v563, 1.442695
      %v615 = vpow.pop %v614
      %v616 = vmul.f32 %v564, 1.442695
      %v617 = vpow.pop %v616
      %v618 = vmul.f32 %v565, 1.442695
      %v619 = vpow.pop %v618
      %v620 = vmul.f32 %v566, 1.442695
      %v621 = vpow.pop %v620
      %v622 = vmul.f32 %v567, 1.442695
      %v623 = vpow.pop %v622
      %v624 = vmul.f32 %v568, 1.442695
      %v625 = vpow.pop %v624
      %v626 = vmul.f32 %v569, 1.442695
      %v627 = vpow.pop %v626
      %v628 = vmul.f32 %v570, 1.442695
      %v629 = vpow.pop %v628
      %v630 = vmul.f32 %v571, 1.442695
      %v631 = vpow.pop %v630
      %v632 = vmul.f32 %v572, 1.442695
      %v633 = vpow.pop %v632
      %v634 = vmul.f32 %v573, 1.442695
      %v635 = vpow.pop %v634
      %v636 = vmul.f32 %v574, 1.442695
      %v637 = vpow.pop %v636
      %v638 = vmul.f32 %v575, 1.442695
      %v639 = vpow.pop %v638
      %v640 = vadd.f32 %v577, 1.0
      %v641 = vadd.f32 %v579, 1.0
      %v642 = vadd.f32 %v581, 1.0
      %v643 = vadd.f32 %v583, 1.0
      %v644 = vadd.f32 %v585, 1.0
      %v645 = vadd.f32 %v587, 1.0
      %v646 = vadd.f32 %v589, 1.0
      %v647 = vadd.f32 %v591, 1.0
      %v648 = vadd.f32 %v593, 1.0
      %v649 = vadd.f32 %v595, 1.0
      %v650 = vadd.f32 %v597, 1.0
      %v651 = vadd.f32 %v599, 1.0
      %v652 = vadd.f32 %v601, 1.0
      %v653 = vadd.f32 %v603, 1.0
      %v654 = vadd.f32 %v605, 1.0
      %v655 = vadd.f32 %v607, 1.0
      %v656 = vadd.f32 %v609, 1.0
      %v657 = vadd.f32 %v611, 1.0
      %v658 = vadd.f32 %v613, 1.0
      %v659 = vadd.f32 %v615, 1.0
      %v660 = vadd.f32 %v617, 1.0
      %v661 = vadd.f32 %v619, 1.0
      %v662 = vadd.f32 %v621, 1.0
      %v663 = vadd.f32 %v623, 1.0
      %v664 = vadd.f32 %v625, 1.0
      %v665 = vadd.f32 %v627, 1.0
      %v666 = vadd.f32 %v629, 1.0
      %v667 = vadd.f32 %v631, 1.0
      %v668 = vadd.f32 %v633, 1.0
      %v669 = vadd.f32 %v635, 1.0
      %v670 = vadd.f32 %v637, 1.0
      %v671 = vadd.f32 %v639, 1.0
      %v672 = vrcp.pop %v640
      %v673 = vrcp.pop %v641
      %v674 = vrcp.pop %v642
      %v675 = vrcp.pop %v643
      %v676 = vrcp.pop %v644
      %v677 = vrcp.pop %v645
      %v678 = vrcp.pop %v646
      %v679 = vrcp.pop %v647
      %v680 = vrcp.pop %v648
      %v681 = vrcp.pop %v649
      %v682 = vrcp.pop %v650
      %v683 = vrcp.pop %v651
      %v684 = vrcp.pop %v652
      %v685 = vrcp.pop %v653
      %v686 = vrcp.pop %v654
      %v687 = vrcp.pop %v655
      %v688 = vrcp.pop %v656
      %v689 = vrcp.pop %v657
      %v690 = vrcp.pop %v658
      %v691 = vrcp.pop %v659
      %v692 = vrcp.pop %v660
      %v693 = vrcp.pop %v661
      %v694 = vrcp.pop %v662
      %v695 = vrcp.pop %v663
      %v696 = vrcp.pop %v664
      %v697 = vrcp.pop %v665
      %v698 = vrcp.pop %v666
      %v699 = vrcp.pop %v667
      %v700 = vrcp.pop %v668
      %v701 = vrcp.pop %v669
      %v702 = vrcp.pop %v670
      %v703 = vrcp.pop %v671
      %v704 = vmul.f32 %v512, %v672
      %v705 = vmul.f32 %v513, %v673
      %v706 = vmul.f32 %v514, %v674
      %v707 = vmul.f32 %v515, %v675
      %v708 = vmul.f32 %v516, %v676
      %v709 = vmul.f32 %v517, %v677
      %v710 = vmul.f32 %v518, %v678
      %v711 = vmul.f32 %v519, %v679
      %v712 = vmul.f32 %v520, %v680
      %v713 = vmul.f32 %v521, %v681
      %v714 = vmul.f32 %v522, %v682
      %v715 = vmul.f32 %v523, %v683
      %v716 = vmul.f32 %v524, %v684
      %v717 = vmul.f32 %v525, %v685
      %v718 = vmul.f32 %v526, %v686
      %v719 = vmul.f32 %v527, %v687
      %v720 = vmul.f32 %v528, %v688
      %v721 = vmul.f32 %v529, %v689
      %v722 = vmul.f32 %v530, %v690
      %v723 = vmul.f32 %v531, %v691
      %v724 = vmul.f32 %v532, %v692
      %v725 = vmul.f32 %v533, %v693
      %v726 = vmul.f32 %v534, %v694
      %v727 = vmul.f32 %v535, %v695
      %v728 = vmul.f32 %v536, %v696
      %v729 = vmul.f32 %v537, %v697
      %v730 = vmul.f32 %v538, %v698
      %v731 = vmul.f32 %v539, %v699
      %v732 = vmul.f32 %v540, %v700
      %v733 = vmul.f32 %v541, %v701
      %v734 = vmul.f32 %v542, %v702
      %v735 = vmul.f32 %v543, %v703
      %vm736 = vcmask 64512
      %737 = vst.msk [vmem:[%s199] sm:$0xff] %vm736, %v704
      %738 = vst.msk [vmem:[%s199 + $0x8] sm:$0xff] %vm736, %v705
      %739 = vst.msk [vmem:[%s199 + $0x10] sm:$0xff] %vm736, %v706
      %740 = vst.msk [vmem:[%s199 + $0x18] sm:$0xff] %vm736, %v707
      %741 = vst.msk [vmem:[%s199 + $0x20] sm:$0xff] %vm736, %v708
      %742 = vst.msk [vmem:[%s199 + $0x28] sm:$0xff] %vm736, %v709
      %743 = vst.msk [vmem:[%s199 + $0x30] sm:$0xff] %vm736, %v710
      %744 = vst.msk [vmem:[%s199 + $0x38] sm:$0xff] %vm736, %v711
      %745 = vst.msk [vmem:[%s199 + $0x40] sm:$0xff] %vm736, %v712
      %746 = vst.msk [vmem:[%s199 + $0x48] sm:$0xff] %vm736, %v713
      %747 = vst.msk [vmem:[%s199 + $0x50] sm:$0xff] %vm736, %v714
      %748 = vst.msk [vmem:[%s199 + $0x58] sm:$0xff] %vm736, %v715
      %749 = vst.msk [vmem:[%s199 + $0x60] sm:$0xff] %vm736, %v716
      %750 = vst.msk [vmem:[%s199 + $0x68] sm:$0xff] %vm736, %v717
      %751 = vst.msk [vmem:[%s199 + $0x70] sm:$0xff] %vm736, %v718
      %752 = vst.msk [vmem:[%s199 + $0x78] sm:$0xff] %vm736, %v719
      %753 = vst.msk [vmem:[%s199 + $0x80] sm:$0xff] %vm736, %v720
      %754 = vst.msk [vmem:[%s199 + $0x88] sm:$0xff] %vm736, %v721
      %755 = vst.msk [vmem:[%s199 + $0x90] sm:$0xff] %vm736, %v722
      %756 = vst.msk [vmem:[%s199 + $0x98] sm:$0xff] %vm736, %v723
      %757 = vst.msk [vmem:[%s199 + $0xa0] sm:$0xff] %vm736, %v724
      %758 = vst.msk [vmem:[%s199 + $0xa8] sm:$0xff] %vm736, %v725
      %759 = vst.msk [vmem:[%s199 + $0xb0] sm:$0xff] %vm736, %v726
      %760 = vst.msk [vmem:[%s199 + $0xb8] sm:$0xff] %vm736, %v727
      %761 = vst.msk [vmem:[%s199 + $0xc0] sm:$0xff] %vm736, %v728
      %762 = vst.msk [vmem:[%s199 + $0xc8] sm:$0xff] %vm736, %v729
      %763 = vst.msk [vmem:[%s199 + $0xd0] sm:$0xff] %vm736, %v730
      %764 = vst.msk [vmem:[%s199 + $0xd8] sm:$0xff] %vm736, %v731
      %765 = vst.msk [vmem:[%s199 + $0xe0] sm:$0xff] %vm736, %v732
      %766 = vst.msk [vmem:[%s199 + $0xe8] sm:$0xff] %vm736, %v733
      %767 = vst.msk [vmem:[%s199 + $0xf0] sm:$0xff] %vm736, %v734
      %768 = vst.msk [vmem:[%s199 + $0xf8] sm:$0xff] %vm736, %v735
      %s769 = smul.u32 32, %s15
      %p770 = scmp.lt.s32.totalorder %s769, 63
      %s771 = scalar_select %p770, %s769, 63
      %s772 = smul.addr %s771, 8
      %s773 = scalar_lea.vmem %s4, %s772
      // Predicated region
      $region37: #{_lambda_.5} parent=35 // pred_check
        %p774 = pneg %p122
      $region38: #{_lambda_.5} parent=35 // pred_check_branch
        %776 = sbr.rel (%p774) target = $region40
      $region39: #{_lambda_.5} parent=35 // pred_region
        %s777 = smul.u32 32, %s15
      $region40: #{_lambda_.5} parent=35 // pred_fallthru
        _
    $region36: #{_lambda_.5} parent=5 // pred_fallthru
      _
    %p778 = scmp.le.s32.totalorder 2, %s10
    // Predicated region
    $region41: #{_lambda_.5} parent=5 // pred_check
      %p779 = pneg %p778
    $region42: #{_lambda_.5} parent=5 // pred_check_branch
      %781 = sbr.rel (%p779) target = $region44
    $region43: #{_lambda_.5} parent=5 // pred_region
      %s782 = ssub.s32 %s10, 2
      // Predicated region
      $region45: #{_lambda_.5} parent=43 // pred_check
        %p783 = pneg %p128
      $region46: #{_lambda_.5} parent=43 // pred_check_branch
        %785 = sbr.rel (%p783) target = $region48
      $region47: #{_lambda_.5} parent=43 // pred_region
        %s786 = smul.u32 32, %s16
        %p787 = scmp.lt.s32.totalorder %s786, 63
        %s788 = scalar_select %p787, %s786, 63
        %s789 = smul.addr %s788, 8
        %s790 = scalar_lea.vmem %s4, %s789
      $region48: #{_lambda_.5} parent=43 // pred_fallthru
        _
    $region44: #{_lambda_.5} parent=5 // pred_fallthru
      _
  $region6: #{_lambda_.5} parent=0 // loop_footer
    %s14 = sadd.s32 1, %s10
  $region7: #{_lambda_.5} parent=0 // loop_footer_branch
    %9 = sbr.rel target = $region3
  $region8: #{_lambda_.5} parent=0 // loop_exit
    _

// kernel: _lambda_.6
$region0: #{_lambda_.6}
  #allocation0 [shape = 'u32[]', space=smem, size = 0x4, offset = 0x4, fixed_abs, tag = 'smem constant byte address 0x4 - core index']
  #allocation1 [shape = 'u32[144,128]{1,0:T(1,128)}', space=vmem, size = 0x12000, scoped, tag = 'internal scratch']
  #allocation2 [shape = 'f32[18,18,4]{2,1,0:T(8,128)}', space=vmem, size = 0x36000, scoped, tag = 'scratch operand']
  #allocation3 [shape = 'f32[256,36]{1,0:T(8,128)}', space=vmem, size = 0x20000, scoped, tag = 'scratch operand']
  %s0 = inlined_call_operand.vmem [shape: f32[2,16,16,4], index: 0, kind: input, shape index: {}]
  %s1 = inlined_call_operand.vmem [shape: f32[36,4], index: 1, kind: input, shape index: {}]
  %s2 = inlined_call_operand.vmem [shape: f32[1,4], index: 2, kind: input, shape index: {}]
  %s3 = inlined_call_operand.vmem [shape: f32[1,4], index: 3, kind: input, shape index: {}]
  %s4 = inlined_call_operand.vmem [shape: f32[2,16,16,4], index: 4, kind: output, shape index: {}]
  %s5 = sld [smem:[#allocation0]]
  $region49: #{_lambda_.6} parent=0
    _
  %s7 = ssub.s32 1, %s5
  %s8 = scalar_select 0, %s7, %s5
  loop: start=0, step=1, limit=4
  $region2: #{_lambda_.6} parent=0 // loop_pre_header
    _
  $region3: #{_lambda_.6} parent=0 // loop_header
    %s10 = sphi 0, %s14
    %p11 = scmp.ge.s32.totalorder %s10, 4
    %s20 = sphi 0, %s22
    %s23 = sphi 0, %s20
    %s24 = sphi 0, %s23
    %s40 = sphi 0, %s24
    %s44 = sphi 0, %s44
    %s46 = sphi 0, %s44
    %s47 = sphi 0, %s46
    %s61 = sphi 0, %s47
    %s65 = sphi 0, %s65
    %s67 = sphi 0, %s65
    %s68 = sphi 0, %s67
    %s82 = sphi 0, %s68
    %s86 = sphi 0, %s86
    %s88 = sphi 0, %s86
    %s89 = sphi 0, %s88
    %s103 = sphi 0, %s89
    %s109 = sphi 0, %s111
    %s112 = sphi 0, %s109
    %s113 = sphi 0, %s112
    %s129 = sphi 0, %s113
  $region4: #{_lambda_.6} parent=0 // loop_header_branch
    %13 = sbr.rel (%p11) target = $region8
  $region5: #{_lambda_.6} parent=0 // loop_body
    %s15 = ssub.s32 %s10, 1
    %s16 = ssub.s32 %s10, 2
    %s17 = sadd.s32 %s10, 1
    %s18 = ssub.s32 %s10, %s17
    %p19 = scmp.eq.s32.totalorder %s18, 0
    %s21 = sadd.s32 %s20, 1
    %s22 = scalar_select %p19, %s20, %s21
    %p25 = pneg %p19
    %p26 = scmp.eq.s32.totalorder %s10, 1
    %p27 = por %p25, %p26
    %p28 = scmp.ne.s32.totalorder %s20, %s23
    %p29 = scmp.eq.s32.totalorder %s10, 0
    %p30 = por %p28, %p29
    %p31 = scmp.ne.s32.totalorder %s20, %s23
    %p32 = scmp.eq.s32.totalorder %s15, 1
    %p33 = por %p31, %p32
    %p34 = scmp.ne.s32.totalorder %s23, %s24
    %p35 = scmp.eq.s32.totalorder %s15, 0
    %p36 = por %p34, %p35
    %p37 = scmp.ne.s32.totalorder %s23, %s24
    %p38 = scmp.eq.s32.totalorder %s16, 1
    %p39 = por %p37, %p38
    %p41 = scmp.ne.s32.totalorder %s24, %s40
    %p42 = scmp.eq.s32.totalorder %s16, 0
    %p43 = por %p41, %p42
    %s45 = sadd.s32 %s44, 1
    %p48 = scmp.eq.s32.totalorder %s10, 1
    %p49 = scmp.ne.s32.totalorder %s44, %s46
    %p50 = scmp.eq.s32.totalorder %s10, 0
    %p51 = por %p49, %p50
    %p52 = scmp.ne.s32.totalorder %s44, %s46
    %p53 = scmp.eq.s32.totalorder %s15, 1
    %p54 = por %p52, %p53
    %p55 = scmp.ne.s32.totalorder %s46, %s47
    %p56 = scmp.eq.s32.totalorder %s15, 0
    %p57 = por %p55, %p56
    %p58 = scmp.ne.s32.totalorder %s46, %s47
    %p59 = scmp.eq.s32.totalorder %s16, 1
    %p60 = por %p58, %p59
    %p62 = scmp.ne.s32.totalorder %s47, %s61
    %p63 = scmp.eq.s32.totalorder %s16, 0
    %p64 = por %p62, %p63
    %s66 = sadd.s32 %s65, 1
    %p69 = scmp.eq.s32.totalorder %s10, 1
    %p70 = scmp.ne.s32.totalorder %s65, %s67
    %p71 = scmp.eq.s32.totalorder %s10, 0
    %p72 = por %p70, %p71
    %p73 = scmp.ne.s32.totalorder %s65, %s67
    %p74 = scmp.eq.s32.totalorder %s15, 1
    %p75 = por %p73, %p74
    %p76 = scmp.ne.s32.totalorder %s67, %s68
    %p77 = scmp.eq.s32.totalorder %s15, 0
    %p78 = por %p76, %p77
    %p79 = scmp.ne.s32.totalorder %s67, %s68
    %p80 = scmp.eq.s32.totalorder %s16, 1
    %p81 = por %p79, %p80
    %p83 = scmp.ne.s32.totalorder %s68, %s82
    %p84 = scmp.eq.s32.totalorder %s16, 0
    %p85 = por %p83, %p84
    %s87 = sadd.s32 %s86, 1
    %p90 = scmp.eq.s32.totalorder %s10, 1
    %p91 = scmp.ne.s32.totalorder %s86, %s88
    %p92 = scmp.eq.s32.totalorder %s10, 0
    %p93 = por %p91, %p92
    %p94 = scmp.ne.s32.totalorder %s86, %s88
    %p95 = scmp.eq.s32.totalorder %s15, 1
    %p96 = por %p94, %p95
    %p97 = scmp.ne.s32.totalorder %s88, %s89
    %p98 = scmp.eq.s32.totalorder %s15, 0
    %p99 = por %p97, %p98
    %p100 = scmp.ne.s32.totalorder %s88, %s89
    %p101 = scmp.eq.s32.totalorder %s16, 1
    %p102 = por %p100, %p101
    %p104 = scmp.ne.s32.totalorder %s89, %s103
    %p105 = scmp.eq.s32.totalorder %s16, 0
    %p106 = por %p104, %p105
    %s107 = ssub.s32 %s10, %s17
    %p108 = scmp.eq.s32.totalorder %s107, 0
    %s110 = sadd.s32 %s109, 1
    %s111 = scalar_select %p108, %s109, %s110
    %p114 = pneg %p108
    %p115 = scmp.eq.s32.totalorder %s10, 1
    %p116 = por %p114, %p115
    %p117 = scmp.ne.s32.totalorder %s109, %s112
    %p118 = scmp.eq.s32.totalorder %s10, 0
    %p119 = por %p117, %p118
    %p120 = scmp.ne.s32.totalorder %s109, %s112
    %p121 = scmp.eq.s32.totalorder %s15, 1
    %p122 = por %p120, %p121
    %p123 = scmp.ne.s32.totalorder %s112, %s113
    %p124 = scmp.eq.s32.totalorder %s15, 0
    %p125 = por %p123, %p124
    %p126 = scmp.ne.s32.totalorder %s112, %s113
    %p127 = scmp.eq.s32.totalorder %s16, 1
    %p128 = por %p126, %p127
    %p130 = scmp.ne.s32.totalorder %s113, %s129
    %p131 = scmp.eq.s32.totalorder %s16, 0
    %p132 = por %p130, %p131
    %p133 = scmp.le.s32.totalorder 1, %s10
    %p134 = scmp.lt.s32.totalorder %s10, 3
    %p135 = pnand %p133, %p134
    %p136 = pneg %p135
    // Predicated region
    $region9: #{_lambda_.6} parent=5 // pred_check
      _
    $region10: #{_lambda_.6} parent=5 // pred_check_branch
      %138 = sbr.rel (%p135) target = $region12
    $region11: #{_lambda_.6} parent=5 // pred_region
      %s139 = ssub.s32 %s10, 1
      // Predicated region
      $region13: #{_lambda_.6} parent=11 // pred_check
        %p140 = pneg %p57
      $region14: #{_lambda_.6} parent=11 // pred_check_branch
        %142 = sbr.rel (%p140) target = $region16
      $region15: #{_lambda_.6} parent=11 // pred_region
        _
      $region16: #{_lambda_.6} parent=11 // pred_fallthru
        _
      // Predicated region
      $region17: #{_lambda_.6} parent=11 // pred_check
        %p143 = pneg %p78
      $region18: #{_lambda_.6} parent=11 // pred_check_branch
        %145 = sbr.rel (%p143) target = $region20
      $region19: #{_lambda_.6} parent=11 // pred_region
        _
      $region20: #{_lambda_.6} parent=11 // pred_fallthru
        _
      // Predicated region
      $region21: #{_lambda_.6} parent=11 // pred_check
        %p146 = pneg %p99
      $region22: #{_lambda_.6} parent=11 // pred_check_branch
        %148 = sbr.rel (%p146) target = $region24
      $region23: #{_lambda_.6} parent=11 // pred_region
        _
      $region24: #{_lambda_.6} parent=11 // pred_fallthru
        _
    $region12: #{_lambda_.6} parent=5 // pred_fallthru
      _
    %p149 = scmp.lt.s32.totalorder %s10, 2
    // Predicated region
    $region25: #{_lambda_.6} parent=5 // pred_check
      %p150 = pneg %p149
    $region26: #{_lambda_.6} parent=5 // pred_check_branch
      %152 = sbr.rel (%p150) target = $region28
    $region27: #{_lambda_.6} parent=5 // pred_region
      // Predicated region
      $region29: #{_lambda_.6} parent=27 // pred_check
        %p153 = pneg %p30
      $region30: #{_lambda_.6} parent=27 // pred_check_branch
        %155 = sbr.rel (%p153) target = $region32
      $region31: #{_lambda_.6} parent=27 // pred_region
        %p156 = scmp.lt.s32.totalorder %s10, 1
        %s157 = scalar_select %p156, %s10, 1
        %s158 = smul.addr %s157, 32
        %s159 = smul.addr %s158, 8
        %s160 = scalar_lea.vmem %s0, %s159
      $region32: #{_lambda_.6} parent=27 // pred_fallthru
        _
    $region28: #{_lambda_.6} parent=5 // pred_fallthru
      _
    %p161 = scmp.le.s32.totalorder 1, %s10
    %p162 = scmp.lt.s32.totalorder %s10, 3
    %p163 = pnand %p161, %p162
    %p164 = pneg %p163
    // Predicated region
    $region33: #{_lambda_.6} parent=5 // pred_check
      _
    $region34: #{_lambda_.6} parent=5 // pred_check_branch
      %166 = sbr.rel (%p163) target = $region36
    $region35: #{_lambda_.6} parent=5 // pred_region
      %s167 = ssub.s32 %s10, 1
      %p168 = scmp.lt.s32.totalorder %s15, 1
      %s169 = scalar_select %p168, %s15, 1
      %s170 = smul.addr %s169, 32
      %s171 = smul.addr %s170, 8
      %s172 = scalar_lea.vmem %s0, %s171
      %p173 = pneg %p36
      %p174 = pneg %p33
      %p175 = pneg %p57
      %p176 = pneg %p54
      %p177 = pneg %p78
      %p178 = pneg %p75
      %p179 = pneg %p99
      %p180 = pneg %p96
      %p181 = pneg %p125
      %p182 = pneg %p122
      %p183 = scmp.lt.s32.totalorder %s15, 1
      %s184 = scalar_select %p183, %s15, 1
      %s185 = smul.addr %s184, 32
      %s186 = smul.addr %s185, 8
      %s187 = scalar_lea.vmem %s4, %s186
      %p188 = scmp.lt.s32.totalorder %s15, 1
      %s189 = scalar_select %p188, %s15, 1
      %s190 = smul.addr %s189, 32
      %s191 = smul.addr %s190, 8
      %s192 = scalar_lea.vmem %s0, %s191
      %p193 = scmp.lt.s32.totalorder %s15, 1
      %s194 = scalar_select %p193, %s15, 1
      %s195 = smul.addr %s194, 32
      %s196 = smul.addr %s195, 8
      %s197 = scalar_lea.vmem %s4, %s196
      %vm199 = vcmask 31744
      %200 = vst.msk [vmem:[#allocation2] sm:$0xff] %vm199, 0.0
      %201 = vst.msk [vmem:[#allocation2 + $0x8] sm:$0xff] %vm199, 0.0
      %vm202 = vcmask 25600
      %203 = vst.msk [vmem:[#allocation2 + $0x10] sm:$0x3] %vm202, 0.0
      %204 = vst.msk [vmem:[#allocation2 + $0x18] sm:$0xff] %vm199, 0.0
      %205 = vst.msk [vmem:[#allocation2 + $0x20] sm:$0xff] %vm199, 0.0
      %206 = vst.msk [vmem:[#allocation2 + $0x28] sm:$0x3] %vm202, 0.0
      %207 = vst.msk [vmem:[#allocation2 + $0x30] sm:$0xff] %vm199, 0.0
      %208 = vst.msk [vmem:[#allocation2 + $0x38] sm:$0xff] %vm199, 0.0
      %209 = vst.msk [vmem:[#allocation2 + $0x40] sm:$0x3] %vm202, 0.0
      %210 = vst.msk [vmem:[#allocation2 + $0x48] sm:$0xff] %vm199, 0.0
      %211 = vst.msk [vmem:[#allocation2 + $0x50] sm:$0xff] %vm199, 0.0
      %212 = vst.msk [vmem:[#allocation2 + $0x58] sm:$0x3] %vm202, 0.0
      %213 = vst.msk [vmem:[#allocation2 + $0x60] sm:$0xff] %vm199, 0.0
      %214 = vst.msk [vmem:[#allocation2 + $0x68] sm:$0xff] %vm199, 0.0
      %215 = vst.msk [vmem:[#allocation2 + $0x70] sm:$0x3] %vm202, 0.0
      %216 = vst.msk [vmem:[#allocation2 + $0x78] sm:$0xff] %vm199, 0.0
      %217 = vst.msk [vmem:[#allocation2 + $0x80] sm:$0xff] %vm199, 0.0
      %218 = vst.msk [vmem:[#allocation2 + $0x88] sm:$0x3] %vm202, 0.0
      %219 = vst.msk [vmem:[#allocation2 + $0x90] sm:$0xff] %vm199, 0.0
      %220 = vst.msk [vmem:[#allocation2 + $0x98] sm:$0xff] %vm199, 0.0
      %221 = vst.msk [vmem:[#allocation2 + $0xa0] sm:$0x3] %vm202, 0.0
      %222 = vst.msk [vmem:[#allocation2 + $0xa8] sm:$0xff] %vm199, 0.0
      %223 = vst.msk [vmem:[#allocation2 + $0xb0] sm:$0xff] %vm199, 0.0
      %224 = vst.msk [vmem:[#allocation2 + $0xb8] sm:$0x3] %vm202, 0.0
      %225 = vst.msk [vmem:[#allocation2 + $0xc0] sm:$0xff] %vm199, 0.0
      %226 = vst.msk [vmem:[#allocation2 + $0xc8] sm:$0xff] %vm199, 0.0
      %227 = vst.msk [vmem:[#allocation2 + $0xd0] sm:$0x3] %vm202, 0.0
      %228 = vst.msk [vmem:[#allocation2 + $0xd8] sm:$0xff] %vm199, 0.0
      %229 = vst.msk [vmem:[#allocation2 + $0xe0] sm:$0xff] %vm199, 0.0
      %230 = vst.msk [vmem:[#allocation2 + $0xe8] sm:$0x3] %vm202, 0.0
      %231 = vst.msk [vmem:[#allocation2 + $0xf0] sm:$0xff] %vm199, 0.0
      %232 = vst.msk [vmem:[#allocation2 + $0xf8] sm:$0xff] %vm199, 0.0
      %233 = vst.msk [vmem:[#allocation2 + $0x100] sm:$0x3] %vm202, 0.0
      %234 = vst.msk [vmem:[#allocation2 + $0x108] sm:$0xff] %vm199, 0.0
      %235 = vst.msk [vmem:[#allocation2 + $0x110] sm:$0xff] %vm199, 0.0
      %236 = vst.msk [vmem:[#allocation2 + $0x118] sm:$0x3] %vm202, 0.0
      %237 = vst.msk [vmem:[#allocation2 + $0x120] sm:$0xff] %vm199, 0.0
      %238 = vst.msk [vmem:[#allocation2 + $0x128] sm:$0xff] %vm199, 0.0
      %239 = vst.msk [vmem:[#allocation2 + $0x130] sm:$0x3] %vm202, 0.0
      %240 = vst.msk [vmem:[#allocation2 + $0x138] sm:$0xff] %vm199, 0.0
      %241 = vst.msk [vmem:[#allocation2 + $0x140] sm:$0xff] %vm199, 0.0
      %242 = vst.msk [vmem:[#allocation2 + $0x148] sm:$0x3] %vm202, 0.0
      %243 = vst.msk [vmem:[#allocation2 + $0x150] sm:$0xff] %vm199, 0.0
      %244 = vst.msk [vmem:[#allocation2 + $0x158] sm:$0xff] %vm199, 0.0
      %245 = vst.msk [vmem:[#allocation2 + $0x160] sm:$0x3] %vm202, 0.0
      %246 = vst.msk [vmem:[#allocation2 + $0x168] sm:$0xff] %vm199, 0.0
      %247 = vst.msk [vmem:[#allocation2 + $0x170] sm:$0xff] %vm199, 0.0
      %248 = vst.msk [vmem:[#allocation2 + $0x178] sm:$0x3] %vm202, 0.0
      %249 = vst.msk [vmem:[#allocation2 + $0x180] sm:$0xff] %vm199, 0.0
      %250 = vst.msk [vmem:[#allocation2 + $0x188] sm:$0xff] %vm199, 0.0
      %251 = vst.msk [vmem:[#allocation2 + $0x190] sm:$0x3] %vm202, 0.0
      %252 = vst.msk [vmem:[#allocation2 + $0x198] sm:$0xff] %vm199, 0.0
      %253 = vst.msk [vmem:[#allocation2 + $0x1a0] sm:$0xff] %vm199, 0.0
      %254 = vst.msk [vmem:[#allocation2 + $0x1a8] sm:$0x3] %vm202, 0.0
      %v255 = vld [vmem:[%s192] sm:$0xff]
      %v256 = vld [vmem:[%s192 + $0x8] sm:$0xff]
      %v257 = vld [vmem:[%s192 + $0x10] sm:$0xff]
      %v258 = vld [vmem:[%s192 + $0x18] sm:$0xff]
      %v259 = vld [vmem:[%s192 + $0x20] sm:$0xff]
      %v260 = vld [vmem:[%s192 + $0x28] sm:$0xff]
      %v261 = vld [vmem:[%s192 + $0x30] sm:$0xff]
      %v262 = vld [vmem:[%s192 + $0x38] sm:$0xff]
      %v263 = vld [vmem:[%s192 + $0x40] sm:$0xff]
      %v264 = vld [vmem:[%s192 + $0x48] sm:$0xff]
      %v265 = vld [vmem:[%s192 + $0x50] sm:$0xff]
      %v266 = vld [vmem:[%s192 + $0x58] sm:$0xff]
      %v267 = vld [vmem:[%s192 + $0x60] sm:$0xff]
      %v268 = vld [vmem:[%s192 + $0x68] sm:$0xff]
      %v269 = vld [vmem:[%s192 + $0x70] sm:$0xff]
      %v270 = vld [vmem:[%s192 + $0x78] sm:$0xff]
      %v271 = vld [vmem:[%s192 + $0x80] sm:$0xff]
      %v272 = vld [vmem:[%s192 + $0x88] sm:$0xff]
      %v273 = vld [vmem:[%s192 + $0x90] sm:$0xff]
      %v274 = vld [vmem:[%s192 + $0x98] sm:$0xff]
      %v275 = vld [vmem:[%s192 + $0xa0] sm:$0xff]
      %v276 = vld [vmem:[%s192 + $0xa8] sm:$0xff]
      %v277 = vld [vmem:[%s192 + $0xb0] sm:$0xff]
      %v278 = vld [vmem:[%s192 + $0xb8] sm:$0xff]
      %v279 = vld [vmem:[%s192 + $0xc0] sm:$0xff]
      %v280 = vld [vmem:[%s192 + $0xc8] sm:$0xff]
      %v281 = vld [vmem:[%s192 + $0xd0] sm:$0xff]
      %v282 = vld [vmem:[%s192 + $0xd8] sm:$0xff]
      %v283 = vld [vmem:[%s192 + $0xe0] sm:$0xff]
      %v284 = vld [vmem:[%s192 + $0xe8] sm:$0xff]
      %v285 = vld [vmem:[%s192 + $0xf0] sm:$0xff]
      %v286 = vld [vmem:[%s192 + $0xf8] sm:$0xff]
      %s287 = scalar_lea.vmem [#allocation2], 24
      %288 = vst.msk [vmem:[%s287 + $0x1] sm:$0xff] %vm199, %v255
      %289 = vst.msk [vmem:[%s287 + $0x9] sm:$0xff] %vm199, %v256
      %290 = vst.msk [vmem:[%s287 + $0x19] sm:$0xff] %vm199, %v257
      %291 = vst.msk [vmem:[%s287 + $0x21] sm:$0xff] %vm199, %v258
      %292 = vst.msk [vmem:[%s287 + $0x31] sm:$0xff] %vm199, %v259
      %293 = vst.msk [vmem:[%s287 + $0x39] sm:$0xff] %vm199, %v260
      %294 = vst.msk [vmem:[%s287 + $0x49] sm:$0xff] %vm199, %v261
      %295 = vst.msk [vmem:[%s287 + $0x51] sm:$0xff] %vm199, %v262
      %296 = vst.msk [vmem:[%s287 + $0x61] sm:$0xff] %vm199, %v263
      %297 = vst.msk [vmem:[%s287 + $0x69] sm:$0xff] %vm199, %v264
      %298 = vst.msk [vmem:[%s287 + $0x79] sm:$0xff] %vm199, %v265
      %299 = vst.msk [vmem:[%s287 + $0x81] sm:$0xff] %vm199, %v266
      %300 = vst.msk [vmem:[%s287 + $0x91] sm:$0xff] %vm199, %v267
      %301 = vst.msk [vmem:[%s287 + $0x99] sm:$0xff] %vm199, %v268
      %302 = vst.msk [vmem:[%s287 + $0xa9] sm:$0xff] %vm199, %v269
      %303 = vst.msk [vmem:[%s287 + $0xb1] sm:$0xff] %vm199, %v270
      %304 = vst.msk [vmem:[%s287 + $0xc1] sm:$0xff] %vm199, %v271
      %305 = vst.msk [vmem:[%s287 + $0xc9] sm:$0xff] %vm199, %v272
      %306 = vst.msk [vmem:[%s287 + $0xd9] sm:$0xff] %vm199, %v273
      %307 = vst.msk [vmem:[%s287 + $0xe1] sm:$0xff] %vm199, %v274
      %308 = vst.msk [vmem:[%s287 + $0xf1] sm:$0xff] %vm199, %v275
      %309 = vst.msk [vmem:[%s287 + $0xf9] sm:$0xff] %vm199, %v276
      %310 = vst.msk [vmem:[%s287 + $0x109] sm:$0xff] %vm199, %v277
      %311 = vst.msk [vmem:[%s287 + $0x111] sm:$0xff] %vm199, %v278
      %312 = vst.msk [vmem:[%s287 + $0x121] sm:$0xff] %vm199, %v279
      %313 = vst.msk [vmem:[%s287 + $0x129] sm:$0xff] %vm199, %v280
      %314 = vst.msk [vmem:[%s287 + $0x139] sm:$0xff] %vm199, %v281
      %315 = vst.msk [vmem:[%s287 + $0x141] sm:$0xff] %vm199, %v282
      %316 = vst.msk [vmem:[%s287 + $0x151] sm:$0xff] %vm199, %v283
      %317 = vst.msk [vmem:[%s287 + $0x159] sm:$0xff] %vm199, %v284
      %318 = vst.msk [vmem:[%s287 + $0x169] sm:$0xff] %vm199, %v285
      %319 = vst.msk [vmem:[%s287 + $0x171] sm:$0xff] %vm199, %v286
      %v320 = vld [vmem:[#allocation2] sm:$0xff]
      %v321 = vld [vmem:[#allocation2 + $0x8] sm:$0xff]
      %v322 = vld [vmem:[#allocation2 + $0x18] sm:$0xff]
      %v323 = vld [vmem:[#allocation2 + $0x20] sm:$0xff]
      %v324 = vld [vmem:[#allocation2 + $0x30] sm:$0xff]
      %v325 = vld [vmem:[#allocation2 + $0x38] sm:$0xff]
      %v326 = vld [vmem:[#allocation2 + $0x48] sm:$0xff]
      %v327 = vld [vmem:[#allocation2 + $0x50] sm:$0xff]
      %v328 = vld [vmem:[#allocation2 + $0x60] sm:$0xff]
      %v329 = vld [vmem:[#allocation2 + $0x68] sm:$0xff]
      %v330 = vld [vmem:[#allocation2 + $0x78] sm:$0xff]
      %v331 = vld [vmem:[#allocation2 + $0x80] sm:$0xff]
      %v332 = vld [vmem:[#allocation2 + $0x90] sm:$0xff]
      %v333 = vld [vmem:[#allocation2 + $0x98] sm:$0xff]
      %v334 = vld [vmem:[#allocation2 + $0xa8] sm:$0xff]
      %v335 = vld [vmem:[#allocation2 + $0xb0] sm:$0xff]
      %v336 = vld [vmem:[#allocation2 + $0xc0] sm:$0xff]
      %v337 = vld [vmem:[#allocation2 + $0xc8] sm:$0xff]
      %v338 = vld [vmem:[#allocation2 + $0xd8] sm:$0xff]
      %v339 = vld [vmem:[#allocation2 + $0xe0] sm:$0xff]
      %v340 = vld [vmem:[#allocation2 + $0xf0] sm:$0xff]
      %v341 = vld [vmem:[#allocation2 + $0xf8] sm:$0xff]
      %v342 = vld [vmem:[#allocation2 + $0x108] sm:$0xff]
      %v343 = vld [vmem:[#allocation2 + $0x110] sm:$0xff]
      %v344 = vld [vmem:[#allocation2 + $0x120] sm:$0xff]
      %v345 = vld [vmem:[#allocation2 + $0x128] sm:$0xff]
      %v346 = vld [vmem:[#allocation2 + $0x138] sm:$0xff]
      %v347 = vld [vmem:[#allocation2 + $0x140] sm:$0xff]
      %v348 = vld [vmem:[#allocation2 + $0x150] sm:$0xff]
      %v349 = vld [vmem:[#allocation2 + $0x158] sm:$0xff]
      %v350 = vld [vmem:[#allocation2 + $0x168] sm:$0xff]
      %v351 = vld [vmem:[#allocation2 + $0x170] sm:$0xff]
      %352 = vst.msk [vmem:[#allocation3] sm:$0xff] %vm199, %v320
      %353 = vst.msk [vmem:[#allocation3 + $0x8] sm:$0xff] %vm199, %v321
      %354 = vst.msk [vmem:[#allocation3 + $0x10] sm:$0xff] %vm199, %v322
      %355 = vst.msk [vmem:[#allocation3 + $0x18] sm:$0xff] %vm199, %v323
      %356 = vst.msk [vmem:[#allocation3 + $0x20] sm:$0xff] %vm199, %v324
      %357 = vst.msk [vmem:[#allocation3 + $0x28] sm:$0xff] %vm199, %v325
      %358 = vst.msk [vmem:[#allocation3 + $0x30] sm:$0xff] %vm199, %v326
      %359 = vst.msk [vmem:[#allocation3 + $0x38] sm:$0xff] %vm199, %v327
      %360 = vst.msk [vmem:[#allocation3 + $0x40] sm:$0xff] %vm199, %v328
      %361 = vst.msk [vmem:[#allocation3 + $0x48] sm:$0xff] %vm199, %v329
      %362 = vst.msk [vmem:[#allocation3 + $0x50] sm:$0xff] %vm199, %v330
      %363 = vst.msk [vmem:[#allocation3 + $0x58] sm:$0xff] %vm199, %v331
      %364 = vst.msk [vmem:[#allocation3 + $0x60] sm:$0xff] %vm199, %v332
      %365 = vst.msk [vmem:[#allocation3 + $0x68] sm:$0xff] %vm199, %v333
      %366 = vst.msk [vmem:[#allocation3 + $0x70] sm:$0xff] %vm199, %v334
      %367 = vst.msk [vmem:[#allocation3 + $0x78] sm:$0xff] %vm199, %v335
      %368 = vst.msk [vmem:[#allocation3 + $0x80] sm:$0xff] %vm199, %v336
      %369 = vst.msk [vmem:[#allocation3 + $0x88] sm:$0xff] %vm199, %v337
      %370 = vst.msk [vmem:[#allocation3 + $0x90] sm:$0xff] %vm199, %v338
      %371 = vst.msk [vmem:[#allocation3 + $0x98] sm:$0xff] %vm199, %v339
      %372 = vst.msk [vmem:[#allocation3 + $0xa0] sm:$0xff] %vm199, %v340
      %373 = vst.msk [vmem:[#allocation3 + $0xa8] sm:$0xff] %vm199, %v341
      %374 = vst.msk [vmem:[#allocation3 + $0xb0] sm:$0xff] %vm199, %v342
      %375 = vst.msk [vmem:[#allocation3 + $0xb8] sm:$0xff] %vm199, %v343
      %376 = vst.msk [vmem:[#allocation3 + $0xc0] sm:$0xff] %vm199, %v344
      %377 = vst.msk [vmem:[#allocation3 + $0xc8] sm:$0xff] %vm199, %v345
      %378 = vst.msk [vmem:[#allocation3 + $0xd0] sm:$0xff] %vm199, %v346
      %379 = vst.msk [vmem:[#allocation3 + $0xd8] sm:$0xff] %vm199, %v347
      %380 = vst.msk [vmem:[#allocation3 + $0xe0] sm:$0xff] %vm199, %v348
      %381 = vst.msk [vmem:[#allocation3 + $0xe8] sm:$0xff] %vm199, %v349
      %382 = vst.msk [vmem:[#allocation3 + $0xf0] sm:$0xff] %vm199, %v350
      %383 = vst.msk [vmem:[#allocation3 + $0xf8] sm:$0xff] %vm199, %v351
      %v384 = vld [vmem:[#allocation2 + $0x1] sm:$0xff]
      %v385 = vld [vmem:[#allocation2 + $0x9] sm:$0xff]
      %v386 = vld [vmem:[#allocation2 + $0x19] sm:$0xff]
      %v387 = vld [vmem:[#allocation2 + $0x21] sm:$0xff]
      %v388 = vld [vmem:[#allocation2 + $0x31] sm:$0xff]
      %v389 = vld [vmem:[#allocation2 + $0x39] sm:$0xff]
      %v390 = vld [vmem:[#allocation2 + $0x49] sm:$0xff]
      %v391 = vld [vmem:[#allocation2 + $0x51] sm:$0xff]
      %v392 = vld [vmem:[#allocation2 + $0x61] sm:$0xff]
      %v393 = vld [vmem:[#allocation2 + $0x69] sm:$0xff]
      %v394 = vld [vmem:[#allocation2 + $0x79] sm:$0xff]
      %v395 = vld [vmem:[#allocation2 + $0x81] sm:$0xff]
      %v396 = vld [vmem:[#allocation2 + $0x91] sm:$0xff]
      %v397 = vld [vmem:[#allocation2 + $0x99] sm:$0xff]
      %v398 = vld [vmem:[#allocation2 + $0xa9] sm:$0xff]
      %v399 = vld [vmem:[#allocation2 + $0xb1] sm:$0xff]
      %v400 = vld [vmem:[#allocation2 + $0xc1] sm:$0xff]
      %v401 = vld [vmem:[#allocation2 + $0xc9] sm:$0xff]
      %v402 = vld [vmem:[#allocation2 + $0xd9] sm:$0xff]
      %v403 = vld [vmem:[#allocation2 + $0xe1] sm:$0xff]
      %v404 = vld [vmem:[#allocation2 + $0xf1] sm:$0xff]
      %v405 = vld [vmem:[#allocation2 + $0xf9] sm:$0xff]
      %v406 = vld [vmem:[#allocation2 + $0x109] sm:$0xff]
      %v407 = vld [vmem:[#allocation2 + $0x111] sm:$0xff]
      %v408 = vld [vmem:[#allocation2 + $0x121] sm:$0xff]
      %v409 = vld [vmem:[#allocation2 + $0x129] sm:$0xff]
      %v410 = vld [vmem:[#allocation2 + $0x139] sm:$0xff]
      %v411 = vld [vmem:[#allocation2 + $0x141] sm:$0xff]
      %v412 = vld [vmem:[#allocation2 + $0x151] sm:$0xff]
      %v413 = vld [vmem:[#allocation2 + $0x159] sm:$0xff]
      %v414 = vld [vmem:[#allocation2 + $0x169] sm:$0xff]
      %v415 = vld [vmem:[#allocation2 + $0x171] sm:$0xff]
      %448 = vrot.lane.b32.xlu0 %v384, 4
      %v449 = vpop.permute.xlu0 %448
      %450 = vrot.lane.b32.xlu0 %v385, 4
      %v451 = vpop.permute.xlu0 %450
      %452 = vrot.lane.b32.xlu0 %v386, 4
      %v453 = vpop.permute.xlu0 %452
      %454 = vrot.lane.b32.xlu0 %v387, 4
      %v455 = vpop.permute.xlu0 %454
      %456 = vrot.lane.b32.xlu0 %v388, 4
      %v457 = vpop.permute.xlu0 %456
      %458 = vrot.lane.b32.xlu0 %v389, 4
      %v459 = vpop.permute.xlu0 %458
      %460 = vrot.lane.b32.xlu0 %v390, 4
      %v461 = vpop.permute.xlu0 %460
      %462 = vrot.lane.b32.xlu0 %v391, 4
      %v463 = vpop.permute.xlu0 %462
      %464 = vrot.lane.b32.xlu0 %v392, 4
      %v465 = vpop.permute.xlu0 %464
      %466 = vrot.lane.b32.xlu0 %v393, 4
      %v467 = vpop.permute.xlu0 %466
      %468 = vrot.lane.b32.xlu0 %v394, 4
      %v469 = vpop.permute.xlu0 %468
      %470 = vrot.lane.b32.xlu0 %v395, 4
      %v471 = vpop.permute.xlu0 %470
      %472 = vrot.lane.b32.xlu0 %v396, 4
      %v473 = vpop.permute.xlu0 %472
      %474 = vrot.lane.b32.xlu0 %v397, 4
      %v475 = vpop.permute.xlu0 %474
      %476 = vrot.lane.b32.xlu0 %v398, 4
      %v477 = vpop.permute.xlu0 %476
      %478 = vrot.lane.b32.xlu0 %v399, 4
      %v479 = vpop.permute.xlu0 %478
      %480 = vrot.lane.b32.xlu0 %v400, 4
      %v481 = vpop.permute.xlu0 %480
      %482 = vrot.lane.b32.xlu0 %v401, 4
      %v483 = vpop.permute.xlu0 %482
      %484 = vrot.lane.b32.xlu0 %v402, 4
      %v485 = vpop.permute.xlu0 %484
      %486 = vrot.lane.b32.xlu0 %v403, 4
      %v487 = vpop.permute.xlu0 %486
      %488 = vrot.lane.b32.xlu0 %v404, 4
      %v489 = vpop.permute.xlu0 %488
      %490 = vrot.lane.b32.xlu0 %v405, 4
      %v491 = vpop.permute.xlu0 %490
      %492 = vrot.lane.b32.xlu0 %v406, 4
      %v493 = vpop.permute.xlu0 %492
      %494 = vrot.lane.b32.xlu0 %v407, 4
      %v495 = vpop.permute.xlu0 %494
      %496 = vrot.lane.b32.xlu0 %v408, 4
      %v497 = vpop.permute.xlu0 %496
      %498 = vrot.lane.b32.xlu0 %v409, 4
      %v499 = vpop.permute.xlu0 %498
      %500 = vrot.lane.b32.xlu0 %v410, 4
      %v501 = vpop.permute.xlu0 %500
      %502 = vrot.lane.b32.xlu0 %v411, 4
      %v503 = vpop.permute.xlu0 %502
      %504 = vrot.lane.b32.xlu0 %v412, 4
      %v505 = vpop.permute.xlu0 %504
      %506 = vrot.lane.b32.xlu0 %v413, 4
      %v507 = vpop.permute.xlu0 %506
      %508 = vrot.lane.b32.xlu0 %v414, 4
      %v509 = vpop.permute.xlu0 %508
      %510 = vrot.lane.b32.xlu0 %v415, 4
      %v511 = vpop.permute.xlu0 %510
      %vm544 = vcmask 64544
      %545 = vst.msk [vmem:[#allocation3] sm:$0xff] %vm544, %v449
      %546 = vst.msk [vmem:[#allocation3 + $0x8] sm:$0xff] %vm544, %v451
      %547 = vst.msk [vmem:[#allocation3 + $0x10] sm:$0xff] %vm544, %v453
      %548 = vst.msk [vmem:[#allocation3 + $0x18] sm:$0xff] %vm544, %v455
      %549 = vst.msk [vmem:[#allocation3 + $0x20] sm:$0xff] %vm544, %v457
      %550 = vst.msk [vmem:[#allocation3 + $0x28] sm:$0xff] %vm544, %v459
      %551 = vst.msk [vmem:[#allocation3 + $0x30] sm:$0xff] %vm544, %v461
      %552 = vst.msk [vmem:[#allocation3 + $0x38] sm:$0xff] %vm544, %v463
      %553 = vst.msk [vmem:[#allocation3 + $0x40] sm:$0xff] %vm544, %v465
      %554 = vst.msk [vmem:[#allocation3 + $0x48] sm:$0xff] %vm544, %v467
      %555 = vst.msk [vmem:[#allocation3 + $0x50] sm:$0xff] %vm544, %v469
      %556 = vst.msk [vmem:[#allocation3 + $0x58] sm:$0xff] %vm544, %v471
      %557 = vst.msk [vmem:[#allocation3 + $0x60] sm:$0xff] %vm544, %v473
      %558 = vst.msk [vmem:[#allocation3 + $0x68] sm:$0xff] %vm544, %v475
      %559 = vst.msk [vmem:[#allocation3 + $0x70] sm:$0xff] %vm544, %v477
      %560 = vst.msk [vmem:[#allocation3 + $0x78] sm:$0xff] %vm544, %v479
      %561 = vst.msk [vmem:[#allocation3 + $0x80] sm:$0xff] %vm544, %v481
      %562 = vst.msk [vmem:[#allocation3 + $0x88] sm:$0xff] %vm544, %v483
      %563 = vst.msk [vmem:[#allocation3 + $0x90] sm:$0xff] %vm544, %v485
      %564 = vst.msk [vmem:[#allocation3 + $0x98] sm:$0xff] %vm544, %v487
      %565 = vst.msk [vmem:[#allocation3 + $0xa0] sm:$0xff] %vm544, %v489
      %566 = vst.msk [vmem:[#allocation3 + $0xa8] sm:$0xff] %vm544, %v491
      %567 = vst.msk [vmem:[#allocation3 + $0xb0] sm:$0xff] %vm544, %v493
      %568 = vst.msk [vmem:[#allocation3 + $0xb8] sm:$0xff] %vm544, %v495
      %569 = vst.msk [vmem:[#allocation3 + $0xc0] sm:$0xff] %vm544, %v497
      %570 = vst.msk [vmem:[#allocation3 + $0xc8] sm:$0xff] %vm544, %v499
      %571 = vst.msk [vmem:[#allocation3 + $0xd0] sm:$0xff] %vm544, %v501
      %572 = vst.msk [vmem:[#allocation3 + $0xd8] sm:$0xff] %vm544, %v503
      %573 = vst.msk [vmem:[#allocation3 + $0xe0] sm:$0xff] %vm544, %v505
      %574 = vst.msk [vmem:[#allocation3 + $0xe8] sm:$0xff] %vm544, %v507
      %575 = vst.msk [vmem:[#allocation3 + $0xf0] sm:$0xff] %vm544, %v509
      %576 = vst.msk [vmem:[#allocation3 + $0xf8] sm:$0xff] %vm544, %v511
      %v577 = vld [vmem:[#allocation2 + $0x2] sm:$0xff]
      %v578 = vld [vmem:[#allocation2 + $0xa] sm:$0xff]
      %v579 = vld [vmem:[#allocation2 + $0x1a] sm:$0xff]
      %v580 = vld [vmem:[#allocation2 + $0x22] sm:$0xff]
      %v581 = vld [vmem:[#allocation2 + $0x32] sm:$0xff]
      %v582 = vld [vmem:[#allocation2 + $0x3a] sm:$0xff]
      %v583 = vld [vmem:[#allocation2 + $0x4a] sm:$0xff]
      %v584 = vld [vmem:[#allocation2 + $0x52] sm:$0xff]
      %v585 = vld [vmem:[#allocation2 + $0x62] sm:$0xff]
      %v586 = vld [vmem:[#allocation2 + $0x6a] sm:$0xff]
      %v587 = vld [vmem:[#allocation2 + $0x7a] sm:$0xff]
      %v588 = vld [vmem:[#allocation2 + $0x82] sm:$0xff]
      %v589 = vld [vmem:[#allocation2 + $0x92] sm:$0xff]
      %v590 = vld [vmem:[#allocation2 + $0x9a] sm:$0xff]
      %v591 = vld [vmem:[#allocation2 + $0xaa] sm:$0xff]
      %v592 = vld [vmem:[#allocation2 + $0xb2] sm:$0xff]
      %v593 = vld [vmem:[#allocation2 + $0xc2] sm:$0xff]
      %v594 = vld [vmem:[#allocation2 + $0xca] sm:$0xff]
      %v595 = vld [vmem:[#allocation2 + $0xda] sm:$0xff]
      %v596 = vld [vmem:[#allocation2 + $0xe2] sm:$0xff]
      %v597 = vld [vmem:[#allocation2 + $0xf2] sm:$0xff]
      %v598 = vld [vmem:[#allocation2 + $0xfa] sm:$0xff]
      %v599 = vld [vmem:[#allocation2 + $0x10a] sm:$0xff]
      %v600 = vld [vmem:[#allocation2 + $0x112] sm:$0xff]
      %v601 = vld [vmem:[#allocation2 + $0x122] sm:$0xff]
      %v602 = vld [vmem:[#allocation2 + $0x12a] sm:$0xff]
      %v603 = vld [vmem:[#allocation2 + $0x13a] sm:$0xff]
      %v604 = vld [vmem:[#allocation2 + $0x142] sm:$0xff]
      %v605 = vld [vmem:[#allocation2 + $0x152] sm:$0xff]
      %v606 = vld [vmem:[#allocation2 + $0x15a] sm:$0xff]
      %v607 = vld [vmem:[#allocation2 + $0x16a] sm:$0xff]
      %v608 = vld [vmem:[#allocation2 + $0x172] sm:$0xff]
      %641 = vrot.lane.b32.xlu0 %v577, 8
      %v642 = vpop.permute.xlu0 %641
      %643 = vrot.lane.b32.xlu0 %v578, 8
      %v644 = vpop.permute.xlu0 %643
      %645 = vrot.lane.b32.xlu0 %v579, 8
      %v646 = vpop.permute.xlu0 %645
      %647 = vrot.lane.b32.xlu0 %v580, 8
      %v648 = vpop.permute.xlu0 %647
      %649 = vrot.lane.b32.xlu0 %v581, 8
      %v650 = vpop.permute.xlu0 %649
      %651 = vrot.lane.b32.xlu0 %v582, 8
      %v652 = vpop.permute.xlu0 %651
      %653 = vrot.lane.b32.xlu0 %v583, 8
      %v654 = vpop.permute.xlu0 %653
      %655 = vrot.lane.b32.xlu0 %v584, 8
      %v656 = vpop.permute.xlu0 %655
      %657 = vrot.lane.b32.xlu0 %v585, 8
      %v658 = vpop.permute.xlu0 %657
      %659 = vrot.lane.b32.xlu0 %v586, 8
      %v660 = vpop.permute.xlu0 %659
      %661 = vrot.lane.b32.xlu0 %v587, 8
      %v662 = vpop.permute.xlu0 %661
      %663 = vrot.lane.b32.xlu0 %v588, 8
      %v664 = vpop.permute.xlu0 %663
      %665 = vrot.lane.b32.xlu0 %v589, 8
      %v666 = vpop.permute.xlu0 %665
      %667 = vrot.lane.b32.xlu0 %v590, 8
      %v668 = vpop.permute.xlu0 %667
      %669 = vrot.lane.b32.xlu0 %v591, 8
      %v670 = vpop.permute.xlu0 %669
      %671 = vrot.lane.b32.xlu0 %v592, 8
      %v672 = vpop.permute.xlu0 %671
      %673 = vrot.lane.b32.xlu0 %v593, 8
      %v674 = vpop.permute.xlu0 %673
      %675 = vrot.lane.b32.xlu0 %v594, 8
      %v676 = vpop.permute.xlu0 %675
      %677 = vrot.lane.b32.xlu0 %v595, 8
      %v678 = vpop.permute.xlu0 %677
      %679 = vrot.lane.b32.xlu0 %v596, 8
      %v680 = vpop.permute.xlu0 %679
      %681 = vrot.lane.b32.xlu0 %v597, 8
      %v682 = vpop.permute.xlu0 %681
      %683 = vrot.lane.b32.xlu0 %v598, 8
      %v684 = vpop.permute.xlu0 %683
      %685 = vrot.lane.b32.xlu0 %v599, 8
      %v686 = vpop.permute.xlu0 %685
      %687 = vrot.lane.b32.xlu0 %v600, 8
      %v688 = vpop.permute.xlu0 %687
      %689 = vrot.lane.b32.xlu0 %v601, 8
      %v690 = vpop.permute.xlu0 %689
      %691 = vrot.lane.b32.xlu0 %v602, 8
      %v692 = vpop.permute.xlu0 %691
      %693 = vrot.lane.b32.xlu0 %v603, 8
      %v694 = vpop.permute.xlu0 %693
      %695 = vrot.lane.b32.xlu0 %v604, 8
      %v696 = vpop.permute.xlu0 %695
      %697 = vrot.lane.b32.xlu0 %v605, 8
      %v698 = vpop.permute.xlu0 %697
      %699 = vrot.lane.b32.xlu0 %v606, 8
      %v700 = vpop.permute.xlu0 %699
      %701 = vrot.lane.b32.xlu0 %v607, 8
      %v702 = vpop.permute.xlu0 %701
      %703 = vrot.lane.b32.xlu0 %v608, 8
      %v704 = vpop.permute.xlu0 %703
      %vm737 = vcmask 97344
      %738 = vst.msk [vmem:[#allocation3] sm:$0xff] %vm737, %v642
      %739 = vst.msk [vmem:[#allocation3 + $0x8] sm:$0xff] %vm737, %v644
      %740 = vst.msk [vmem:[#allocation3 + $0x10] sm:$0xff] %vm737, %v646
      %741 = vst.msk [vmem:[#allocation3 + $0x18] sm:$0xff] %vm737, %v648
      %742 = vst.msk [vmem:[#allocation3 + $0x20] sm:$0xff] %vm737, %v650
      %743 = vst.msk [vmem:[#allocation3 + $0x28] sm:$0xff] %vm737, %v652
      %744 = vst.msk [vmem:[#allocation3 + $0x30] sm:$0xff] %vm737, %v654
      %745 = vst.msk [vmem:[#allocation3 + $0x38] sm:$0xff] %vm737, %v656
      %746 = vst.msk [vmem:[#allocation3 + $0x40] sm:$0xff] %vm737, %v658
      %747 = vst.msk [vmem:[#allocation3 + $0x48] sm:$0xff] %vm737, %v660
      %748 = vst.msk [vmem:[#allocation3 + $0x50] sm:$0xff] %vm737, %v662
      %749 = vst.msk [vmem:[#allocation3 + $0x58] sm:$0xff] %vm737, %v664
      %750 = vst.msk [vmem:[#allocation3 + $0x60] sm:$0xff] %vm737, %v666
      %751 = vst.msk [vmem:[#allocation3 + $0x68] sm:$0xff] %vm737, %v668
      %752 = vst.msk [vmem:[#allocation3 + $0x70] sm:$0xff] %vm737, %v670
      %753 = vst.msk [vmem:[#allocation3 + $0x78] sm:$0xff] %vm737, %v672
      %754 = vst.msk [vmem:[#allocation3 + $0x80] sm:$0xff] %vm737, %v674
      %755 = vst.msk [vmem:[#allocation3 + $0x88] sm:$0xff] %vm737, %v676
      %756 = vst.msk [vmem:[#allocation3 + $0x90] sm:$0xff] %vm737, %v678
      %757 = vst.msk [vmem:[#allocation3 + $0x98] sm:$0xff] %vm737, %v680
      %758 = vst.msk [vmem:[#allocation3 + $0xa0] sm:$0xff] %vm737, %v682
      %759 = vst.msk [vmem:[#allocation3 + $0xa8] sm:$0xff] %vm737, %v684
      %760 = vst.msk [vmem:[#allocation3 + $0xb0] sm:$0xff] %vm737, %v686
      %761 = vst.msk [vmem:[#allocation3 + $0xb8] sm:$0xff] %vm737, %v688
      %762 = vst.msk [vmem:[#allocation3 + $0xc0] sm:$0xff] %vm737, %v690
      %763 = vst.msk [vmem:[#allocation3 + $0xc8] sm:$0xff] %vm737, %v692
      %764 = vst.msk [vmem:[#allocation3 + $0xd0] sm:$0xff] %vm737, %v694
      %765 = vst.msk [vmem:[#allocation3 + $0xd8] sm:$0xff] %vm737, %v696
      %766 = vst.msk [vmem:[#allocation3 + $0xe0] sm:$0xff] %vm737, %v698
      %767 = vst.msk [vmem:[#allocation3 + $0xe8] sm:$0xff] %vm737, %v700
      %768 = vst.msk [vmem:[#allocation3 + $0xf0] sm:$0xff] %vm737, %v702
      %769 = vst.msk [vmem:[#allocation3 + $0xf8] sm:$0xff] %vm737, %v704
      %v770 = vld [vmem:[%s287] sm:$0xff]
      %v771 = vld [vmem:[%s287 + $0x8] sm:$0xff]
      %v772 = vld [vmem:[%s287 + $0x18] sm:$0xff]
      %v773 = vld [vmem:[%s287 + $0x20] sm:$0xff]
      %v774 = vld [vmem:[%s287 + $0x30] sm:$0xff]
      %v775 = vld [vmem:[%s287 + $0x38] sm:$0xff]
      %v776 = vld [vmem:[%s287 + $0x48] sm:$0xff]
      %v777 = vld [vmem:[%s287 + $0x50] sm:$0xff]
      %v778 = vld [vmem:[%s287 + $0x60] sm:$0xff]
      %v779 = vld [vmem:[%s287 + $0x68] sm:$0xff]
      %v780 = vld [vmem:[%s287 + $0x78] sm:$0xff]
      %v781 = vld [vmem:[%s287 + $0x80] sm:$0xff]
      %v782 = vld [vmem:[%s287 + $0x90] sm:$0xff]
      %v783 = vld [vmem:[%s287 + $0x98] sm:$0xff]
      %v784 = vld [vmem:[%s287 + $0xa8] sm:$0xff]
      %v785 = vld [vmem:[%s287 + $0xb0] sm:$0xff]
      %v786 = vld [vmem:[%s287 + $0xc0] sm:$0xff]
      %v787 = vld [vmem:[%s287 + $0xc8] sm:$0xff]
      %v788 = vld [vmem:[%s287 + $0xd8] sm:$0xff]
      %v789 = vld [vmem:[%s287 + $0xe0] sm:$0xff]
      %v790 = vld [vmem:[%s287 + $0xf0] sm:$0xff]
      %v791 = vld [vmem:[%s287 + $0xf8] sm:$0xff]
      %v792 = vld [vmem:[%s287 + $0x108] sm:$0xff]
      %v793 = vld [vmem:[%s287 + $0x110] sm:$0xff]
      %v794 = vld [vmem:[%s287 + $0x120] sm:$0xff]
      %v795 = vld [vmem:[%s287 + $0x128] sm:$0xff]
      %v796 = vld [vmem:[%s287 + $0x138] sm:$0xff]
      %v797 = vld [vmem:[%s287 + $0x140] sm:$0xff]
      %v798 = vld [vmem:[%s287 + $0x150] sm:$0xff]
      %v799 = vld [vmem:[%s287 + $0x158] sm:$0xff]
      %v800 = vld [vmem:[%s287 + $0x168] sm:$0xff]
      %v801 = vld [vmem:[%s287 + $0x170] sm:$0xff]
      %834 = vrot.lane.b32.xlu0 %v770, 12
      %v835 = vpop.permute.xlu0 %834
      %836 = vrot.lane.b32.xlu0 %v771, 12
      %v837 = vpop.permute.xlu0 %836
      %838 = vrot.lane.b32.xlu0 %v772, 12
      %v839 = vpop.permute.xlu0 %838
      %840 = vrot.lane.b32.xlu0 %v773, 12
      %v841 = vpop.permute.xlu0 %840
      %842 = vrot.lane.b32.xlu0 %v774, 12
      %v843 = vpop.permute.xlu0 %842
      %844 = vrot.lane.b32.xlu0 %v775, 12
      %v845 = vpop.permute.xlu0 %844
      %846 = vrot.lane.b32.xlu0 %v776, 12
      %v847 = vpop.permute.xlu0 %846
      %848 = vrot.lane.b32.xlu0 %v777, 12
      %v849 = vpop.permute.xlu0 %848
      %850 = vrot.lane.b32.xlu0 %v778, 12
      %v851 = vpop.permute.xlu0 %850
      %852 = vrot.lane.b32.xlu0 %v779, 12
      %v853 = vpop.permute.xlu0 %852
      %854 = vrot.lane.b32.xlu0 %v780, 12
      %v855 = vpop.permute.xlu0 %854
      %856 = vrot.lane.b32.xlu0 %v781, 12
      %v857 = vpop.permute.xlu0 %856
      %858 = vrot.lane.b32.xlu0 %v782, 12
      %v859 = vpop.permute.xlu0 %858
      %860 = vrot.lane.b32.xlu0 %v783, 12
      %v861 = vpop.permute.xlu0 %860
      %862 = vrot.lane.b32.xlu0 %v784, 12
      %v863 = vpop.permute.xlu0 %862
      %864 = vrot.lane.b32.xlu0 %v785, 12
      %v865 = vpop.permute.xlu0 %864
      %866 = vrot.lane.b32.xlu0 %v786, 12
      %v867 = vpop.permute.xlu0 %866
      %868 = vrot.lane.b32.xlu0 %v787, 12
      %v869 = vpop.permute.xlu0 %868
      %870 = vrot.lane.b32.xlu0 %v788, 12
      %v871 = vpop.permute.xlu0 %870
      %872 = vrot.lane.b32.xlu0 %v789, 12
      %v873 = vpop.permute.xlu0 %872
      %874 = vrot.lane.b32.xlu0 %v790, 12
      %v875 = vpop.permute.xlu0 %874
      %876 = vrot.lane.b32.xlu0 %v791, 12
      %v877 = vpop.permute.xlu0 %876
      %878 = vrot.lane.b32.xlu0 %v792, 12
      %v879 = vpop.permute.xlu0 %878
      %880 = vrot.lane.b32.xlu0 %v793, 12
      %v881 = vpop.permute.xlu0 %880
      %882 = vrot.lane.b32.xlu0 %v794, 12
      %v883 = vpop.permute.xlu0 %882
      %884 = vrot.lane.b32.xlu0 %v795, 12
      %v885 = vpop.permute.xlu0 %884
      %886 = vrot.lane.b32.xlu0 %v796, 12
      %v887 = vpop.permute.xlu0 %886
      %888 = vrot.lane.b32.xlu0 %v797, 12
      %v889 = vpop.permute.xlu0 %888
      %890 = vrot.lane.b32.xlu0 %v798, 12
      %v891 = vpop.permute.xlu0 %890
      %892 = vrot.lane.b32.xlu0 %v799, 12
      %v893 = vpop.permute.xlu0 %892
      %894 = vrot.lane.b32.xlu0 %v800, 12
      %v895 = vpop.permute.xlu0 %894
      %896 = vrot.lane.b32.xlu0 %v801, 12
      %v897 = vpop.permute.xlu0 %896
      %vm930 = vcmask 130144
      %931 = vst.msk [vmem:[#allocation3] sm:$0xff] %vm930, %v835
      %932 = vst.msk [vmem:[#allocation3 + $0x8] sm:$0xff] %vm930, %v837
      %933 = vst.msk [vmem:[#allocation3 + $0x10] sm:$0xff] %vm930, %v839
      %934 = vst.msk [vmem:[#allocation3 + $0x18] sm:$0xff] %vm930, %v841
      %935 = vst.msk [vmem:[#allocation3 + $0x20] sm:$0xff] %vm930, %v843
      %936 = vst.msk [vmem:[#allocation3 + $0x28] sm:$0xff] %vm930, %v845
      %937 = vst.msk [vmem:[#allocation3 + $0x30] sm:$0xff] %vm930, %v847
      %938 = vst.msk [vmem:[#allocation3 + $0x38] sm:$0xff] %vm930, %v849
      %939 = vst.msk [vmem:[#allocation3 + $0x40] sm:$0xff] %vm930, %v851
      %940 = vst.msk [vmem:[#allocation3 + $0x48] sm:$0xff] %vm930, %v853
      %941 = vst.msk [vmem:[#allocation3 + $0x50] sm:$0xff] %vm930, %v855
      %942 = vst.msk [vmem:[#allocation3 + $0x58] sm:$0xff] %vm930, %v857
      %943 = vst.msk [vmem:[#allocation3 + $0x60] sm:$0xff] %vm930, %v859
      %944 = vst.msk [vmem:[#allocation3 + $0x68] sm:$0xff] %vm930, %v861
      %945 = vst.msk [vmem:[#allocation3 + $0x70] sm:$0xff] %vm930, %v863
      %946 = vst.msk [vmem:[#allocation3 + $0x78] sm:$0xff] %vm930, %v865
      %947 = vst.msk [vmem:[#allocation3 + $0x80] sm:$0xff] %vm930, %v867
      %948 = vst.msk [vmem:[#allocation3 + $0x88] sm:$0xff] %vm930, %v869
      %949 = vst.msk [vmem:[#allocation3 + $0x90] sm:$0xff] %vm930, %v871
      %950 = vst.msk [vmem:[#allocation3 + $0x98] sm:$0xff] %vm930, %v873
      %951 = vst.msk [vmem:[#allocation3 + $0xa0] sm:$0xff] %vm930, %v875
      %952 = vst.msk [vmem:[#allocation3 + $0xa8] sm:$0xff] %vm930, %v877
      %953 = vst.msk [vmem:[#allocation3 + $0xb0] sm:$0xff] %vm930, %v879
      %954 = vst.msk [vmem:[#allocation3 + $0xb8] sm:$0xff] %vm930, %v881
      %955 = vst.msk [vmem:[#allocation3 + $0xc0] sm:$0xff] %vm930, %v883
      %956 = vst.msk [vmem:[#allocation3 + $0xc8] sm:$0xff] %vm930, %v885
      %957 = vst.msk [vmem:[#allocation3 + $0xd0] sm:$0xff] %vm930, %v887
      %958 = vst.msk [vmem:[#allocation3 + $0xd8] sm:$0xff] %vm930, %v889
      %959 = vst.msk [vmem:[#allocation3 + $0xe0] sm:$0xff] %vm930, %v891
      %960 = vst.msk [vmem:[#allocation3 + $0xe8] sm:$0xff] %vm930, %v893
      %961 = vst.msk [vmem:[#allocation3 + $0xf0] sm:$0xff] %vm930, %v895
      %962 = vst.msk [vmem:[#allocation3 + $0xf8] sm:$0xff] %vm930, %v897
      %v963 = vld [vmem:[%s287 + $0x1] sm:$0xff]
      %v964 = vld [vmem:[%s287 + $0x9] sm:$0xff]
      %v965 = vld [vmem:[%s287 + $0x19] sm:$0xff]
      %v966 = vld [vmem:[%s287 + $0x21] sm:$0xff]
      %v967 = vld [vmem:[%s287 + $0x31] sm:$0xff]
      %v968 = vld [vmem:[%s287 + $0x39] sm:$0xff]
      %v969 = vld [vmem:[%s287 + $0x49] sm:$0xff]
      %v970 = vld [vmem:[%s287 + $0x51] sm:$0xff]
      %v971 = vld [vmem:[%s287 + $0x61] sm:$0xff]
      %v972 = vld [vmem:[%s287 + $0x69] sm:$0xff]
      %v973 = vld [vmem:[%s287 + $0x79] sm:$0xff]
      %v974 = vld [vmem:[%s287 + $0x81] sm:$0xff]
      %v975 = vld [vmem:[%s287 + $0x91] sm:$0xff]
      %v976 = vld [vmem:[%s287 + $0x99] sm:$0xff]
      %v977 = vld [vmem:[%s287 + $0xa9] sm:$0xff]
      %v978 = vld [vmem:[%s287 + $0xb1] sm:$0xff]
      %v979 = vld [vmem:[%s287 + $0xc1] sm:$0xff]
      %v980 = vld [vmem:[%s287 + $0xc9] sm:$0xff]
      %v981 = vld [vmem:[%s287 + $0xd9] sm:$0xff]
      %v982 = vld [vmem:[%s287 + $0xe1] sm:$0xff]
      %v983 = vld [vmem:[%s287 + $0xf1] sm:$0xff]
      %v984 = vld [vmem:[%s287 + $0xf9] sm:$0xff]
      %v985 = vld [vmem:[%s287 + $0x109] sm:$0xff]
      %v986 = vld [vmem:[%s287 + $0x111] sm:$0xff]
      %v987 = vld [vmem:[%s287 + $0x121] sm:$0xff]
      %v988 = vld [vmem:[%s287 + $0x129] sm:$0xff]
      %v989 = vld [vmem:[%s287 + $0x139] sm:$0xff]
      %v990 = vld [vmem:[%s287 + $0x141] sm:$0xff]
      %v991 = vld [vmem:[%s287 + $0x151] sm:$0xff]
      %v992 = vld [vmem:[%s287 + $0x159] sm:$0xff]
      %v993 = vld [vmem:[%s287 + $0x169] sm:$0xff]
      %v994 = vld [vmem:[%s287 + $0x171] sm:$0xff]
      %1027 = vrot.lane.b32.xlu0 %v963, 16
      %v1028 = vpop.permute.xlu0 %1027
      %1029 = vrot.lane.b32.xlu0 %v964, 16
      %v1030 = vpop.permute.xlu0 %1029
      %1031 = vrot.lane.b32.xlu0 %v965, 16
      %v1032 = vpop.permute.xlu0 %1031
      %1033 = vrot.lane.b32.xlu0 %v966, 16
      %v1034 = vpop.permute.xlu0 %1033
      %1035 = vrot.lane.b32.xlu0 %v967, 16
      %v1036 = vpop.permute.xlu0 %1035
      %1037 = vrot.lane.b32.xlu0 %v968, 16
      %v1038 = vpop.permute.xlu0 %1037
      %1039 = vrot.lane.b32.xlu0 %v969, 16
      %v1040 = vpop.permute.xlu0 %1039
      %1041 = vrot.lane.b32.xlu0 %v970, 16
      %v1042 = vpop.permute.xlu0 %1041
      %1043 = vrot.lane.b32.xlu0 %v971, 16
      %v1044 = vpop.permute.xlu0 %1043
      %1045 = vrot.lane.b32.xlu0 %v972, 16
      %v1046 = vpop.permute.xlu0 %1045
      %1047 = vrot.lane.b32.xlu0 %v973, 16
      %v1048 = vpop.permute.xlu0 %1047
      %1049 = vrot.lane.b32.xlu0 %v974, 16
      %v1050 = vpop.permute.xlu0 %1049
      %1051 = vrot.lane.b32.xlu0 %v975, 16
      %v1052 = vpop.permute.xlu0 %1051
      %1053 = vrot.lane.b32.xlu0 %v976, 16
      %v1054 = vpop.permute.xlu0 %1053
      %1055 = vrot.lane.b32.xlu0 %v977, 16
      %v1056 = vpop.permute.xlu0 %1055
      %1057 = vrot.lane.b32.xlu0 %v978, 16
      %v1058 = vpop.permute.xlu0 %1057
      %1059 = vrot.lane.b32.xlu0 %v979, 16
      %v1060 = vpop.permute.xlu0 %1059
      %1061 = vrot.lane.b32.xlu0 %v980, 16
      %v1062 = vpop.permute.xlu0 %1061
      %1063 = vrot.lane.b32.xlu0 %v981, 16
      %v1064 = vpop.permute.xlu0 %1063
      %1065 = vrot.lane.b32.xlu0 %v982, 16
      %v1066 = vpop.permute.xlu0 %1065
      %1067 = vrot.lane.b32.xlu0 %v983, 16
      %v1068 = vpop.permute.xlu0 %1067
      %1069 = vrot.lane.b32.xlu0 %v984, 16
      %v1070 = vpop.permute.xlu0 %1069
      %1071 = vrot.lane.b32.xlu0 %v985, 16
      %v1072 = vpop.permute.xlu0 %1071
      %1073 = vrot.lane.b32.xlu0 %v986, 16
      %v1074 = vpop.permute.xlu0 %1073
      %1075 = vrot.lane.b32.xlu0 %v987, 16
      %v1076 = vpop.permute.xlu0 %1075
      %1077 = vrot.lane.b32.xlu0 %v988, 16
      %v1078 = vpop.permute.xlu0 %1077
      %1079 = vrot.lane.b32.xlu0 %v989, 16
      %v1080 = vpop.permute.xlu0 %1079
      %1081 = vrot.lane.b32.xlu0 %v990, 16
      %v1082 = vpop.permute.xlu0 %1081
      %1083 = vrot.lane.b32.xlu0 %v991, 16
      %v1084 = vpop.permute.xlu0 %1083
      %1085 = vrot.lane.b32.xlu0 %v992, 16
      %v1086 = vpop.permute.xlu0 %1085
      %1087 = vrot.lane.b32.xlu0 %v993, 16
      %v1088 = vpop.permute.xlu0 %1087
      %1089 = vrot.lane.b32.xlu0 %v994, 16
      %v1090 = vpop.permute.xlu0 %1089
      %vm1123 = vcmask 162944
      %1124 = vst.msk [vmem:[#allocation3] sm:$0xff] %vm1123, %v1028
      %1125 = vst.msk [vmem:[#allocation3 + $0x8] sm:$0xff] %vm1123, %v1030
      %1126 = vst.msk [vmem:[#allocation3 + $0x10] sm:$0xff] %vm1123, %v1032
      %1127 = vst.msk [vmem:[#allocation3 + $0x18] sm:$0xff] %vm1123, %v1034
      %1128 = vst.msk [vmem:[#allocation3 + $0x20] sm:$0xff] %vm1123, %v1036
      %1129 = vst.msk [vmem:[#allocation3 + $0x28] sm:$0xff] %vm1123, %v1038
      %1130 = vst.msk [vmem:[#allocation3 + $0x30] sm:$0xff] %vm1123, %v1040
      %1131 = vst.msk [vmem:[#allocation3 + $0x38] sm:$0xff] %vm1123, %v1042
      %1132 = vst.msk [vmem:[#allocation3 + $0x40] sm:$0xff] %vm1123, %v1044
      %1133 = vst.msk [vmem:[#allocation3 + $0x48] sm:$0xff] %vm1123, %v1046
      %1134 = vst.msk [vmem:[#allocation3 + $0x50] sm:$0xff] %vm1123, %v1048
      %1135 = vst.msk [vmem:[#allocation3 + $0x58] sm:$0xff] %vm1123, %v1050
      %1136 = vst.msk [vmem:[#allocation3 + $0x60] sm:$0xff] %vm1123, %v1052
      %1137 = vst.msk [vmem:[#allocation3 + $0x68] sm:$0xff] %vm1123, %v1054
      %1138 = vst.msk [vmem:[#allocation3 + $0x70] sm:$0xff] %vm1123, %v1056
      %1139 = vst.msk [vmem:[#allocation3 + $0x78] sm:$0xff] %vm1123, %v1058
      %1140 = vst.msk [vmem:[#allocation3 + $0x80] sm:$0xff] %vm1123, %v1060
      %1141 = vst.msk [vmem:[#allocation3 + $0x88] sm:$0xff] %vm1123, %v1062
      %1142 = vst.msk [vmem:[#allocation3 + $0x90] sm:$0xff] %vm1123, %v1064
      %1143 = vst.msk [vmem:[#allocation3 + $0x98] sm:$0xff] %vm1123, %v1066
      %1144 = vst.msk [vmem:[#allocation3 + $0xa0] sm:$0xff] %vm1123, %v1068
      %1145 = vst.msk [vmem:[#allocation3 + $0xa8] sm:$0xff] %vm1123, %v1070
      %1146 = vst.msk [vmem:[#allocation3 + $0xb0] sm:$0xff] %vm1123, %v1072
      %1147 = vst.msk [vmem:[#allocation3 + $0xb8] sm:$0xff] %vm1123, %v1074
      %1148 = vst.msk [vmem:[#allocation3 + $0xc0] sm:$0xff] %vm1123, %v1076
      %1149 = vst.msk [vmem:[#allocation3 + $0xc8] sm:$0xff] %vm1123, %v1078
      %1150 = vst.msk [vmem:[#allocation3 + $0xd0] sm:$0xff] %vm1123, %v1080
      %1151 = vst.msk [vmem:[#allocation3 + $0xd8] sm:$0xff] %vm1123, %v1082
      %1152 = vst.msk [vmem:[#allocation3 + $0xe0] sm:$0xff] %vm1123, %v1084
      %1153 = vst.msk [vmem:[#allocation3 + $0xe8] sm:$0xff] %vm1123, %v1086
      %1154 = vst.msk [vmem:[#allocation3 + $0xf0] sm:$0xff] %vm1123, %v1088
      %1155 = vst.msk [vmem:[#allocation3 + $0xf8] sm:$0xff] %vm1123, %v1090
      %v1156 = vld [vmem:[%s287 + $0x2] sm:$0xff]
      %v1157 = vld [vmem:[%s287 + $0xa] sm:$0xff]
      %v1158 = vld [vmem:[%s287 + $0x1a] sm:$0xff]
      %v1159 = vld [vmem:[%s287 + $0x22] sm:$0xff]
      %v1160 = vld [vmem:[%s287 + $0x32] sm:$0xff]
      %v1161 = vld [vmem:[%s287 + $0x3a] sm:$0xff]
      %v1162 = vld [vmem:[%s287 + $0x4a] sm:$0xff]
      %v1163 = vld [vmem:[%s287 + $0x52] sm:$0xff]
      %v1164 = vld [vmem:[%s287 + $0x62] sm:$0xff]
      %v1165 = vld [vmem:[%s287 + $0x6a] sm:$0xff]
      %v1166 = vld [vmem:[%s287 + $0x7a] sm:$0xff]
      %v1167 = vld [vmem:[%s287 + $0x82] sm:$0xff]
      %v1168 = vld [vmem:[%s287 + $0x92] sm:$0xff]
      %v1169 = vld [vmem:[%s287 + $0x9a] sm:$0xff]
      %v1170 = vld [vmem:[%s287 + $0xaa] sm:$0xff]
      %v1171 = vld [vmem:[%s287 + $0xb2] sm:$0xff]
      %v1172 = vld [vmem:[%s287 + $0xc2] sm:$0xff]
      %v1173 = vld [vmem:[%s287 + $0xca] sm:$0xff]
      %v1174 = vld [vmem:[%s287 + $0xda] sm:$0xff]
      %v1175 = vld [vmem:[%s287 + $0xe2] sm:$0xff]
      %v1176 = vld [vmem:[%s287 + $0xf2] sm:$0xff]
      %v1177 = vld [vmem:[%s287 + $0xfa] sm:$0xff]
      %v1178 = vld [vmem:[%s287 + $0x10a] sm:$0xff]
      %v1179 = vld [vmem:[%s287 + $0x112] sm:$0xff]
      %v1180 = vld [vmem:[%s287 + $0x122] sm:$0xff]
      %v1181 = vld [vmem:[%s287 + $0x12a] sm:$0xff]
      %v1182 = vld [vmem:[%s287 + $0x13a] sm:$0xff]
      %v1183 = vld [vmem:[%s287 + $0x142] sm:$0xff]
      %v1184 = vld [vmem:[%s287 + $0x152] sm:$0xff]
      %v1185 = vld [vmem:[%s287 + $0x15a] sm:$0xff]
      %v1186 = vld [vmem:[%s287 + $0x16a] sm:$0xff]
      %v1187 = vld [vmem:[%s287 + $0x172] sm:$0xff]
      %1220 = vrot.lane.b32.xlu0 %v1156, 20
      %v1221 = vpop.permute.xlu0 %1220
      %1222 = vrot.lane.b32.xlu0 %v1157, 20
      %v1223 = vpop.permute.xlu0 %1222
      %1224 = vrot.lane.b32.xlu0 %v1158, 20
      %v1225 = vpop.permute.xlu0 %1224
      %1226 = vrot.lane.b32.xlu0 %v1159, 20
      %v1227 = vpop.permute.xlu0 %1226
      %1228 = vrot.lane.b32.xlu0 %v1160, 20
      %v1229 = vpop.permute.xlu0 %1228
      %1230 = vrot.lane.b32.xlu0 %v1161, 20
      %v1231 = vpop.permute.xlu0 %1230
      %1232 = vrot.lane.b32.xlu0 %v1162, 20
      %v1233 = vpop.permute.xlu0 %1232
      %1234 = vrot.lane.b32.xlu0 %v1163, 20
      %v1235 = vpop.permute.xlu0 %1234
      %1236 = vrot.lane.b32.xlu0 %v1164, 20
      %v1237 = vpop.permute.xlu0 %1236
      %1238 = vrot.lane.b32.xlu0 %v1165, 20
      %v1239 = vpop.permute.xlu0 %1238
      %1240 = vrot.lane.b32.xlu0 %v1166, 20
      %v1241 = vpop.permute.xlu0 %1240
      %1242 = vrot.lane.b32.xlu0 %v1167, 20
      %v1243 = vpop.permute.xlu0 %1242
      %1244 = vrot.lane.b32.xlu0 %v1168, 20
      %v1245 = vpop.permute.xlu0 %1244
      %1246 = vrot.lane.b32.xlu0 %v1169, 20
      %v1247 = vpop.permute.xlu0 %1246
      %1248 = vrot.lane.b32.xlu0 %v1170, 20
      %v1249 = vpop.permute.xlu0 %1248
      %1250 = vrot.lane.b32.xlu0 %v1171, 20
      %v1251 = vpop.permute.xlu0 %1250
      %1252 = vrot.lane.b32.xlu0 %v1172, 20
      %v1253 = vpop.permute.xlu0 %1252
      %1254 = vrot.lane.b32.xlu0 %v1173, 20
      %v1255 = vpop.permute.xlu0 %1254
      %1256 = vrot.lane.b32.xlu0 %v1174, 20
      %v1257 = vpop.permute.xlu0 %1256
      %1258 = vrot.lane.b32.xlu0 %v1175, 20
      %v1259 = vpop.permute.xlu0 %1258
      %1260 = vrot.lane.b32.xlu0 %v1176, 20
      %v1261 = vpop.permute.xlu0 %1260
      %1262 = vrot.lane.b32.xlu0 %v1177, 20
      %v1263 = vpop.permute.xlu0 %1262
      %1264 = vrot.lane.b32.xlu0 %v1178, 20
      %v1265 = vpop.permute.xlu0 %1264
      %1266 = vrot.lane.b32.xlu0 %v1179, 20
      %v1267 = vpop.permute.xlu0 %1266
      %1268 = vrot.lane.b32.xlu0 %v1180, 20
      %v1269 = vpop.permute.xlu0 %1268
      %1270 = vrot.lane.b32.xlu0 %v1181, 20
      %v1271 = vpop.permute.xlu0 %1270
      %1272 = vrot.lane.b32.xlu0 %v1182, 20
      %v1273 = vpop.permute.xlu0 %1272
      %1274 = vrot.lane.b32.xlu0 %v1183, 20
      %v1275 = vpop.permute.xlu0 %1274
      %1276 = vrot.lane.b32.xlu0 %v1184, 20
      %v1277 = vpop.permute.xlu0 %1276
      %1278 = vrot.lane.b32.xlu0 %v1185, 20
      %v1279 = vpop.permute.xlu0 %1278
      %1280 = vrot.lane.b32.xlu0 %v1186, 20
      %v1281 = vpop.permute.xlu0 %1280
      %1282 = vrot.lane.b32.xlu0 %v1187, 20
      %v1283 = vpop.permute.xlu0 %1282
      %vm1316 = vcmask 195744
      %1317 = vst.msk [vmem:[#allocation3] sm:$0xff] %vm1316, %v1221
      %1318 = vst.msk [vmem:[#allocation3 + $0x8] sm:$0xff] %vm1316, %v1223
      %1319 = vst.msk [vmem:[#allocation3 + $0x10] sm:$0xff] %vm1316, %v1225
      %1320 = vst.msk [vmem:[#allocation3 + $0x18] sm:$0xff] %vm1316, %v1227
      %1321 = vst.msk [vmem:[#allocation3 + $0x20] sm:$0xff] %vm1316, %v1229
      %1322 = vst.msk [vmem:[#allocation3 + $0x28] sm:$0xff] %vm1316, %v1231
      %1323 = vst.msk [vmem:[#allocation3 + $0x30] sm:$0xff] %vm1316, %v1233
      %1324 = vst.msk [vmem:[#allocation3 + $0x38] sm:$0xff] %vm1316, %v1235
      %1325 = vst.msk [vmem:[#allocation3 + $0x40] sm:$0xff] %vm1316, %v1237
      %1326 = vst.msk [vmem:[#allocation3 + $0x48] sm:$0xff] %vm1316, %v1239
      %1327 = vst.msk [vmem:[#allocation3 + $0x50] sm:$0xff] %vm1316, %v1241
      %1328 = vst.msk [vmem:[#allocation3 + $0x58] sm:$0xff] %vm1316, %v1243
      %1329 = vst.msk [vmem:[#allocation3 + $0x60] sm:$0xff] %vm1316, %v1245
      %1330 = vst.msk [vmem:[#allocation3 + $0x68] sm:$0xff] %vm1316, %v1247
      %1331 = vst.msk [vmem:[#allocation3 + $0x70] sm:$0xff] %vm1316, %v1249
      %1332 = vst.msk [vmem:[#allocation3 + $0x78] sm:$0xff] %vm1316, %v1251
      %1333 = vst.msk [vmem:[#allocation3 + $0x80] sm:$0xff] %vm1316, %v1253
      %1334 = vst.msk [vmem:[#allocation3 + $0x88] sm:$0xff] %vm1316, %v1255
      %1335 = vst.msk [vmem:[#allocation3 + $0x90] sm:$0xff] %vm1316, %v1257
      %1336 = vst.msk [vmem:[#allocation3 + $0x98] sm:$0xff] %vm1316, %v1259
      %1337 = vst.msk [vmem:[#allocation3 + $0xa0] sm:$0xff] %vm1316, %v1261
      %1338 = vst.msk [vmem:[#allocation3 + $0xa8] sm:$0xff] %vm1316, %v1263
      %1339 = vst.msk [vmem:[#allocation3 + $0xb0] sm:$0xff] %vm1316, %v1265
      %1340 = vst.msk [vmem:[#allocation3 + $0xb8] sm:$0xff] %vm1316, %v1267
      %1341 = vst.msk [vmem:[#allocation3 + $0xc0] sm:$0xff] %vm1316, %v1269
      %1342 = vst.msk [vmem:[#allocation3 + $0xc8] sm:$0xff] %vm1316, %v1271
      %1343 = vst.msk [vmem:[#allocation3 + $0xd0] sm:$0xff] %vm1316, %v1273
      %1344 = vst.msk [vmem:[#allocation3 + $0xd8] sm:$0xff] %vm1316, %v1275
      %1345 = vst.msk [vmem:[#allocation3 + $0xe0] sm:$0xff] %vm1316, %v1277
      %1346 = vst.msk [vmem:[#allocation3 + $0xe8] sm:$0xff] %vm1316, %v1279
      %1347 = vst.msk [vmem:[#allocation3 + $0xf0] sm:$0xff] %vm1316, %v1281
      %1348 = vst.msk [vmem:[#allocation3 + $0xf8] sm:$0xff] %vm1316, %v1283
      %s1349 = scalar_lea.vmem [#allocation2], 48
      %v1350 = vld [vmem:[%s1349] sm:$0xff]
      %v1351 = vld [vmem:[%s1349 + $0x8] sm:$0xff]
      %v1352 = vld [vmem:[%s1349 + $0x18] sm:$0xff]
      %v1353 = vld [vmem:[%s1349 + $0x20] sm:$0xff]
      %v1354 = vld [vmem:[%s1349 + $0x30] sm:$0xff]
      %v1355 = vld [vmem:[%s1349 + $0x38] sm:$0xff]
      %v1356 = vld [vmem:[%s1349 + $0x48] sm:$0xff]
      %v1357 = vld [vmem:[%s1349 + $0x50] sm:$0xff]
      %v1358 = vld [vmem:[%s1349 + $0x60] sm:$0xff]
      %v1359 = vld [vmem:[%s1349 + $0x68] sm:$0xff]
      %v1360 = vld [vmem:[%s1349 + $0x78] sm:$0xff]
      %v1361 = vld [vmem:[%s1349 + $0x80] sm:$0xff]
      %v1362 = vld [vmem:[%s1349 + $0x90] sm:$0xff]
      %v1363 = vld [vmem:[%s1349 + $0x98] sm:$0xff]
      %v1364 = vld [vmem:[%s1349 + $0xa8] sm:$0xff]
      %v1365 = vld [vmem:[%s1349 + $0xb0] sm:$0xff]
      %v1366 = vld [vmem:[%s1349 + $0xc0] sm:$0xff]
      %v1367 = vld [vmem:[%s1349 + $0xc8] sm:$0xff]
      %v1368 = vld [vmem:[%s1349 + $0xd8] sm:$0xff]
      %v1369 = vld [vmem:[%s1349 + $0xe0] sm:$0xff]
      %v1370 = vld [vmem:[%s1349 + $0xf0] sm:$0xff]
      %v1371 = vld [vmem:[%s1349 + $0xf8] sm:$0xff]
      %v1372 = vld [vmem:[%s1349 + $0x108] sm:$0xff]
      %v1373 = vld [vmem:[%s1349 + $0x110] sm:$0xff]
      %v1374 = vld [vmem:[%s1349 + $0x120] sm:$0xff]
      %v1375 = vld [vmem:[%s1349 + $0x128] sm:$0xff]
      %v1376 = vld [vmem:[%s1349 + $0x138] sm:$0xff]
      %v1377 = vld [vmem:[%s1349 + $0x140] sm:$0xff]
      %v1378 = vld [vmem:[%s1349 + $0x150] sm:$0xff]
      %v1379 = vld [vmem:[%s1349 + $0x158] sm:$0xff]
      %v1380 = vld [vmem:[%s1349 + $0x168] sm:$0xff]
      %v1381 = vld [vmem:[%s1349 + $0x170] sm:$0xff]
      %1414 = vrot.lane.b32.xlu0 %v1350, 24
      %v1415 = vpop.permute.xlu0 %1414
      %1416 = vrot.lane.b32.xlu0 %v1351, 24
      %v1417 = vpop.permute.xlu0 %1416
      %1418 = vrot.lane.b32.xlu0 %v1352, 24
      %v1419 = vpop.permute.xlu0 %1418
      %1420 = vrot.lane.b32.xlu0 %v1353, 24
      %v1421 = vpop.permute.xlu0 %1420
      %1422 = vrot.lane.b32.xlu0 %v1354, 24
      %v1423 = vpop.permute.xlu0 %1422
      %1424 = vrot.lane.b32.xlu0 %v1355, 24
      %v1425 = vpop.permute.xlu0 %1424
      %1426 = vrot.lane.b32.xlu0 %v1356, 24
      %v1427 = vpop.permute.xlu0 %1426
      %1428 = vrot.lane.b32.xlu0 %v1357, 24
      %v1429 = vpop.permute.xlu0 %1428
      %1430 = vrot.lane.b32.xlu0 %v1358, 24
      %v1431 = vpop.permute.xlu0 %1430
      %1432 = vrot.lane.b32.xlu0 %v1359, 24
      %v1433 = vpop.permute.xlu0 %1432
      %1434 = vrot.lane.b32.xlu0 %v1360, 24
      %v1435 = vpop.permute.xlu0 %1434
      %1436 = vrot.lane.b32.xlu0 %v1361, 24
      %v1437 = vpop.permute.xlu0 %1436
      %1438 = vrot.lane.b32.xlu0 %v1362, 24
      %v1439 = vpop.permute.xlu0 %1438
      %1440 = vrot.lane.b32.xlu0 %v1363, 24
      %v1441 = vpop.permute.xlu0 %1440
      %1442 = vrot.lane.b32.xlu0 %v1364, 24
      %v1443 = vpop.permute.xlu0 %1442
      %1444 = vrot.lane.b32.xlu0 %v1365, 24
      %v1445 = vpop.permute.xlu0 %1444
      %1446 = vrot.lane.b32.xlu0 %v1366, 24
      %v1447 = vpop.permute.xlu0 %1446
      %1448 = vrot.lane.b32.xlu0 %v1367, 24
      %v1449 = vpop.permute.xlu0 %1448
      %1450 = vrot.lane.b32.xlu0 %v1368, 24
      %v1451 = vpop.permute.xlu0 %1450
      %1452 = vrot.lane.b32.xlu0 %v1369, 24
      %v1453 = vpop.permute.xlu0 %1452
      %1454 = vrot.lane.b32.xlu0 %v1370, 24
      %v1455 = vpop.permute.xlu0 %1454
      %1456 = vrot.lane.b32.xlu0 %v1371, 24
      %v1457 = vpop.permute.xlu0 %1456
      %1458 = vrot.lane.b32.xlu0 %v1372, 24
      %v1459 = vpop.permute.xlu0 %1458
      %1460 = vrot.lane.b32.xlu0 %v1373, 24
      %v1461 = vpop.permute.xlu0 %1460
      %1462 = vrot.lane.b32.xlu0 %v1374, 24
      %v1463 = vpop.permute.xlu0 %1462
      %1464 = vrot.lane.b32.xlu0 %v1375, 24
      %v1465 = vpop.permute.xlu0 %1464
      %1466 = vrot.lane.b32.xlu0 %v1376, 24
      %v1467 = vpop.permute.xlu0 %1466
      %1468 = vrot.lane.b32.xlu0 %v1377, 24
      %v1469 = vpop.permute.xlu0 %1468
      %1470 = vrot.lane.b32.xlu0 %v1378, 24
      %v1471 = vpop.permute.xlu0 %1470
      %1472 = vrot.lane.b32.xlu0 %v1379, 24
      %v1473 = vpop.permute.xlu0 %1472
      %1474 = vrot.lane.b32.xlu0 %v1380, 24
      %v1475 = vpop.permute.xlu0 %1474
      %1476 = vrot.lane.b32.xlu0 %v1381, 24
      %v1477 = vpop.permute.xlu0 %1476
      %vm1510 = vcmask 228544
      %1511 = vst.msk [vmem:[#allocation3] sm:$0xff] %vm1510, %v1415
      %1512 = vst.msk [vmem:[#allocation3 + $0x8] sm:$0xff] %vm1510, %v1417
      %1513 = vst.msk [vmem:[#allocation3 + $0x10] sm:$0xff] %vm1510, %v1419
      %1514 = vst.msk [vmem:[#allocation3 + $0x18] sm:$0xff] %vm1510, %v1421
      %1515 = vst.msk [vmem:[#allocation3 + $0x20] sm:$0xff] %vm1510, %v1423
      %1516 = vst.msk [vmem:[#allocation3 + $0x28] sm:$0xff] %vm1510, %v1425
      %1517 = vst.msk [vmem:[#allocation3 + $0x30] sm:$0xff] %vm1510, %v1427
      %1518 = vst.msk [vmem:[#allocation3 + $0x38] sm:$0xff] %vm1510, %v1429
      %1519 = vst.msk [vmem:[#allocation3 + $0x40] sm:$0xff] %vm1510, %v1431
      %1520 = vst.msk [vmem:[#allocation3 + $0x48] sm:$0xff] %vm1510, %v1433
      %1521 = vst.msk [vmem:[#allocation3 + $0x50] sm:$0xff] %vm1510, %v1435
      %1522 = vst.msk [vmem:[#allocation3 + $0x58] sm:$0xff] %vm1510, %v1437
      %1523 = vst.msk [vmem:[#allocation3 + $0x60] sm:$0xff] %vm1510, %v1439
      %1524 = vst.msk [vmem:[#allocation3 + $0x68] sm:$0xff] %vm1510, %v1441
      %1525 = vst.msk [vmem:[#allocation3 + $0x70] sm:$0xff] %vm1510, %v1443
      %1526 = vst.msk [vmem:[#allocation3 + $0x78] sm:$0xff] %vm1510, %v1445
      %1527 = vst.msk [vmem:[#allocation3 + $0x80] sm:$0xff] %vm1510, %v1447
      %1528 = vst.msk [vmem:[#allocation3 + $0x88] sm:$0xff] %vm1510, %v1449
      %1529 = vst.msk [vmem:[#allocation3 + $0x90] sm:$0xff] %vm1510, %v1451
      %1530 = vst.msk [vmem:[#allocation3 + $0x98] sm:$0xff] %vm1510, %v1453
      %1531 = vst.msk [vmem:[#allocation3 + $0xa0] sm:$0xff] %vm1510, %v1455
      %1532 = vst.msk [vmem:[#allocation3 + $0xa8] sm:$0xff] %vm1510, %v1457
      %1533 = vst.msk [vmem:[#allocation3 + $0xb0] sm:$0xff] %vm1510, %v1459
      %1534 = vst.msk [vmem:[#allocation3 + $0xb8] sm:$0xff] %vm1510, %v1461
      %1535 = vst.msk [vmem:[#allocation3 + $0xc0] sm:$0xff] %vm1510, %v1463
      %1536 = vst.msk [vmem:[#allocation3 + $0xc8] sm:$0xff] %vm1510, %v1465
      %1537 = vst.msk [vmem:[#allocation3 + $0xd0] sm:$0xff] %vm1510, %v1467
      %1538 = vst.msk [vmem:[#allocation3 + $0xd8] sm:$0xff] %vm1510, %v1469
      %1539 = vst.msk [vmem:[#allocation3 + $0xe0] sm:$0xff] %vm1510, %v1471
      %1540 = vst.msk [vmem:[#allocation3 + $0xe8] sm:$0xff] %vm1510, %v1473
      %1541 = vst.msk [vmem:[#allocation3 + $0xf0] sm:$0xff] %vm1510, %v1475
      %1542 = vst.msk [vmem:[#allocation3 + $0xf8] sm:$0xff] %vm1510, %v1477
      %v1543 = vld [vmem:[%s1349 + $0x1] sm:$0xff]
      %v1544 = vld [vmem:[%s1349 + $0x9] sm:$0xff]
      %v1545 = vld [vmem:[%s1349 + $0x19] sm:$0xff]
      %v1546 = vld [vmem:[%s1349 + $0x21] sm:$0xff]
      %v1547 = vld [vmem:[%s1349 + $0x31] sm:$0xff]
      %v1548 = vld [vmem:[%s1349 + $0x39] sm:$0xff]
      %v1549 = vld [vmem:[%s1349 + $0x49] sm:$0xff]
      %v1550 = vld [vmem:[%s1349 + $0x51] sm:$0xff]
      %v1551 = vld [vmem:[%s1349 + $0x61] sm:$0xff]
      %v1552 = vld [vmem:[%s1349 + $0x69] sm:$0xff]
      %v1553 = vld [vmem:[%s1349 + $0x79] sm:$0xff]
      %v1554 = vld [vmem:[%s1349 + $0x81] sm:$0xff]
      %v1555 = vld [vmem:[%s1349 + $0x91] sm:$0xff]
      %v1556 = vld [vmem:[%s1349 + $0x99] sm:$0xff]
      %v1557 = vld [vmem:[%s1349 + $0xa9] sm:$0xff]
      %v1558 = vld [vmem:[%s1349 + $0xb1] sm:$0xff]
      %v1559 = vld [vmem:[%s1349 + $0xc1] sm:$0xff]
      %v1560 = vld [vmem:[%s1349 + $0xc9] sm:$0xff]
      %v1561 = vld [vmem:[%s1349 + $0xd9] sm:$0xff]
      %v1562 = vld [vmem:[%s1349 + $0xe1] sm:$0xff]
      %v1563 = vld [vmem:[%s1349 + $0xf1] sm:$0xff]
      %v1564 = vld [vmem:[%s1349 + $0xf9] sm:$0xff]
      %v1565 = vld [vmem:[%s1349 + $0x109] sm:$0xff]
      %v1566 = vld [vmem:[%s1349 + $0x111] sm:$0xff]
      %v1567 = vld [vmem:[%s1349 + $0x121] sm:$0xff]
      %v1568 = vld [vmem:[%s1349 + $0x129] sm:$0xff]
      %v1569 = vld [vmem:[%s1349 + $0x139] sm:$0xff]
      %v1570 = vld [vmem:[%s1349 + $0x141] sm:$0xff]
      %v1571 = vld [vmem:[%s1349 + $0x151] sm:$0xff]
      %v1572 = vld [vmem:[%s1349 + $0x159] sm:$0xff]
      %v1573 = vld [vmem:[%s1349 + $0x169] sm:$0xff]
      %v1574 = vld [vmem:[%s1349 + $0x171] sm:$0xff]
      %1607 = vrot.lane.b32.xlu0 %v1543, 28
      %v1608 = vpop.permute.xlu0 %1607
      %1609 = vrot.lane.b32.xlu0 %v1544, 28
      %v1610 = vpop.permute.xlu0 %1609
      %1611 = vrot.lane.b32.xlu0 %v1545, 28
      %v1612 = vpop.permute.xlu0 %1611
      %1613 = vrot.lane.b32.xlu0 %v1546, 28
      %v1614 = vpop.permute.xlu0 %1613
      %1615 = vrot.lane.b32.xlu0 %v1547, 28
      %v1616 = vpop.permute.xlu0 %1615
      %1617 = vrot.lane.b32.xlu0 %v1548, 28
      %v1618 = vpop.permute.xlu0 %1617
      %1619 = vrot.lane.b32.xlu0 %v1549, 28
      %v1620 = vpop.permute.xlu0 %1619
      %1621 = vrot.lane.b32.xlu0 %v1550, 28
      %v1622 = vpop.permute.xlu0 %1621
      %1623 = vrot.lane.b32.xlu0 %v1551, 28
      %v1624 = vpop.permute.xlu0 %1623
      %1625 = vrot.lane.b32.xlu0 %v1552, 28
      %v1626 = vpop.permute.xlu0 %1625
      %1627 = vrot.lane.b32.xlu0 %v1553, 28
      %v1628 = vpop.permute.xlu0 %1627
      %1629 = vrot.lane.b32.xlu0 %v1554, 28
      %v1630 = vpop.permute.xlu0 %1629
      %1631 = vrot.lane.b32.xlu0 %v1555, 28
      %v1632 = vpop.permute.xlu0 %1631
      %1633 = vrot.lane.b32.xlu0 %v1556, 28
      %v1634 = vpop.permute.xlu0 %1633
      %1635 = vrot.lane.b32.xlu0 %v1557, 28
      %v1636 = vpop.permute.xlu0 %1635
      %1637 = vrot.lane.b32.xlu0 %v1558, 28
      %v1638 = vpop.permute.xlu0 %1637
      %1639 = vrot.lane.b32.xlu0 %v1559, 28
      %v1640 = vpop.permute.xlu0 %1639
      %1641 = vrot.lane.b32.xlu0 %v1560, 28
      %v1642 = vpop.permute.xlu0 %1641
      %1643 = vrot.lane.b32.xlu0 %v1561, 28
      %v1644 = vpop.permute.xlu0 %1643
      %1645 = vrot.lane.b32.xlu0 %v1562, 28
      %v1646 = vpop.permute.xlu0 %1645
      %1647 = vrot.lane.b32.xlu0 %v1563, 28
      %v1648 = vpop.permute.xlu0 %1647
      %1649 = vrot.lane.b32.xlu0 %v1564, 28
      %v1650 = vpop.permute.xlu0 %1649
      %1651 = vrot.lane.b32.xlu0 %v1565, 28
      %v1652 = vpop.permute.xlu0 %1651
      %1653 = vrot.lane.b32.xlu0 %v1566, 28
      %v1654 = vpop.permute.xlu0 %1653
      %1655 = vrot.lane.b32.xlu0 %v1567, 28
      %v1656 = vpop.permute.xlu0 %1655
      %1657 = vrot.lane.b32.xlu0 %v1568, 28
      %v1658 = vpop.permute.xlu0 %1657
      %1659 = vrot.lane.b32.xlu0 %v1569, 28
      %v1660 = vpop.permute.xlu0 %1659
      %1661 = vrot.lane.b32.xlu0 %v1570, 28
      %v1662 = vpop.permute.xlu0 %1661
      %1663 = vrot.lane.b32.xlu0 %v1571, 28
      %v1664 = vpop.permute.xlu0 %1663
      %1665 = vrot.lane.b32.xlu0 %v1572, 28
      %v1666 = vpop.permute.xlu0 %1665
      %1667 = vrot.lane.b32.xlu0 %v1573, 28
      %v1668 = vpop.permute.xlu0 %1667
      %1669 = vrot.lane.b32.xlu0 %v1574, 28
      %v1670 = vpop.permute.xlu0 %1669
      %vm1703 = vcmask 261344
      %1704 = vst.msk [vmem:[#allocation3] sm:$0xff] %vm1703, %v1608
      %1705 = vst.msk [vmem:[#allocation3 + $0x8] sm:$0xff] %vm1703, %v1610
      %1706 = vst.msk [vmem:[#allocation3 + $0x10] sm:$0xff] %vm1703, %v1612
      %1707 = vst.msk [vmem:[#allocation3 + $0x18] sm:$0xff] %vm1703, %v1614
      %1708 = vst.msk [vmem:[#allocation3 + $0x20] sm:$0xff] %vm1703, %v1616
      %1709 = vst.msk [vmem:[#allocation3 + $0x28] sm:$0xff] %vm1703, %v1618
      %1710 = vst.msk [vmem:[#allocation3 + $0x30] sm:$0xff] %vm1703, %v1620
      %1711 = vst.msk [vmem:[#allocation3 + $0x38] sm:$0xff] %vm1703, %v1622
      %1712 = vst.msk [vmem:[#allocation3 + $0x40] sm:$0xff] %vm1703, %v1624
      %1713 = vst.msk [vmem:[#allocation3 + $0x48] sm:$0xff] %vm1703, %v1626
      %1714 = vst.msk [vmem:[#allocation3 + $0x50] sm:$0xff] %vm1703, %v1628
      %1715 = vst.msk [vmem:[#allocation3 + $0x58] sm:$0xff] %vm1703, %v1630
      %1716 = vst.msk [vmem:[#allocation3 + $0x60] sm:$0xff] %vm1703, %v1632
      %1717 = vst.msk [vmem:[#allocation3 + $0x68] sm:$0xff] %vm1703, %v1634
      %1718 = vst.msk [vmem:[#allocation3 + $0x70] sm:$0xff] %vm1703, %v1636
      %1719 = vst.msk [vmem:[#allocation3 + $0x78] sm:$0xff] %vm1703, %v1638
      %1720 = vst.msk [vmem:[#allocation3 + $0x80] sm:$0xff] %vm1703, %v1640
      %1721 = vst.msk [vmem:[#allocation3 + $0x88] sm:$0xff] %vm1703, %v1642
      %1722 = vst.msk [vmem:[#allocation3 + $0x90] sm:$0xff] %vm1703, %v1644
      %1723 = vst.msk [vmem:[#allocation3 + $0x98] sm:$0xff] %vm1703, %v1646
      %1724 = vst.msk [vmem:[#allocation3 + $0xa0] sm:$0xff] %vm1703, %v1648
      %1725 = vst.msk [vmem:[#allocation3 + $0xa8] sm:$0xff] %vm1703, %v1650
      %1726 = vst.msk [vmem:[#allocation3 + $0xb0] sm:$0xff] %vm1703, %v1652
      %1727 = vst.msk [vmem:[#allocation3 + $0xb8] sm:$0xff] %vm1703, %v1654
      %1728 = vst.msk [vmem:[#allocation3 + $0xc0] sm:$0xff] %vm1703, %v1656
      %1729 = vst.msk [vmem:[#allocation3 + $0xc8] sm:$0xff] %vm1703, %v1658
      %1730 = vst.msk [vmem:[#allocation3 + $0xd0] sm:$0xff] %vm1703, %v1660
      %1731 = vst.msk [vmem:[#allocation3 + $0xd8] sm:$0xff] %vm1703, %v1662
      %1732 = vst.msk [vmem:[#allocation3 + $0xe0] sm:$0xff] %vm1703, %v1664
      %1733 = vst.msk [vmem:[#allocation3 + $0xe8] sm:$0xff] %vm1703, %v1666
      %1734 = vst.msk [vmem:[#allocation3 + $0xf0] sm:$0xff] %vm1703, %v1668
      %1735 = vst.msk [vmem:[#allocation3 + $0xf8] sm:$0xff] %vm1703, %v1670
      %v1736 = vld [vmem:[%s1349 + $0x2] sm:$0xff]
      %v1737 = vld [vmem:[%s1349 + $0xa] sm:$0xff]
      %v1738 = vld [vmem:[%s1349 + $0x1a] sm:$0xff]
      %v1739 = vld [vmem:[%s1349 + $0x22] sm:$0xff]
      %v1740 = vld [vmem:[%s1349 + $0x32] sm:$0xff]
      %v1741 = vld [vmem:[%s1349 + $0x3a] sm:$0xff]
      %v1742 = vld [vmem:[%s1349 + $0x4a] sm:$0xff]
      %v1743 = vld [vmem:[%s1349 + $0x52] sm:$0xff]
      %v1744 = vld [vmem:[%s1349 + $0x62] sm:$0xff]
      %v1745 = vld [vmem:[%s1349 + $0x6a] sm:$0xff]
      %v1746 = vld [vmem:[%s1349 + $0x7a] sm:$0xff]
      %v1747 = vld [vmem:[%s1349 + $0x82] sm:$0xff]
      %v1748 = vld [vmem:[%s1349 + $0x92] sm:$0xff]
      %v1749 = vld [vmem:[%s1349 + $0x9a] sm:$0xff]
      %v1750 = vld [vmem:[%s1349 + $0xaa] sm:$0xff]
      %v1751 = vld [vmem:[%s1349 + $0xb2] sm:$0xff]
      %v1752 = vld [vmem:[%s1349 + $0xc2] sm:$0xff]
      %v1753 = vld [vmem:[%s1349 + $0xca] sm:$0xff]
      %v1754 = vld [vmem:[%s1349 + $0xda] sm:$0xff]
      %v1755 = vld [vmem:[%s1349 + $0xe2] sm:$0xff]
      %v1756 = vld [vmem:[%s1349 + $0xf2] sm:$0xff]
      %v1757 = vld [vmem:[%s1349 + $0xfa] sm:$0xff]
      %v1758 = vld [vmem:[%s1349 + $0x10a] sm:$0xff]
      %v1759 = vld [vmem:[%s1349 + $0x112] sm:$0xff]
      %v1760 = vld [vmem:[%s1349 + $0x122] sm:$0xff]
      %v1761 = vld [vmem:[%s1349 + $0x12a] sm:$0xff]
      %v1762 = vld [vmem:[%s1349 + $0x13a] sm:$0xff]
      %v1763 = vld [vmem:[%s1349 + $0x142] sm:$0xff]
      %v1764 = vld [vmem:[%s1349 + $0x152] sm:$0xff]
      %v1765 = vld [vmem:[%s1349 + $0x15a] sm:$0xff]
      %v1766 = vld [vmem:[%s1349 + $0x16a] sm:$0xff]
      %v1767 = vld [vmem:[%s1349 + $0x172] sm:$0xff]
      %1800 = vrot.lane.b32.xlu0 %v1736, 32
      %v1801 = vpop.permute.xlu0 %1800
      %1802 = vrot.lane.b32.xlu0 %v1737, 32
      %v1803 = vpop.permute.xlu0 %1802
      %1804 = vrot.lane.b32.xlu0 %v1738, 32
      %v1805 = vpop.permute.xlu0 %1804
      %1806 = vrot.lane.b32.xlu0 %v1739, 32
      %v1807 = vpop.permute.xlu0 %1806
      %1808 = vrot.lane.b32.xlu0 %v1740, 32
      %v1809 = vpop.permute.xlu0 %1808
      %1810 = vrot.lane.b32.xlu0 %v1741, 32
      %v1811 = vpop.permute.xlu0 %1810
      %1812 = vrot.lane.b32.xlu0 %v1742, 32
      %v1813 = vpop.permute.xlu0 %1812
      %1814 = vrot.lane.b32.xlu0 %v1743, 32
      %v1815 = vpop.permute.xlu0 %1814
      %1816 = vrot.lane.b32.xlu0 %v1744, 32
      %v1817 = vpop.permute.xlu0 %1816
      %1818 = vrot.lane.b32.xlu0 %v1745, 32
      %v1819 = vpop.permute.xlu0 %1818
      %1820 = vrot.lane.b32.xlu0 %v1746, 32
      %v1821 = vpop.permute.xlu0 %1820
      %1822 = vrot.lane.b32.xlu0 %v1747, 32
      %v1823 = vpop.permute.xlu0 %1822
      %1824 = vrot.lane.b32.xlu0 %v1748, 32
      %v1825 = vpop.permute.xlu0 %1824
      %1826 = vrot.lane.b32.xlu0 %v1749, 32
      %v1827 = vpop.permute.xlu0 %1826
      %1828 = vrot.lane.b32.xlu0 %v1750, 32
      %v1829 = vpop.permute.xlu0 %1828
      %1830 = vrot.lane.b32.xlu0 %v1751, 32
      %v1831 = vpop.permute.xlu0 %1830
      %1832 = vrot.lane.b32.xlu0 %v1752, 32
      %v1833 = vpop.permute.xlu0 %1832
      %1834 = vrot.lane.b32.xlu0 %v1753, 32
      %v1835 = vpop.permute.xlu0 %1834
      %1836 = vrot.lane.b32.xlu0 %v1754, 32
      %v1837 = vpop.permute.xlu0 %1836
      %1838 = vrot.lane.b32.xlu0 %v1755, 32
      %v1839 = vpop.permute.xlu0 %1838
      %1840 = vrot.lane.b32.xlu0 %v1756, 32
      %v1841 = vpop.permute.xlu0 %1840
      %1842 = vrot.lane.b32.xlu0 %v1757, 32
      %v1843 = vpop.permute.xlu0 %1842
      %1844 = vrot.lane.b32.xlu0 %v1758, 32
      %v1845 = vpop.permute.xlu0 %1844
      %1846 = vrot.lane.b32.xlu0 %v1759, 32
      %v1847 = vpop.permute.xlu0 %1846
      %1848 = vrot.lane.b32.xlu0 %v1760, 32
      %v1849 = vpop.permute.xlu0 %1848
      %1850 = vrot.lane.b32.xlu0 %v1761, 32
      %v1851 = vpop.permute.xlu0 %1850
      %1852 = vrot.lane.b32.xlu0 %v1762, 32
      %v1853 = vpop.permute.xlu0 %1852
      %1854 = vrot.lane.b32.xlu0 %v1763, 32
      %v1855 = vpop.permute.xlu0 %1854
      %1856 = vrot.lane.b32.xlu0 %v1764, 32
      %v1857 = vpop.permute.xlu0 %1856
      %1858 = vrot.lane.b32.xlu0 %v1765, 32
      %v1859 = vpop.permute.xlu0 %1858
      %1860 = vrot.lane.b32.xlu0 %v1766, 32
      %v1861 = vpop.permute.xlu0 %1860
      %1862 = vrot.lane.b32.xlu0 %v1767, 32
      %v1863 = vpop.permute.xlu0 %1862
      %vm1896 = vcmask 294144
      %1897 = vst.msk [vmem:[#allocation3] sm:$0xff] %vm1896, %v1801
      %1898 = vst.msk [vmem:[#allocation3 + $0x8] sm:$0xff] %vm1896, %v1803
      %1899 = vst.msk [vmem:[#allocation3 + $0x10] sm:$0xff] %vm1896, %v1805
      %1900 = vst.msk [vmem:[#allocation3 + $0x18] sm:$0xff] %vm1896, %v1807
      %1901 = vst.msk [vmem:[#allocation3 + $0x20] sm:$0xff] %vm1896, %v1809
      %1902 = vst.msk [vmem:[#allocation3 + $0x28] sm:$0xff] %vm1896, %v1811
      %1903 = vst.msk [vmem:[#allocation3 + $0x30] sm:$0xff] %vm1896, %v1813
      %1904 = vst.msk [vmem:[#allocation3 + $0x38] sm:$0xff] %vm1896, %v1815
      %1905 = vst.msk [vmem:[#allocation3 + $0x40] sm:$0xff] %vm1896, %v1817
      %1906 = vst.msk [vmem:[#allocation3 + $0x48] sm:$0xff] %vm1896, %v1819
      %1907 = vst.msk [vmem:[#allocation3 + $0x50] sm:$0xff] %vm1896, %v1821
      %1908 = vst.msk [vmem:[#allocation3 + $0x58] sm:$0xff] %vm1896, %v1823
      %1909 = vst.msk [vmem:[#allocation3 + $0x60] sm:$0xff] %vm1896, %v1825
      %1910 = vst.msk [vmem:[#allocation3 + $0x68] sm:$0xff] %vm1896, %v1827
      %1911 = vst.msk [vmem:[#allocation3 + $0x70] sm:$0xff] %vm1896, %v1829
      %1912 = vst.msk [vmem:[#allocation3 + $0x78] sm:$0xff] %vm1896, %v1831
      %1913 = vst.msk [vmem:[#allocation3 + $0x80] sm:$0xff] %vm1896, %v1833
      %1914 = vst.msk [vmem:[#allocation3 + $0x88] sm:$0xff] %vm1896, %v1835
      %1915 = vst.msk [vmem:[#allocation3 + $0x90] sm:$0xff] %vm1896, %v1837
      %1916 = vst.msk [vmem:[#allocation3 + $0x98] sm:$0xff] %vm1896, %v1839
      %1917 = vst.msk [vmem:[#allocation3 + $0xa0] sm:$0xff] %vm1896, %v1841
      %1918 = vst.msk [vmem:[#allocation3 + $0xa8] sm:$0xff] %vm1896, %v1843
      %1919 = vst.msk [vmem:[#allocation3 + $0xb0] sm:$0xff] %vm1896, %v1845
      %1920 = vst.msk [vmem:[#allocation3 + $0xb8] sm:$0xff] %vm1896, %v1847
      %1921 = vst.msk [vmem:[#allocation3 + $0xc0] sm:$0xff] %vm1896, %v1849
      %1922 = vst.msk [vmem:[#allocation3 + $0xc8] sm:$0xff] %vm1896, %v1851
      %1923 = vst.msk [vmem:[#allocation3 + $0xd0] sm:$0xff] %vm1896, %v1853
      %1924 = vst.msk [vmem:[#allocation3 + $0xd8] sm:$0xff] %vm1896, %v1855
      %1925 = vst.msk [vmem:[#allocation3 + $0xe0] sm:$0xff] %vm1896, %v1857
      %1926 = vst.msk [vmem:[#allocation3 + $0xe8] sm:$0xff] %vm1896, %v1859
      %1927 = vst.msk [vmem:[#allocation3 + $0xf0] sm:$0xff] %vm1896, %v1861
      %1928 = vst.msk [vmem:[#allocation3 + $0xf8] sm:$0xff] %vm1896, %v1863
      %v1929 = vld [vmem:[#allocation3] sm:$0xff]
      %v1930 = vld [vmem:[#allocation3 + $0x8] sm:$0xff]
      %v1931 = vld [vmem:[#allocation3 + $0x10] sm:$0xff]
      %v1932 = vld [vmem:[#allocation3 + $0x18] sm:$0xff]
      %v1933 = vld [vmem:[#allocation3 + $0x20] sm:$0xff]
      %v1934 = vld [vmem:[#allocation3 + $0x28] sm:$0xff]
      %v1935 = vld [vmem:[#allocation3 + $0x30] sm:$0xff]
      %v1936 = vld [vmem:[#allocation3 + $0x38] sm:$0xff]
      %v1937 = vld [vmem:[#allocation3 + $0x40] sm:$0xff]
      %v1938 = vld [vmem:[#allocation3 + $0x48] sm:$0xff]
      %v1939 = vld [vmem:[#allocation3 + $0x50] sm:$0xff]
      %v1940 = vld [vmem:[#allocation3 + $0x58] sm:$0xff]
      %v1941 = vld [vmem:[#allocation3 + $0x60] sm:$0xff]
      %v1942 = vld [vmem:[#allocation3 + $0x68] sm:$0xff]
      %v1943 = vld [vmem:[#allocation3 + $0x70] sm:$0xff]
      %v1944 = vld [vmem:[#allocation3 + $0x78] sm:$0xff]
      %v1945 = vld [vmem:[#allocation3 + $0x80] sm:$0xff]
      %v1946 = vld [vmem:[#allocation3 + $0x88] sm:$0xff]
      %v1947 = vld [vmem:[#allocation3 + $0x90] sm:$0xff]
      %v1948 = vld [vmem:[#allocation3 + $0x98] sm:$0xff]
      %v1949 = vld [vmem:[#allocation3 + $0xa0] sm:$0xff]
      %v1950 = vld [vmem:[#allocation3 + $0xa8] sm:$0xff]
      %v1951 = vld [vmem:[#allocation3 + $0xb0] sm:$0xff]
      %v1952 = vld [vmem:[#allocation3 + $0xb8] sm:$0xff]
      %v1953 = vld [vmem:[#allocation3 + $0xc0] sm:$0xff]
      %v1954 = vld [vmem:[#allocation3 + $0xc8] sm:$0xff]
      %v1955 = vld [vmem:[#allocation3 + $0xd0] sm:$0xff]
      %v1956 = vld [vmem:[#allocation3 + $0xd8] sm:$0xff]
      %v1957 = vld [vmem:[#allocation3 + $0xe0] sm:$0xff]
      %v1958 = vld [vmem:[#allocation3 + $0xe8] sm:$0xff]
      %v1959 = vld [vmem:[#allocation3 + $0xf0] sm:$0xff]
      %v1960 = vld [vmem:[#allocation3 + $0xf8] sm:$0xff]
      %v1961 = vpack.c.bf16 %v1930, %v1929
      %v1962 = vpack.c.bf16 %v1932, %v1931
      %v1963 = vpack.c.bf16 %v1934, %v1933
      %v1964 = vpack.c.bf16 %v1936, %v1935
      %v1965 = vpack.c.bf16 %v1938, %v1937
      %v1966 = vpack.c.bf16 %v1940, %v1939
      %v1967 = vpack.c.bf16 %v1942, %v1941
      %v1968 = vpack.c.bf16 %v1944, %v1943
      %v1969 = vpack.c.bf16 %v1946, %v1945
      %v1970 = vpack.c.bf16 %v1948, %v1947
      %v1971 = vpack.c.bf16 %v1950, %v1949
      %v1972 = vpack.c.bf16 %v1952, %v1951
      %v1973 = vpack.c.bf16 %v1954, %v1953
      %v1974 = vpack.c.bf16 %v1956, %v1955
      %v1975 = vpack.c.bf16 %v1958, %v1957
      %v1976 = vpack.c.bf16 %v1960, %v1959
      %v1977 = vld [vmem:[%s1] sm:$0xff]
      %v1978 = vld [vmem:[%s1 + $0x8] sm:$0xff]
      %v1979 = vld [vmem:[%s1 + $0x10] sm:$0xff]
      %v1980 = vld [vmem:[%s1 + $0x18] sm:$0xff]
      %v1981 = vld [vmem:[%s1 + $0x20] sm:$0xf]
      %v1982 = vpack.c.bf16 %v1978, %v1977
      %v1983 = vpack.c.bf16 %v1980, %v1979
      %v1984 = vpack.c.bf16 %v1981, %v1981
      %vm1985 = vcmask 293888
      %v1987 = vsel %vm1985, %v1961, 0
      %v1990 = vsel %vm1985, %v1962, 0
      %v1993 = vsel %vm1985, %v1963, 0
      %v1996 = vsel %vm1985, %v1964, 0
      %v1999 = vsel %vm1985, %v1965, 0
      %v2002 = vsel %vm1985, %v1966, 0
      %v2005 = vsel %vm1985, %v1967, 0
      %v2008 = vsel %vm1985, %v1968, 0
      %v2011 = vsel %vm1985, %v1969, 0
      %v2014 = vsel %vm1985, %v1970, 0
      %v2017 = vsel %vm1985, %v1971, 0
      %v2020 = vsel %vm1985, %v1972, 0
      %v2023 = vsel %vm1985, %v1973, 0
      %v2026 = vsel %vm1985, %v1974, 0
      %v2029 = vsel %vm1985, %v1975, 0
      %v2032 = vsel %vm1985, %v1976, 0
      %vm2034 = vcmask 1041408
      %v2036 = vsel %vm2034, %v1984, 0
      %2038 = vmatprep.subr.bf16.mxu0 0
      %2039 = vmatpush1.bf16.msra.mxu0 %v1982
      %2040 = vmatprep.subr.bf16.mxu0 0
      %2041 = vmatpush1.bf16.msra.mxu0 %v1983
      %2042 = vmatprep.subr.bf16.mxu0 0
      %2043 = vmatpush1.bf16.msra.mxu0 %v2036
      %2044 = vmatprep.subr.bf16.mxu0 0
      %2045 = vmatpush1.bf16.msra.mxu0 0
      %2046 = vmatprep.subr.bf16.mxu0 0
      %2047 = vmatpush1.bf16.msra.mxu0 0
      %2048 = vmatprep.subr.bf16.mxu0 0
      %2049 = vmatpush1.bf16.msra.mxu0 0
      %2050 = vmatprep.subr.bf16.mxu0 0
      %2051 = vmatpush1.bf16.msra.mxu0 0
      %2052 = vmatprep.subr.bf16.mxu0 0
      %2053 = vmatpush1.bf16.msra.mxu0 0
      %2054 = vmatprep.subr.bf16.mxu0 0
      %2055 = vmatpush1.bf16.msra.mxu0 0
      %2056 = vmatprep.subr.bf16.mxu0 0
      %2057 = vmatpush1.bf16.msra.mxu0 0
      %2058 = vmatprep.subr.bf16.mxu0 0
      %2059 = vmatpush1.bf16.msra.mxu0 0
      %2060 = vmatprep.subr.bf16.mxu0 0
      %2061 = vmatpush1.bf16.msra.mxu0 0
      %2062 = vmatprep.subr.bf16.mxu0 0
      %2063 = vmatpush1.bf16.msra.mxu0 0
      %2064 = vmatprep.subr.bf16.mxu0 0
      %2065 = vmatpush1.bf16.msra.mxu0 0
      %2066 = vmatprep.subr.bf16.mxu0 0
      %2067 = vmatpush1.bf16.msra.mxu0 0
      %2068 = vmatprep.subr.bf16.mxu0 0
      %2069 = vmatpush1.bf16.msra.mxu0 0
      %2070 = vmatprep.mubr.bf16.mxu0 0
      %2071 = vmatmul.mubr.bf16.gmra.mrb[0].mxu0 %v1987
      %v2072 = vpop.f32.mrb[0].mxu0
      %v2073 = vadd.f32 0.0, %v2072
      %v2074 = vpop.f32.mrb[0].mxu0
      %v2075 = vpop.f32.mrb[0].mxu0
      %v2076 = vadd.f32 0.0, %v2075
      %v2077 = vpop.f32.mrb[0].mxu0
      %2078 = vmatprep.mubr.bf16.mxu0 0
      %2079 = vmatmul.mubr.bf16.gmra.mrb[0].mxu0 %v1990
      %v2080 = vpop.f32.mrb[0].mxu0
      %v2081 = vadd.f32 0.0, %v2080
      %v2082 = vpop.f32.mrb[0].mxu0
      %v2083 = vpop.f32.mrb[0].mxu0
      %v2084 = vadd.f32 0.0, %v2083
      %v2085 = vpop.f32.mrb[0].mxu0
      %2086 = vmatprep.mubr.bf16.mxu0 0
      %2087 = vmatmul.mubr.bf16.gmra.mrb[0].mxu0 %v1993
      %v2088 = vpop.f32.mrb[0].mxu0
      %v2089 = vadd.f32 0.0, %v2088
      %v2090 = vpop.f32.mrb[0].mxu0
      %v2091 = vpop.f32.mrb[0].mxu0
      %v2092 = vadd.f32 0.0, %v2091
      %v2093 = vpop.f32.mrb[0].mxu0
      %2094 = vmatprep.mubr.bf16.mxu0 0
      %2095 = vmatmul.mubr.bf16.gmra.mrb[0].mxu0 %v1996
      %v2096 = vpop.f32.mrb[0].mxu0
      %v2097 = vadd.f32 0.0, %v2096
      %v2098 = vpop.f32.mrb[0].mxu0
      %v2099 = vpop.f32.mrb[0].mxu0
      %v2100 = vadd.f32 0.0, %v2099
      %v2101 = vpop.f32.mrb[0].mxu0
      %2102 = vmatprep.mubr.bf16.mxu0 0
      %2103 = vmatmul.mubr.bf16.gmra.mrb[0].mxu0 %v1999
      %v2104 = vpop.f32.mrb[0].mxu0
      %v2105 = vadd.f32 0.0, %v2104
      %v2106 = vpop.f32.mrb[0].mxu0
      %v2107 = vpop.f32.mrb[0].mxu0
      %v2108 = vadd.f32 0.0, %v2107
      %v2109 = vpop.f32.mrb[0].mxu0
      %2110 = vmatprep.mubr.bf16.mxu0 0
      %2111 = vmatmul.mubr.bf16.gmra.mrb[0].mxu0 %v2002
      %v2112 = vpop.f32.mrb[0].mxu0
      %v2113 = vadd.f32 0.0, %v2112
      %v2114 = vpop.f32.mrb[0].mxu0
      %v2115 = vpop.f32.mrb[0].mxu0
      %v2116 = vadd.f32 0.0, %v2115
      %v2117 = vpop.f32.mrb[0].mxu0
      %2118 = vmatprep.mubr.bf16.mxu0 0
      %2119 = vmatmul.mubr.bf16.gmra.mrb[0].mxu0 %v2005
      %v2120 = vpop.f32.mrb[0].mxu0
      %v2121 = vadd.f32 0.0, %v2120
      %v2122 = vpop.f32.mrb[0].mxu0
      %v2123 = vpop.f32.mrb[0].mxu0
      %v2124 = vadd.f32 0.0, %v2123
      %v2125 = vpop.f32.mrb[0].mxu0
      %2126 = vmatprep.mubr.bf16.mxu0 0
      %2127 = vmatmul.mubr.bf16.gmra.mrb[0].mxu0 %v2008
      %v2128 = vpop.f32.mrb[0].mxu0
      %v2129 = vadd.f32 0.0, %v2128
      %v2130 = vpop.f32.mrb[0].mxu0
      %v2131 = vpop.f32.mrb[0].mxu0
      %v2132 = vadd.f32 0.0, %v2131
      %v2133 = vpop.f32.mrb[0].mxu0
      %2134 = vmatprep.mubr.bf16.mxu0 0
      %2135 = vmatmul.mubr.bf16.gmra.mrb[0].mxu0 %v2011
      %v2136 = vpop.f32.mrb[0].mxu0
      %v2137 = vadd.f32 0.0, %v2136
      %v2138 = vpop.f32.mrb[0].mxu0
      %v2139 = vpop.f32.mrb[0].mxu0
      %v2140 = vadd.f32 0.0, %v2139
      %v2141 = vpop.f32.mrb[0].mxu0
      %2142 = vmatprep.mubr.bf16.mxu0 0
      %2143 = vmatmul.mubr.bf16.gmra.mrb[0].mxu0 %v2014
      %v2144 = vpop.f32.mrb[0].mxu0
      %v2145 = vadd.f32 0.0, %v2144
      %v2146 = vpop.f32.mrb[0].mxu0
      %v2147 = vpop.f32.mrb[0].mxu0
      %v2148 = vadd.f32 0.0, %v2147
      %v2149 = vpop.f32.mrb[0].mxu0
      %2150 = vmatprep.mubr.bf16.mxu0 0
      %2151 = vmatmul.mubr.bf16.gmra.mrb[0].mxu0 %v2017
      %v2152 = vpop.f32.mrb[0].mxu0
      %v2153 = vadd.f32 0.0, %v2152
      %v2154 = vpop.f32.mrb[0].mxu0
      %v2155 = vpop.f32.mrb[0].mxu0
      %v2156 = vadd.f32 0.0, %v2155
      %v2157 = vpop.f32.mrb[0].mxu0
      %2158 = vmatprep.mubr.bf16.mxu0 0
      %2159 = vmatmul.mubr.bf16.gmra.mrb[0].mxu0 %v2020
      %v2160 = vpop.f32.mrb[0].mxu0
      %v2161 = vadd.f32 0.0, %v2160
      %v2162 = vpop.f32.mrb[0].mxu0
      %v2163 = vpop.f32.mrb[0].mxu0
      %v2164 = vadd.f32 0.0, %v2163
      %v2165 = vpop.f32.mrb[0].mxu0
      %2166 = vmatprep.mubr.bf16.mxu0 0
      %2167 = vmatmul.mubr.bf16.gmra.mrb[0].mxu0 %v2023
      %v2168 = vpop.f32.mrb[0].mxu0
      %v2169 = vadd.f32 0.0, %v2168
      %v2170 = vpop.f32.mrb[0].mxu0
      %v2171 = vpop.f32.mrb[0].mxu0
      %v2172 = vadd.f32 0.0, %v2171
      %v2173 = vpop.f32.mrb[0].mxu0
      %2174 = vmatprep.mubr.bf16.mxu0 0
      %2175 = vmatmul.mubr.bf16.gmra.mrb[0].mxu0 %v2026
      %v2176 = vpop.f32.mrb[0].mxu0
      %v2177 = vadd.f32 0.0, %v2176
      %v2178 = vpop.f32.mrb[0].mxu0
      %v2179 = vpop.f32.mrb[0].mxu0
      %v2180 = vadd.f32 0.0, %v2179
      %v2181 = vpop.f32.mrb[0].mxu0
      %2182 = vmatprep.mubr.bf16.mxu0 0
      %2183 = vmatmul.mubr.bf16.gmra.mrb[0].mxu0 %v2029
      %v2184 = vpop.f32.mrb[0].mxu0
      %v2185 = vadd.f32 0.0, %v2184
      %v2186 = vpop.f32.mrb[0].mxu0
      %v2187 = vpop.f32.mrb[0].mxu0
      %v2188 = vadd.f32 0.0, %v2187
      %v2189 = vpop.f32.mrb[0].mxu0
      %2190 = vmatprep.mubr.bf16.mxu0 0
      %2191 = vmatmul.mubr.bf16.gmra.mrb[0].mxu0 %v2032
      %v2192 = vpop.f32.mrb[0].mxu0
      %v2193 = vadd.f32 0.0, %v2192
      %v2194 = vpop.f32.mrb[0].mxu0
      %v2195 = vpop.f32.mrb[0].mxu0
      %v2196 = vadd.f32 0.0, %v2195
      %v2197 = vpop.f32.mrb[0].mxu0
      %2198 = vdwg.mxu0
      %v2199 = vld [vmem:[%s2] sm:$0x1]
      %v2201 = vlaneseq
      %v2202 = vshrl.u32 %v2201, 7
      %v2203 = vsub.s32 0, %v2202
      %v2204 = vrot.slane %v2199, %v2203
      %v2206 = vmul.f32 %v2073, %v2204
      %v2207 = vmul.f32 %v2076, %v2204
      %v2208 = vmul.f32 %v2081, %v2204
      %v2209 = vmul.f32 %v2084, %v2204
      %v2210 = vmul.f32 %v2089, %v2204
      %v2211 = vmul.f32 %v2092, %v2204
      %v2212 = vmul.f32 %v2097, %v2204
      %v2213 = vmul.f32 %v2100, %v2204
      %v2214 = vmul.f32 %v2105, %v2204
      %v2215 = vmul.f32 %v2108, %v2204
      %v2216 = vmul.f32 %v2113, %v2204
      %v2217 = vmul.f32 %v2116, %v2204
      %v2218 = vmul.f32 %v2121, %v2204
      %v2219 = vmul.f32 %v2124, %v2204
      %v2220 = vmul.f32 %v2129, %v2204
      %v2221 = vmul.f32 %v2132, %v2204
      %v2222 = vmul.f32 %v2137, %v2204
      %v2223 = vmul.f32 %v2140, %v2204
      %v2224 = vmul.f32 %v2145, %v2204
      %v2225 = vmul.f32 %v2148, %v2204
      %v2226 = vmul.f32 %v2153, %v2204
      %v2227 = vmul.f32 %v2156, %v2204
      %v2228 = vmul.f32 %v2161, %v2204
      %v2229 = vmul.f32 %v2164, %v2204
      %v2230 = vmul.f32 %v2169, %v2204
      %v2231 = vmul.f32 %v2172, %v2204
      %v2232 = vmul.f32 %v2177, %v2204
      %v2233 = vmul.f32 %v2180, %v2204
      %v2234 = vmul.f32 %v2185, %v2204
      %v2235 = vmul.f32 %v2188, %v2204
      %v2236 = vmul.f32 %v2193, %v2204
      %v2237 = vmul.f32 %v2196, %v2204
      %v2238 = vld [vmem:[%s3] sm:$0x1]
      %v2240 = vlaneseq
      %v2241 = vshrl.u32 %v2240, 7
      %v2242 = vsub.s32 0, %v2241
      %v2243 = vrot.slane %v2238, %v2242
      %v2245 = vadd.f32 %v2206, %v2243
      %v2246 = vadd.f32 %v2207, %v2243
      %v2247 = vadd.f32 %v2208, %v2243
      %v2248 = vadd.f32 %v2209, %v2243
      %v2249 = vadd.f32 %v2210, %v2243
      %v2250 = vadd.f32 %v2211, %v2243
      %v2251 = vadd.f32 %v2212, %v2243
      %v2252 = vadd.f32 %v2213, %v2243
      %v2253 = vadd.f32 %v2214, %v2243
      %v2254 = vadd.f32 %v2215, %v2243
      %v2255 = vadd.f32 %v2216, %v2243
      %v2256 = vadd.f32 %v2217, %v2243
      %v2257 = vadd.f32 %v2218, %v2243
      %v2258 = vadd.f32 %v2219, %v2243
      %v2259 = vadd.f32 %v2220, %v2243
      %v2260 = vadd.f32 %v2221, %v2243
      %v2261 = vadd.f32 %v2222, %v2243
      %v2262 = vadd.f32 %v2223, %v2243
      %v2263 = vadd.f32 %v2224, %v2243
      %v2264 = vadd.f32 %v2225, %v2243
      %v2265 = vadd.f32 %v2226, %v2243
      %v2266 = vadd.f32 %v2227, %v2243
      %v2267 = vadd.f32 %v2228, %v2243
      %v2268 = vadd.f32 %v2229, %v2243
      %v2269 = vadd.f32 %v2230, %v2243
      %v2270 = vadd.f32 %v2231, %v2243
      %v2271 = vadd.f32 %v2232, %v2243
      %v2272 = vadd.f32 %v2233, %v2243
      %v2273 = vadd.f32 %v2234, %v2243
      %v2274 = vadd.f32 %v2235, %v2243
      %v2275 = vadd.f32 %v2236, %v2243
      %v2276 = vadd.f32 %v2237, %v2243
      %v2277 = vsub.f32 0.0, %v2245
      %v2278 = vsub.f32 0.0, %v2246
      %v2279 = vsub.f32 0.0, %v2247
      %v2280 = vsub.f32 0.0, %v2248
      %v2281 = vsub.f32 0.0, %v2249
      %v2282 = vsub.f32 0.0, %v2250
      %v2283 = vsub.f32 0.0, %v2251
      %v2284 = vsub.f32 0.0, %v2252
      %v2285 = vsub.f32 0.0, %v2253
      %v2286 = vsub.f32 0.0, %v2254
      %v2287 = vsub.f32 0.0, %v2255
      %v2288 = vsub.f32 0.0, %v2256
      %v2289 = vsub.f32 0.0, %v2257
      %v2290 = vsub.f32 0.0, %v2258
      %v2291 = vsub.f32 0.0, %v2259
      %v2292 = vsub.f32 0.0, %v2260
      %v2293 = vsub.f32 0.0, %v2261
      %v2294 = vsub.f32 0.0, %v2262
      %v2295 = vsub.f32 0.0, %v2263
      %v2296 = vsub.f32 0.0, %v2264
      %v2297 = vsub.f32 0.0, %v2265
      %v2298 = vsub.f32 0.0, %v2266
      %v2299 = vsub.f32 0.0, %v2267
      %v2300 = vsub.f32 0.0, %v2268
      %v2301 = vsub.f32 0.0, %v2269
      %v2302 = vsub.f32 0.0, %v2270
      %v2303 = vsub.f32 0.0, %v2271
      %v2304 = vsub.f32 0.0, %v2272
      %v2305 = vsub.f32 0.0, %v2273
      %v2306 = vsub.f32 0.0, %v2274
      %v2307 = vsub.f32 0.0, %v2275
      %v2308 = vsub.f32 0.0, %v2276
      %v2309 = vmul.f32 %v2277, 1.442695
      %v2310 = vpow.pop %v2309
      %v2311 = vmul.f32 %v2278, 1.442695
      %v2312 = vpow.pop %v2311
      %v2313 = vmul.f32 %v2279, 1.442695
      %v2314 = vpow.pop %v2313
      %v2315 = vmul.f32 %v2280, 1.442695
      %v2316 = vpow.pop %v2315
      %v2317 = vmul.f32 %v2281, 1.442695
      %v2318 = vpow.pop %v2317
      %v2319 = vmul.f32 %v2282, 1.442695
      %v2320 = vpow.pop %v2319
      %v2321 = vmul.f32 %v2283, 1.442695
      %v2322 = vpow.pop %v2321
      %v2323 = vmul.f32 %v2284, 1.442695
      %v2324 = vpow.pop %v2323
      %v2325 = vmul.f32 %v2285, 1.442695
      %v2326 = vpow.pop %v2325
      %v2327 = vmul.f32 %v2286, 1.442695
      %v2328 = vpow.pop %v2327
      %v2329 = vmul.f32 %v2287, 1.442695
      %v2330 = vpow.pop %v2329
      %v2331 = vmul.f32 %v2288, 1.442695
      %v2332 = vpow.pop %v2331
      %v2333 = vmul.f32 %v2289, 1.442695
      %v2334 = vpow.pop %v2333
      %v2335 = vmul.f32 %v2290, 1.442695
      %v2336 = vpow.pop %v2335
      %v2337 = vmul.f32 %v2291, 1.442695
      %v2338 = vpow.pop %v2337
      %v2339 = vmul.f32 %v2292, 1.442695
      %v2340 = vpow.pop %v2339
      %v2341 = vmul.f32 %v2293, 1.442695
      %v2342 = vpow.pop %v2341
      %v2343 = vmul.f32 %v2294, 1.442695
      %v2344 = vpow.pop %v2343
      %v2345 = vmul.f32 %v2295, 1.442695
      %v2346 = vpow.pop %v2345
      %v2347 = vmul.f32 %v2296, 1.442695
      %v2348 = vpow.pop %v2347
      %v2349 = vmul.f32 %v2297, 1.442695
      %v2350 = vpow.pop %v2349
      %v2351 = vmul.f32 %v2298, 1.442695
      %v2352 = vpow.pop %v2351
      %v2353 = vmul.f32 %v2299, 1.442695
      %v2354 = vpow.pop %v2353
      %v2355 = vmul.f32 %v2300, 1.442695
      %v2356 = vpow.pop %v2355
      %v2357 = vmul.f32 %v2301, 1.442695
      %v2358 = vpow.pop %v2357
      %v2359 = vmul.f32 %v2302, 1.442695
      %v2360 = vpow.pop %v2359
      %v2361 = vmul.f32 %v2303, 1.442695
      %v2362 = vpow.pop %v2361
      %v2363 = vmul.f32 %v2304, 1.442695
      %v2364 = vpow.pop %v2363
      %v2365 = vmul.f32 %v2305, 1.442695
      %v2366 = vpow.pop %v2365
      %v2367 = vmul.f32 %v2306, 1.442695
      %v2368 = vpow.pop %v2367
      %v2369 = vmul.f32 %v2307, 1.442695
      %v2370 = vpow.pop %v2369
      %v2371 = vmul.f32 %v2308, 1.442695
      %v2372 = vpow.pop %v2371
      %v2373 = vadd.f32 %v2310, 1.0
      %v2374 = vadd.f32 %v2312, 1.0
      %v2375 = vadd.f32 %v2314, 1.0
      %v2376 = vadd.f32 %v2316, 1.0
      %v2377 = vadd.f32 %v2318, 1.0
      %v2378 = vadd.f32 %v2320, 1.0
      %v2379 = vadd.f32 %v2322, 1.0
      %v2380 = vadd.f32 %v2324, 1.0
      %v2381 = vadd.f32 %v2326, 1.0
      %v2382 = vadd.f32 %v2328, 1.0
      %v2383 = vadd.f32 %v2330, 1.0
      %v2384 = vadd.f32 %v2332, 1.0
      %v2385 = vadd.f32 %v2334, 1.0
      %v2386 = vadd.f32 %v2336, 1.0
      %v2387 = vadd.f32 %v2338, 1.0
      %v2388 = vadd.f32 %v2340, 1.0
      %v2389 = vadd.f32 %v2342, 1.0
      %v2390 = vadd.f32 %v2344, 1.0
      %v2391 = vadd.f32 %v2346, 1.0
      %v2392 = vadd.f32 %v2348, 1.0
      %v2393 = vadd.f32 %v2350, 1.0
      %v2394 = vadd.f32 %v2352, 1.0
      %v2395 = vadd.f32 %v2354, 1.0
      %v2396 = vadd.f32 %v2356, 1.0
      %v2397 = vadd.f32 %v2358, 1.0
      %v2398 = vadd.f32 %v2360, 1.0
      %v2399 = vadd.f32 %v2362, 1.0
      %v2400 = vadd.f32 %v2364, 1.0
      %v2401 = vadd.f32 %v2366, 1.0
      %v2402 = vadd.f32 %v2368, 1.0
      %v2403 = vadd.f32 %v2370, 1.0
      %v2404 = vadd.f32 %v2372, 1.0
      %v2405 = vrcp.pop %v2373
      %v2406 = vrcp.pop %v2374
      %v2407 = vrcp.pop %v2375
      %v2408 = vrcp.pop %v2376
      %v2409 = vrcp.pop %v2377
      %v2410 = vrcp.pop %v2378
      %v2411 = vrcp.pop %v2379
      %v2412 = vrcp.pop %v2380
      %v2413 = vrcp.pop %v2381
      %v2414 = vrcp.pop %v2382
      %v2415 = vrcp.pop %v2383
      %v2416 = vrcp.pop %v2384
      %v2417 = vrcp.pop %v2385
      %v2418 = vrcp.pop %v2386
      %v2419 = vrcp.pop %v2387
      %v2420 = vrcp.pop %v2388
      %v2421 = vrcp.pop %v2389
      %v2422 = vrcp.pop %v2390
      %v2423 = vrcp.pop %v2391
      %v2424 = vrcp.pop %v2392
      %v2425 = vrcp.pop %v2393
      %v2426 = vrcp.pop %v2394
      %v2427 = vrcp.pop %v2395
      %v2428 = vrcp.pop %v2396
      %v2429 = vrcp.pop %v2397
      %v2430 = vrcp.pop %v2398
      %v2431 = vrcp.pop %v2399
      %v2432 = vrcp.pop %v2400
      %v2433 = vrcp.pop %v2401
      %v2434 = vrcp.pop %v2402
      %v2435 = vrcp.pop %v2403
      %v2436 = vrcp.pop %v2404
      %v2437 = vmul.f32 %v2245, %v2405
      %v2438 = vmul.f32 %v2246, %v2406
      %v2439 = vmul.f32 %v2247, %v2407
      %v2440 = vmul.f32 %v2248, %v2408
      %v2441 = vmul.f32 %v2249, %v2409
      %v2442 = vmul.f32 %v2250, %v2410
      %v2443 = vmul.f32 %v2251, %v2411
      %v2444 = vmul.f32 %v2252, %v2412
      %v2445 = vmul.f32 %v2253, %v2413
      %v2446 = vmul.f32 %v2254, %v2414
      %v2447 = vmul.f32 %v2255, %v2415
      %v2448 = vmul.f32 %v2256, %v2416
      %v2449 = vmul.f32 %v2257, %v2417
      %v2450 = vmul.f32 %v2258, %v2418
      %v2451 = vmul.f32 %v2259, %v2419
      %v2452 = vmul.f32 %v2260, %v2420
      %v2453 = vmul.f32 %v2261, %v2421
      %v2454 = vmul.f32 %v2262, %v2422
      %v2455 = vmul.f32 %v2263, %v2423
      %v2456 = vmul.f32 %v2264, %v2424
      %v2457 = vmul.f32 %v2265, %v2425
      %v2458 = vmul.f32 %v2266, %v2426
      %v2459 = vmul.f32 %v2267, %v2427
      %v2460 = vmul.f32 %v2268, %v2428
      %v2461 = vmul.f32 %v2269, %v2429
      %v2462 = vmul.f32 %v2270, %v2430
      %v2463 = vmul.f32 %v2271, %v2431
      %v2464 = vmul.f32 %v2272, %v2432
      %v2465 = vmul.f32 %v2273, %v2433
      %v2466 = vmul.f32 %v2274, %v2434
      %v2467 = vmul.f32 %v2275, %v2435
      %v2468 = vmul.f32 %v2276, %v2436
      %2469 = vst.msk [vmem:[%s197] sm:$0xff] %vm199, %v2437
      %2470 = vst.msk [vmem:[%s197 + $0x8] sm:$0xff] %vm199, %v2438
      %2471 = vst.msk [vmem:[%s197 + $0x10] sm:$0xff] %vm199, %v2439
      %2472 = vst.msk [vmem:[%s197 + $0x18] sm:$0xff] %vm199, %v2440
      %2473 = vst.msk [vmem:[%s197 + $0x20] sm:$0xff] %vm199, %v2441
      %2474 = vst.msk [vmem:[%s197 + $0x28] sm:$0xff] %vm199, %v2442
      %2475 = vst.msk [vmem:[%s197 + $0x30] sm:$0xff] %vm199, %v2443
      %2476 = vst.msk [vmem:[%s197 + $0x38] sm:$0xff] %vm199, %v2444
      %2477 = vst.msk [vmem:[%s197 + $0x40] sm:$0xff] %vm199, %v2445
      %2478 = vst.msk [vmem:[%s197 + $0x48] sm:$0xff] %vm199, %v2446
      %2479 = vst.msk [vmem:[%s197 + $0x50] sm:$0xff] %vm199, %v2447
      %2480 = vst.msk [vmem:[%s197 + $0x58] sm:$0xff] %vm199, %v2448
      %2481 = vst.msk [vmem:[%s197 + $0x60] sm:$0xff] %vm199, %v2449
      %2482 = vst.msk [vmem:[%s197 + $0x68] sm:$0xff] %vm199, %v2450
      %2483 = vst.msk [vmem:[%s197 + $0x70] sm:$0xff] %vm199, %v2451
      %2484 = vst.msk [vmem:[%s197 + $0x78] sm:$0xff] %vm199, %v2452
      %2485 = vst.msk [vmem:[%s197 + $0x80] sm:$0xff] %vm199, %v2453
      %2486 = vst.msk [vmem:[%s197 + $0x88] sm:$0xff] %vm199, %v2454
      %2487 = vst.msk [vmem:[%s197 + $0x90] sm:$0xff] %vm199, %v2455
      %2488 = vst.msk [vmem:[%s197 + $0x98] sm:$0xff] %vm199, %v2456
      %2489 = vst.msk [vmem:[%s197 + $0xa0] sm:$0xff] %vm199, %v2457
      %2490 = vst.msk [vmem:[%s197 + $0xa8] sm:$0xff] %vm199, %v2458
      %2491 = vst.msk [vmem:[%s197 + $0xb0] sm:$0xff] %vm199, %v2459
      %2492 = vst.msk [vmem:[%s197 + $0xb8] sm:$0xff] %vm199, %v2460
      %2493 = vst.msk [vmem:[%s197 + $0xc0] sm:$0xff] %vm199, %v2461
      %2494 = vst.msk [vmem:[%s197 + $0xc8] sm:$0xff] %vm199, %v2462
      %2495 = vst.msk [vmem:[%s197 + $0xd0] sm:$0xff] %vm199, %v2463
      %2496 = vst.msk [vmem:[%s197 + $0xd8] sm:$0xff] %vm199, %v2464
      %2497 = vst.msk [vmem:[%s197 + $0xe0] sm:$0xff] %vm199, %v2465
      %2498 = vst.msk [vmem:[%s197 + $0xe8] sm:$0xff] %vm199, %v2466
      %2499 = vst.msk [vmem:[%s197 + $0xf0] sm:$0xff] %vm199, %v2467
      %2500 = vst.msk [vmem:[%s197 + $0xf8] sm:$0xff] %vm199, %v2468
      %p2501 = scmp.lt.s32.totalorder %s15, 1
      %s2502 = scalar_select %p2501, %s15, 1
      %s2503 = smul.addr %s2502, 32
      %s2504 = smul.addr %s2503, 8
      %s2505 = scalar_lea.vmem %s4, %s2504
      // Predicated region
      $region37: #{_lambda_.6} parent=35 // pred_check
        %p2506 = pneg %p122
      $region38: #{_lambda_.6} parent=35 // pred_check_branch
        %2508 = sbr.rel (%p2506) target = $region40
      $region39: #{_lambda_.6} parent=35 // pred_region
        _
      $region40: #{_lambda_.6} parent=35 // pred_fallthru
        _
    $region36: #{_lambda_.6} parent=5 // pred_fallthru
      _
    %p2509 = scmp.le.s32.totalorder 2, %s10
    // Predicated region
    $region41: #{_lambda_.6} parent=5 // pred_check
      %p2510 = pneg %p2509
    $region42: #{_lambda_.6} parent=5 // pred_check_branch
      %2512 = sbr.rel (%p2510) target = $region44
    $region43: #{_lambda_.6} parent=5 // pred_region
      %s2513 = ssub.s32 %s10, 2
      // Predicated region
      $region45: #{_lambda_.6} parent=43 // pred_check
        %p2514 = pneg %p128
      $region46: #{_lambda_.6} parent=43 // pred_check_branch
        %2516 = sbr.rel (%p2514) target = $region48
      $region47: #{_lambda_.6} parent=43 // pred_region
        %p2517 = scmp.lt.s32.totalorder %s16, 1
        %s2518 = scalar_select %p2517, %s16, 1
        %s2519 = smul.addr %s2518, 32
        %s2520 = smul.addr %s2519, 8
        %s2521 = scalar_lea.vmem %s4, %s2520
      $region48: #{_lambda_.6} parent=43 // pred_fallthru
        _
    $region44: #{_lambda_.6} parent=5 // pred_fallthru
      _
  $region6: #{_lambda_.6} parent=0 // loop_footer
    %s14 = sadd.s32 1, %s10
  $region7: #{_lambda_.6} parent=0 // loop_footer_branch
    %9 = sbr.rel target = $region3
  $region8: #{_lambda_.6} parent=0 // loop_exit
    _

// kernel: _lambda_.8
$region0: #{_lambda_.8}
  #allocation0 [shape = 'u32[]', space=smem, size = 0x4, offset = 0x4, fixed_abs, tag = 'smem constant byte address 0x4 - core index']
  #allocation1 [shape = 'u32[144,128]{1,0:T(1,128)}', space=vmem, size = 0x12000, scoped, tag = 'internal scratch']
  #allocation2 [shape = 'f32[10,10,16]{2,1,0:T(8,128)}', space=vmem, size = 0x14000, scoped, tag = 'scratch operand']
  %s0 = inlined_call_operand.vmem [shape: f32[16,2,8,8], index: 0, kind: input, shape index: {}]
  %s1 = inlined_call_operand.vmem [shape: f32[16,2,8,8], index: 1, kind: input, shape index: {}]
  %s2 = inlined_call_operand.vmem [shape: f32[9,1,1,16], index: 2, kind: input, shape index: {}]
  %s3 = inlined_call_operand.vmem [shape: f32[1,1,16], index: 3, kind: input, shape index: {}]
  %s4 = inlined_call_operand.vmem [shape: f32[16,2,8,8], index: 4, kind: output, shape index: {}]
  %s5 = sld [smem:[#allocation0]]
  $region49: #{_lambda_.8} parent=0
    _
  %s7 = ssub.s32 1, %s5
  %s8 = scalar_select 0, %s7, %s5
  loop: start=0, step=1, limit=4
  $region2: #{_lambda_.8} parent=0 // loop_pre_header
    _
  $region3: #{_lambda_.8} parent=0 // loop_header
    %s10 = sphi 0, %s14
    %p11 = scmp.ge.s32.totalorder %s10, 4
    %s20 = sphi 0, %s22
    %s23 = sphi 0, %s20
    %s24 = sphi 0, %s23
    %s40 = sphi 0, %s24
    %s46 = sphi 0, %s48
    %s49 = sphi 0, %s46
    %s50 = sphi 0, %s49
    %s66 = sphi 0, %s50
    %s70 = sphi 0, %s70
    %s72 = sphi 0, %s70
    %s73 = sphi 0, %s72
    %s87 = sphi 0, %s73
    %s91 = sphi 0, %s91
    %s93 = sphi 0, %s91
    %s94 = sphi 0, %s93
    %s108 = sphi 0, %s94
    %s114 = sphi 0, %s116
    %s117 = sphi 0, %s114
    %s118 = sphi 0, %s117
    %s134 = sphi 0, %s118
  $region4: #{_lambda_.8} parent=0 // loop_header_branch
    %13 = sbr.rel (%p11) target = $region8
  $region5: #{_lambda_.8} parent=0 // loop_body
    %s15 = ssub.s32 %s10, 1
    %s16 = ssub.s32 %s10, 2
    %s17 = sadd.s32 %s10, 1
    %s18 = ssub.s32 %s10, %s17
    %p19 = scmp.eq.s32.totalorder %s18, 0
    %s21 = sadd.s32 %s20, 1
    %s22 = scalar_select %p19, %s20, %s21
    %p25 = pneg %p19
    %p26 = scmp.eq.s32.totalorder %s10, 1
    %p27 = por %p25, %p26
    %p28 = scmp.ne.s32.totalorder %s20, %s23
    %p29 = scmp.eq.s32.totalorder %s10, 0
    %p30 = por %p28, %p29
    %p31 = scmp.ne.s32.totalorder %s20, %s23
    %p32 = scmp.eq.s32.totalorder %s15, 1
    %p33 = por %p31, %p32
    %p34 = scmp.ne.s32.totalorder %s23, %s24
    %p35 = scmp.eq.s32.totalorder %s15, 0
    %p36 = por %p34, %p35
    %p37 = scmp.ne.s32.totalorder %s23, %s24
    %p38 = scmp.eq.s32.totalorder %s16, 1
    %p39 = por %p37, %p38
    %p41 = scmp.ne.s32.totalorder %s24, %s40
    %p42 = scmp.eq.s32.totalorder %s16, 0
    %p43 = por %p41, %p42
    %s44 = ssub.s32 %s10, %s17
    %p45 = scmp.eq.s32.totalorder %s44, 0
    %s47 = sadd.s32 %s46, 1
    %s48 = scalar_select %p45, %s46, %s47
    %p51 = pneg %p45
    %p52 = scmp.eq.s32.totalorder %s10, 1
    %p53 = por %p51, %p52
    %p54 = scmp.ne.s32.totalorder %s46, %s49
    %p55 = scmp.eq.s32.totalorder %s10, 0
    %p56 = por %p54, %p55
    %p57 = scmp.ne.s32.totalorder %s46, %s49
    %p58 = scmp.eq.s32.totalorder %s15, 1
    %p59 = por %p57, %p58
    %p60 = scmp.ne.s32.totalorder %s49, %s50
    %p61 = scmp.eq.s32.totalorder %s15, 0
    %p62 = por %p60, %p61
    %p63 = scmp.ne.s32.totalorder %s49, %s50
    %p64 = scmp.eq.s32.totalorder %s16, 1
    %p65 = por %p63, %p64
    %p67 = scmp.ne.s32.totalorder %s50, %s66
    %p68 = scmp.eq.s32.totalorder %s16, 0
    %p69 = por %p67, %p68
    %s71 = sadd.s32 %s70, 1
    %p74 = scmp.eq.s32.totalorder %s10, 1
    %p75 = scmp.ne.s32.totalorder %s70, %s72
    %p76 = scmp.eq.s32.totalorder %s10, 0
    %p77 = por %p75, %p76
    %p78 = scmp.ne.s32.totalorder %s70, %s72
    %p79 = scmp.eq.s32.totalorder %s15, 1
    %p80 = por %p78, %p79
    %p81 = scmp.ne.s32.totalorder %s72, %s73
    %p82 = scmp.eq.s32.totalorder %s15, 0
    %p83 = por %p81, %p82
    %p84 = scmp.ne.s32.totalorder %s72, %s73
    %p85 = scmp.eq.s32.totalorder %s16, 1
    %p86 = por %p84, %p85
    %p88 = scmp.ne.s32.totalorder %s73, %s87
    %p89 = scmp.eq.s32.totalorder %s16, 0
    %p90 = por %p88, %p89
    %s92 = sadd.s32 %s91, 1
    %p95 = scmp.eq.s32.totalorder %s10, 1
    %p96 = scmp.ne.s32.totalorder %s91, %s93
    %p97 = scmp.eq.s32.totalorder %s10, 0
    %p98 = por %p96, %p97
    %p99 = scmp.ne.s32.totalorder %s91, %s93
    %p100 = scmp.eq.s32.totalorder %s15, 1
    %p101 = por %p99, %p100
    %p102 = scmp.ne.s32.totalorder %s93, %s94
    %p103 = scmp.eq.s32.totalorder %s15, 0
    %p104 = por %p102, %p103
    %p105 = scmp.ne.s32.totalorder %s93, %s94
    %p106 = scmp.eq.s32.totalorder %s16, 1
    %p107 = por %p105, %p106
    %p109 = scmp.ne.s32.totalorder %s94, %s108
    %p110 = scmp.eq.s32.totalorder %s16, 0
    %p111 = por %p109, %p110
    %s112 = ssub.s32 %s10, %s17
    %p113 = scmp.eq.s32.totalorder %s112, 0
    %s115 = sadd.s32 %s114, 1
    %s116 = scalar_select %p113, %s114, %s115
    %p119 = pneg %p113
    %p120 = scmp.eq.s32.totalorder %s10, 1
    %p121 = por %p119, %p120
    %p122 = scmp.ne.s32.totalorder %s114, %s117
    %p123 = scmp.eq.s32.totalorder %s10, 0
    %p124 = por %p122, %p123
    %p125 = scmp.ne.s32.totalorder %s114, %s117
    %p126 = scmp.eq.s32.totalorder %s15, 1
    %p127 = por %p125, %p126
    %p128 = scmp.ne.s32.totalorder %s117, %s118
    %p129 = scmp.eq.s32.totalorder %s15, 0
    %p130 = por %p128, %p129
    %p131 = scmp.ne.s32.totalorder %s117, %s118
    %p132 = scmp.eq.s32.totalorder %s16, 1
    %p133 = por %p131, %p132
    %p135 = scmp.ne.s32.totalorder %s118, %s134
    %p136 = scmp.eq.s32.totalorder %s16, 0
    %p137 = por %p135, %p136
    %p138 = scmp.le.s32.totalorder 1, %s10
    %p139 = scmp.lt.s32.totalorder %s10, 3
    %p140 = pnand %p138, %p139
    %p141 = pneg %p140
    // Predicated region
    $region9: #{_lambda_.8} parent=5 // pred_check
      _
    $region10: #{_lambda_.8} parent=5 // pred_check_branch
      %143 = sbr.rel (%p140) target = $region12
    $region11: #{_lambda_.8} parent=5 // pred_region
      %s144 = ssub.s32 %s10, 1
      // Predicated region
      $region13: #{_lambda_.8} parent=11 // pred_check
        %p145 = pneg %p83
      $region14: #{_lambda_.8} parent=11 // pred_check_branch
        %147 = sbr.rel (%p145) target = $region16
      $region15: #{_lambda_.8} parent=11 // pred_region
        _
      $region16: #{_lambda_.8} parent=11 // pred_fallthru
        _
      // Predicated region
      $region17: #{_lambda_.8} parent=11 // pred_check
        %p148 = pneg %p104
      $region18: #{_lambda_.8} parent=11 // pred_check_branch
        %150 = sbr.rel (%p148) target = $region20
      $region19: #{_lambda_.8} parent=11 // pred_region
        _
      $region20: #{_lambda_.8} parent=11 // pred_fallthru
        _
    $region12: #{_lambda_.8} parent=5 // pred_fallthru
      _
    %p151 = scmp.lt.s32.totalorder %s10, 2
    // Predicated region
    $region21: #{_lambda_.8} parent=5 // pred_check
      %p152 = pneg %p151
    $region22: #{_lambda_.8} parent=5 // pred_check_branch
      %154 = sbr.rel (%p152) target = $region24
    $region23: #{_lambda_.8} parent=5 // pred_region
      // Predicated region
      $region25: #{_lambda_.8} parent=23 // pred_check
        %p155 = pneg %p30
      $region26: #{_lambda_.8} parent=23 // pred_check_branch
        %157 = sbr.rel (%p155) target = $region28
      $region27: #{_lambda_.8} parent=23 // pred_region
        %s158 = smul.u32 8, %s10
        %p159 = scmp.lt.s32.totalorder %s158, 15
        %s160 = scalar_select %p159, %s158, 15
        %s161 = smul.addr %s160, 2
        %s162 = smul.addr %s161, 8
        %s163 = scalar_lea.vmem %s0, %s162
        %s164 = smul.u32 8, %s10
      $region28: #{_lambda_.8} parent=23 // pred_fallthru
        _
      // Predicated region
      $region29: #{_lambda_.8} parent=23 // pred_check
        %p165 = pneg %p56
      $region30: #{_lambda_.8} parent=23 // pred_check_branch
        %167 = sbr.rel (%p165) target = $region32
      $region31: #{_lambda_.8} parent=23 // pred_region
        %s168 = smul.u32 8, %s10
        %p169 = scmp.lt.s32.totalorder %s168, 15
        %s170 = scalar_select %p169, %s168, 15
        %s171 = smul.addr %s170, 2
        %s172 = smul.addr %s171, 8
        %s173 = scalar_lea.vmem %s1, %s172
        %s174 = smul.u32 8, %s10
      $region32: #{_lambda_.8} parent=23 // pred_fallthru
        _
    $region24: #{_lambda_.8} parent=5 // pred_fallthru
      _
    %p175 = scmp.le.s32.totalorder 1, %s10
    %p176 = scmp.lt.s32.totalorder %s10, 3
    %p177 = pnand %p175, %p176
    %p178 = pneg %p177
    // Predicated region
    $region33: #{_lambda_.8} parent=5 // pred_check
      _
    $region34: #{_lambda_.8} parent=5 // pred_check_branch
      %180 = sbr.rel (%p177) target = $region36
    $region35: #{_lambda_.8} parent=5 // pred_region
      %s181 = ssub.s32 %s10, 1
      %s182 = smul.u32 8, %s15
      %p183 = scmp.lt.s32.totalorder %s182, 15
      %s184 = scalar_select %p183, %s182, 15
      %s185 = smul.addr %s184, 2
      %s186 = smul.addr %s185, 8
      %s187 = scalar_lea.vmem %s0, %s186
      %p188 = pneg %p36
      %p189 = pneg %p33
      %s190 = smul.u32 8, %s15
      %p191 = scmp.lt.s32.totalorder %s190, 15
      %s192 = scalar_select %p191, %s190, 15
      %s193 = smul.addr %s192, 2
      %s194 = smul.addr %s193, 8
      %s195 = scalar_lea.vmem %s1, %s194
      %p196 = pneg %p62
      %p197 = pneg %p59
      %p198 = pneg %p83
      %p199 = pneg %p80
      %p200 = pneg %p104
      %p201 = pneg %p101
      %p202 = pneg %p130
      %p203 = pneg %p127
      %s204 = smul.u32 8, %s15
      %p205 = scmp.lt.s32.totalorder %s204, 15
      %s206 = scalar_select %p205, %s204, 15
      %s207 = smul.addr %s206, 2
      %s208 = smul.addr %s207, 8
      %s209 = scalar_lea.vmem %s4, %s208
      %s210 = smul.u32 8, %s15
      %p211 = scmp.lt.s32.totalorder %s210, 15
      %s212 = scalar_select %p211, %s210, 15
      %s213 = smul.addr %s212, 2
      %s214 = smul.addr %s213, 8
      %s215 = scalar_lea.vmem %s0, %s214
      %s216 = smul.u32 8, %s15
      %s217 = smul.u32 8, %s15
      %p218 = scmp.lt.s32.totalorder %s217, 15
      %s219 = scalar_select %p218, %s217, 15
      %s220 = smul.addr %s219, 2
      %s221 = smul.addr %s220, 8
      %s222 = scalar_lea.vmem %s1, %s221
      %s223 = smul.u32 8, %s15
      %s224 = smul.u32 8, %s15
      %p225 = scmp.lt.s32.totalorder %s224, 15
      %s226 = scalar_select %p225, %s224, 15
      %s227 = smul.addr %s226, 2
      %s228 = smul.addr %s227, 8
      %s229 = scalar_lea.vmem %s4, %s228
      %s230 = smul.u32 8, %s15
      %v231 = vld [vmem:[%s215] sm:$0xff]
      %v232 = vld [vmem:[%s215 + $0x10] sm:$0xff]
      %v233 = vld [vmem:[%s215 + $0x20] sm:$0xff]
      %v234 = vld [vmem:[%s215 + $0x30] sm:$0xff]
      %v235 = vld [vmem:[%s215 + $0x40] sm:$0xff]
      %v236 = vld [vmem:[%s215 + $0x50] sm:$0xff]
      %v237 = vld [vmem:[%s215 + $0x60] sm:$0xff]
      %v238 = vld [vmem:[%s215 + $0x70] sm:$0xff]
      %s239 = scalar_lea.vmem %s215, 8
      %v240 = vld [vmem:[%s239] sm:$0xff]
      %v241 = vld [vmem:[%s239 + $0x10] sm:$0xff]
      %v242 = vld [vmem:[%s239 + $0x20] sm:$0xff]
      %v243 = vld [vmem:[%s239 + $0x30] sm:$0xff]
      %v244 = vld [vmem:[%s239 + $0x40] sm:$0xff]
      %v245 = vld [vmem:[%s239 + $0x50] sm:$0xff]
      %v246 = vld [vmem:[%s239 + $0x60] sm:$0xff]
      %v247 = vld [vmem:[%s239 + $0x70] sm:$0xff]
      %256 = vrot.lane.b32.xlu0 %v231, 124
      %v257 = vpop.permute.xlu0 %256
      %258 = vrot.lane.b32.xlu0 %v232, 124
      %v259 = vpop.permute.xlu0 %258
      %260 = vrot.lane.b32.xlu0 %v233, 124
      %v261 = vpop.permute.xlu0 %260
      %262 = vrot.lane.b32.xlu0 %v234, 124
      %v263 = vpop.permute.xlu0 %262
      %264 = vrot.lane.b32.xlu0 %v235, 124
      %v265 = vpop.permute.xlu0 %264
      %266 = vrot.lane.b32.xlu0 %v236, 124
      %v267 = vpop.permute.xlu0 %266
      %268 = vrot.lane.b32.xlu0 %v237, 124
      %v269 = vpop.permute.xlu0 %268
      %270 = vrot.lane.b32.xlu0 %v238, 124
      %v271 = vpop.permute.xlu0 %270
      %v280 = vadd.f32 %v231, %v257
      %v281 = vadd.f32 %v232, %v259
      %v282 = vadd.f32 %v233, %v261
      %v283 = vadd.f32 %v234, %v263
      %v284 = vadd.f32 %v235, %v265
      %v285 = vadd.f32 %v236, %v267
      %v286 = vadd.f32 %v237, %v269
      %v287 = vadd.f32 %v238, %v271
      %v288 = vadd.f32 %v280, %v240
      %v289 = vadd.f32 %v281, %v241
      %v290 = vadd.f32 %v282, %v242
      %v291 = vadd.f32 %v283, %v243
      %v292 = vadd.f32 %v284, %v244
      %v293 = vadd.f32 %v285, %v245
      %v294 = vadd.f32 %v286, %v246
      %v295 = vadd.f32 %v287, %v247
      %304 = vrot.lane.b32.xlu0 %v240, 124
      %v305 = vpop.permute.xlu0 %304
      %306 = vrot.lane.b32.xlu0 %v241, 124
      %v307 = vpop.permute.xlu0 %306
      %308 = vrot.lane.b32.xlu0 %v242, 124
      %v309 = vpop.permute.xlu0 %308
      %310 = vrot.lane.b32.xlu0 %v243, 124
      %v311 = vpop.permute.xlu0 %310
      %312 = vrot.lane.b32.xlu0 %v244, 124
      %v313 = vpop.permute.xlu0 %312
      %314 = vrot.lane.b32.xlu0 %v245, 124
      %v315 = vpop.permute.xlu0 %314
      %316 = vrot.lane.b32.xlu0 %v246, 124
      %v317 = vpop.permute.xlu0 %316
      %318 = vrot.lane.b32.xlu0 %v247, 124
      %v319 = vpop.permute.xlu0 %318
      %v328 = vadd.f32 %v288, %v305
      %v329 = vadd.f32 %v289, %v307
      %v330 = vadd.f32 %v290, %v309
      %v331 = vadd.f32 %v291, %v311
      %v332 = vadd.f32 %v292, %v313
      %v333 = vadd.f32 %v293, %v315
      %v334 = vadd.f32 %v294, %v317
      %v335 = vadd.f32 %v295, %v319
      %v336 = vmul.f32 %v328, 0.5
      %v337 = vmul.f32 %v329, 0.5
      %v338 = vmul.f32 %v330, 0.5
      %v339 = vmul.f32 %v331, 0.5
      %v340 = vmul.f32 %v332, 0.5
      %v341 = vmul.f32 %v333, 0.5
      %v342 = vmul.f32 %v334, 0.5
      %v343 = vmul.f32 %v335, 0.5
      %v344 = vsub.f32 %v280, %v240
      %v345 = vsub.f32 %v281, %v241
      %v346 = vsub.f32 %v282, %v242
      %v347 = vsub.f32 %v283, %v243
      %v348 = vsub.f32 %v284, %v244
      %v349 = vsub.f32 %v285, %v245
      %v350 = vsub.f32 %v286, %v246
      %v351 = vsub.f32 %v287, %v247
      %v352 = vsub.f32 %v344, %v305
      %v353 = vsub.f32 %v345, %v307
      %v354 = vsub.f32 %v346, %v309
      %v355 = vsub.f32 %v347, %v311
      %v356 = vsub.f32 %v348, %v313
      %v357 = vsub.f32 %v349, %v315
      %v358 = vsub.f32 %v350, %v317
      %v359 = vsub.f32 %v351, %v319
      %v360 = vmul.f32 %v352, 0.5
      %v361 = vmul.f32 %v353, 0.5
      %v362 = vmul.f32 %v354, 0.5
      %v363 = vmul.f32 %v355, 0.5
      %v364 = vmul.f32 %v356, 0.5
      %v365 = vmul.f32 %v357, 0.5
      %v366 = vmul.f32 %v358, 0.5
      %v367 = vmul.f32 %v359, 0.5
      %v368 = vsub.f32 %v231, %v257
      %v369 = vsub.f32 %v232, %v259
      %v370 = vsub.f32 %v233, %v261
      %v371 = vsub.f32 %v234, %v263
      %v372 = vsub.f32 %v235, %v265
      %v373 = vsub.f32 %v236, %v267
      %v374 = vsub.f32 %v237, %v269
      %v375 = vsub.f32 %v238, %v271
      %v376 = vadd.f32 %v368, %v240
      %v377 = vadd.f32 %v369, %v241
      %v378 = vadd.f32 %v370, %v242
      %v379 = vadd.f32 %v371, %v243
      %v380 = vadd.f32 %v372, %v244
      %v381 = vadd.f32 %v373, %v245
      %v382 = vadd.f32 %v374, %v246
      %v383 = vadd.f32 %v375, %v247
      %v384 = vsub.f32 %v376, %v305
      %v385 = vsub.f32 %v377, %v307
      %v386 = vsub.f32 %v378, %v309
      %v387 = vsub.f32 %v379, %v311
      %v388 = vsub.f32 %v380, %v313
      %v389 = vsub.f32 %v381, %v315
      %v390 = vsub.f32 %v382, %v317
      %v391 = vsub.f32 %v383, %v319
      %v392 = vmul.f32 %v384, 0.5
      %v393 = vmul.f32 %v385, 0.5
      %v394 = vmul.f32 %v386, 0.5
      %v395 = vmul.f32 %v387, 0.5
      %v396 = vmul.f32 %v388, 0.5
      %v397 = vmul.f32 %v389, 0.5
      %v398 = vmul.f32 %v390, 0.5
      %v399 = vmul.f32 %v391, 0.5
      %v400 = vsub.f32 %v368, %v240
      %v401 = vsub.f32 %v369, %v241
      %v402 = vsub.f32 %v370, %v242
      %v403 = vsub.f32 %v371, %v243
      %v404 = vsub.f32 %v372, %v244
      %v405 = vsub.f32 %v373, %v245
      %v406 = vsub.f32 %v374, %v246
      %v407 = vsub.f32 %v375, %v247
      %v408 = vadd.f32 %v400, %v305
      %v409 = vadd.f32 %v401, %v307
      %v410 = vadd.f32 %v402, %v309
      %v411 = vadd.f32 %v403, %v311
      %v412 = vadd.f32 %v404, %v313
      %v413 = vadd.f32 %v405, %v315
      %v414 = vadd.f32 %v406, %v317
      %v415 = vadd.f32 %v407, %v319
      %v416 = vmul.f32 %v408, 0.5
      %v417 = vmul.f32 %v409, 0.5
      %v418 = vmul.f32 %v410, 0.5
      %v419 = vmul.f32 %v411, 0.5
      %v420 = vmul.f32 %v412, 0.5
      %v421 = vmul.f32 %v413, 0.5
      %v422 = vmul.f32 %v414, 0.5
      %v423 = vmul.f32 %v415, 0.5
      %vm424 = vcmask 130048
      %425 = vst.msk [vmem:[#allocation2] sm:$0xff] %vm424, 0.0
      %vm426 = vcmask 123904
      %427 = vst.msk [vmem:[#allocation2 + $0x8] sm:$0x3] %vm426, 0.0
      %428 = vst.msk [vmem:[#allocation2 + $0x10] sm:$0xff] %vm424, 0.0
      %429 = vst.msk [vmem:[#allocation2 + $0x18] sm:$0x3] %vm426, 0.0
      %430 = vst.msk [vmem:[#allocation2 + $0x20] sm:$0xff] %vm424, 0.0
      %431 = vst.msk [vmem:[#allocation2 + $0x28] sm:$0x3] %vm426, 0.0
      %432 = vst.msk [vmem:[#allocation2 + $0x30] sm:$0xff] %vm424, 0.0
      %433 = vst.msk [vmem:[#allocation2 + $0x38] sm:$0x3] %vm426, 0.0
      %434 = vst.msk [vmem:[#allocation2 + $0x40] sm:$0xff] %vm424, 0.0
      %435 = vst.msk [vmem:[#allocation2 + $0x48] sm:$0x3] %vm426, 0.0
      %436 = vst.msk [vmem:[#allocation2 + $0x50] sm:$0xff] %vm424, 0.0
      %437 = vst.msk [vmem:[#allocation2 + $0x58] sm:$0x3] %vm426, 0.0
      %438 = vst.msk [vmem:[#allocation2 + $0x60] sm:$0xff] %vm424, 0.0
      %439 = vst.msk [vmem:[#allocation2 + $0x68] sm:$0x3] %vm426, 0.0
      %440 = vst.msk [vmem:[#allocation2 + $0x70] sm:$0xff] %vm424, 0.0
      %441 = vst.msk [vmem:[#allocation2 + $0x78] sm:$0x3] %vm426, 0.0
      %442 = vst.msk [vmem:[#allocation2 + $0x80] sm:$0xff] %vm424, 0.0
      %443 = vst.msk [vmem:[#allocation2 + $0x88] sm:$0x3] %vm426, 0.0
      %444 = vst.msk [vmem:[#allocation2 + $0x90] sm:$0xff] %vm424, 0.0
      %445 = vst.msk [vmem:[#allocation2 + $0x98] sm:$0x3] %vm426, 0.0
      %s446 = scalar_lea.vmem [#allocation2], 16
      %vm447 = vcmask 31744
      %448 = vst.msk [vmem:[%s446 + $0x1] sm:$0xff] %vm447, %v336
      %449 = vst.msk [vmem:[%s446 + $0x11] sm:$0xff] %vm447, %v337
      %450 = vst.msk [vmem:[%s446 + $0x21] sm:$0xff] %vm447, %v338
      %451 = vst.msk [vmem:[%s446 + $0x31] sm:$0xff] %vm447, %v339
      %452 = vst.msk [vmem:[%s446 + $0x41] sm:$0xff] %vm447, %v340
      %453 = vst.msk [vmem:[%s446 + $0x51] sm:$0xff] %vm447, %v341
      %454 = vst.msk [vmem:[%s446 + $0x61] sm:$0xff] %vm447, %v342
      %455 = vst.msk [vmem:[%s446 + $0x71] sm:$0xff] %vm447, %v343
      %464 = vrot.lane.b32.xlu0 %v360, 4
      %v465 = vpop.permute.xlu0 %464
      %466 = vrot.lane.b32.xlu0 %v361, 4
      %v467 = vpop.permute.xlu0 %466
      %468 = vrot.lane.b32.xlu0 %v362, 4
      %v469 = vpop.permute.xlu0 %468
      %470 = vrot.lane.b32.xlu0 %v363, 4
      %v471 = vpop.permute.xlu0 %470
      %472 = vrot.lane.b32.xlu0 %v364, 4
      %v473 = vpop.permute.xlu0 %472
      %474 = vrot.lane.b32.xlu0 %v365, 4
      %v475 = vpop.permute.xlu0 %474
      %476 = vrot.lane.b32.xlu0 %v366, 4
      %v477 = vpop.permute.xlu0 %476
      %478 = vrot.lane.b32.xlu0 %v367, 4
      %v479 = vpop.permute.xlu0 %478
      %vm488 = vcmask 64544
      %489 = vst.msk [vmem:[%s446 + $0x1] sm:$0xff] %vm488, %v465
      %490 = vst.msk [vmem:[%s446 + $0x11] sm:$0xff] %vm488, %v467
      %491 = vst.msk [vmem:[%s446 + $0x21] sm:$0xff] %vm488, %v469
      %492 = vst.msk [vmem:[%s446 + $0x31] sm:$0xff] %vm488, %v471
      %493 = vst.msk [vmem:[%s446 + $0x41] sm:$0xff] %vm488, %v473
      %494 = vst.msk [vmem:[%s446 + $0x51] sm:$0xff] %vm488, %v475
      %495 = vst.msk [vmem:[%s446 + $0x61] sm:$0xff] %vm488, %v477
      %496 = vst.msk [vmem:[%s446 + $0x71] sm:$0xff] %vm488, %v479
      %505 = vrot.lane.b32.xlu0 %v392, 8
      %v506 = vpop.permute.xlu0 %505
      %507 = vrot.lane.b32.xlu0 %v393, 8
      %v508 = vpop.permute.xlu0 %507
      %509 = vrot.lane.b32.xlu0 %v394, 8
      %v510 = vpop.permute.xlu0 %509
      %511 = vrot.lane.b32.xlu0 %v395, 8
      %v512 = vpop.permute.xlu0 %511
      %513 = vrot.lane.b32.xlu0 %v396, 8
      %v514 = vpop.permute.xlu0 %513
      %515 = vrot.lane.b32.xlu0 %v397, 8
      %v516 = vpop.permute.xlu0 %515
      %517 = vrot.lane.b32.xlu0 %v398, 8
      %v518 = vpop.permute.xlu0 %517
      %519 = vrot.lane.b32.xlu0 %v399, 8
      %v520 = vpop.permute.xlu0 %519
      %vm529 = vcmask 97344
      %530 = vst.msk [vmem:[%s446 + $0x1] sm:$0xff] %vm529, %v506
      %531 = vst.msk [vmem:[%s446 + $0x11] sm:$0xff] %vm529, %v508
      %532 = vst.msk [vmem:[%s446 + $0x21] sm:$0xff] %vm529, %v510
      %533 = vst.msk [vmem:[%s446 + $0x31] sm:$0xff] %vm529, %v512
      %534 = vst.msk [vmem:[%s446 + $0x41] sm:$0xff] %vm529, %v514
      %535 = vst.msk [vmem:[%s446 + $0x51] sm:$0xff] %vm529, %v516
      %536 = vst.msk [vmem:[%s446 + $0x61] sm:$0xff] %vm529, %v518
      %537 = vst.msk [vmem:[%s446 + $0x71] sm:$0xff] %vm529, %v520
      %546 = vrot.lane.b32.xlu0 %v416, 12
      %v547 = vpop.permute.xlu0 %546
      %548 = vrot.lane.b32.xlu0 %v417, 12
      %v549 = vpop.permute.xlu0 %548
      %550 = vrot.lane.b32.xlu0 %v418, 12
      %v551 = vpop.permute.xlu0 %550
      %552 = vrot.lane.b32.xlu0 %v419, 12
      %v553 = vpop.permute.xlu0 %552
      %554 = vrot.lane.b32.xlu0 %v420, 12
      %v555 = vpop.permute.xlu0 %554
      %556 = vrot.lane.b32.xlu0 %v421, 12
      %v557 = vpop.permute.xlu0 %556
      %558 = vrot.lane.b32.xlu0 %v422, 12
      %v559 = vpop.permute.xlu0 %558
      %560 = vrot.lane.b32.xlu0 %v423, 12
      %v561 = vpop.permute.xlu0 %560
      %vm570 = vcmask 130144
      %571 = vst.msk [vmem:[%s446 + $0x1] sm:$0xff] %vm570, %v547
      %572 = vst.msk [vmem:[%s446 + $0x11] sm:$0xff] %vm570, %v549
      %573 = vst.msk [vmem:[%s446 + $0x21] sm:$0xff] %vm570, %v551
      %574 = vst.msk [vmem:[%s446 + $0x31] sm:$0xff] %vm570, %v553
      %575 = vst.msk [vmem:[%s446 + $0x41] sm:$0xff] %vm570, %v555
      %576 = vst.msk [vmem:[%s446 + $0x51] sm:$0xff] %vm570, %v557
      %577 = vst.msk [vmem:[%s446 + $0x61] sm:$0xff] %vm570, %v559
      %578 = vst.msk [vmem:[%s446 + $0x71] sm:$0xff] %vm570, %v561
      %v579 = vld [vmem:[#allocation2] sm:$0xff]
      %v580 = vld [vmem:[#allocation2 + $0x10] sm:$0xff]
      %v581 = vld [vmem:[#allocation2 + $0x20] sm:$0xff]
      %v582 = vld [vmem:[#allocation2 + $0x30] sm:$0xff]
      %v583 = vld [vmem:[#allocation2 + $0x40] sm:$0xff]
      %v584 = vld [vmem:[#allocation2 + $0x50] sm:$0xff]
      %v585 = vld [vmem:[#allocation2 + $0x60] sm:$0xff]
      %v586 = vld [vmem:[#allocation2 + $0x70] sm:$0xff]
      %v587 = vld [vmem:[%s2] sm:$0x1]
      %v589 = vlaneseq
      %v590 = vshrl.u32 %v589, 7
      %v591 = vsub.s32 0, %v590
      %v592 = vrot.slane %v587, %v591
      %v594 = vmul.f32 %v579, %v592
      %v595 = vmul.f32 %v580, %v592
      %v596 = vmul.f32 %v581, %v592
      %v597 = vmul.f32 %v582, %v592
      %v598 = vmul.f32 %v583, %v592
      %v599 = vmul.f32 %v584, %v592
      %v600 = vmul.f32 %v585, %v592
      %v601 = vmul.f32 %v586, %v592
      %v602 = vadd.f32 %v594, 0.0
      %v603 = vadd.f32 %v595, 0.0
      %v604 = vadd.f32 %v596, 0.0
      %v605 = vadd.f32 %v597, 0.0
      %v606 = vadd.f32 %v598, 0.0
      %v607 = vadd.f32 %v599, 0.0
      %v608 = vadd.f32 %v600, 0.0
      %v609 = vadd.f32 %v601, 0.0
      %v610 = vld [vmem:[#allocation2 + $0x1] sm:$0xff]
      %v611 = vld [vmem:[#allocation2 + $0x11] sm:$0xff]
      %v612 = vld [vmem:[#allocation2 + $0x21] sm:$0xff]
      %v613 = vld [vmem:[#allocation2 + $0x31] sm:$0xff]
      %v614 = vld [vmem:[#allocation2 + $0x41] sm:$0xff]
      %v615 = vld [vmem:[#allocation2 + $0x51] sm:$0xff]
      %v616 = vld [vmem:[#allocation2 + $0x61] sm:$0xff]
      %v617 = vld [vmem:[#allocation2 + $0x71] sm:$0xff]
      %s618 = scalar_lea.vmem %s2, 1
      %v619 = vld [vmem:[%s618] sm:$0x1]
      %v621 = vlaneseq
      %v622 = vshrl.u32 %v621, 7
      %v623 = vsub.s32 0, %v622
      %v624 = vrot.slane %v619, %v623
      %v626 = vmul.f32 %v610, %v624
      %v627 = vmul.f32 %v611, %v624
      %v628 = vmul.f32 %v612, %v624
      %v629 = vmul.f32 %v613, %v624
      %v630 = vmul.f32 %v614, %v624
      %v631 = vmul.f32 %v615, %v624
      %v632 = vmul.f32 %v616, %v624
      %v633 = vmul.f32 %v617, %v624
      %v634 = vadd.f32 %v602, %v626
      %v635 = vadd.f32 %v603, %v627
      %v636 = vadd.f32 %v604, %v628
      %v637 = vadd.f32 %v605, %v629
      %v638 = vadd.f32 %v606, %v630
      %v639 = vadd.f32 %v607, %v631
      %v640 = vadd.f32 %v608, %v632
      %v641 = vadd.f32 %v609, %v633
      %v642 = vld [vmem:[#allocation2 + $0x2] sm:$0xff]
      %v643 = vld [vmem:[#allocation2 + $0x12] sm:$0xff]
      %v644 = vld [vmem:[#allocation2 + $0x22] sm:$0xff]
      %v645 = vld [vmem:[#allocation2 + $0x32] sm:$0xff]
      %v646 = vld [vmem:[#allocation2 + $0x42] sm:$0xff]
      %v647 = vld [vmem:[#allocation2 + $0x52] sm:$0xff]
      %v648 = vld [vmem:[#allocation2 + $0x62] sm:$0xff]
      %v649 = vld [vmem:[#allocation2 + $0x72] sm:$0xff]
      %s650 = scalar_lea.vmem %s2, 2
      %v651 = vld [vmem:[%s650] sm:$0x1]
      %v653 = vlaneseq
      %v654 = vshrl.u32 %v653, 7
      %v655 = vsub.s32 0, %v654
      %v656 = vrot.slane %v651, %v655
      %v658 = vmul.f32 %v642, %v656
      %v659 = vmul.f32 %v643, %v656
      %v660 = vmul.f32 %v644, %v656
      %v661 = vmul.f32 %v645, %v656
      %v662 = vmul.f32 %v646, %v656
      %v663 = vmul.f32 %v647, %v656
      %v664 = vmul.f32 %v648, %v656
      %v665 = vmul.f32 %v649, %v656
      %v666 = vadd.f32 %v634, %v658
      %v667 = vadd.f32 %v635, %v659
      %v668 = vadd.f32 %v636, %v660
      %v669 = vadd.f32 %v637, %v661
      %v670 = vadd.f32 %v638, %v662
      %v671 = vadd.f32 %v639, %v663
      %v672 = vadd.f32 %v640, %v664
      %v673 = vadd.f32 %v641, %v665
      %v674 = vld [vmem:[%s446] sm:$0xff]
      %v675 = vld [vmem:[%s446 + $0x10] sm:$0xff]
      %v676 = vld [vmem:[%s446 + $0x20] sm:$0xff]
      %v677 = vld [vmem:[%s446 + $0x30] sm:$0xff]
      %v678 = vld [vmem:[%s446 + $0x40] sm:$0xff]
      %v679 = vld [vmem:[%s446 + $0x50] sm:$0xff]
      %v680 = vld [vmem:[%s446 + $0x60] sm:$0xff]
      %v681 = vld [vmem:[%s446 + $0x70] sm:$0xff]
      %s682 = scalar_lea.vmem %s2, 3
      %v683 = vld [vmem:[%s682] sm:$0x1]
      %v685 = vlaneseq
      %v686 = vshrl.u32 %v685, 7
      %v687 = vsub.s32 0, %v686
      %v688 = vrot.slane %v683, %v687
      %v690 = vmul.f32 %v674, %v688
      %v691 = vmul.f32 %v675, %v688
      %v692 = vmul.f32 %v676, %v688
      %v693 = vmul.f32 %v677, %v688
      %v694 = vmul.f32 %v678, %v688
      %v695 = vmul.f32 %v679, %v688
      %v696 = vmul.f32 %v680, %v688
      %v697 = vmul.f32 %v681, %v688
      %v698 = vadd.f32 %v666, %v690
      %v699 = vadd.f32 %v667, %v691
      %v700 = vadd.f32 %v668, %v692
      %v701 = vadd.f32 %v669, %v693
      %v702 = vadd.f32 %v670, %v694
      %v703 = vadd.f32 %v671, %v695
      %v704 = vadd.f32 %v672, %v696
      %v705 = vadd.f32 %v673, %v697
      %v706 = vld [vmem:[%s446 + $0x1] sm:$0xff]
      %v707 = vld [vmem:[%s446 + $0x11] sm:$0xff]
      %v708 = vld [vmem:[%s446 + $0x21] sm:$0xff]
      %v709 = vld [vmem:[%s446 + $0x31] sm:$0xff]
      %v710 = vld [vmem:[%s446 + $0x41] sm:$0xff]
      %v711 = vld [vmem:[%s446 + $0x51] sm:$0xff]
      %v712 = vld [vmem:[%s446 + $0x61] sm:$0xff]
      %v713 = vld [vmem:[%s446 + $0x71] sm:$0xff]
      %s714 = scalar_lea.vmem %s2, 4
      %v715 = vld [vmem:[%s714] sm:$0x1]
      %v717 = vlaneseq
      %v718 = vshrl.u32 %v717, 7
      %v719 = vsub.s32 0, %v718
      %v720 = vrot.slane %v715, %v719
      %v722 = vmul.f32 %v706, %v720
      %v723 = vmul.f32 %v707, %v720
      %v724 = vmul.f32 %v708, %v720
      %v725 = vmul.f32 %v709, %v720
      %v726 = vmul.f32 %v710, %v720
      %v727 = vmul.f32 %v711, %v720
      %v728 = vmul.f32 %v712, %v720
      %v729 = vmul.f32 %v713, %v720
      %v730 = vadd.f32 %v698, %v722
      %v731 = vadd.f32 %v699, %v723
      %v732 = vadd.f32 %v700, %v724
      %v733 = vadd.f32 %v701, %v725
      %v734 = vadd.f32 %v702, %v726
      %v735 = vadd.f32 %v703, %v727
      %v736 = vadd.f32 %v704, %v728
      %v737 = vadd.f32 %v705, %v729
      %v738 = vld [vmem:[%s446 + $0x2] sm:$0xff]
      %v739 = vld [vmem:[%s446 + $0x12] sm:$0xff]
      %v740 = vld [vmem:[%s446 + $0x22] sm:$0xff]
      %v741 = vld [vmem:[%s446 + $0x32] sm:$0xff]
      %v742 = vld [vmem:[%s446 + $0x42] sm:$0xff]
      %v743 = vld [vmem:[%s446 + $0x52] sm:$0xff]
      %v744 = vld [vmem:[%s446 + $0x62] sm:$0xff]
      %v745 = vld [vmem:[%s446 + $0x72] sm:$0xff]
      %s746 = scalar_lea.vmem %s2, 5
      %v747 = vld [vmem:[%s746] sm:$0x1]
      %v749 = vlaneseq
      %v750 = vshrl.u32 %v749, 7
      %v751 = vsub.s32 0, %v750
      %v752 = vrot.slane %v747, %v751
      %v754 = vmul.f32 %v738, %v752
      %v755 = vmul.f32 %v739, %v752
      %v756 = vmul.f32 %v740, %v752
      %v757 = vmul.f32 %v741, %v752
      %v758 = vmul.f32 %v742, %v752
      %v759 = vmul.f32 %v743, %v752
      %v760 = vmul.f32 %v744, %v752
      %v761 = vmul.f32 %v745, %v752
      %v762 = vadd.f32 %v730, %v754
      %v763 = vadd.f32 %v731, %v755
      %v764 = vadd.f32 %v732, %v756
      %v765 = vadd.f32 %v733, %v757
      %v766 = vadd.f32 %v734, %v758
      %v767 = vadd.f32 %v735, %v759
      %v768 = vadd.f32 %v736, %v760
      %v769 = vadd.f32 %v737, %v761
      %s770 = scalar_lea.vmem [#allocation2], 32
      %v771 = vld [vmem:[%s770] sm:$0xff]
      %v772 = vld [vmem:[%s770 + $0x10] sm:$0xff]
      %v773 = vld [vmem:[%s770 + $0x20] sm:$0xff]
      %v774 = vld [vmem:[%s770 + $0x30] sm:$0xff]
      %v775 = vld [vmem:[%s770 + $0x40] sm:$0xff]
      %v776 = vld [vmem:[%s770 + $0x50] sm:$0xff]
      %v777 = vld [vmem:[%s770 + $0x60] sm:$0xff]
      %v778 = vld [vmem:[%s770 + $0x70] sm:$0xff]
      %s779 = scalar_lea.vmem %s2, 6
      %v780 = vld [vmem:[%s779] sm:$0x1]
      %v782 = vlaneseq
      %v783 = vshrl.u32 %v782, 7
      %v784 = vsub.s32 0, %v783
      %v785 = vrot.slane %v780, %v784
      %v787 = vmul.f32 %v771, %v785
      %v788 = vmul.f32 %v772, %v785
      %v789 = vmul.f32 %v773, %v785
      %v790 = vmul.f32 %v774, %v785
      %v791 = vmul.f32 %v775, %v785
      %v792 = vmul.f32 %v776, %v785
      %v793 = vmul.f32 %v777, %v785
      %v794 = vmul.f32 %v778, %v785
      %v795 = vadd.f32 %v762, %v787
      %v796 = vadd.f32 %v763, %v788
      %v797 = vadd.f32 %v764, %v789
      %v798 = vadd.f32 %v765, %v790
      %v799 = vadd.f32 %v766, %v791
      %v800 = vadd.f32 %v767, %v792
      %v801 = vadd.f32 %v768, %v793
      %v802 = vadd.f32 %v769, %v794
      %v803 = vld [vmem:[%s770 + $0x1] sm:$0xff]
      %v804 = vld [vmem:[%s770 + $0x11] sm:$0xff]
      %v805 = vld [vmem:[%s770 + $0x21] sm:$0xff]
      %v806 = vld [vmem:[%s770 + $0x31] sm:$0xff]
      %v807 = vld [vmem:[%s770 + $0x41] sm:$0xff]
      %v808 = vld [vmem:[%s770 + $0x51] sm:$0xff]
      %v809 = vld [vmem:[%s770 + $0x61] sm:$0xff]
      %v810 = vld [vmem:[%s770 + $0x71] sm:$0xff]
      %s811 = scalar_lea.vmem %s2, 7
      %v812 = vld [vmem:[%s811] sm:$0x1]
      %v814 = vlaneseq
      %v815 = vshrl.u32 %v814, 7
      %v816 = vsub.s32 0, %v815
      %v817 = vrot.slane %v812, %v816
      %v819 = vmul.f32 %v803, %v817
      %v820 = vmul.f32 %v804, %v817
      %v821 = vmul.f32 %v805, %v817
      %v822 = vmul.f32 %v806, %v817
      %v823 = vmul.f32 %v807, %v817
      %v824 = vmul.f32 %v808, %v817
      %v825 = vmul.f32 %v809, %v817
      %v826 = vmul.f32 %v810, %v817
      %v827 = vadd.f32 %v795, %v819
      %v828 = vadd.f32 %v796, %v820
      %v829 = vadd.f32 %v797, %v821
      %v830 = vadd.f32 %v798, %v822
      %v831 = vadd.f32 %v799, %v823
      %v832 = vadd.f32 %v800, %v824
      %v833 = vadd.f32 %v801, %v825
      %v834 = vadd.f32 %v802, %v826
      %v835 = vld [vmem:[%s770 + $0x2] sm:$0xff]
      %v836 = vld [vmem:[%s770 + $0x12] sm:$0xff]
      %v837 = vld [vmem:[%s770 + $0x22] sm:$0xff]
      %v838 = vld [vmem:[%s770 + $0x32] sm:$0xff]
      %v839 = vld [vmem:[%s770 + $0x42] sm:$0xff]
      %v840 = vld [vmem:[%s770 + $0x52] sm:$0xff]
      %v841 = vld [vmem:[%s770 + $0x62] sm:$0xff]
      %v842 = vld [vmem:[%s770 + $0x72] sm:$0xff]
      %s843 = scalar_lea.vmem %s2, 8
      %v844 = vld [vmem:[%s843] sm:$0x1]
      %v846 = vlaneseq
      %v847 = vshrl.u32 %v846, 7
      %v848 = vsub.s32 0, %v847
      %v849 = vrot.slane %v844, %v848
      %v851 = vmul.f32 %v835, %v849
      %v852 = vmul.f32 %v836, %v849
      %v853 = vmul.f32 %v837, %v849
      %v854 = vmul.f32 %v838, %v849
      %v855 = vmul.f32 %v839, %v849
      %v856 = vmul.f32 %v840, %v849
      %v857 = vmul.f32 %v841, %v849
      %v858 = vmul.f32 %v842, %v849
      %v859 = vadd.f32 %v827, %v851
      %v860 = vadd.f32 %v828, %v852
      %v861 = vadd.f32 %v829, %v853
      %v862 = vadd.f32 %v830, %v854
      %v863 = vadd.f32 %v831, %v855
      %v864 = vadd.f32 %v832, %v856
      %v865 = vadd.f32 %v833, %v857
      %v866 = vadd.f32 %v834, %v858
      %v867 = vld [vmem:[%s3] sm:$0x1]
      %v869 = vlaneseq
      %v870 = vshrl.u32 %v869, 7
      %v871 = vsub.s32 0, %v870
      %v872 = vrot.slane %v867, %v871
      %v874 = vmul.f32 %v859, %v872
      %v875 = vmul.f32 %v860, %v872
      %v876 = vmul.f32 %v861, %v872
      %v877 = vmul.f32 %v862, %v872
      %v878 = vmul.f32 %v863, %v872
      %v879 = vmul.f32 %v864, %v872
      %v880 = vmul.f32 %v865, %v872
      %v881 = vmul.f32 %v866, %v872
      %v882 = vld [vmem:[%s222] sm:$0xff]
      %v883 = vld [vmem:[%s222 + $0x10] sm:$0xff]
      %v884 = vld [vmem:[%s222 + $0x20] sm:$0xff]
      %v885 = vld [vmem:[%s222 + $0x30] sm:$0xff]
      %v886 = vld [vmem:[%s222 + $0x40] sm:$0xff]
      %v887 = vld [vmem:[%s222 + $0x50] sm:$0xff]
      %v888 = vld [vmem:[%s222 + $0x60] sm:$0xff]
      %v889 = vld [vmem:[%s222 + $0x70] sm:$0xff]
      %s890 = scalar_lea.vmem %s222, 8
      %v891 = vld [vmem:[%s890] sm:$0xff]
      %v892 = vld [vmem:[%s890 + $0x10] sm:$0xff]
      %v893 = vld [vmem:[%s890 + $0x20] sm:$0xff]
      %v894 = vld [vmem:[%s890 + $0x30] sm:$0xff]
      %v895 = vld [vmem:[%s890 + $0x40] sm:$0xff]
      %v896 = vld [vmem:[%s890 + $0x50] sm:$0xff]
      %v897 = vld [vmem:[%s890 + $0x60] sm:$0xff]
      %v898 = vld [vmem:[%s890 + $0x70] sm:$0xff]
      %907 = vrot.lane.b32.xlu0 %v874, 124
      %v908 = vpop.permute.xlu0 %907
      %909 = vrot.lane.b32.xlu0 %v875, 124
      %v910 = vpop.permute.xlu0 %909
      %911 = vrot.lane.b32.xlu0 %v876, 124
      %v912 = vpop.permute.xlu0 %911
      %913 = vrot.lane.b32.xlu0 %v877, 124
      %v914 = vpop.permute.xlu0 %913
      %915 = vrot.lane.b32.xlu0 %v878, 124
      %v916 = vpop.permute.xlu0 %915
      %917 = vrot.lane.b32.xlu0 %v879, 124
      %v918 = vpop.permute.xlu0 %917
      %919 = vrot.lane.b32.xlu0 %v880, 124
      %v920 = vpop.permute.xlu0 %919
      %921 = vrot.lane.b32.xlu0 %v881, 124
      %v922 = vpop.permute.xlu0 %921
      %v931 = vadd.f32 %v874, %v908
      %v932 = vadd.f32 %v875, %v910
      %v933 = vadd.f32 %v876, %v912
      %v934 = vadd.f32 %v877, %v914
      %v935 = vadd.f32 %v878, %v916
      %v936 = vadd.f32 %v879, %v918
      %v937 = vadd.f32 %v880, %v920
      %v938 = vadd.f32 %v881, %v922
      %939 = vrot.lane.b32.xlu0 %v874, 120
      %v940 = vpop.permute.xlu0 %939
      %941 = vrot.lane.b32.xlu0 %v875, 120
      %v942 = vpop.permute.xlu0 %941
      %943 = vrot.lane.b32.xlu0 %v876, 120
      %v944 = vpop.permute.xlu0 %943
      %945 = vrot.lane.b32.xlu0 %v877, 120
      %v946 = vpop.permute.xlu0 %945
      %947 = vrot.lane.b32.xlu0 %v878, 120
      %v948 = vpop.permute.xlu0 %947
      %949 = vrot.lane.b32.xlu0 %v879, 120
      %v950 = vpop.permute.xlu0 %949
      %951 = vrot.lane.b32.xlu0 %v880, 120
      %v952 = vpop.permute.xlu0 %951
      %953 = vrot.lane.b32.xlu0 %v881, 120
      %v954 = vpop.permute.xlu0 %953
      %v963 = vadd.f32 %v931, %v940
      %v964 = vadd.f32 %v932, %v942
      %v965 = vadd.f32 %v933, %v944
      %v966 = vadd.f32 %v934, %v946
      %v967 = vadd.f32 %v935, %v948
      %v968 = vadd.f32 %v936, %v950
      %v969 = vadd.f32 %v937, %v952
      %v970 = vadd.f32 %v938, %v954
      %971 = vrot.lane.b32.xlu0 %v874, 116
      %v972 = vpop.permute.xlu0 %971
      %973 = vrot.lane.b32.xlu0 %v875, 116
      %v974 = vpop.permute.xlu0 %973
      %975 = vrot.lane.b32.xlu0 %v876, 116
      %v976 = vpop.permute.xlu0 %975
      %977 = vrot.lane.b32.xlu0 %v877, 116
      %v978 = vpop.permute.xlu0 %977
      %979 = vrot.lane.b32.xlu0 %v878, 116
      %v980 = vpop.permute.xlu0 %979
      %981 = vrot.lane.b32.xlu0 %v879, 116
      %v982 = vpop.permute.xlu0 %981
      %983 = vrot.lane.b32.xlu0 %v880, 116
      %v984 = vpop.permute.xlu0 %983
      %985 = vrot.lane.b32.xlu0 %v881, 116
      %v986 = vpop.permute.xlu0 %985
      %v995 = vadd.f32 %v963, %v972
      %v996 = vadd.f32 %v964, %v974
      %v997 = vadd.f32 %v965, %v976
      %v998 = vadd.f32 %v966, %v978
      %v999 = vadd.f32 %v967, %v980
      %v1000 = vadd.f32 %v968, %v982
      %v1001 = vadd.f32 %v969, %v984
      %v1002 = vadd.f32 %v970, %v986
      %v1003 = vmul.f32 %v995, 0.5
      %v1004 = vmul.f32 %v996, 0.5
      %v1005 = vmul.f32 %v997, 0.5
      %v1006 = vmul.f32 %v998, 0.5
      %v1007 = vmul.f32 %v999, 0.5
      %v1008 = vmul.f32 %v1000, 0.5
      %v1009 = vmul.f32 %v1001, 0.5
      %v1010 = vmul.f32 %v1002, 0.5
      %v1011 = vadd.f32 %v882, %v1003
      %v1012 = vadd.f32 %v883, %v1004
      %v1013 = vadd.f32 %v884, %v1005
      %v1014 = vadd.f32 %v885, %v1006
      %v1015 = vadd.f32 %v886, %v1007
      %v1016 = vadd.f32 %v887, %v1008
      %v1017 = vadd.f32 %v888, %v1009
      %v1018 = vadd.f32 %v889, %v1010
      %1019 = vst.msk [vmem:[%s229] sm:$0xff] %vm447, %v1011
      %1020 = vst.msk [vmem:[%s229 + $0x10] sm:$0xff] %vm447, %v1012
      %1021 = vst.msk [vmem:[%s229 + $0x20] sm:$0xff] %vm447, %v1013
      %1022 = vst.msk [vmem:[%s229 + $0x30] sm:$0xff] %vm447, %v1014
      %1023 = vst.msk [vmem:[%s229 + $0x40] sm:$0xff] %vm447, %v1015
      %1024 = vst.msk [vmem:[%s229 + $0x50] sm:$0xff] %vm447, %v1016
      %1025 = vst.msk [vmem:[%s229 + $0x60] sm:$0xff] %vm447, %v1017
      %1026 = vst.msk [vmem:[%s229 + $0x70] sm:$0xff] %vm447, %v1018
      %v1027 = vsub.f32 %v931, %v940
      %v1028 = vsub.f32 %v932, %v942
      %v1029 = vsub.f32 %v933, %v944
      %v1030 = vsub.f32 %v934, %v946
      %v1031 = vsub.f32 %v935, %v948
      %v1032 = vsub.f32 %v936, %v950
      %v1033 = vsub.f32 %v937, %v952
      %v1034 = vsub.f32 %v938, %v954
      %v1035 = vsub.f32 %v1027, %v972
      %v1036 = vsub.f32 %v1028, %v974
      %v1037 = vsub.f32 %v1029, %v976
      %v1038 = vsub.f32 %v1030, %v978
      %v1039 = vsub.f32 %v1031, %v980
      %v1040 = vsub.f32 %v1032, %v982
      %v1041 = vsub.f32 %v1033, %v984
      %v1042 = vsub.f32 %v1034, %v986
      %v1043 = vmul.f32 %v1035, 0.5
      %v1044 = vmul.f32 %v1036, 0.5
      %v1045 = vmul.f32 %v1037, 0.5
      %v1046 = vmul.f32 %v1038, 0.5
      %v1047 = vmul.f32 %v1039, 0.5
      %v1048 = vmul.f32 %v1040, 0.5
      %v1049 = vmul.f32 %v1041, 0.5
      %v1050 = vmul.f32 %v1042, 0.5
      %1059 = vrot.lane.b32.xlu0 %v1043, 4
      %v1060 = vpop.permute.xlu0 %1059
      %1061 = vrot.lane.b32.xlu0 %v1044, 4
      %v1062 = vpop.permute.xlu0 %1061
      %1063 = vrot.lane.b32.xlu0 %v1045, 4
      %v1064 = vpop.permute.xlu0 %1063
      %1065 = vrot.lane.b32.xlu0 %v1046, 4
      %v1066 = vpop.permute.xlu0 %1065
      %1067 = vrot.lane.b32.xlu0 %v1047, 4
      %v1068 = vpop.permute.xlu0 %1067
      %1069 = vrot.lane.b32.xlu0 %v1048, 4
      %v1070 = vpop.permute.xlu0 %1069
      %1071 = vrot.lane.b32.xlu0 %v1049, 4
      %v1072 = vpop.permute.xlu0 %1071
      %1073 = vrot.lane.b32.xlu0 %v1050, 4
      %v1074 = vpop.permute.xlu0 %1073
      %v1083 = vadd.f32 %v882, %v1060
      %v1084 = vadd.f32 %v883, %v1062
      %v1085 = vadd.f32 %v884, %v1064
      %v1086 = vadd.f32 %v885, %v1066
      %v1087 = vadd.f32 %v886, %v1068
      %v1088 = vadd.f32 %v887, %v1070
      %v1089 = vadd.f32 %v888, %v1072
      %v1090 = vadd.f32 %v889, %v1074
      %1091 = vst.msk [vmem:[%s229] sm:$0xff] %vm488, %v1083
      %1092 = vst.msk [vmem:[%s229 + $0x10] sm:$0xff] %vm488, %v1084
      %1093 = vst.msk [vmem:[%s229 + $0x20] sm:$0xff] %vm488, %v1085
      %1094 = vst.msk [vmem:[%s229 + $0x30] sm:$0xff] %vm488, %v1086
      %1095 = vst.msk [vmem:[%s229 + $0x40] sm:$0xff] %vm488, %v1087
      %1096 = vst.msk [vmem:[%s229 + $0x50] sm:$0xff] %vm488, %v1088
      %1097 = vst.msk [vmem:[%s229 + $0x60] sm:$0xff] %vm488, %v1089
      %1098 = vst.msk [vmem:[%s229 + $0x70] sm:$0xff] %vm488, %v1090
      %v1099 = vsub.f32 %v874, %v908
      %v1100 = vsub.f32 %v875, %v910
      %v1101 = vsub.f32 %v876, %v912
      %v1102 = vsub.f32 %v877, %v914
      %v1103 = vsub.f32 %v878, %v916
      %v1104 = vsub.f32 %v879, %v918
      %v1105 = vsub.f32 %v880, %v920
      %v1106 = vsub.f32 %v881, %v922
      %v1107 = vadd.f32 %v1099, %v940
      %v1108 = vadd.f32 %v1100, %v942
      %v1109 = vadd.f32 %v1101, %v944
      %v1110 = vadd.f32 %v1102, %v946
      %v1111 = vadd.f32 %v1103, %v948
      %v1112 = vadd.f32 %v1104, %v950
      %v1113 = vadd.f32 %v1105, %v952
      %v1114 = vadd.f32 %v1106, %v954
      %v1115 = vsub.f32 %v1107, %v972
      %v1116 = vsub.f32 %v1108, %v974
      %v1117 = vsub.f32 %v1109, %v976
      %v1118 = vsub.f32 %v1110, %v978
      %v1119 = vsub.f32 %v1111, %v980
      %v1120 = vsub.f32 %v1112, %v982
      %v1121 = vsub.f32 %v1113, %v984
      %v1122 = vsub.f32 %v1114, %v986
      %v1123 = vmul.f32 %v1115, 0.5
      %v1124 = vmul.f32 %v1116, 0.5
      %v1125 = vmul.f32 %v1117, 0.5
      %v1126 = vmul.f32 %v1118, 0.5
      %v1127 = vmul.f32 %v1119, 0.5
      %v1128 = vmul.f32 %v1120, 0.5
      %v1129 = vmul.f32 %v1121, 0.5
      %v1130 = vmul.f32 %v1122, 0.5
      %v1131 = vadd.f32 %v891, %v1123
      %v1132 = vadd.f32 %v892, %v1124
      %v1133 = vadd.f32 %v893, %v1125
      %v1134 = vadd.f32 %v894, %v1126
      %v1135 = vadd.f32 %v895, %v1127
      %v1136 = vadd.f32 %v896, %v1128
      %v1137 = vadd.f32 %v897, %v1129
      %v1138 = vadd.f32 %v898, %v1130
      %s1139 = scalar_lea.vmem %s229, 8
      %1140 = vst.msk [vmem:[%s1139] sm:$0xff] %vm447, %v1131
      %1141 = vst.msk [vmem:[%s1139 + $0x10] sm:$0xff] %vm447, %v1132
      %1142 = vst.msk [vmem:[%s1139 + $0x20] sm:$0xff] %vm447, %v1133
      %1143 = vst.msk [vmem:[%s1139 + $0x30] sm:$0xff] %vm447, %v1134
      %1144 = vst.msk [vmem:[%s1139 + $0x40] sm:$0xff] %vm447, %v1135
      %1145 = vst.msk [vmem:[%s1139 + $0x50] sm:$0xff] %vm447, %v1136
      %1146 = vst.msk [vmem:[%s1139 + $0x60] sm:$0xff] %vm447, %v1137
      %1147 = vst.msk [vmem:[%s1139 + $0x70] sm:$0xff] %vm447, %v1138
      %v1148 = vsub.f32 %v1099, %v940
      %v1149 = vsub.f32 %v1100, %v942
      %v1150 = vsub.f32 %v1101, %v944
      %v1151 = vsub.f32 %v1102, %v946
      %v1152 = vsub.f32 %v1103, %v948
      %v1153 = vsub.f32 %v1104, %v950
      %v1154 = vsub.f32 %v1105, %v952
      %v1155 = vsub.f32 %v1106, %v954
      %v1156 = vadd.f32 %v1148, %v972
      %v1157 = vadd.f32 %v1149, %v974
      %v1158 = vadd.f32 %v1150, %v976
      %v1159 = vadd.f32 %v1151, %v978
      %v1160 = vadd.f32 %v1152, %v980
      %v1161 = vadd.f32 %v1153, %v982
      %v1162 = vadd.f32 %v1154, %v984
      %v1163 = vadd.f32 %v1155, %v986
      %v1164 = vmul.f32 %v1156, 0.5
      %v1165 = vmul.f32 %v1157, 0.5
      %v1166 = vmul.f32 %v1158, 0.5
      %v1167 = vmul.f32 %v1159, 0.5
      %v1168 = vmul.f32 %v1160, 0.5
      %v1169 = vmul.f32 %v1161, 0.5
      %v1170 = vmul.f32 %v1162, 0.5
      %v1171 = vmul.f32 %v1163, 0.5
      %1180 = vrot.lane.b32.xlu0 %v1164, 4
      %v1181 = vpop.permute.xlu0 %1180
      %1182 = vrot.lane.b32.xlu0 %v1165, 4
      %v1183 = vpop.permute.xlu0 %1182
      %1184 = vrot.lane.b32.xlu0 %v1166, 4
      %v1185 = vpop.permute.xlu0 %1184
      %1186 = vrot.lane.b32.xlu0 %v1167, 4
      %v1187 = vpop.permute.xlu0 %1186
      %1188 = vrot.lane.b32.xlu0 %v1168, 4
      %v1189 = vpop.permute.xlu0 %1188
      %1190 = vrot.lane.b32.xlu0 %v1169, 4
      %v1191 = vpop.permute.xlu0 %1190
      %1192 = vrot.lane.b32.xlu0 %v1170, 4
      %v1193 = vpop.permute.xlu0 %1192
      %1194 = vrot.lane.b32.xlu0 %v1171, 4
      %v1195 = vpop.permute.xlu0 %1194
      %v1204 = vadd.f32 %v891, %v1181
      %v1205 = vadd.f32 %v892, %v1183
      %v1206 = vadd.f32 %v893, %v1185
      %v1207 = vadd.f32 %v894, %v1187
      %v1208 = vadd.f32 %v895, %v1189
      %v1209 = vadd.f32 %v896, %v1191
      %v1210 = vadd.f32 %v897, %v1193
      %v1211 = vadd.f32 %v898, %v1195
      %1212 = vst.msk [vmem:[%s1139] sm:$0xff] %vm488, %v1204
      %1213 = vst.msk [vmem:[%s1139 + $0x10] sm:$0xff] %vm488, %v1205
      %1214 = vst.msk [vmem:[%s1139 + $0x20] sm:$0xff] %vm488, %v1206
      %1215 = vst.msk [vmem:[%s1139 + $0x30] sm:$0xff] %vm488, %v1207
      %1216 = vst.msk [vmem:[%s1139 + $0x40] sm:$0xff] %vm488, %v1208
      %1217 = vst.msk [vmem:[%s1139 + $0x50] sm:$0xff] %vm488, %v1209
      %1218 = vst.msk [vmem:[%s1139 + $0x60] sm:$0xff] %vm488, %v1210
      %1219 = vst.msk [vmem:[%s1139 + $0x70] sm:$0xff] %vm488, %v1211
      %s1220 = smul.u32 8, %s15
      %p1221 = scmp.lt.s32.totalorder %s1220, 15
      %s1222 = scalar_select %p1221, %s1220, 15
      %s1223 = smul.addr %s1222, 2
      %s1224 = smul.addr %s1223, 8
      %s1225 = scalar_lea.vmem %s4, %s1224
      // Predicated region
      $region37: #{_lambda_.8} parent=35 // pred_check
        %p1226 = pneg %p127
      $region38: #{_lambda_.8} parent=35 // pred_check_branch
        %1228 = sbr.rel (%p1226) target = $region40
      $region39: #{_lambda_.8} parent=35 // pred_region
        %s1229 = smul.u32 8, %s15
      $region40: #{_lambda_.8} parent=35 // pred_fallthru
        _
    $region36: #{_lambda_.8} parent=5 // pred_fallthru
      _
    %p1230 = scmp.le.s32.totalorder 2, %s10
    // Predicated region
    $region41: #{_lambda_.8} parent=5 // pred_check
      %p1231 = pneg %p1230
    $region42: #{_lambda_.8} parent=5 // pred_check_branch
      %1233 = sbr.rel (%p1231) target = $region44
    $region43: #{_lambda_.8} parent=5 // pred_region
      %s1234 = ssub.s32 %s10, 2
      // Predicated region
      $region45: #{_lambda_.8} parent=43 // pred_check
        %p1235 = pneg %p133
      $region46: #{_lambda_.8} parent=43 // pred_check_branch
        %1237 = sbr.rel (%p1235) target = $region48
      $region47: #{_lambda_.8} parent=43 // pred_region
        %s1238 = smul.u32 8, %s16
        %p1239 = scmp.lt.s32.totalorder %s1238, 15
        %s1240 = scalar_select %p1239, %s1238, 15
        %s1241 = smul.addr %s1240, 2
        %s1242 = smul.addr %s1241, 8
        %s1243 = scalar_lea.vmem %s4, %s1242
      $region48: #{_lambda_.8} parent=43 // pred_fallthru
        _
    $region44: #{_lambda_.8} parent=5 // pred_fallthru
      _
  $region6: #{_lambda_.8} parent=0 // loop_footer
    %s14 = sadd.s32 1, %s10
  $region7: #{_lambda_.8} parent=0 // loop_footer_branch
    %9 = sbr.rel target = $region3
  $region8: #{_lambda_.8} parent=0 // loop_exit
    _

// kernel: _lambda_.7
$region0: #{_lambda_.7}
  #allocation0 [shape = 'u32[]', space=smem, size = 0x4, offset = 0x4, fixed_abs, tag = 'smem constant byte address 0x4 - core index']
  #allocation1 [shape = 'u32[144,128]{1,0:T(1,128)}', space=vmem, size = 0x12000, scoped, tag = 'internal scratch']
  #allocation2 [shape = 'f32[18,18,4]{2,1,0:T(8,128)}', space=vmem, size = 0x36000, scoped, tag = 'scratch operand']
  %s0 = inlined_call_operand.vmem [shape: f32[2,16,16,4], index: 0, kind: input, shape index: {}]
  %s1 = inlined_call_operand.vmem [shape: f32[9,1,1,4], index: 1, kind: input, shape index: {}]
  %s2 = inlined_call_operand.vmem [shape: f32[1,1,4], index: 2, kind: input, shape index: {}]
  %s3 = inlined_call_operand.vmem [shape: f32[1,1,4], index: 3, kind: input, shape index: {}]
  %s4 = inlined_call_operand.vmem [shape: f32[2,16,16,4], index: 4, kind: output, shape index: {}]
  %s5 = sld [smem:[#allocation0]]
  $region49: #{_lambda_.7} parent=0
    _
  %s7 = ssub.s32 1, %s5
  %s8 = scalar_select 0, %s7, %s5
  loop: start=0, step=1, limit=4
  $region2: #{_lambda_.7} parent=0 // loop_pre_header
    _
  $region3: #{_lambda_.7} parent=0 // loop_header
    %s10 = sphi 0, %s14
    %p11 = scmp.ge.s32.totalorder %s10, 4
    %s20 = sphi 0, %s22
    %s23 = sphi 0, %s20
    %s24 = sphi 0, %s23
    %s40 = sphi 0, %s24
    %s44 = sphi 0, %s44
    %s46 = sphi 0, %s44
    %s47 = sphi 0, %s46
    %s61 = sphi 0, %s47
    %s65 = sphi 0, %s65
    %s67 = sphi 0, %s65
    %s68 = sphi 0, %s67
    %s82 = sphi 0, %s68
    %s86 = sphi 0, %s86
    %s88 = sphi 0, %s86
    %s89 = sphi 0, %s88
    %s103 = sphi 0, %s89
    %s109 = sphi 0, %s111
    %s112 = sphi 0, %s109
    %s113 = sphi 0, %s112
    %s129 = sphi 0, %s113
  $region4: #{_lambda_.7} parent=0 // loop_header_branch
    %13 = sbr.rel (%p11) target = $region8
  $region5: #{_lambda_.7} parent=0 // loop_body
    %s15 = ssub.s32 %s10, 1
    %s16 = ssub.s32 %s10, 2
    %s17 = sadd.s32 %s10, 1
    %s18 = ssub.s32 %s10, %s17
    %p19 = scmp.eq.s32.totalorder %s18, 0
    %s21 = sadd.s32 %s20, 1
    %s22 = scalar_select %p19, %s20, %s21
    %p25 = pneg %p19
    %p26 = scmp.eq.s32.totalorder %s10, 1
    %p27 = por %p25, %p26
    %p28 = scmp.ne.s32.totalorder %s20, %s23
    %p29 = scmp.eq.s32.totalorder %s10, 0
    %p30 = por %p28, %p29
    %p31 = scmp.ne.s32.totalorder %s20, %s23
    %p32 = scmp.eq.s32.totalorder %s15, 1
    %p33 = por %p31, %p32
    %p34 = scmp.ne.s32.totalorder %s23, %s24
    %p35 = scmp.eq.s32.totalorder %s15, 0
    %p36 = por %p34, %p35
    %p37 = scmp.ne.s32.totalorder %s23, %s24
    %p38 = scmp.eq.s32.totalorder %s16, 1
    %p39 = por %p37, %p38
    %p41 = scmp.ne.s32.totalorder %s24, %s40
    %p42 = scmp.eq.s32.totalorder %s16, 0
    %p43 = por %p41, %p42
    %s45 = sadd.s32 %s44, 1
    %p48 = scmp.eq.s32.totalorder %s10, 1
    %p49 = scmp.ne.s32.totalorder %s44, %s46
    %p50 = scmp.eq.s32.totalorder %s10, 0
    %p51 = por %p49, %p50
    %p52 = scmp.ne.s32.totalorder %s44, %s46
    %p53 = scmp.eq.s32.totalorder %s15, 1
    %p54 = por %p52, %p53
    %p55 = scmp.ne.s32.totalorder %s46, %s47
    %p56 = scmp.eq.s32.totalorder %s15, 0
    %p57 = por %p55, %p56
    %p58 = scmp.ne.s32.totalorder %s46, %s47
    %p59 = scmp.eq.s32.totalorder %s16, 1
    %p60 = por %p58, %p59
    %p62 = scmp.ne.s32.totalorder %s47, %s61
    %p63 = scmp.eq.s32.totalorder %s16, 0
    %p64 = por %p62, %p63
    %s66 = sadd.s32 %s65, 1
    %p69 = scmp.eq.s32.totalorder %s10, 1
    %p70 = scmp.ne.s32.totalorder %s65, %s67
    %p71 = scmp.eq.s32.totalorder %s10, 0
    %p72 = por %p70, %p71
    %p73 = scmp.ne.s32.totalorder %s65, %s67
    %p74 = scmp.eq.s32.totalorder %s15, 1
    %p75 = por %p73, %p74
    %p76 = scmp.ne.s32.totalorder %s67, %s68
    %p77 = scmp.eq.s32.totalorder %s15, 0
    %p78 = por %p76, %p77
    %p79 = scmp.ne.s32.totalorder %s67, %s68
    %p80 = scmp.eq.s32.totalorder %s16, 1
    %p81 = por %p79, %p80
    %p83 = scmp.ne.s32.totalorder %s68, %s82
    %p84 = scmp.eq.s32.totalorder %s16, 0
    %p85 = por %p83, %p84
    %s87 = sadd.s32 %s86, 1
    %p90 = scmp.eq.s32.totalorder %s10, 1
    %p91 = scmp.ne.s32.totalorder %s86, %s88
    %p92 = scmp.eq.s32.totalorder %s10, 0
    %p93 = por %p91, %p92
    %p94 = scmp.ne.s32.totalorder %s86, %s88
    %p95 = scmp.eq.s32.totalorder %s15, 1
    %p96 = por %p94, %p95
    %p97 = scmp.ne.s32.totalorder %s88, %s89
    %p98 = scmp.eq.s32.totalorder %s15, 0
    %p99 = por %p97, %p98
    %p100 = scmp.ne.s32.totalorder %s88, %s89
    %p101 = scmp.eq.s32.totalorder %s16, 1
    %p102 = por %p100, %p101
    %p104 = scmp.ne.s32.totalorder %s89, %s103
    %p105 = scmp.eq.s32.totalorder %s16, 0
    %p106 = por %p104, %p105
    %s107 = ssub.s32 %s10, %s17
    %p108 = scmp.eq.s32.totalorder %s107, 0
    %s110 = sadd.s32 %s109, 1
    %s111 = scalar_select %p108, %s109, %s110
    %p114 = pneg %p108
    %p115 = scmp.eq.s32.totalorder %s10, 1
    %p116 = por %p114, %p115
    %p117 = scmp.ne.s32.totalorder %s109, %s112
    %p118 = scmp.eq.s32.totalorder %s10, 0
    %p119 = por %p117, %p118
    %p120 = scmp.ne.s32.totalorder %s109, %s112
    %p121 = scmp.eq.s32.totalorder %s15, 1
    %p122 = por %p120, %p121
    %p123 = scmp.ne.s32.totalorder %s112, %s113
    %p124 = scmp.eq.s32.totalorder %s15, 0
    %p125 = por %p123, %p124
    %p126 = scmp.ne.s32.totalorder %s112, %s113
    %p127 = scmp.eq.s32.totalorder %s16, 1
    %p128 = por %p126, %p127
    %p130 = scmp.ne.s32.totalorder %s113, %s129
    %p131 = scmp.eq.s32.totalorder %s16, 0
    %p132 = por %p130, %p131
    %p133 = scmp.le.s32.totalorder 1, %s10
    %p134 = scmp.lt.s32.totalorder %s10, 3
    %p135 = pnand %p133, %p134
    %p136 = pneg %p135
    // Predicated region
    $region9: #{_lambda_.7} parent=5 // pred_check
      _
    $region10: #{_lambda_.7} parent=5 // pred_check_branch
      %138 = sbr.rel (%p135) target = $region12
    $region11: #{_lambda_.7} parent=5 // pred_region
      %s139 = ssub.s32 %s10, 1
      // Predicated region
      $region13: #{_lambda_.7} parent=11 // pred_check
        %p140 = pneg %p57
      $region14: #{_lambda_.7} parent=11 // pred_check_branch
        %142 = sbr.rel (%p140) target = $region16
      $region15: #{_lambda_.7} parent=11 // pred_region
        _
      $region16: #{_lambda_.7} parent=11 // pred_fallthru
        _
      // Predicated region
      $region17: #{_lambda_.7} parent=11 // pred_check
        %p143 = pneg %p78
      $region18: #{_lambda_.7} parent=11 // pred_check_branch
        %145 = sbr.rel (%p143) target = $region20
      $region19: #{_lambda_.7} parent=11 // pred_region
        _
      $region20: #{_lambda_.7} parent=11 // pred_fallthru
        _
      // Predicated region
      $region21: #{_lambda_.7} parent=11 // pred_check
        %p146 = pneg %p99
      $region22: #{_lambda_.7} parent=11 // pred_check_branch
        %148 = sbr.rel (%p146) target = $region24
      $region23: #{_lambda_.7} parent=11 // pred_region
        _
      $region24: #{_lambda_.7} parent=11 // pred_fallthru
        _
    $region12: #{_lambda_.7} parent=5 // pred_fallthru
      _
    %p149 = scmp.lt.s32.totalorder %s10, 2
    // Predicated region
    $region25: #{_lambda_.7} parent=5 // pred_check
      %p150 = pneg %p149
    $region26: #{_lambda_.7} parent=5 // pred_check_branch
      %152 = sbr.rel (%p150) target = $region28
    $region27: #{_lambda_.7} parent=5 // pred_region
      // Predicated region
      $region29: #{_lambda_.7} parent=27 // pred_check
        %p153 = pneg %p30
      $region30: #{_lambda_.7} parent=27 // pred_check_branch
        %155 = sbr.rel (%p153) target = $region32
      $region31: #{_lambda_.7} parent=27 // pred_region
        %p156 = scmp.lt.s32.totalorder %s10, 1
        %s157 = scalar_select %p156, %s10, 1
        %s158 = smul.addr %s157, 32
        %s159 = smul.addr %s158, 8
        %s160 = scalar_lea.vmem %s0, %s159
      $region32: #{_lambda_.7} parent=27 // pred_fallthru
        _
    $region28: #{_lambda_.7} parent=5 // pred_fallthru
      _
    %p161 = scmp.le.s32.totalorder 1, %s10
    %p162 = scmp.lt.s32.totalorder %s10, 3
    %p163 = pnand %p161, %p162
    %p164 = pneg %p163
    // Predicated region
    $region33: #{_lambda_.7} parent=5 // pred_check
      _
    $region34: #{_lambda_.7} parent=5 // pred_check_branch
      %166 = sbr.rel (%p163) target = $region36
    $region35: #{_lambda_.7} parent=5 // pred_region
      %s167 = ssub.s32 %s10, 1
      %p168 = scmp.lt.s32.totalorder %s15, 1
      %s169 = scalar_select %p168, %s15, 1
      %s170 = smul.addr %s169, 32
      %s171 = smul.addr %s170, 8
      %s172 = scalar_lea.vmem %s0, %s171
      %p173 = pneg %p36
      %p174 = pneg %p33
      %p175 = pneg %p57
      %p176 = pneg %p54
      %p177 = pneg %p78
      %p178 = pneg %p75
      %p179 = pneg %p99
      %p180 = pneg %p96
      %p181 = pneg %p125
      %p182 = pneg %p122
      %p183 = scmp.lt.s32.totalorder %s15, 1
      %s184 = scalar_select %p183, %s15, 1
      %s185 = smul.addr %s184, 32
      %s186 = smul.addr %s185, 8
      %s187 = scalar_lea.vmem %s4, %s186
      %p188 = scmp.lt.s32.totalorder %s15, 1
      %s189 = scalar_select %p188, %s15, 1
      %s190 = smul.addr %s189, 32
      %s191 = smul.addr %s190, 8
      %s192 = scalar_lea.vmem %s0, %s191
      %p193 = scmp.lt.s32.totalorder %s15, 1
      %s194 = scalar_select %p193, %s15, 1
      %s195 = smul.addr %s194, 32
      %s196 = smul.addr %s195, 8
      %s197 = scalar_lea.vmem %s4, %s196
      %vm198 = vcmask 31744
      %199 = vst.msk [vmem:[#allocation2] sm:$0xff] %vm198, 0.0
      %200 = vst.msk [vmem:[#allocation2 + $0x8] sm:$0xff] %vm198, 0.0
      %vm201 = vcmask 25600
      %202 = vst.msk [vmem:[#allocation2 + $0x10] sm:$0x3] %vm201, 0.0
      %203 = vst.msk [vmem:[#allocation2 + $0x18] sm:$0xff] %vm198, 0.0
      %204 = vst.msk [vmem:[#allocation2 + $0x20] sm:$0xff] %vm198, 0.0
      %205 = vst.msk [vmem:[#allocation2 + $0x28] sm:$0x3] %vm201, 0.0
      %206 = vst.msk [vmem:[#allocation2 + $0x30] sm:$0xff] %vm198, 0.0
      %207 = vst.msk [vmem:[#allocation2 + $0x38] sm:$0xff] %vm198, 0.0
      %208 = vst.msk [vmem:[#allocation2 + $0x40] sm:$0x3] %vm201, 0.0
      %209 = vst.msk [vmem:[#allocation2 + $0x48] sm:$0xff] %vm198, 0.0
      %210 = vst.msk [vmem:[#allocation2 + $0x50] sm:$0xff] %vm198, 0.0
      %211 = vst.msk [vmem:[#allocation2 + $0x58] sm:$0x3] %vm201, 0.0
      %212 = vst.msk [vmem:[#allocation2 + $0x60] sm:$0xff] %vm198, 0.0
      %213 = vst.msk [vmem:[#allocation2 + $0x68] sm:$0xff] %vm198, 0.0
      %214 = vst.msk [vmem:[#allocation2 + $0x70] sm:$0x3] %vm201, 0.0
      %215 = vst.msk [vmem:[#allocation2 + $0x78] sm:$0xff] %vm198, 0.0
      %216 = vst.msk [vmem:[#allocation2 + $0x80] sm:$0xff] %vm198, 0.0
      %217 = vst.msk [vmem:[#allocation2 + $0x88] sm:$0x3] %vm201, 0.0
      %218 = vst.msk [vmem:[#allocation2 + $0x90] sm:$0xff] %vm198, 0.0
      %219 = vst.msk [vmem:[#allocation2 + $0x98] sm:$0xff] %vm198, 0.0
      %220 = vst.msk [vmem:[#allocation2 + $0xa0] sm:$0x3] %vm201, 0.0
      %221 = vst.msk [vmem:[#allocation2 + $0xa8] sm:$0xff] %vm198, 0.0
      %222 = vst.msk [vmem:[#allocation2 + $0xb0] sm:$0xff] %vm198, 0.0
      %223 = vst.msk [vmem:[#allocation2 + $0xb8] sm:$0x3] %vm201, 0.0
      %224 = vst.msk [vmem:[#allocation2 + $0xc0] sm:$0xff] %vm198, 0.0
      %225 = vst.msk [vmem:[#allocation2 + $0xc8] sm:$0xff] %vm198, 0.0
      %226 = vst.msk [vmem:[#allocation2 + $0xd0] sm:$0x3] %vm201, 0.0
      %227 = vst.msk [vmem:[#allocation2 + $0xd8] sm:$0xff] %vm198, 0.0
      %228 = vst.msk [vmem:[#allocation2 + $0xe0] sm:$0xff] %vm198, 0.0
      %229 = vst.msk [vmem:[#allocation2 + $0xe8] sm:$0x3] %vm201, 0.0
      %230 = vst.msk [vmem:[#allocation2 + $0xf0] sm:$0xff] %vm198, 0.0
      %231 = vst.msk [vmem:[#allocation2 + $0xf8] sm:$0xff] %vm198, 0.0
      %232 = vst.msk [vmem:[#allocation2 + $0x100] sm:$0x3] %vm201, 0.0
      %233 = vst.msk [vmem:[#allocation2 + $0x108] sm:$0xff] %vm198, 0.0
      %234 = vst.msk [vmem:[#allocation2 + $0x110] sm:$0xff] %vm198, 0.0
      %235 = vst.msk [vmem:[#allocation2 + $0x118] sm:$0x3] %vm201, 0.0
      %236 = vst.msk [vmem:[#allocation2 + $0x120] sm:$0xff] %vm198, 0.0
      %237 = vst.msk [vmem:[#allocation2 + $0x128] sm:$0xff] %vm198, 0.0
      %238 = vst.msk [vmem:[#allocation2 + $0x130] sm:$0x3] %vm201, 0.0
      %239 = vst.msk [vmem:[#allocation2 + $0x138] sm:$0xff] %vm198, 0.0
      %240 = vst.msk [vmem:[#allocation2 + $0x140] sm:$0xff] %vm198, 0.0
      %241 = vst.msk [vmem:[#allocation2 + $0x148] sm:$0x3] %vm201, 0.0
      %242 = vst.msk [vmem:[#allocation2 + $0x150] sm:$0xff] %vm198, 0.0
      %243 = vst.msk [vmem:[#allocation2 + $0x158] sm:$0xff] %vm198, 0.0
      %244 = vst.msk [vmem:[#allocation2 + $0x160] sm:$0x3] %vm201, 0.0
      %245 = vst.msk [vmem:[#allocation2 + $0x168] sm:$0xff] %vm198, 0.0
      %246 = vst.msk [vmem:[#allocation2 + $0x170] sm:$0xff] %vm198, 0.0
      %247 = vst.msk [vmem:[#allocation2 + $0x178] sm:$0x3] %vm201, 0.0
      %248 = vst.msk [vmem:[#allocation2 + $0x180] sm:$0xff] %vm198, 0.0
      %249 = vst.msk [vmem:[#allocation2 + $0x188] sm:$0xff] %vm198, 0.0
      %250 = vst.msk [vmem:[#allocation2 + $0x190] sm:$0x3] %vm201, 0.0
      %251 = vst.msk [vmem:[#allocation2 + $0x198] sm:$0xff] %vm198, 0.0
      %252 = vst.msk [vmem:[#allocation2 + $0x1a0] sm:$0xff] %vm198, 0.0
      %253 = vst.msk [vmem:[#allocation2 + $0x1a8] sm:$0x3] %vm201, 0.0
      %v254 = vld [vmem:[%s192] sm:$0xff]
      %v255 = vld [vmem:[%s192 + $0x8] sm:$0xff]
      %v256 = vld [vmem:[%s192 + $0x10] sm:$0xff]
      %v257 = vld [vmem:[%s192 + $0x18] sm:$0xff]
      %v258 = vld [vmem:[%s192 + $0x20] sm:$0xff]
      %v259 = vld [vmem:[%s192 + $0x28] sm:$0xff]
      %v260 = vld [vmem:[%s192 + $0x30] sm:$0xff]
      %v261 = vld [vmem:[%s192 + $0x38] sm:$0xff]
      %v262 = vld [vmem:[%s192 + $0x40] sm:$0xff]
      %v263 = vld [vmem:[%s192 + $0x48] sm:$0xff]
      %v264 = vld [vmem:[%s192 + $0x50] sm:$0xff]
      %v265 = vld [vmem:[%s192 + $0x58] sm:$0xff]
      %v266 = vld [vmem:[%s192 + $0x60] sm:$0xff]
      %v267 = vld [vmem:[%s192 + $0x68] sm:$0xff]
      %v268 = vld [vmem:[%s192 + $0x70] sm:$0xff]
      %v269 = vld [vmem:[%s192 + $0x78] sm:$0xff]
      %v270 = vld [vmem:[%s192 + $0x80] sm:$0xff]
      %v271 = vld [vmem:[%s192 + $0x88] sm:$0xff]
      %v272 = vld [vmem:[%s192 + $0x90] sm:$0xff]
      %v273 = vld [vmem:[%s192 + $0x98] sm:$0xff]
      %v274 = vld [vmem:[%s192 + $0xa0] sm:$0xff]
      %v275 = vld [vmem:[%s192 + $0xa8] sm:$0xff]
      %v276 = vld [vmem:[%s192 + $0xb0] sm:$0xff]
      %v277 = vld [vmem:[%s192 + $0xb8] sm:$0xff]
      %v278 = vld [vmem:[%s192 + $0xc0] sm:$0xff]
      %v279 = vld [vmem:[%s192 + $0xc8] sm:$0xff]
      %v280 = vld [vmem:[%s192 + $0xd0] sm:$0xff]
      %v281 = vld [vmem:[%s192 + $0xd8] sm:$0xff]
      %v282 = vld [vmem:[%s192 + $0xe0] sm:$0xff]
      %v283 = vld [vmem:[%s192 + $0xe8] sm:$0xff]
      %v284 = vld [vmem:[%s192 + $0xf0] sm:$0xff]
      %v285 = vld [vmem:[%s192 + $0xf8] sm:$0xff]
      %s286 = scalar_lea.vmem [#allocation2], 24
      %287 = vst.msk [vmem:[%s286 + $0x1] sm:$0xff] %vm198, %v254
      %288 = vst.msk [vmem:[%s286 + $0x9] sm:$0xff] %vm198, %v255
      %289 = vst.msk [vmem:[%s286 + $0x19] sm:$0xff] %vm198, %v256
      %290 = vst.msk [vmem:[%s286 + $0x21] sm:$0xff] %vm198, %v257
      %291 = vst.msk [vmem:[%s286 + $0x31] sm:$0xff] %vm198, %v258
      %292 = vst.msk [vmem:[%s286 + $0x39] sm:$0xff] %vm198, %v259
      %293 = vst.msk [vmem:[%s286 + $0x49] sm:$0xff] %vm198, %v260
      %294 = vst.msk [vmem:[%s286 + $0x51] sm:$0xff] %vm198, %v261
      %295 = vst.msk [vmem:[%s286 + $0x61] sm:$0xff] %vm198, %v262
      %296 = vst.msk [vmem:[%s286 + $0x69] sm:$0xff] %vm198, %v263
      %297 = vst.msk [vmem:[%s286 + $0x79] sm:$0xff] %vm198, %v264
      %298 = vst.msk [vmem:[%s286 + $0x81] sm:$0xff] %vm198, %v265
      %299 = vst.msk [vmem:[%s286 + $0x91] sm:$0xff] %vm198, %v266
      %300 = vst.msk [vmem:[%s286 + $0x99] sm:$0xff] %vm198, %v267
      %301 = vst.msk [vmem:[%s286 + $0xa9] sm:$0xff] %vm198, %v268
      %302 = vst.msk [vmem:[%s286 + $0xb1] sm:$0xff] %vm198, %v269
      %303 = vst.msk [vmem:[%s286 + $0xc1] sm:$0xff] %vm198, %v270
      %304 = vst.msk [vmem:[%s286 + $0xc9] sm:$0xff] %vm198, %v271
      %305 = vst.msk [vmem:[%s286 + $0xd9] sm:$0xff] %vm198, %v272
      %306 = vst.msk [vmem:[%s286 + $0xe1] sm:$0xff] %vm198, %v273
      %307 = vst.msk [vmem:[%s286 + $0xf1] sm:$0xff] %vm198, %v274
      %308 = vst.msk [vmem:[%s286 + $0xf9] sm:$0xff] %vm198, %v275
      %309 = vst.msk [vmem:[%s286 + $0x109] sm:$0xff] %vm198, %v276
      %310 = vst.msk [vmem:[%s286 + $0x111] sm:$0xff] %vm198, %v277
      %311 = vst.msk [vmem:[%s286 + $0x121] sm:$0xff] %vm198, %v278
      %312 = vst.msk [vmem:[%s286 + $0x129] sm:$0xff] %vm198, %v279
      %313 = vst.msk [vmem:[%s286 + $0x139] sm:$0xff] %vm198, %v280
      %314 = vst.msk [vmem:[%s286 + $0x141] sm:$0xff] %vm198, %v281
      %315 = vst.msk [vmem:[%s286 + $0x151] sm:$0xff] %vm198, %v282
      %316 = vst.msk [vmem:[%s286 + $0x159] sm:$0xff] %vm198, %v283
      %317 = vst.msk [vmem:[%s286 + $0x169] sm:$0xff] %vm198, %v284
      %318 = vst.msk [vmem:[%s286 + $0x171] sm:$0xff] %vm198, %v285
      %v319 = vld [vmem:[#allocation2] sm:$0xff]
      %v320 = vld [vmem:[#allocation2 + $0x8] sm:$0xff]
      %v321 = vld [vmem:[#allocation2 + $0x18] sm:$0xff]
      %v322 = vld [vmem:[#allocation2 + $0x20] sm:$0xff]
      %v323 = vld [vmem:[#allocation2 + $0x30] sm:$0xff]
      %v324 = vld [vmem:[#allocation2 + $0x38] sm:$0xff]
      %v325 = vld [vmem:[#allocation2 + $0x48] sm:$0xff]
      %v326 = vld [vmem:[#allocation2 + $0x50] sm:$0xff]
      %v327 = vld [vmem:[#allocation2 + $0x60] sm:$0xff]
      %v328 = vld [vmem:[#allocation2 + $0x68] sm:$0xff]
      %v329 = vld [vmem:[#allocation2 + $0x78] sm:$0xff]
      %v330 = vld [vmem:[#allocation2 + $0x80] sm:$0xff]
      %v331 = vld [vmem:[#allocation2 + $0x90] sm:$0xff]
      %v332 = vld [vmem:[#allocation2 + $0x98] sm:$0xff]
      %v333 = vld [vmem:[#allocation2 + $0xa8] sm:$0xff]
      %v334 = vld [vmem:[#allocation2 + $0xb0] sm:$0xff]
      %v335 = vld [vmem:[#allocation2 + $0xc0] sm:$0xff]
      %v336 = vld [vmem:[#allocation2 + $0xc8] sm:$0xff]
      %v337 = vld [vmem:[#allocation2 + $0xd8] sm:$0xff]
      %v338 = vld [vmem:[#allocation2 + $0xe0] sm:$0xff]
      %v339 = vld [vmem:[#allocation2 + $0xf0] sm:$0xff]
      %v340 = vld [vmem:[#allocation2 + $0xf8] sm:$0xff]
      %v341 = vld [vmem:[#allocation2 + $0x108] sm:$0xff]
      %v342 = vld [vmem:[#allocation2 + $0x110] sm:$0xff]
      %v343 = vld [vmem:[#allocation2 + $0x120] sm:$0xff]
      %v344 = vld [vmem:[#allocation2 + $0x128] sm:$0xff]
      %v345 = vld [vmem:[#allocation2 + $0x138] sm:$0xff]
      %v346 = vld [vmem:[#allocation2 + $0x140] sm:$0xff]
      %v347 = vld [vmem:[#allocation2 + $0x150] sm:$0xff]
      %v348 = vld [vmem:[#allocation2 + $0x158] sm:$0xff]
      %v349 = vld [vmem:[#allocation2 + $0x168] sm:$0xff]
      %v350 = vld [vmem:[#allocation2 + $0x170] sm:$0xff]
      %v351 = vld [vmem:[%s1] sm:$0x1]
      %v353 = vlaneseq
      %v354 = vshrl.u32 %v353, 7
      %v355 = vsub.s32 0, %v354
      %v356 = vrot.slane %v351, %v355
      %v358 = vmul.f32 %v319, %v356
      %v359 = vmul.f32 %v320, %v356
      %v360 = vmul.f32 %v321, %v356
      %v361 = vmul.f32 %v322, %v356
      %v362 = vmul.f32 %v323, %v356
      %v363 = vmul.f32 %v324, %v356
      %v364 = vmul.f32 %v325, %v356
      %v365 = vmul.f32 %v326, %v356
      %v366 = vmul.f32 %v327, %v356
      %v367 = vmul.f32 %v328, %v356
      %v368 = vmul.f32 %v329, %v356
      %v369 = vmul.f32 %v330, %v356
      %v370 = vmul.f32 %v331, %v356
      %v371 = vmul.f32 %v332, %v356
      %v372 = vmul.f32 %v333, %v356
      %v373 = vmul.f32 %v334, %v356
      %v374 = vmul.f32 %v335, %v356
      %v375 = vmul.f32 %v336, %v356
      %v376 = vmul.f32 %v337, %v356
      %v377 = vmul.f32 %v338, %v356
      %v378 = vmul.f32 %v339, %v356
      %v379 = vmul.f32 %v340, %v356
      %v380 = vmul.f32 %v341, %v356
      %v381 = vmul.f32 %v342, %v356
      %v382 = vmul.f32 %v343, %v356
      %v383 = vmul.f32 %v344, %v356
      %v384 = vmul.f32 %v345, %v356
      %v385 = vmul.f32 %v346, %v356
      %v386 = vmul.f32 %v347, %v356
      %v387 = vmul.f32 %v348, %v356
      %v388 = vmul.f32 %v349, %v356
      %v389 = vmul.f32 %v350, %v356
      %v390 = vadd.f32 %v358, 0.0
      %v391 = vadd.f32 %v359, 0.0
      %v392 = vadd.f32 %v360, 0.0
      %v393 = vadd.f32 %v361, 0.0
      %v394 = vadd.f32 %v362, 0.0
      %v395 = vadd.f32 %v363, 0.0
      %v396 = vadd.f32 %v364, 0.0
      %v397 = vadd.f32 %v365, 0.0
      %v398 = vadd.f32 %v366, 0.0
      %v399 = vadd.f32 %v367, 0.0
      %v400 = vadd.f32 %v368, 0.0
      %v401 = vadd.f32 %v369, 0.0
      %v402 = vadd.f32 %v370, 0.0
      %v403 = vadd.f32 %v371, 0.0
      %v404 = vadd.f32 %v372, 0.0
      %v405 = vadd.f32 %v373, 0.0
      %v406 = vadd.f32 %v374, 0.0
      %v407 = vadd.f32 %v375, 0.0
      %v408 = vadd.f32 %v376, 0.0
      %v409 = vadd.f32 %v377, 0.0
      %v410 = vadd.f32 %v378, 0.0
      %v411 = vadd.f32 %v379, 0.0
      %v412 = vadd.f32 %v380, 0.0
      %v413 = vadd.f32 %v381, 0.0
      %v414 = vadd.f32 %v382, 0.0
      %v415 = vadd.f32 %v383, 0.0
      %v416 = vadd.f32 %v384, 0.0
      %v417 = vadd.f32 %v385, 0.0
      %v418 = vadd.f32 %v386, 0.0
      %v419 = vadd.f32 %v387, 0.0
      %v420 = vadd.f32 %v388, 0.0
      %v421 = vadd.f32 %v389, 0.0
      %v422 = vld [vmem:[#allocation2 + $0x1] sm:$0xff]
      %v423 = vld [vmem:[#allocation2 + $0x9] sm:$0xff]
      %v424 = vld [vmem:[#allocation2 + $0x19] sm:$0xff]
      %v425 = vld [vmem:[#allocation2 + $0x21] sm:$0xff]
      %v426 = vld [vmem:[#allocation2 + $0x31] sm:$0xff]
      %v427 = vld [vmem:[#allocation2 + $0x39] sm:$0xff]
      %v428 = vld [vmem:[#allocation2 + $0x49] sm:$0xff]
      %v429 = vld [vmem:[#allocation2 + $0x51] sm:$0xff]
      %v430 = vld [vmem:[#allocation2 + $0x61] sm:$0xff]
      %v431 = vld [vmem:[#allocation2 + $0x69] sm:$0xff]
      %v432 = vld [vmem:[#allocation2 + $0x79] sm:$0xff]
      %v433 = vld [vmem:[#allocation2 + $0x81] sm:$0xff]
      %v434 = vld [vmem:[#allocation2 + $0x91] sm:$0xff]
      %v435 = vld [vmem:[#allocation2 + $0x99] sm:$0xff]
      %v436 = vld [vmem:[#allocation2 + $0xa9] sm:$0xff]
      %v437 = vld [vmem:[#allocation2 + $0xb1] sm:$0xff]
      %v438 = vld [vmem:[#allocation2 + $0xc1] sm:$0xff]
      %v439 = vld [vmem:[#allocation2 + $0xc9] sm:$0xff]
      %v440 = vld [vmem:[#allocation2 + $0xd9] sm:$0xff]
      %v441 = vld [vmem:[#allocation2 + $0xe1] sm:$0xff]
      %v442 = vld [vmem:[#allocation2 + $0xf1] sm:$0xff]
      %v443 = vld [vmem:[#allocation2 + $0xf9] sm:$0xff]
      %v444 = vld [vmem:[#allocation2 + $0x109] sm:$0xff]
      %v445 = vld [vmem:[#allocation2 + $0x111] sm:$0xff]
      %v446 = vld [vmem:[#allocation2 + $0x121] sm:$0xff]
      %v447 = vld [vmem:[#allocation2 + $0x129] sm:$0xff]
      %v448 = vld [vmem:[#allocation2 + $0x139] sm:$0xff]
      %v449 = vld [vmem:[#allocation2 + $0x141] sm:$0xff]
      %v450 = vld [vmem:[#allocation2 + $0x151] sm:$0xff]
      %v451 = vld [vmem:[#allocation2 + $0x159] sm:$0xff]
      %v452 = vld [vmem:[#allocation2 + $0x169] sm:$0xff]
      %v453 = vld [vmem:[#allocation2 + $0x171] sm:$0xff]
      %s454 = scalar_lea.vmem %s1, 1
      %v455 = vld [vmem:[%s454] sm:$0x1]
      %v457 = vlaneseq
      %v458 = vshrl.u32 %v457, 7
      %v459 = vsub.s32 0, %v458
      %v460 = vrot.slane %v455, %v459
      %v462 = vmul.f32 %v422, %v460
      %v463 = vmul.f32 %v423, %v460
      %v464 = vmul.f32 %v424, %v460
      %v465 = vmul.f32 %v425, %v460
      %v466 = vmul.f32 %v426, %v460
      %v467 = vmul.f32 %v427, %v460
      %v468 = vmul.f32 %v428, %v460
      %v469 = vmul.f32 %v429, %v460
      %v470 = vmul.f32 %v430, %v460
      %v471 = vmul.f32 %v431, %v460
      %v472 = vmul.f32 %v432, %v460
      %v473 = vmul.f32 %v433, %v460
      %v474 = vmul.f32 %v434, %v460
      %v475 = vmul.f32 %v435, %v460
      %v476 = vmul.f32 %v436, %v460
      %v477 = vmul.f32 %v437, %v460
      %v478 = vmul.f32 %v438, %v460
      %v479 = vmul.f32 %v439, %v460
      %v480 = vmul.f32 %v440, %v460
      %v481 = vmul.f32 %v441, %v460
      %v482 = vmul.f32 %v442, %v460
      %v483 = vmul.f32 %v443, %v460
      %v484 = vmul.f32 %v444, %v460
      %v485 = vmul.f32 %v445, %v460
      %v486 = vmul.f32 %v446, %v460
      %v487 = vmul.f32 %v447, %v460
      %v488 = vmul.f32 %v448, %v460
      %v489 = vmul.f32 %v449, %v460
      %v490 = vmul.f32 %v450, %v460
      %v491 = vmul.f32 %v451, %v460
      %v492 = vmul.f32 %v452, %v460
      %v493 = vmul.f32 %v453, %v460
      %v494 = vadd.f32 %v390, %v462
      %v495 = vadd.f32 %v391, %v463
      %v496 = vadd.f32 %v392, %v464
      %v497 = vadd.f32 %v393, %v465
      %v498 = vadd.f32 %v394, %v466
      %v499 = vadd.f32 %v395, %v467
      %v500 = vadd.f32 %v396, %v468
      %v501 = vadd.f32 %v397, %v469
      %v502 = vadd.f32 %v398, %v470
      %v503 = vadd.f32 %v399, %v471
      %v504 = vadd.f32 %v400, %v472
      %v505 = vadd.f32 %v401, %v473
      %v506 = vadd.f32 %v402, %v474
      %v507 = vadd.f32 %v403, %v475
      %v508 = vadd.f32 %v404, %v476
      %v509 = vadd.f32 %v405, %v477
      %v510 = vadd.f32 %v406, %v478
      %v511 = vadd.f32 %v407, %v479
      %v512 = vadd.f32 %v408, %v480
      %v513 = vadd.f32 %v409, %v481
      %v514 = vadd.f32 %v410, %v482
      %v515 = vadd.f32 %v411, %v483
      %v516 = vadd.f32 %v412, %v484
      %v517 = vadd.f32 %v413, %v485
      %v518 = vadd.f32 %v414, %v486
      %v519 = vadd.f32 %v415, %v487
      %v520 = vadd.f32 %v416, %v488
      %v521 = vadd.f32 %v417, %v489
      %v522 = vadd.f32 %v418, %v490
      %v523 = vadd.f32 %v419, %v491
      %v524 = vadd.f32 %v420, %v492
      %v525 = vadd.f32 %v421, %v493
      %v526 = vld [vmem:[#allocation2 + $0x2] sm:$0xff]
      %v527 = vld [vmem:[#allocation2 + $0xa] sm:$0xff]
      %v528 = vld [vmem:[#allocation2 + $0x1a] sm:$0xff]
      %v529 = vld [vmem:[#allocation2 + $0x22] sm:$0xff]
      %v530 = vld [vmem:[#allocation2 + $0x32] sm:$0xff]
      %v531 = vld [vmem:[#allocation2 + $0x3a] sm:$0xff]
      %v532 = vld [vmem:[#allocation2 + $0x4a] sm:$0xff]
      %v533 = vld [vmem:[#allocation2 + $0x52] sm:$0xff]
      %v534 = vld [vmem:[#allocation2 + $0x62] sm:$0xff]
      %v535 = vld [vmem:[#allocation2 + $0x6a] sm:$0xff]
      %v536 = vld [vmem:[#allocation2 + $0x7a] sm:$0xff]
      %v537 = vld [vmem:[#allocation2 + $0x82] sm:$0xff]
      %v538 = vld [vmem:[#allocation2 + $0x92] sm:$0xff]
      %v539 = vld [vmem:[#allocation2 + $0x9a] sm:$0xff]
      %v540 = vld [vmem:[#allocation2 + $0xaa] sm:$0xff]
      %v541 = vld [vmem:[#allocation2 + $0xb2] sm:$0xff]
      %v542 = vld [vmem:[#allocation2 + $0xc2] sm:$0xff]
      %v543 = vld [vmem:[#allocation2 + $0xca] sm:$0xff]
      %v544 = vld [vmem:[#allocation2 + $0xda] sm:$0xff]
      %v545 = vld [vmem:[#allocation2 + $0xe2] sm:$0xff]
      %v546 = vld [vmem:[#allocation2 + $0xf2] sm:$0xff]
      %v547 = vld [vmem:[#allocation2 + $0xfa] sm:$0xff]
      %v548 = vld [vmem:[#allocation2 + $0x10a] sm:$0xff]
      %v549 = vld [vmem:[#allocation2 + $0x112] sm:$0xff]
      %v550 = vld [vmem:[#allocation2 + $0x122] sm:$0xff]
      %v551 = vld [vmem:[#allocation2 + $0x12a] sm:$0xff]
      %v552 = vld [vmem:[#allocation2 + $0x13a] sm:$0xff]
      %v553 = vld [vmem:[#allocation2 + $0x142] sm:$0xff]
      %v554 = vld [vmem:[#allocation2 + $0x152] sm:$0xff]
      %v555 = vld [vmem:[#allocation2 + $0x15a] sm:$0xff]
      %v556 = vld [vmem:[#allocation2 + $0x16a] sm:$0xff]
      %v557 = vld [vmem:[#allocation2 + $0x172] sm:$0xff]
      %s558 = scalar_lea.vmem %s1, 2
      %v559 = vld [vmem:[%s558] sm:$0x1]
      %v561 = vlaneseq
      %v562 = vshrl.u32 %v561, 7
      %v563 = vsub.s32 0, %v562
      %v564 = vrot.slane %v559, %v563
      %v566 = vmul.f32 %v526, %v564
      %v567 = vmul.f32 %v527, %v564
      %v568 = vmul.f32 %v528, %v564
      %v569 = vmul.f32 %v529, %v564
      %v570 = vmul.f32 %v530, %v564
      %v571 = vmul.f32 %v531, %v564
      %v572 = vmul.f32 %v532, %v564
      %v573 = vmul.f32 %v533, %v564
      %v574 = vmul.f32 %v534, %v564
      %v575 = vmul.f32 %v535, %v564
      %v576 = vmul.f32 %v536, %v564
      %v577 = vmul.f32 %v537, %v564
      %v578 = vmul.f32 %v538, %v564
      %v579 = vmul.f32 %v539, %v564
      %v580 = vmul.f32 %v540, %v564
      %v581 = vmul.f32 %v541, %v564
      %v582 = vmul.f32 %v542, %v564
      %v583 = vmul.f32 %v543, %v564
      %v584 = vmul.f32 %v544, %v564
      %v585 = vmul.f32 %v545, %v564
      %v586 = vmul.f32 %v546, %v564
      %v587 = vmul.f32 %v547, %v564
      %v588 = vmul.f32 %v548, %v564
      %v589 = vmul.f32 %v549, %v564
      %v590 = vmul.f32 %v550, %v564
      %v591 = vmul.f32 %v551, %v564
      %v592 = vmul.f32 %v552, %v564
      %v593 = vmul.f32 %v553, %v564
      %v594 = vmul.f32 %v554, %v564
      %v595 = vmul.f32 %v555, %v564
      %v596 = vmul.f32 %v556, %v564
      %v597 = vmul.f32 %v557, %v564
      %v598 = vadd.f32 %v494, %v566
      %v599 = vadd.f32 %v495, %v567
      %v600 = vadd.f32 %v496, %v568
      %v601 = vadd.f32 %v497, %v569
      %v602 = vadd.f32 %v498, %v570
      %v603 = vadd.f32 %v499, %v571
      %v604 = vadd.f32 %v500, %v572
      %v605 = vadd.f32 %v501, %v573
      %v606 = vadd.f32 %v502, %v574
      %v607 = vadd.f32 %v503, %v575
      %v608 = vadd.f32 %v504, %v576
      %v609 = vadd.f32 %v505, %v577
      %v610 = vadd.f32 %v506, %v578
      %v611 = vadd.f32 %v507, %v579
      %v612 = vadd.f32 %v508, %v580
      %v613 = vadd.f32 %v509, %v581
      %v614 = vadd.f32 %v510, %v582
      %v615 = vadd.f32 %v511, %v583
      %v616 = vadd.f32 %v512, %v584
      %v617 = vadd.f32 %v513, %v585
      %v618 = vadd.f32 %v514, %v586
      %v619 = vadd.f32 %v515, %v587
      %v620 = vadd.f32 %v516, %v588
      %v621 = vadd.f32 %v517, %v589
      %v622 = vadd.f32 %v518, %v590
      %v623 = vadd.f32 %v519, %v591
      %v624 = vadd.f32 %v520, %v592
      %v625 = vadd.f32 %v521, %v593
      %v626 = vadd.f32 %v522, %v594
      %v627 = vadd.f32 %v523, %v595
      %v628 = vadd.f32 %v524, %v596
      %v629 = vadd.f32 %v525, %v597
      %v630 = vld [vmem:[%s286] sm:$0xff]
      %v631 = vld [vmem:[%s286 + $0x8] sm:$0xff]
      %v632 = vld [vmem:[%s286 + $0x18] sm:$0xff]
      %v633 = vld [vmem:[%s286 + $0x20] sm:$0xff]
      %v634 = vld [vmem:[%s286 + $0x30] sm:$0xff]
      %v635 = vld [vmem:[%s286 + $0x38] sm:$0xff]
      %v636 = vld [vmem:[%s286 + $0x48] sm:$0xff]
      %v637 = vld [vmem:[%s286 + $0x50] sm:$0xff]
      %v638 = vld [vmem:[%s286 + $0x60] sm:$0xff]
      %v639 = vld [vmem:[%s286 + $0x68] sm:$0xff]
      %v640 = vld [vmem:[%s286 + $0x78] sm:$0xff]
      %v641 = vld [vmem:[%s286 + $0x80] sm:$0xff]
      %v642 = vld [vmem:[%s286 + $0x90] sm:$0xff]
      %v643 = vld [vmem:[%s286 + $0x98] sm:$0xff]
      %v644 = vld [vmem:[%s286 + $0xa8] sm:$0xff]
      %v645 = vld [vmem:[%s286 + $0xb0] sm:$0xff]
      %v646 = vld [vmem:[%s286 + $0xc0] sm:$0xff]
      %v647 = vld [vmem:[%s286 + $0xc8] sm:$0xff]
      %v648 = vld [vmem:[%s286 + $0xd8] sm:$0xff]
      %v649 = vld [vmem:[%s286 + $0xe0] sm:$0xff]
      %v650 = vld [vmem:[%s286 + $0xf0] sm:$0xff]
      %v651 = vld [vmem:[%s286 + $0xf8] sm:$0xff]
      %v652 = vld [vmem:[%s286 + $0x108] sm:$0xff]
      %v653 = vld [vmem:[%s286 + $0x110] sm:$0xff]
      %v654 = vld [vmem:[%s286 + $0x120] sm:$0xff]
      %v655 = vld [vmem:[%s286 + $0x128] sm:$0xff]
      %v656 = vld [vmem:[%s286 + $0x138] sm:$0xff]
      %v657 = vld [vmem:[%s286 + $0x140] sm:$0xff]
      %v658 = vld [vmem:[%s286 + $0x150] sm:$0xff]
      %v659 = vld [vmem:[%s286 + $0x158] sm:$0xff]
      %v660 = vld [vmem:[%s286 + $0x168] sm:$0xff]
      %v661 = vld [vmem:[%s286 + $0x170] sm:$0xff]
      %s662 = scalar_lea.vmem %s1, 3
      %v663 = vld [vmem:[%s662] sm:$0x1]
      %v665 = vlaneseq
      %v666 = vshrl.u32 %v665, 7
      %v667 = vsub.s32 0, %v666
      %v668 = vrot.slane %v663, %v667
      %v670 = vmul.f32 %v630, %v668
      %v671 = vmul.f32 %v631, %v668
      %v672 = vmul.f32 %v632, %v668
      %v673 = vmul.f32 %v633, %v668
      %v674 = vmul.f32 %v634, %v668
      %v675 = vmul.f32 %v635, %v668
      %v676 = vmul.f32 %v636, %v668
      %v677 = vmul.f32 %v637, %v668
      %v678 = vmul.f32 %v638, %v668
      %v679 = vmul.f32 %v639, %v668
      %v680 = vmul.f32 %v640, %v668
      %v681 = vmul.f32 %v641, %v668
      %v682 = vmul.f32 %v642, %v668
      %v683 = vmul.f32 %v643, %v668
      %v684 = vmul.f32 %v644, %v668
      %v685 = vmul.f32 %v645, %v668
      %v686 = vmul.f32 %v646, %v668
      %v687 = vmul.f32 %v647, %v668
      %v688 = vmul.f32 %v648, %v668
      %v689 = vmul.f32 %v649, %v668
      %v690 = vmul.f32 %v650, %v668
      %v691 = vmul.f32 %v651, %v668
      %v692 = vmul.f32 %v652, %v668
      %v693 = vmul.f32 %v653, %v668
      %v694 = vmul.f32 %v654, %v668
      %v695 = vmul.f32 %v655, %v668
      %v696 = vmul.f32 %v656, %v668
      %v697 = vmul.f32 %v657, %v668
      %v698 = vmul.f32 %v658, %v668
      %v699 = vmul.f32 %v659, %v668
      %v700 = vmul.f32 %v660, %v668
      %v701 = vmul.f32 %v661, %v668
      %v702 = vadd.f32 %v598, %v670
      %v703 = vadd.f32 %v599, %v671
      %v704 = vadd.f32 %v600, %v672
      %v705 = vadd.f32 %v601, %v673
      %v706 = vadd.f32 %v602, %v674
      %v707 = vadd.f32 %v603, %v675
      %v708 = vadd.f32 %v604, %v676
      %v709 = vadd.f32 %v605, %v677
      %v710 = vadd.f32 %v606, %v678
      %v711 = vadd.f32 %v607, %v679
      %v712 = vadd.f32 %v608, %v680
      %v713 = vadd.f32 %v609, %v681
      %v714 = vadd.f32 %v610, %v682
      %v715 = vadd.f32 %v611, %v683
      %v716 = vadd.f32 %v612, %v684
      %v717 = vadd.f32 %v613, %v685
      %v718 = vadd.f32 %v614, %v686
      %v719 = vadd.f32 %v615, %v687
      %v720 = vadd.f32 %v616, %v688
      %v721 = vadd.f32 %v617, %v689
      %v722 = vadd.f32 %v618, %v690
      %v723 = vadd.f32 %v619, %v691
      %v724 = vadd.f32 %v620, %v692
      %v725 = vadd.f32 %v621, %v693
      %v726 = vadd.f32 %v622, %v694
      %v727 = vadd.f32 %v623, %v695
      %v728 = vadd.f32 %v624, %v696
      %v729 = vadd.f32 %v625, %v697
      %v730 = vadd.f32 %v626, %v698
      %v731 = vadd.f32 %v627, %v699
      %v732 = vadd.f32 %v628, %v700
      %v733 = vadd.f32 %v629, %v701
      %v734 = vld [vmem:[%s286 + $0x1] sm:$0xff]
      %v735 = vld [vmem:[%s286 + $0x9] sm:$0xff]
      %v736 = vld [vmem:[%s286 + $0x19] sm:$0xff]
      %v737 = vld [vmem:[%s286 + $0x21] sm:$0xff]
      %v738 = vld [vmem:[%s286 + $0x31] sm:$0xff]
      %v739 = vld [vmem:[%s286 + $0x39] sm:$0xff]
      %v740 = vld [vmem:[%s286 + $0x49] sm:$0xff]
      %v741 = vld [vmem:[%s286 + $0x51] sm:$0xff]
      %v742 = vld [vmem:[%s286 + $0x61] sm:$0xff]
      %v743 = vld [vmem:[%s286 + $0x69] sm:$0xff]
      %v744 = vld [vmem:[%s286 + $0x79] sm:$0xff]
      %v745 = vld [vmem:[%s286 + $0x81] sm:$0xff]
      %v746 = vld [vmem:[%s286 + $0x91] sm:$0xff]
      %v747 = vld [vmem:[%s286 + $0x99] sm:$0xff]
      %v748 = vld [vmem:[%s286 + $0xa9] sm:$0xff]
      %v749 = vld [vmem:[%s286 + $0xb1] sm:$0xff]
      %v750 = vld [vmem:[%s286 + $0xc1] sm:$0xff]
      %v751 = vld [vmem:[%s286 + $0xc9] sm:$0xff]
      %v752 = vld [vmem:[%s286 + $0xd9] sm:$0xff]
      %v753 = vld [vmem:[%s286 + $0xe1] sm:$0xff]
      %v754 = vld [vmem:[%s286 + $0xf1] sm:$0xff]
      %v755 = vld [vmem:[%s286 + $0xf9] sm:$0xff]
      %v756 = vld [vmem:[%s286 + $0x109] sm:$0xff]
      %v757 = vld [vmem:[%s286 + $0x111] sm:$0xff]
      %v758 = vld [vmem:[%s286 + $0x121] sm:$0xff]
      %v759 = vld [vmem:[%s286 + $0x129] sm:$0xff]
      %v760 = vld [vmem:[%s286 + $0x139] sm:$0xff]
      %v761 = vld [vmem:[%s286 + $0x141] sm:$0xff]
      %v762 = vld [vmem:[%s286 + $0x151] sm:$0xff]
      %v763 = vld [vmem:[%s286 + $0x159] sm:$0xff]
      %v764 = vld [vmem:[%s286 + $0x169] sm:$0xff]
      %v765 = vld [vmem:[%s286 + $0x171] sm:$0xff]
      %s766 = scalar_lea.vmem %s1, 4
      %v767 = vld [vmem:[%s766] sm:$0x1]
      %v769 = vlaneseq
      %v770 = vshrl.u32 %v769, 7
      %v771 = vsub.s32 0, %v770
      %v772 = vrot.slane %v767, %v771
      %v774 = vmul.f32 %v734, %v772
      %v775 = vmul.f32 %v735, %v772
      %v776 = vmul.f32 %v736, %v772
      %v777 = vmul.f32 %v737, %v772
      %v778 = vmul.f32 %v738, %v772
      %v779 = vmul.f32 %v739, %v772
      %v780 = vmul.f32 %v740, %v772
      %v781 = vmul.f32 %v741, %v772
      %v782 = vmul.f32 %v742, %v772
      %v783 = vmul.f32 %v743, %v772
      %v784 = vmul.f32 %v744, %v772
      %v785 = vmul.f32 %v745, %v772
      %v786 = vmul.f32 %v746, %v772
      %v787 = vmul.f32 %v747, %v772
      %v788 = vmul.f32 %v748, %v772
      %v789 = vmul.f32 %v749, %v772
      %v790 = vmul.f32 %v750, %v772
      %v791 = vmul.f32 %v751, %v772
      %v792 = vmul.f32 %v752, %v772
      %v793 = vmul.f32 %v753, %v772
      %v794 = vmul.f32 %v754, %v772
      %v795 = vmul.f32 %v755, %v772
      %v796 = vmul.f32 %v756, %v772
      %v797 = vmul.f32 %v757, %v772
      %v798 = vmul.f32 %v758, %v772
      %v799 = vmul.f32 %v759, %v772
      %v800 = vmul.f32 %v760, %v772
      %v801 = vmul.f32 %v761, %v772
      %v802 = vmul.f32 %v762, %v772
      %v803 = vmul.f32 %v763, %v772
      %v804 = vmul.f32 %v764, %v772
      %v805 = vmul.f32 %v765, %v772
      %v806 = vadd.f32 %v702, %v774
      %v807 = vadd.f32 %v703, %v775
      %v808 = vadd.f32 %v704, %v776
      %v809 = vadd.f32 %v705, %v777
      %v810 = vadd.f32 %v706, %v778
      %v811 = vadd.f32 %v707, %v779
      %v812 = vadd.f32 %v708, %v780
      %v813 = vadd.f32 %v709, %v781
      %v814 = vadd.f32 %v710, %v782
      %v815 = vadd.f32 %v711, %v783
      %v816 = vadd.f32 %v712, %v784
      %v817 = vadd.f32 %v713, %v785
      %v818 = vadd.f32 %v714, %v786
      %v819 = vadd.f32 %v715, %v787
      %v820 = vadd.f32 %v716, %v788
      %v821 = vadd.f32 %v717, %v789
      %v822 = vadd.f32 %v718, %v790
      %v823 = vadd.f32 %v719, %v791
      %v824 = vadd.f32 %v720, %v792
      %v825 = vadd.f32 %v721, %v793
      %v826 = vadd.f32 %v722, %v794
      %v827 = vadd.f32 %v723, %v795
      %v828 = vadd.f32 %v724, %v796
      %v829 = vadd.f32 %v725, %v797
      %v830 = vadd.f32 %v726, %v798
      %v831 = vadd.f32 %v727, %v799
      %v832 = vadd.f32 %v728, %v800
      %v833 = vadd.f32 %v729, %v801
      %v834 = vadd.f32 %v730, %v802
      %v835 = vadd.f32 %v731, %v803
      %v836 = vadd.f32 %v732, %v804
      %v837 = vadd.f32 %v733, %v805
      %v838 = vld [vmem:[%s286 + $0x2] sm:$0xff]
      %v839 = vld [vmem:[%s286 + $0xa] sm:$0xff]
      %v840 = vld [vmem:[%s286 + $0x1a] sm:$0xff]
      %v841 = vld [vmem:[%s286 + $0x22] sm:$0xff]
      %v842 = vld [vmem:[%s286 + $0x32] sm:$0xff]
      %v843 = vld [vmem:[%s286 + $0x3a] sm:$0xff]
      %v844 = vld [vmem:[%s286 + $0x4a] sm:$0xff]
      %v845 = vld [vmem:[%s286 + $0x52] sm:$0xff]
      %v846 = vld [vmem:[%s286 + $0x62] sm:$0xff]
      %v847 = vld [vmem:[%s286 + $0x6a] sm:$0xff]
      %v848 = vld [vmem:[%s286 + $0x7a] sm:$0xff]
      %v849 = vld [vmem:[%s286 + $0x82] sm:$0xff]
      %v850 = vld [vmem:[%s286 + $0x92] sm:$0xff]
      %v851 = vld [vmem:[%s286 + $0x9a] sm:$0xff]
      %v852 = vld [vmem:[%s286 + $0xaa] sm:$0xff]
      %v853 = vld [vmem:[%s286 + $0xb2] sm:$0xff]
      %v854 = vld [vmem:[%s286 + $0xc2] sm:$0xff]
      %v855 = vld [vmem:[%s286 + $0xca] sm:$0xff]
      %v856 = vld [vmem:[%s286 + $0xda] sm:$0xff]
      %v857 = vld [vmem:[%s286 + $0xe2] sm:$0xff]
      %v858 = vld [vmem:[%s286 + $0xf2] sm:$0xff]
      %v859 = vld [vmem:[%s286 + $0xfa] sm:$0xff]
      %v860 = vld [vmem:[%s286 + $0x10a] sm:$0xff]
      %v861 = vld [vmem:[%s286 + $0x112] sm:$0xff]
      %v862 = vld [vmem:[%s286 + $0x122] sm:$0xff]
      %v863 = vld [vmem:[%s286 + $0x12a] sm:$0xff]
      %v864 = vld [vmem:[%s286 + $0x13a] sm:$0xff]
      %v865 = vld [vmem:[%s286 + $0x142] sm:$0xff]
      %v866 = vld [vmem:[%s286 + $0x152] sm:$0xff]
      %v867 = vld [vmem:[%s286 + $0x15a] sm:$0xff]
      %v868 = vld [vmem:[%s286 + $0x16a] sm:$0xff]
      %v869 = vld [vmem:[%s286 + $0x172] sm:$0xff]
      %s870 = scalar_lea.vmem %s1, 5
      %v871 = vld [vmem:[%s870] sm:$0x1]
      %v873 = vlaneseq
      %v874 = vshrl.u32 %v873, 7
      %v875 = vsub.s32 0, %v874
      %v876 = vrot.slane %v871, %v875
      %v878 = vmul.f32 %v838, %v876
      %v879 = vmul.f32 %v839, %v876
      %v880 = vmul.f32 %v840, %v876
      %v881 = vmul.f32 %v841, %v876
      %v882 = vmul.f32 %v842, %v876
      %v883 = vmul.f32 %v843, %v876
      %v884 = vmul.f32 %v844, %v876
      %v885 = vmul.f32 %v845, %v876
      %v886 = vmul.f32 %v846, %v876
      %v887 = vmul.f32 %v847, %v876
      %v888 = vmul.f32 %v848, %v876
      %v889 = vmul.f32 %v849, %v876
      %v890 = vmul.f32 %v850, %v876
      %v891 = vmul.f32 %v851, %v876
      %v892 = vmul.f32 %v852, %v876
      %v893 = vmul.f32 %v853, %v876
      %v894 = vmul.f32 %v854, %v876
      %v895 = vmul.f32 %v855, %v876
      %v896 = vmul.f32 %v856, %v876
      %v897 = vmul.f32 %v857, %v876
      %v898 = vmul.f32 %v858, %v876
      %v899 = vmul.f32 %v859, %v876
      %v900 = vmul.f32 %v860, %v876
      %v901 = vmul.f32 %v861, %v876
      %v902 = vmul.f32 %v862, %v876
      %v903 = vmul.f32 %v863, %v876
      %v904 = vmul.f32 %v864, %v876
      %v905 = vmul.f32 %v865, %v876
      %v906 = vmul.f32 %v866, %v876
      %v907 = vmul.f32 %v867, %v876
      %v908 = vmul.f32 %v868, %v876
      %v909 = vmul.f32 %v869, %v876
      %v910 = vadd.f32 %v806, %v878
      %v911 = vadd.f32 %v807, %v879
      %v912 = vadd.f32 %v808, %v880
      %v913 = vadd.f32 %v809, %v881
      %v914 = vadd.f32 %v810, %v882
      %v915 = vadd.f32 %v811, %v883
      %v916 = vadd.f32 %v812, %v884
      %v917 = vadd.f32 %v813, %v885
      %v918 = vadd.f32 %v814, %v886
      %v919 = vadd.f32 %v815, %v887
      %v920 = vadd.f32 %v816, %v888
      %v921 = vadd.f32 %v817, %v889
      %v922 = vadd.f32 %v818, %v890
      %v923 = vadd.f32 %v819, %v891
      %v924 = vadd.f32 %v820, %v892
      %v925 = vadd.f32 %v821, %v893
      %v926 = vadd.f32 %v822, %v894
      %v927 = vadd.f32 %v823, %v895
      %v928 = vadd.f32 %v824, %v896
      %v929 = vadd.f32 %v825, %v897
      %v930 = vadd.f32 %v826, %v898
      %v931 = vadd.f32 %v827, %v899
      %v932 = vadd.f32 %v828, %v900
      %v933 = vadd.f32 %v829, %v901
      %v934 = vadd.f32 %v830, %v902
      %v935 = vadd.f32 %v831, %v903
      %v936 = vadd.f32 %v832, %v904
      %v937 = vadd.f32 %v833, %v905
      %v938 = vadd.f32 %v834, %v906
      %v939 = vadd.f32 %v835, %v907
      %v940 = vadd.f32 %v836, %v908
      %v941 = vadd.f32 %v837, %v909
      %s942 = scalar_lea.vmem [#allocation2], 48
      %v943 = vld [vmem:[%s942] sm:$0xff]
      %v944 = vld [vmem:[%s942 + $0x8] sm:$0xff]
      %v945 = vld [vmem:[%s942 + $0x18] sm:$0xff]
      %v946 = vld [vmem:[%s942 + $0x20] sm:$0xff]
      %v947 = vld [vmem:[%s942 + $0x30] sm:$0xff]
      %v948 = vld [vmem:[%s942 + $0x38] sm:$0xff]
      %v949 = vld [vmem:[%s942 + $0x48] sm:$0xff]
      %v950 = vld [vmem:[%s942 + $0x50] sm:$0xff]
      %v951 = vld [vmem:[%s942 + $0x60] sm:$0xff]
      %v952 = vld [vmem:[%s942 + $0x68] sm:$0xff]
      %v953 = vld [vmem:[%s942 + $0x78] sm:$0xff]
      %v954 = vld [vmem:[%s942 + $0x80] sm:$0xff]
      %v955 = vld [vmem:[%s942 + $0x90] sm:$0xff]
      %v956 = vld [vmem:[%s942 + $0x98] sm:$0xff]
      %v957 = vld [vmem:[%s942 + $0xa8] sm:$0xff]
      %v958 = vld [vmem:[%s942 + $0xb0] sm:$0xff]
      %v959 = vld [vmem:[%s942 + $0xc0] sm:$0xff]
      %v960 = vld [vmem:[%s942 + $0xc8] sm:$0xff]
      %v961 = vld [vmem:[%s942 + $0xd8] sm:$0xff]
      %v962 = vld [vmem:[%s942 + $0xe0] sm:$0xff]
      %v963 = vld [vmem:[%s942 + $0xf0] sm:$0xff]
      %v964 = vld [vmem:[%s942 + $0xf8] sm:$0xff]
      %v965 = vld [vmem:[%s942 + $0x108] sm:$0xff]
      %v966 = vld [vmem:[%s942 + $0x110] sm:$0xff]
      %v967 = vld [vmem:[%s942 + $0x120] sm:$0xff]
      %v968 = vld [vmem:[%s942 + $0x128] sm:$0xff]
      %v969 = vld [vmem:[%s942 + $0x138] sm:$0xff]
      %v970 = vld [vmem:[%s942 + $0x140] sm:$0xff]
      %v971 = vld [vmem:[%s942 + $0x150] sm:$0xff]
      %v972 = vld [vmem:[%s942 + $0x158] sm:$0xff]
      %v973 = vld [vmem:[%s942 + $0x168] sm:$0xff]
      %v974 = vld [vmem:[%s942 + $0x170] sm:$0xff]
      %s975 = scalar_lea.vmem %s1, 6
      %v976 = vld [vmem:[%s975] sm:$0x1]
      %v978 = vlaneseq
      %v979 = vshrl.u32 %v978, 7
      %v980 = vsub.s32 0, %v979
      %v981 = vrot.slane %v976, %v980
      %v983 = vmul.f32 %v943, %v981
      %v984 = vmul.f32 %v944, %v981
      %v985 = vmul.f32 %v945, %v981
      %v986 = vmul.f32 %v946, %v981
      %v987 = vmul.f32 %v947, %v981
      %v988 = vmul.f32 %v948, %v981
      %v989 = vmul.f32 %v949, %v981
      %v990 = vmul.f32 %v950, %v981
      %v991 = vmul.f32 %v951, %v981
      %v992 = vmul.f32 %v952, %v981
      %v993 = vmul.f32 %v953, %v981
      %v994 = vmul.f32 %v954, %v981
      %v995 = vmul.f32 %v955, %v981
      %v996 = vmul.f32 %v956, %v981
      %v997 = vmul.f32 %v957, %v981
      %v998 = vmul.f32 %v958, %v981
      %v999 = vmul.f32 %v959, %v981
      %v1000 = vmul.f32 %v960, %v981
      %v1001 = vmul.f32 %v961, %v981
      %v1002 = vmul.f32 %v962, %v981
      %v1003 = vmul.f32 %v963, %v981
      %v1004 = vmul.f32 %v964, %v981
      %v1005 = vmul.f32 %v965, %v981
      %v1006 = vmul.f32 %v966, %v981
      %v1007 = vmul.f32 %v967, %v981
      %v1008 = vmul.f32 %v968, %v981
      %v1009 = vmul.f32 %v969, %v981
      %v1010 = vmul.f32 %v970, %v981
      %v1011 = vmul.f32 %v971, %v981
      %v1012 = vmul.f32 %v972, %v981
      %v1013 = vmul.f32 %v973, %v981
      %v1014 = vmul.f32 %v974, %v981
      %v1015 = vadd.f32 %v910, %v983
      %v1016 = vadd.f32 %v911, %v984
      %v1017 = vadd.f32 %v912, %v985
      %v1018 = vadd.f32 %v913, %v986
      %v1019 = vadd.f32 %v914, %v987
      %v1020 = vadd.f32 %v915, %v988
      %v1021 = vadd.f32 %v916, %v989
      %v1022 = vadd.f32 %v917, %v990
      %v1023 = vadd.f32 %v918, %v991
      %v1024 = vadd.f32 %v919, %v992
      %v1025 = vadd.f32 %v920, %v993
      %v1026 = vadd.f32 %v921, %v994
      %v1027 = vadd.f32 %v922, %v995
      %v1028 = vadd.f32 %v923, %v996
      %v1029 = vadd.f32 %v924, %v997
      %v1030 = vadd.f32 %v925, %v998
      %v1031 = vadd.f32 %v926, %v999
      %v1032 = vadd.f32 %v927, %v1000
      %v1033 = vadd.f32 %v928, %v1001
      %v1034 = vadd.f32 %v929, %v1002
      %v1035 = vadd.f32 %v930, %v1003
      %v1036 = vadd.f32 %v931, %v1004
      %v1037 = vadd.f32 %v932, %v1005
      %v1038 = vadd.f32 %v933, %v1006
      %v1039 = vadd.f32 %v934, %v1007
      %v1040 = vadd.f32 %v935, %v1008
      %v1041 = vadd.f32 %v936, %v1009
      %v1042 = vadd.f32 %v937, %v1010
      %v1043 = vadd.f32 %v938, %v1011
      %v1044 = vadd.f32 %v939, %v1012
      %v1045 = vadd.f32 %v940, %v1013
      %v1046 = vadd.f32 %v941, %v1014
      %v1047 = vld [vmem:[%s942 + $0x1] sm:$0xff]
      %v1048 = vld [vmem:[%s942 + $0x9] sm:$0xff]
      %v1049 = vld [vmem:[%s942 + $0x19] sm:$0xff]
      %v1050 = vld [vmem:[%s942 + $0x21] sm:$0xff]
      %v1051 = vld [vmem:[%s942 + $0x31] sm:$0xff]
      %v1052 = vld [vmem:[%s942 + $0x39] sm:$0xff]
      %v1053 = vld [vmem:[%s942 + $0x49] sm:$0xff]
      %v1054 = vld [vmem:[%s942 + $0x51] sm:$0xff]
      %v1055 = vld [vmem:[%s942 + $0x61] sm:$0xff]
      %v1056 = vld [vmem:[%s942 + $0x69] sm:$0xff]
      %v1057 = vld [vmem:[%s942 + $0x79] sm:$0xff]
      %v1058 = vld [vmem:[%s942 + $0x81] sm:$0xff]
      %v1059 = vld [vmem:[%s942 + $0x91] sm:$0xff]
      %v1060 = vld [vmem:[%s942 + $0x99] sm:$0xff]
      %v1061 = vld [vmem:[%s942 + $0xa9] sm:$0xff]
      %v1062 = vld [vmem:[%s942 + $0xb1] sm:$0xff]
      %v1063 = vld [vmem:[%s942 + $0xc1] sm:$0xff]
      %v1064 = vld [vmem:[%s942 + $0xc9] sm:$0xff]
      %v1065 = vld [vmem:[%s942 + $0xd9] sm:$0xff]
      %v1066 = vld [vmem:[%s942 + $0xe1] sm:$0xff]
      %v1067 = vld [vmem:[%s942 + $0xf1] sm:$0xff]
      %v1068 = vld [vmem:[%s942 + $0xf9] sm:$0xff]
      %v1069 = vld [vmem:[%s942 + $0x109] sm:$0xff]
      %v1070 = vld [vmem:[%s942 + $0x111] sm:$0xff]
      %v1071 = vld [vmem:[%s942 + $0x121] sm:$0xff]
      %v1072 = vld [vmem:[%s942 + $0x129] sm:$0xff]
      %v1073 = vld [vmem:[%s942 + $0x139] sm:$0xff]
      %v1074 = vld [vmem:[%s942 + $0x141] sm:$0xff]
      %v1075 = vld [vmem:[%s942 + $0x151] sm:$0xff]
      %v1076 = vld [vmem:[%s942 + $0x159] sm:$0xff]
      %v1077 = vld [vmem:[%s942 + $0x169] sm:$0xff]
      %v1078 = vld [vmem:[%s942 + $0x171] sm:$0xff]
      %s1079 = scalar_lea.vmem %s1, 7
      %v1080 = vld [vmem:[%s1079] sm:$0x1]
      %v1082 = vlaneseq
      %v1083 = vshrl.u32 %v1082, 7
      %v1084 = vsub.s32 0, %v1083
      %v1085 = vrot.slane %v1080, %v1084
      %v1087 = vmul.f32 %v1047, %v1085
      %v1088 = vmul.f32 %v1048, %v1085
      %v1089 = vmul.f32 %v1049, %v1085
      %v1090 = vmul.f32 %v1050, %v1085
      %v1091 = vmul.f32 %v1051, %v1085
      %v1092 = vmul.f32 %v1052, %v1085
      %v1093 = vmul.f32 %v1053, %v1085
      %v1094 = vmul.f32 %v1054, %v1085
      %v1095 = vmul.f32 %v1055, %v1085
      %v1096 = vmul.f32 %v1056, %v1085
      %v1097 = vmul.f32 %v1057, %v1085
      %v1098 = vmul.f32 %v1058, %v1085
      %v1099 = vmul.f32 %v1059, %v1085
      %v1100 = vmul.f32 %v1060, %v1085
      %v1101 = vmul.f32 %v1061, %v1085
      %v1102 = vmul.f32 %v1062, %v1085
      %v1103 = vmul.f32 %v1063, %v1085
      %v1104 = vmul.f32 %v1064, %v1085
      %v1105 = vmul.f32 %v1065, %v1085
      %v1106 = vmul.f32 %v1066, %v1085
      %v1107 = vmul.f32 %v1067, %v1085
      %v1108 = vmul.f32 %v1068, %v1085
      %v1109 = vmul.f32 %v1069, %v1085
      %v1110 = vmul.f32 %v1070, %v1085
      %v1111 = vmul.f32 %v1071, %v1085
      %v1112 = vmul.f32 %v1072, %v1085
      %v1113 = vmul.f32 %v1073, %v1085
      %v1114 = vmul.f32 %v1074, %v1085
      %v1115 = vmul.f32 %v1075, %v1085
      %v1116 = vmul.f32 %v1076, %v1085
      %v1117 = vmul.f32 %v1077, %v1085
      %v1118 = vmul.f32 %v1078, %v1085
      %v1119 = vadd.f32 %v1015, %v1087
      %v1120 = vadd.f32 %v1016, %v1088
      %v1121 = vadd.f32 %v1017, %v1089
      %v1122 = vadd.f32 %v1018, %v1090
      %v1123 = vadd.f32 %v1019, %v1091
      %v1124 = vadd.f32 %v1020, %v1092
      %v1125 = vadd.f32 %v1021, %v1093
      %v1126 = vadd.f32 %v1022, %v1094
      %v1127 = vadd.f32 %v1023, %v1095
      %v1128 = vadd.f32 %v1024, %v1096
      %v1129 = vadd.f32 %v1025, %v1097
      %v1130 = vadd.f32 %v1026, %v1098
      %v1131 = vadd.f32 %v1027, %v1099
      %v1132 = vadd.f32 %v1028, %v1100
      %v1133 = vadd.f32 %v1029, %v1101
      %v1134 = vadd.f32 %v1030, %v1102
      %v1135 = vadd.f32 %v1031, %v1103
      %v1136 = vadd.f32 %v1032, %v1104
      %v1137 = vadd.f32 %v1033, %v1105
      %v1138 = vadd.f32 %v1034, %v1106
      %v1139 = vadd.f32 %v1035, %v1107
      %v1140 = vadd.f32 %v1036, %v1108
      %v1141 = vadd.f32 %v1037, %v1109
      %v1142 = vadd.f32 %v1038, %v1110
      %v1143 = vadd.f32 %v1039, %v1111
      %v1144 = vadd.f32 %v1040, %v1112
      %v1145 = vadd.f32 %v1041, %v1113
      %v1146 = vadd.f32 %v1042, %v1114
      %v1147 = vadd.f32 %v1043, %v1115
      %v1148 = vadd.f32 %v1044, %v1116
      %v1149 = vadd.f32 %v1045, %v1117
      %v1150 = vadd.f32 %v1046, %v1118
      %v1151 = vld [vmem:[%s942 + $0x2] sm:$0xff]
      %v1152 = vld [vmem:[%s942 + $0xa] sm:$0xff]
      %v1153 = vld [vmem:[%s942 + $0x1a] sm:$0xff]
      %v1154 = vld [vmem:[%s942 + $0x22] sm:$0xff]
      %v1155 = vld [vmem:[%s942 + $0x32] sm:$0xff]
      %v1156 = vld [vmem:[%s942 + $0x3a] sm:$0xff]
      %v1157 = vld [vmem:[%s942 + $0x4a] sm:$0xff]
      %v1158 = vld [vmem:[%s942 + $0x52] sm:$0xff]
      %v1159 = vld [vmem:[%s942 + $0x62] sm:$0xff]
      %v1160 = vld [vmem:[%s942 + $0x6a] sm:$0xff]
      %v1161 = vld [vmem:[%s942 + $0x7a] sm:$0xff]
      %v1162 = vld [vmem:[%s942 + $0x82] sm:$0xff]
      %v1163 = vld [vmem:[%s942 + $0x92] sm:$0xff]
      %v1164 = vld [vmem:[%s942 + $0x9a] sm:$0xff]
      %v1165 = vld [vmem:[%s942 + $0xaa] sm:$0xff]
      %v1166 = vld [vmem:[%s942 + $0xb2] sm:$0xff]
      %v1167 = vld [vmem:[%s942 + $0xc2] sm:$0xff]
      %v1168 = vld [vmem:[%s942 + $0xca] sm:$0xff]
      %v1169 = vld [vmem:[%s942 + $0xda] sm:$0xff]
      %v1170 = vld [vmem:[%s942 + $0xe2] sm:$0xff]
      %v1171 = vld [vmem:[%s942 + $0xf2] sm:$0xff]
      %v1172 = vld [vmem:[%s942 + $0xfa] sm:$0xff]
      %v1173 = vld [vmem:[%s942 + $0x10a] sm:$0xff]
      %v1174 = vld [vmem:[%s942 + $0x112] sm:$0xff]
      %v1175 = vld [vmem:[%s942 + $0x122] sm:$0xff]
      %v1176 = vld [vmem:[%s942 + $0x12a] sm:$0xff]
      %v1177 = vld [vmem:[%s942 + $0x13a] sm:$0xff]
      %v1178 = vld [vmem:[%s942 + $0x142] sm:$0xff]
      %v1179 = vld [vmem:[%s942 + $0x152] sm:$0xff]
      %v1180 = vld [vmem:[%s942 + $0x15a] sm:$0xff]
      %v1181 = vld [vmem:[%s942 + $0x16a] sm:$0xff]
      %v1182 = vld [vmem:[%s942 + $0x172] sm:$0xff]
      %s1183 = scalar_lea.vmem %s1, 8
      %v1184 = vld [vmem:[%s1183] sm:$0x1]
      %v1186 = vlaneseq
      %v1187 = vshrl.u32 %v1186, 7
      %v1188 = vsub.s32 0, %v1187
      %v1189 = vrot.slane %v1184, %v1188
      %v1191 = vmul.f32 %v1151, %v1189
      %v1192 = vmul.f32 %v1152, %v1189
      %v1193 = vmul.f32 %v1153, %v1189
      %v1194 = vmul.f32 %v1154, %v1189
      %v1195 = vmul.f32 %v1155, %v1189
      %v1196 = vmul.f32 %v1156, %v1189
      %v1197 = vmul.f32 %v1157, %v1189
      %v1198 = vmul.f32 %v1158, %v1189
      %v1199 = vmul.f32 %v1159, %v1189
      %v1200 = vmul.f32 %v1160, %v1189
      %v1201 = vmul.f32 %v1161, %v1189
      %v1202 = vmul.f32 %v1162, %v1189
      %v1203 = vmul.f32 %v1163, %v1189
      %v1204 = vmul.f32 %v1164, %v1189
      %v1205 = vmul.f32 %v1165, %v1189
      %v1206 = vmul.f32 %v1166, %v1189
      %v1207 = vmul.f32 %v1167, %v1189
      %v1208 = vmul.f32 %v1168, %v1189
      %v1209 = vmul.f32 %v1169, %v1189
      %v1210 = vmul.f32 %v1170, %v1189
      %v1211 = vmul.f32 %v1171, %v1189
      %v1212 = vmul.f32 %v1172, %v1189
      %v1213 = vmul.f32 %v1173, %v1189
      %v1214 = vmul.f32 %v1174, %v1189
      %v1215 = vmul.f32 %v1175, %v1189
      %v1216 = vmul.f32 %v1176, %v1189
      %v1217 = vmul.f32 %v1177, %v1189
      %v1218 = vmul.f32 %v1178, %v1189
      %v1219 = vmul.f32 %v1179, %v1189
      %v1220 = vmul.f32 %v1180, %v1189
      %v1221 = vmul.f32 %v1181, %v1189
      %v1222 = vmul.f32 %v1182, %v1189
      %v1223 = vadd.f32 %v1119, %v1191
      %v1224 = vadd.f32 %v1120, %v1192
      %v1225 = vadd.f32 %v1121, %v1193
      %v1226 = vadd.f32 %v1122, %v1194
      %v1227 = vadd.f32 %v1123, %v1195
      %v1228 = vadd.f32 %v1124, %v1196
      %v1229 = vadd.f32 %v1125, %v1197
      %v1230 = vadd.f32 %v1126, %v1198
      %v1231 = vadd.f32 %v1127, %v1199
      %v1232 = vadd.f32 %v1128, %v1200
      %v1233 = vadd.f32 %v1129, %v1201
      %v1234 = vadd.f32 %v1130, %v1202
      %v1235 = vadd.f32 %v1131, %v1203
      %v1236 = vadd.f32 %v1132, %v1204
      %v1237 = vadd.f32 %v1133, %v1205
      %v1238 = vadd.f32 %v1134, %v1206
      %v1239 = vadd.f32 %v1135, %v1207
      %v1240 = vadd.f32 %v1136, %v1208
      %v1241 = vadd.f32 %v1137, %v1209
      %v1242 = vadd.f32 %v1138, %v1210
      %v1243 = vadd.f32 %v1139, %v1211
      %v1244 = vadd.f32 %v1140, %v1212
      %v1245 = vadd.f32 %v1141, %v1213
      %v1246 = vadd.f32 %v1142, %v1214
      %v1247 = vadd.f32 %v1143, %v1215
      %v1248 = vadd.f32 %v1144, %v1216
      %v1249 = vadd.f32 %v1145, %v1217
      %v1250 = vadd.f32 %v1146, %v1218
      %v1251 = vadd.f32 %v1147, %v1219
      %v1252 = vadd.f32 %v1148, %v1220
      %v1253 = vadd.f32 %v1149, %v1221
      %v1254 = vadd.f32 %v1150, %v1222
      %v1255 = vld [vmem:[%s2] sm:$0x1]
      %v1257 = vlaneseq
      %v1258 = vshrl.u32 %v1257, 7
      %v1259 = vsub.s32 0, %v1258
      %v1260 = vrot.slane %v1255, %v1259
      %v1262 = vadd.f32 %v1223, %v1260
      %v1263 = vadd.f32 %v1224, %v1260
      %v1264 = vadd.f32 %v1225, %v1260
      %v1265 = vadd.f32 %v1226, %v1260
      %v1266 = vadd.f32 %v1227, %v1260
      %v1267 = vadd.f32 %v1228, %v1260
      %v1268 = vadd.f32 %v1229, %v1260
      %v1269 = vadd.f32 %v1230, %v1260
      %v1270 = vadd.f32 %v1231, %v1260
      %v1271 = vadd.f32 %v1232, %v1260
      %v1272 = vadd.f32 %v1233, %v1260
      %v1273 = vadd.f32 %v1234, %v1260
      %v1274 = vadd.f32 %v1235, %v1260
      %v1275 = vadd.f32 %v1236, %v1260
      %v1276 = vadd.f32 %v1237, %v1260
      %v1277 = vadd.f32 %v1238, %v1260
      %v1278 = vadd.f32 %v1239, %v1260
      %v1279 = vadd.f32 %v1240, %v1260
      %v1280 = vadd.f32 %v1241, %v1260
      %v1281 = vadd.f32 %v1242, %v1260
      %v1282 = vadd.f32 %v1243, %v1260
      %v1283 = vadd.f32 %v1244, %v1260
      %v1284 = vadd.f32 %v1245, %v1260
      %v1285 = vadd.f32 %v1246, %v1260
      %v1286 = vadd.f32 %v1247, %v1260
      %v1287 = vadd.f32 %v1248, %v1260
      %v1288 = vadd.f32 %v1249, %v1260
      %v1289 = vadd.f32 %v1250, %v1260
      %v1290 = vadd.f32 %v1251, %v1260
      %v1291 = vadd.f32 %v1252, %v1260
      %v1292 = vadd.f32 %v1253, %v1260
      %v1293 = vadd.f32 %v1254, %v1260
      %v1294 = vld [vmem:[%s3] sm:$0x1]
      %v1296 = vlaneseq
      %v1297 = vshrl.u32 %v1296, 7
      %v1298 = vsub.s32 0, %v1297
      %v1299 = vrot.slane %v1294, %v1298
      %v1301 = vmul.f32 %v1262, %v1299
      %v1302 = vmul.f32 %v1263, %v1299
      %v1303 = vmul.f32 %v1264, %v1299
      %v1304 = vmul.f32 %v1265, %v1299
      %v1305 = vmul.f32 %v1266, %v1299
      %v1306 = vmul.f32 %v1267, %v1299
      %v1307 = vmul.f32 %v1268, %v1299
      %v1308 = vmul.f32 %v1269, %v1299
      %v1309 = vmul.f32 %v1270, %v1299
      %v1310 = vmul.f32 %v1271, %v1299
      %v1311 = vmul.f32 %v1272, %v1299
      %v1312 = vmul.f32 %v1273, %v1299
      %v1313 = vmul.f32 %v1274, %v1299
      %v1314 = vmul.f32 %v1275, %v1299
      %v1315 = vmul.f32 %v1276, %v1299
      %v1316 = vmul.f32 %v1277, %v1299
      %v1317 = vmul.f32 %v1278, %v1299
      %v1318 = vmul.f32 %v1279, %v1299
      %v1319 = vmul.f32 %v1280, %v1299
      %v1320 = vmul.f32 %v1281, %v1299
      %v1321 = vmul.f32 %v1282, %v1299
      %v1322 = vmul.f32 %v1283, %v1299
      %v1323 = vmul.f32 %v1284, %v1299
      %v1324 = vmul.f32 %v1285, %v1299
      %v1325 = vmul.f32 %v1286, %v1299
      %v1326 = vmul.f32 %v1287, %v1299
      %v1327 = vmul.f32 %v1288, %v1299
      %v1328 = vmul.f32 %v1289, %v1299
      %v1329 = vmul.f32 %v1290, %v1299
      %v1330 = vmul.f32 %v1291, %v1299
      %v1331 = vmul.f32 %v1292, %v1299
      %v1332 = vmul.f32 %v1293, %v1299
      %1333 = vst.msk [vmem:[%s197] sm:$0xff] %vm198, %v1301
      %1334 = vst.msk [vmem:[%s197 + $0x8] sm:$0xff] %vm198, %v1302
      %1335 = vst.msk [vmem:[%s197 + $0x10] sm:$0xff] %vm198, %v1303
      %1336 = vst.msk [vmem:[%s197 + $0x18] sm:$0xff] %vm198, %v1304
      %1337 = vst.msk [vmem:[%s197 + $0x20] sm:$0xff] %vm198, %v1305
      %1338 = vst.msk [vmem:[%s197 + $0x28] sm:$0xff] %vm198, %v1306
      %1339 = vst.msk [vmem:[%s197 + $0x30] sm:$0xff] %vm198, %v1307
      %1340 = vst.msk [vmem:[%s197 + $0x38] sm:$0xff] %vm198, %v1308
      %1341 = vst.msk [vmem:[%s197 + $0x40] sm:$0xff] %vm198, %v1309
      %1342 = vst.msk [vmem:[%s197 + $0x48] sm:$0xff] %vm198, %v1310
      %1343 = vst.msk [vmem:[%s197 + $0x50] sm:$0xff] %vm198, %v1311
      %1344 = vst.msk [vmem:[%s197 + $0x58] sm:$0xff] %vm198, %v1312
      %1345 = vst.msk [vmem:[%s197 + $0x60] sm:$0xff] %vm198, %v1313
      %1346 = vst.msk [vmem:[%s197 + $0x68] sm:$0xff] %vm198, %v1314
      %1347 = vst.msk [vmem:[%s197 + $0x70] sm:$0xff] %vm198, %v1315
      %1348 = vst.msk [vmem:[%s197 + $0x78] sm:$0xff] %vm198, %v1316
      %1349 = vst.msk [vmem:[%s197 + $0x80] sm:$0xff] %vm198, %v1317
      %1350 = vst.msk [vmem:[%s197 + $0x88] sm:$0xff] %vm198, %v1318
      %1351 = vst.msk [vmem:[%s197 + $0x90] sm:$0xff] %vm198, %v1319
      %1352 = vst.msk [vmem:[%s197 + $0x98] sm:$0xff] %vm198, %v1320
      %1353 = vst.msk [vmem:[%s197 + $0xa0] sm:$0xff] %vm198, %v1321
      %1354 = vst.msk [vmem:[%s197 + $0xa8] sm:$0xff] %vm198, %v1322
      %1355 = vst.msk [vmem:[%s197 + $0xb0] sm:$0xff] %vm198, %v1323
      %1356 = vst.msk [vmem:[%s197 + $0xb8] sm:$0xff] %vm198, %v1324
      %1357 = vst.msk [vmem:[%s197 + $0xc0] sm:$0xff] %vm198, %v1325
      %1358 = vst.msk [vmem:[%s197 + $0xc8] sm:$0xff] %vm198, %v1326
      %1359 = vst.msk [vmem:[%s197 + $0xd0] sm:$0xff] %vm198, %v1327
      %1360 = vst.msk [vmem:[%s197 + $0xd8] sm:$0xff] %vm198, %v1328
      %1361 = vst.msk [vmem:[%s197 + $0xe0] sm:$0xff] %vm198, %v1329
      %1362 = vst.msk [vmem:[%s197 + $0xe8] sm:$0xff] %vm198, %v1330
      %1363 = vst.msk [vmem:[%s197 + $0xf0] sm:$0xff] %vm198, %v1331
      %1364 = vst.msk [vmem:[%s197 + $0xf8] sm:$0xff] %vm198, %v1332
      %p1365 = scmp.lt.s32.totalorder %s15, 1
      %s1366 = scalar_select %p1365, %s15, 1
      %s1367 = smul.addr %s1366, 32
      %s1368 = smul.addr %s1367, 8
      %s1369 = scalar_lea.vmem %s4, %s1368
      // Predicated region
      $region37: #{_lambda_.7} parent=35 // pred_check
        %p1370 = pneg %p122
      $region38: #{_lambda_.7} parent=35 // pred_check_branch
        %1372 = sbr.rel (%p1370) target = $region40
      $region39: #{_lambda_.7} parent=35 // pred_region
        _
      $region40: #{_lambda_.7} parent=35 // pred_fallthru
        _
    $region36: #{_lambda_.7} parent=5 // pred_fallthru
      _
    %p1373 = scmp.le.s32.totalorder 2, %s10
    // Predicated region
    $region41: #{_lambda_.7} parent=5 // pred_check
      %p1374 = pneg %p1373
    $region42: #{_lambda_.7} parent=5 // pred_check_branch
      %1376 = sbr.rel (%p1374) target = $region44
    $region43: #{_lambda_.7} parent=5 // pred_region
      %s1377 = ssub.s32 %s10, 2
      // Predicated region
      $region45: #{_lambda_.7} parent=43 // pred_check
        %p1378 = pneg %p128
      $region46: #{_lambda_.7} parent=43 // pred_check_branch
        %1380 = sbr.rel (%p1378) target = $region48
      $region47: #{_lambda_.7} parent=43 // pred_region
        %p1381 = scmp.lt.s32.totalorder %s16, 1
        %s1382 = scalar_select %p1381, %s16, 1
        %s1383 = smul.addr %s1382, 32
        %s1384 = smul.addr %s1383, 8
        %s1385 = scalar_lea.vmem %s4, %s1384
      $region48: #{_lambda_.7} parent=43 // pred_fallthru
        _
    $region44: #{_lambda_.7} parent=5 // pred_fallthru
      _
  $region6: #{_lambda_.7} parent=0 // loop_footer
    %s14 = sadd.s32 1, %s10
  $region7: #{_lambda_.7} parent=0 // loop_footer_branch
    %9 = sbr.rel target = $region3
  $region8: #{_lambda_.7} parent=0 // loop_exit
    _

// kernel: _lambda_.9
$region0: #{_lambda_.9}
  #allocation0 [shape = 'u32[]', space=smem, size = 0x4, offset = 0x4, fixed_abs, tag = 'smem constant byte address 0x4 - core index']
  #allocation1 [shape = 'u32[144,128]{1,0:T(1,128)}', space=vmem, size = 0x12000, scoped, tag = 'internal scratch']
  %s0 = inlined_call_operand.vmem [shape: f32[512,8], index: 0, kind: input, shape index: {}]
  %s1 = inlined_call_operand.vmem [shape: f32[512,4], index: 1, kind: input, shape index: {}]
  %s2 = inlined_call_operand.vmem [shape: f32[8,8], index: 2, kind: input, shape index: {}]
  %s3 = inlined_call_operand.vmem [shape: f32[4,8], index: 3, kind: input, shape index: {}]
  %s4 = inlined_call_operand.vmem [shape: f32[1,8], index: 4, kind: input, shape index: {}]
  %s5 = inlined_call_operand.vmem [shape: f32[1,8], index: 5, kind: input, shape index: {}]
  %s6 = inlined_call_operand.vmem [shape: f32[512,8], index: 6, kind: output, shape index: {}]
  %s7 = sld [smem:[#allocation0]]
  $region57: #{_lambda_.9} parent=0
    _
  %s9 = ssub.s32 1, %s7
  %s10 = scalar_select 0, %s9, %s7
  loop: start=0, step=1, limit=4
  $region2: #{_lambda_.9} parent=0 // loop_pre_header
    _
  $region3: #{_lambda_.9} parent=0 // loop_header
    %s12 = sphi 0, %s16
    %p13 = scmp.ge.s32.totalorder %s12, 4
    %s22 = sphi 0, %s24
    %s25 = sphi 0, %s22
    %s26 = sphi 0, %s25
    %s42 = sphi 0, %s26
    %s48 = sphi 0, %s50
    %s51 = sphi 0, %s48
    %s52 = sphi 0, %s51
    %s68 = sphi 0, %s52
    %s72 = sphi 0, %s72
    %s74 = sphi 0, %s72
    %s75 = sphi 0, %s74
    %s89 = sphi 0, %s75
    %s93 = sphi 0, %s93
    %s95 = sphi 0, %s93
    %s96 = sphi 0, %s95
    %s110 = sphi 0, %s96
    %s114 = sphi 0, %s114
    %s116 = sphi 0, %s114
    %s117 = sphi 0, %s116
    %s131 = sphi 0, %s117
    %s135 = sphi 0, %s135
    %s137 = sphi 0, %s135
    %s138 = sphi 0, %s137
    %s152 = sphi 0, %s138
    %s158 = sphi 0, %s160
    %s161 = sphi 0, %s158
    %s162 = sphi 0, %s161
    %s178 = sphi 0, %s162
  $region4: #{_lambda_.9} parent=0 // loop_header_branch
    %15 = sbr.rel (%p13) target = $region8
  $region5: #{_lambda_.9} parent=0 // loop_body
    %s17 = ssub.s32 %s12, 1
    %s18 = ssub.s32 %s12, 2
    %s19 = sadd.s32 %s12, 1
    %s20 = ssub.s32 %s12, %s19
    %p21 = scmp.eq.s32.totalorder %s20, 0
    %s23 = sadd.s32 %s22, 1
    %s24 = scalar_select %p21, %s22, %s23
    %p27 = pneg %p21
    %p28 = scmp.eq.s32.totalorder %s12, 1
    %p29 = por %p27, %p28
    %p30 = scmp.ne.s32.totalorder %s22, %s25
    %p31 = scmp.eq.s32.totalorder %s12, 0
    %p32 = por %p30, %p31
    %p33 = scmp.ne.s32.totalorder %s22, %s25
    %p34 = scmp.eq.s32.totalorder %s17, 1
    %p35 = por %p33, %p34
    %p36 = scmp.ne.s32.totalorder %s25, %s26
    %p37 = scmp.eq.s32.totalorder %s17, 0
    %p38 = por %p36, %p37
    %p39 = scmp.ne.s32.totalorder %s25, %s26
    %p40 = scmp.eq.s32.totalorder %s18, 1
    %p41 = por %p39, %p40
    %p43 = scmp.ne.s32.totalorder %s26, %s42
    %p44 = scmp.eq.s32.totalorder %s18, 0
    %p45 = por %p43, %p44
    %s46 = ssub.s32 %s12, %s19
    %p47 = scmp.eq.s32.totalorder %s46, 0
    %s49 = sadd.s32 %s48, 1
    %s50 = scalar_select %p47, %s48, %s49
    %p53 = pneg %p47
    %p54 = scmp.eq.s32.totalorder %s12, 1
    %p55 = por %p53, %p54
    %p56 = scmp.ne.s32.totalorder %s48, %s51
    %p57 = scmp.eq.s32.totalorder %s12, 0
    %p58 = por %p56, %p57
    %p59 = scmp.ne.s32.totalorder %s48, %s51
    %p60 = scmp.eq.s32.totalorder %s17, 1
    %p61 = por %p59, %p60
    %p62 = scmp.ne.s32.totalorder %s51, %s52
    %p63 = scmp.eq.s32.totalorder %s17, 0
    %p64 = por %p62, %p63
    %p65 = scmp.ne.s32.totalorder %s51, %s52
    %p66 = scmp.eq.s32.totalorder %s18, 1
    %p67 = por %p65, %p66
    %p69 = scmp.ne.s32.totalorder %s52, %s68
    %p70 = scmp.eq.s32.totalorder %s18, 0
    %p71 = por %p69, %p70
    %s73 = sadd.s32 %s72, 1
    %p76 = scmp.eq.s32.totalorder %s12, 1
    %p77 = scmp.ne.s32.totalorder %s72, %s74
    %p78 = scmp.eq.s32.totalorder %s12, 0
    %p79 = por %p77, %p78
    %p80 = scmp.ne.s32.totalorder %s72, %s74
    %p81 = scmp.eq.s32.totalorder %s17, 1
    %p82 = por %p80, %p81
    %p83 = scmp.ne.s32.totalorder %s74, %s75
    %p84 = scmp.eq.s32.totalorder %s17, 0
    %p85 = por %p83, %p84
    %p86 = scmp.ne.s32.totalorder %s74, %s75
    %p87 = scmp.eq.s32.totalorder %s18, 1
    %p88 = por %p86, %p87
    %p90 = scmp.ne.s32.totalorder %s75, %s89
    %p91 = scmp.eq.s32.totalorder %s18, 0
    %p92 = por %p90, %p91
    %s94 = sadd.s32 %s93, 1
    %p97 = scmp.eq.s32.totalorder %s12, 1
    %p98 = scmp.ne.s32.totalorder %s93, %s95
    %p99 = scmp.eq.s32.totalorder %s12, 0
    %p100 = por %p98, %p99
    %p101 = scmp.ne.s32.totalorder %s93, %s95
    %p102 = scmp.eq.s32.totalorder %s17, 1
    %p103 = por %p101, %p102
    %p104 = scmp.ne.s32.totalorder %s95, %s96
    %p105 = scmp.eq.s32.totalorder %s17, 0
    %p106 = por %p104, %p105
    %p107 = scmp.ne.s32.totalorder %s95, %s96
    %p108 = scmp.eq.s32.totalorder %s18, 1
    %p109 = por %p107, %p108
    %p111 = scmp.ne.s32.totalorder %s96, %s110
    %p112 = scmp.eq.s32.totalorder %s18, 0
    %p113 = por %p111, %p112
    %s115 = sadd.s32 %s114, 1
    %p118 = scmp.eq.s32.totalorder %s12, 1
    %p119 = scmp.ne.s32.totalorder %s114, %s116
    %p120 = scmp.eq.s32.totalorder %s12, 0
    %p121 = por %p119, %p120
    %p122 = scmp.ne.s32.totalorder %s114, %s116
    %p123 = scmp.eq.s32.totalorder %s17, 1
    %p124 = por %p122, %p123
    %p125 = scmp.ne.s32.totalorder %s116, %s117
    %p126 = scmp.eq.s32.totalorder %s17, 0
    %p127 = por %p125, %p126
    %p128 = scmp.ne.s32.totalorder %s116, %s117
    %p129 = scmp.eq.s32.totalorder %s18, 1
    %p130 = por %p128, %p129
    %p132 = scmp.ne.s32.totalorder %s117, %s131
    %p133 = scmp.eq.s32.totalorder %s18, 0
    %p134 = por %p132, %p133
    %s136 = sadd.s32 %s135, 1
    %p139 = scmp.eq.s32.totalorder %s12, 1
    %p140 = scmp.ne.s32.totalorder %s135, %s137
    %p141 = scmp.eq.s32.totalorder %s12, 0
    %p142 = por %p140, %p141
    %p143 = scmp.ne.s32.totalorder %s135, %s137
    %p144 = scmp.eq.s32.totalorder %s17, 1
    %p145 = por %p143, %p144
    %p146 = scmp.ne.s32.totalorder %s137, %s138
    %p147 = scmp.eq.s32.totalorder %s17, 0
    %p148 = por %p146, %p147
    %p149 = scmp.ne.s32.totalorder %s137, %s138
    %p150 = scmp.eq.s32.totalorder %s18, 1
    %p151 = por %p149, %p150
    %p153 = scmp.ne.s32.totalorder %s138, %s152
    %p154 = scmp.eq.s32.totalorder %s18, 0
    %p155 = por %p153, %p154
    %s156 = ssub.s32 %s12, %s19
    %p157 = scmp.eq.s32.totalorder %s156, 0
    %s159 = sadd.s32 %s158, 1
    %s160 = scalar_select %p157, %s158, %s159
    %p163 = pneg %p157
    %p164 = scmp.eq.s32.totalorder %s12, 1
    %p165 = por %p163, %p164
    %p166 = scmp.ne.s32.totalorder %s158, %s161
    %p167 = scmp.eq.s32.totalorder %s12, 0
    %p168 = por %p166, %p167
    %p169 = scmp.ne.s32.totalorder %s158, %s161
    %p170 = scmp.eq.s32.totalorder %s17, 1
    %p171 = por %p169, %p170
    %p172 = scmp.ne.s32.totalorder %s161, %s162
    %p173 = scmp.eq.s32.totalorder %s17, 0
    %p174 = por %p172, %p173
    %p175 = scmp.ne.s32.totalorder %s161, %s162
    %p176 = scmp.eq.s32.totalorder %s18, 1
    %p177 = por %p175, %p176
    %p179 = scmp.ne.s32.totalorder %s162, %s178
    %p180 = scmp.eq.s32.totalorder %s18, 0
    %p181 = por %p179, %p180
    %p182 = scmp.le.s32.totalorder 1, %s12
    %p183 = scmp.lt.s32.totalorder %s12, 3
    %p184 = pnand %p182, %p183
    %p185 = pneg %p184
    // Predicated region
    $region9: #{_lambda_.9} parent=5 // pred_check
      _
    $region10: #{_lambda_.9} parent=5 // pred_check_branch
      %187 = sbr.rel (%p184) target = $region12
    $region11: #{_lambda_.9} parent=5 // pred_region
      %s188 = ssub.s32 %s12, 1
      // Predicated region
      $region13: #{_lambda_.9} parent=11 // pred_check
        %p189 = pneg %p85
      $region14: #{_lambda_.9} parent=11 // pred_check_branch
        %191 = sbr.rel (%p189) target = $region16
      $region15: #{_lambda_.9} parent=11 // pred_region
        _
      $region16: #{_lambda_.9} parent=11 // pred_fallthru
        _
      // Predicated region
      $region17: #{_lambda_.9} parent=11 // pred_check
        %p192 = pneg %p106
      $region18: #{_lambda_.9} parent=11 // pred_check_branch
        %194 = sbr.rel (%p192) target = $region20
      $region19: #{_lambda_.9} parent=11 // pred_region
        _
      $region20: #{_lambda_.9} parent=11 // pred_fallthru
        _
      // Predicated region
      $region21: #{_lambda_.9} parent=11 // pred_check
        %p195 = pneg %p127
      $region22: #{_lambda_.9} parent=11 // pred_check_branch
        %197 = sbr.rel (%p195) target = $region24
      $region23: #{_lambda_.9} parent=11 // pred_region
        _
      $region24: #{_lambda_.9} parent=11 // pred_fallthru
        _
      // Predicated region
      $region25: #{_lambda_.9} parent=11 // pred_check
        %p198 = pneg %p148
      $region26: #{_lambda_.9} parent=11 // pred_check_branch
        %200 = sbr.rel (%p198) target = $region28
      $region27: #{_lambda_.9} parent=11 // pred_region
        _
      $region28: #{_lambda_.9} parent=11 // pred_fallthru
        _
    $region12: #{_lambda_.9} parent=5 // pred_fallthru
      _
    %p201 = scmp.lt.s32.totalorder %s12, 2
    // Predicated region
    $region29: #{_lambda_.9} parent=5 // pred_check
      %p202 = pneg %p201
    $region30: #{_lambda_.9} parent=5 // pred_check_branch
      %204 = sbr.rel (%p202) target = $region32
    $region31: #{_lambda_.9} parent=5 // pred_region
      // Predicated region
      $region33: #{_lambda_.9} parent=31 // pred_check
        %p205 = pneg %p32
      $region34: #{_lambda_.9} parent=31 // pred_check_branch
        %207 = sbr.rel (%p205) target = $region36
      $region35: #{_lambda_.9} parent=31 // pred_region
        %s208 = smul.u32 32, %s12
        %p209 = scmp.lt.s32.totalorder %s208, 63
        %s210 = scalar_select %p209, %s208, 63
        %s211 = smul.addr %s210, 8
        %s212 = scalar_lea.vmem %s0, %s211
        %s213 = smul.u32 32, %s12
      $region36: #{_lambda_.9} parent=31 // pred_fallthru
        _
      // Predicated region
      $region37: #{_lambda_.9} parent=31 // pred_check
        %p214 = pneg %p58
      $region38: #{_lambda_.9} parent=31 // pred_check_branch
        %216 = sbr.rel (%p214) target = $region40
      $region39: #{_lambda_.9} parent=31 // pred_region
        %s217 = smul.u32 32, %s12
        %p218 = scmp.lt.s32.totalorder %s217, 63
        %s219 = scalar_select %p218, %s217, 63
        %s220 = smul.addr %s219, 8
        %s221 = scalar_lea.vmem %s1, %s220
        %s222 = smul.u32 32, %s12
      $region40: #{_lambda_.9} parent=31 // pred_fallthru
        _
    $region32: #{_lambda_.9} parent=5 // pred_fallthru
      _
    %p223 = scmp.le.s32.totalorder 1, %s12
    %p224 = scmp.lt.s32.totalorder %s12, 3
    %p225 = pnand %p223, %p224
    %p226 = pneg %p225
    // Predicated region
    $region41: #{_lambda_.9} parent=5 // pred_check
      _
    $region42: #{_lambda_.9} parent=5 // pred_check_branch
      %228 = sbr.rel (%p225) target = $region44
    $region43: #{_lambda_.9} parent=5 // pred_region
      %s229 = ssub.s32 %s12, 1
      %s230 = smul.u32 32, %s17
      %p231 = scmp.lt.s32.totalorder %s230, 63
      %s232 = scalar_select %p231, %s230, 63
      %s233 = smul.addr %s232, 8
      %s234 = scalar_lea.vmem %s0, %s233
      %p235 = pneg %p38
      %p236 = pneg %p35
      %s237 = smul.u32 32, %s17
      %p238 = scmp.lt.s32.totalorder %s237, 63
      %s239 = scalar_select %p238, %s237, 63
      %s240 = smul.addr %s239, 8
      %s241 = scalar_lea.vmem %s1, %s240
      %p242 = pneg %p64
      %p243 = pneg %p61
      %p244 = pneg %p85
      %p245 = pneg %p82
      %p246 = pneg %p106
      %p247 = pneg %p103
      %p248 = pneg %p127
      %p249 = pneg %p124
      %p250 = pneg %p148
      %p251 = pneg %p145
      %p252 = pneg %p174
      %p253 = pneg %p171
      %s254 = smul.u32 32, %s17
      %p255 = scmp.lt.s32.totalorder %s254, 63
      %s256 = scalar_select %p255, %s254, 63
      %s257 = smul.addr %s256, 8
      %s258 = scalar_lea.vmem %s6, %s257
      %s259 = smul.u32 32, %s17
      %p260 = scmp.lt.s32.totalorder %s259, 63
      %s261 = scalar_select %p260, %s259, 63
      %s262 = smul.addr %s261, 8
      %s263 = scalar_lea.vmem %s0, %s262
      %s264 = smul.u32 32, %s17
      %s265 = smul.u32 32, %s17
      %p266 = scmp.lt.s32.totalorder %s265, 63
      %s267 = scalar_select %p266, %s265, 63
      %s268 = smul.addr %s267, 8
      %s269 = scalar_lea.vmem %s1, %s268
      %s270 = smul.u32 32, %s17
      %s271 = smul.u32 32, %s17
      %p272 = scmp.lt.s32.totalorder %s271, 63
      %s273 = scalar_select %p272, %s271, 63
      %s274 = smul.addr %s273, 8
      %s275 = scalar_lea.vmem %s6, %s274
      %s276 = smul.u32 32, %s17
      %v278 = vld [vmem:[%s263] sm:$0xff]
      %v279 = vld [vmem:[%s263 + $0x8] sm:$0xff]
      %v280 = vld [vmem:[%s263 + $0x10] sm:$0xff]
      %v281 = vld [vmem:[%s263 + $0x18] sm:$0xff]
      %v282 = vld [vmem:[%s263 + $0x20] sm:$0xff]
      %v283 = vld [vmem:[%s263 + $0x28] sm:$0xff]
      %v284 = vld [vmem:[%s263 + $0x30] sm:$0xff]
      %v285 = vld [vmem:[%s263 + $0x38] sm:$0xff]
      %v286 = vld [vmem:[%s263 + $0x40] sm:$0xff]
      %v287 = vld [vmem:[%s263 + $0x48] sm:$0xff]
      %v288 = vld [vmem:[%s263 + $0x50] sm:$0xff]
      %v289 = vld [vmem:[%s263 + $0x58] sm:$0xff]
      %v290 = vld [vmem:[%s263 + $0x60] sm:$0xff]
      %v291 = vld [vmem:[%s263 + $0x68] sm:$0xff]
      %v292 = vld [vmem:[%s263 + $0x70] sm:$0xff]
      %v293 = vld [vmem:[%s263 + $0x78] sm:$0xff]
      %v294 = vld [vmem:[%s263 + $0x80] sm:$0xff]
      %v295 = vld [vmem:[%s263 + $0x88] sm:$0xff]
      %v296 = vld [vmem:[%s263 + $0x90] sm:$0xff]
      %v297 = vld [vmem:[%s263 + $0x98] sm:$0xff]
      %v298 = vld [vmem:[%s263 + $0xa0] sm:$0xff]
      %v299 = vld [vmem:[%s263 + $0xa8] sm:$0xff]
      %v300 = vld [vmem:[%s263 + $0xb0] sm:$0xff]
      %v301 = vld [vmem:[%s263 + $0xb8] sm:$0xff]
      %v302 = vld [vmem:[%s263 + $0xc0] sm:$0xff]
      %v303 = vld [vmem:[%s263 + $0xc8] sm:$0xff]
      %v304 = vld [vmem:[%s263 + $0xd0] sm:$0xff]
      %v305 = vld [vmem:[%s263 + $0xd8] sm:$0xff]
      %v306 = vld [vmem:[%s263 + $0xe0] sm:$0xff]
      %v307 = vld [vmem:[%s263 + $0xe8] sm:$0xff]
      %v308 = vld [vmem:[%s263 + $0xf0] sm:$0xff]
      %v309 = vld [vmem:[%s263 + $0xf8] sm:$0xff]
      %v310 = vpack.c.bf16 %v279, %v278
      %v311 = vpack.c.bf16 %v281, %v280
      %v312 = vpack.c.bf16 %v283, %v282
      %v313 = vpack.c.bf16 %v285, %v284
      %v314 = vpack.c.bf16 %v287, %v286
      %v315 = vpack.c.bf16 %v289, %v288
      %v316 = vpack.c.bf16 %v291, %v290
      %v317 = vpack.c.bf16 %v293, %v292
      %v318 = vpack.c.bf16 %v295, %v294
      %v319 = vpack.c.bf16 %v297, %v296
      %v320 = vpack.c.bf16 %v299, %v298
      %v321 = vpack.c.bf16 %v301, %v300
      %v322 = vpack.c.bf16 %v303, %v302
      %v323 = vpack.c.bf16 %v305, %v304
      %v324 = vpack.c.bf16 %v307, %v306
      %v325 = vpack.c.bf16 %v309, %v308
      %v326 = vld [vmem:[%s2] sm:$0xff]
      %v327 = vpack.c.bf16 %v326, %v326
      %v328 = vld [vmem:[%s269] sm:$0xff]
      %v329 = vld [vmem:[%s269 + $0x8] sm:$0xff]
      %v330 = vld [vmem:[%s269 + $0x10] sm:$0xff]
      %v331 = vld [vmem:[%s269 + $0x18] sm:$0xff]
      %v332 = vld [vmem:[%s269 + $0x20] sm:$0xff]
      %v333 = vld [vmem:[%s269 + $0x28] sm:$0xff]
      %v334 = vld [vmem:[%s269 + $0x30] sm:$0xff]
      %v335 = vld [vmem:[%s269 + $0x38] sm:$0xff]
      %v336 = vld [vmem:[%s269 + $0x40] sm:$0xff]
      %v337 = vld [vmem:[%s269 + $0x48] sm:$0xff]
      %v338 = vld [vmem:[%s269 + $0x50] sm:$0xff]
      %v339 = vld [vmem:[%s269 + $0x58] sm:$0xff]
      %v340 = vld [vmem:[%s269 + $0x60] sm:$0xff]
      %v341 = vld [vmem:[%s269 + $0x68] sm:$0xff]
      %v342 = vld [vmem:[%s269 + $0x70] sm:$0xff]
      %v343 = vld [vmem:[%s269 + $0x78] sm:$0xff]
      %v344 = vld [vmem:[%s269 + $0x80] sm:$0xff]
      %v345 = vld [vmem:[%s269 + $0x88] sm:$0xff]
      %v346 = vld [vmem:[%s269 + $0x90] sm:$0xff]
      %v347 = vld [vmem:[%s269 + $0x98] sm:$0xff]
      %v348 = vld [vmem:[%s269 + $0xa0] sm:$0xff]
      %v349 = vld [vmem:[%s269 + $0xa8] sm:$0xff]
      %v350 = vld [vmem:[%s269 + $0xb0] sm:$0xff]
      %v351 = vld [vmem:[%s269 + $0xb8] sm:$0xff]
      %v352 = vld [vmem:[%s269 + $0xc0] sm:$0xff]
      %v353 = vld [vmem:[%s269 + $0xc8] sm:$0xff]
      %v354 = vld [vmem:[%s269 + $0xd0] sm:$0xff]
      %v355 = vld [vmem:[%s269 + $0xd8] sm:$0xff]
      %v356 = vld [vmem:[%s269 + $0xe0] sm:$0xff]
      %v357 = vld [vmem:[%s269 + $0xe8] sm:$0xff]
      %v358 = vld [vmem:[%s269 + $0xf0] sm:$0xff]
      %v359 = vld [vmem:[%s269 + $0xf8] sm:$0xff]
      %v360 = vpack.c.bf16 %v329, %v328
      %v361 = vpack.c.bf16 %v331, %v330
      %v362 = vpack.c.bf16 %v333, %v332
      %v363 = vpack.c.bf16 %v335, %v334
      %v364 = vpack.c.bf16 %v337, %v336
      %v365 = vpack.c.bf16 %v339, %v338
      %v366 = vpack.c.bf16 %v341, %v340
      %v367 = vpack.c.bf16 %v343, %v342
      %v368 = vpack.c.bf16 %v345, %v344
      %v369 = vpack.c.bf16 %v347, %v346
      %v370 = vpack.c.bf16 %v349, %v348
      %v371 = vpack.c.bf16 %v351, %v350
      %v372 = vpack.c.bf16 %v353, %v352
      %v373 = vpack.c.bf16 %v355, %v354
      %v374 = vpack.c.bf16 %v357, %v356
      %v375 = vpack.c.bf16 %v359, %v358
      %v376 = vld [vmem:[%s3] sm:$0xf]
      %v377 = vpack.c.bf16 %v376, %v376
      %vm378 = vcmask 31744
      %v380 = vsel %vm378, %v360, 0
      %v383 = vsel %vm378, %v361, 0
      %v386 = vsel %vm378, %v362, 0
      %v389 = vsel %vm378, %v363, 0
      %v392 = vsel %vm378, %v364, 0
      %v395 = vsel %vm378, %v365, 0
      %v398 = vsel %vm378, %v366, 0
      %v401 = vsel %vm378, %v367, 0
      %v404 = vsel %vm378, %v368, 0
      %v407 = vsel %vm378, %v369, 0
      %v410 = vsel %vm378, %v370, 0
      %v413 = vsel %vm378, %v371, 0
      %v416 = vsel %vm378, %v372, 0
      %v419 = vsel %vm378, %v373, 0
      %v422 = vsel %vm378, %v374, 0
      %v425 = vsel %vm378, %v375, 0
      %vm427 = vcmask 1041408
      %v429 = vsel %vm427, %v377, 0
      %431 = vmatprep.subr.bf16.mxu0 0
      %432 = vmatpush1.bf16.msra.mxu0 %v429
      %433 = vmatprep.subr.bf16.mxu0 0
      %434 = vmatpush1.bf16.msra.mxu0 0
      %435 = vmatprep.subr.bf16.mxu0 0
      %436 = vmatpush1.bf16.msra.mxu0 0
      %437 = vmatprep.subr.bf16.mxu0 0
      %438 = vmatpush1.bf16.msra.mxu0 0
      %439 = vmatprep.subr.bf16.mxu0 0
      %440 = vmatpush1.bf16.msra.mxu0 0
      %441 = vmatprep.subr.bf16.mxu0 0
      %442 = vmatpush1.bf16.msra.mxu0 0
      %443 = vmatprep.subr.bf16.mxu0 0
      %444 = vmatpush1.bf16.msra.mxu0 0
      %445 = vmatprep.subr.bf16.mxu0 0
      %446 = vmatpush1.bf16.msra.mxu0 0
      %447 = vmatprep.subr.bf16.mxu0 0
      %448 = vmatpush1.bf16.msra.mxu0 0
      %449 = vmatprep.subr.bf16.mxu0 0
      %450 = vmatpush1.bf16.msra.mxu0 0
      %451 = vmatprep.subr.bf16.mxu0 0
      %452 = vmatpush1.bf16.msra.mxu0 0
      %453 = vmatprep.subr.bf16.mxu0 0
      %454 = vmatpush1.bf16.msra.mxu0 0
      %455 = vmatprep.subr.bf16.mxu0 0
      %456 = vmatpush1.bf16.msra.mxu0 0
      %457 = vmatprep.subr.bf16.mxu0 0
      %458 = vmatpush1.bf16.msra.mxu0 0
      %459 = vmatprep.subr.bf16.mxu0 0
      %460 = vmatpush1.bf16.msra.mxu0 0
      %461 = vmatprep.subr.bf16.mxu0 0
      %462 = vmatpush1.bf16.msra.mxu0 0
      %463 = vmatprep.mubr.bf16.mxu0 0
      %464 = vmatmul.mubr.bf16.gmra.mrb[0].mxu0 %v380
      %v465 = vpop.f32.mrb[0].mxu0
      %v466 = vadd.f32 0.0, %v465
      %v467 = vpop.f32.mrb[0].mxu0
      %v468 = vpop.f32.mrb[0].mxu0
      %v469 = vadd.f32 0.0, %v468
      %v470 = vpop.f32.mrb[0].mxu0
      %471 = vmatprep.mubr.bf16.mxu0 0
      %472 = vmatmul.mubr.bf16.gmra.mrb[0].mxu0 %v383
      %v473 = vpop.f32.mrb[0].mxu0
      %v474 = vadd.f32 0.0, %v473
      %v475 = vpop.f32.mrb[0].mxu0
      %v476 = vpop.f32.mrb[0].mxu0
      %v477 = vadd.f32 0.0, %v476
      %v478 = vpop.f32.mrb[0].mxu0
      %479 = vmatprep.mubr.bf16.mxu0 0
      %480 = vmatmul.mubr.bf16.gmra.mrb[0].mxu0 %v386
      %v481 = vpop.f32.mrb[0].mxu0
      %v482 = vadd.f32 0.0, %v481
      %v483 = vpop.f32.mrb[0].mxu0
      %v484 = vpop.f32.mrb[0].mxu0
      %v485 = vadd.f32 0.0, %v484
      %v486 = vpop.f32.mrb[0].mxu0
      %487 = vmatprep.mubr.bf16.mxu0 0
      %488 = vmatmul.mubr.bf16.gmra.mrb[0].mxu0 %v389
      %v489 = vpop.f32.mrb[0].mxu0
      %v490 = vadd.f32 0.0, %v489
      %v491 = vpop.f32.mrb[0].mxu0
      %v492 = vpop.f32.mrb[0].mxu0
      %v493 = vadd.f32 0.0, %v492
      %v494 = vpop.f32.mrb[0].mxu0
      %495 = vmatprep.mubr.bf16.mxu0 0
      %496 = vmatmul.mubr.bf16.gmra.mrb[0].mxu0 %v392
      %v497 = vpop.f32.mrb[0].mxu0
      %v498 = vadd.f32 0.0, %v497
      %v499 = vpop.f32.mrb[0].mxu0
      %v500 = vpop.f32.mrb[0].mxu0
      %v501 = vadd.f32 0.0, %v500
      %v502 = vpop.f32.mrb[0].mxu0
      %503 = vmatprep.mubr.bf16.mxu0 0
      %504 = vmatmul.mubr.bf16.gmra.mrb[0].mxu0 %v395
      %v505 = vpop.f32.mrb[0].mxu0
      %v506 = vadd.f32 0.0, %v505
      %v507 = vpop.f32.mrb[0].mxu0
      %v508 = vpop.f32.mrb[0].mxu0
      %v509 = vadd.f32 0.0, %v508
      %v510 = vpop.f32.mrb[0].mxu0
      %511 = vmatprep.mubr.bf16.mxu0 0
      %512 = vmatmul.mubr.bf16.gmra.mrb[0].mxu0 %v398
      %v513 = vpop.f32.mrb[0].mxu0
      %v514 = vadd.f32 0.0, %v513
      %v515 = vpop.f32.mrb[0].mxu0
      %v516 = vpop.f32.mrb[0].mxu0
      %v517 = vadd.f32 0.0, %v516
      %v518 = vpop.f32.mrb[0].mxu0
      %519 = vmatprep.mubr.bf16.mxu0 0
      %520 = vmatmul.mubr.bf16.gmra.mrb[0].mxu0 %v401
      %v521 = vpop.f32.mrb[0].mxu0
      %v522 = vadd.f32 0.0, %v521
      %v523 = vpop.f32.mrb[0].mxu0
      %v524 = vpop.f32.mrb[0].mxu0
      %v525 = vadd.f32 0.0, %v524
      %v526 = vpop.f32.mrb[0].mxu0
      %527 = vmatprep.mubr.bf16.mxu0 0
      %528 = vmatmul.mubr.bf16.gmra.mrb[0].mxu0 %v404
      %v529 = vpop.f32.mrb[0].mxu0
      %v530 = vadd.f32 0.0, %v529
      %v531 = vpop.f32.mrb[0].mxu0
      %v532 = vpop.f32.mrb[0].mxu0
      %v533 = vadd.f32 0.0, %v532
      %v534 = vpop.f32.mrb[0].mxu0
      %535 = vmatprep.mubr.bf16.mxu0 0
      %536 = vmatmul.mubr.bf16.gmra.mrb[0].mxu0 %v407
      %v537 = vpop.f32.mrb[0].mxu0
      %v538 = vadd.f32 0.0, %v537
      %v539 = vpop.f32.mrb[0].mxu0
      %v540 = vpop.f32.mrb[0].mxu0
      %v541 = vadd.f32 0.0, %v540
      %v542 = vpop.f32.mrb[0].mxu0
      %543 = vmatprep.mubr.bf16.mxu0 0
      %544 = vmatmul.mubr.bf16.gmra.mrb[0].mxu0 %v410
      %v545 = vpop.f32.mrb[0].mxu0
      %v546 = vadd.f32 0.0, %v545
      %v547 = vpop.f32.mrb[0].mxu0
      %v548 = vpop.f32.mrb[0].mxu0
      %v549 = vadd.f32 0.0, %v548
      %v550 = vpop.f32.mrb[0].mxu0
      %551 = vmatprep.mubr.bf16.mxu0 0
      %552 = vmatmul.mubr.bf16.gmra.mrb[0].mxu0 %v413
      %v553 = vpop.f32.mrb[0].mxu0
      %v554 = vadd.f32 0.0, %v553
      %v555 = vpop.f32.mrb[0].mxu0
      %v556 = vpop.f32.mrb[0].mxu0
      %v557 = vadd.f32 0.0, %v556
      %v558 = vpop.f32.mrb[0].mxu0
      %559 = vmatprep.mubr.bf16.mxu0 0
      %560 = vmatmul.mubr.bf16.gmra.mrb[0].mxu0 %v416
      %v561 = vpop.f32.mrb[0].mxu0
      %v562 = vadd.f32 0.0, %v561
      %v563 = vpop.f32.mrb[0].mxu0
      %v564 = vpop.f32.mrb[0].mxu0
      %v565 = vadd.f32 0.0, %v564
      %v566 = vpop.f32.mrb[0].mxu0
      %567 = vmatprep.mubr.bf16.mxu0 0
      %568 = vmatmul.mubr.bf16.gmra.mrb[0].mxu0 %v419
      %v569 = vpop.f32.mrb[0].mxu0
      %v570 = vadd.f32 0.0, %v569
      %v571 = vpop.f32.mrb[0].mxu0
      %v572 = vpop.f32.mrb[0].mxu0
      %v573 = vadd.f32 0.0, %v572
      %v574 = vpop.f32.mrb[0].mxu0
      %575 = vmatprep.mubr.bf16.mxu0 0
      %576 = vmatmul.mubr.bf16.gmra.mrb[0].mxu0 %v422
      %v577 = vpop.f32.mrb[0].mxu0
      %v578 = vadd.f32 0.0, %v577
      %v579 = vpop.f32.mrb[0].mxu0
      %v580 = vpop.f32.mrb[0].mxu0
      %v581 = vadd.f32 0.0, %v580
      %v582 = vpop.f32.mrb[0].mxu0
      %583 = vmatprep.mubr.bf16.mxu0 0
      %584 = vmatmul.mubr.bf16.gmra.mrb[0].mxu0 %v425
      %v585 = vpop.f32.mrb[0].mxu0
      %v586 = vadd.f32 0.0, %v585
      %v587 = vpop.f32.mrb[0].mxu0
      %v588 = vpop.f32.mrb[0].mxu0
      %v589 = vadd.f32 0.0, %v588
      %v590 = vpop.f32.mrb[0].mxu0
      %591 = vdwg.mxu0
      %vm592 = vcmask 64512
      %v594 = vsel %vm592, %v310, 0
      %v597 = vsel %vm592, %v311, 0
      %v600 = vsel %vm592, %v312, 0
      %v603 = vsel %vm592, %v313, 0
      %v606 = vsel %vm592, %v314, 0
      %v609 = vsel %vm592, %v315, 0
      %v612 = vsel %vm592, %v316, 0
      %v615 = vsel %vm592, %v317, 0
      %v618 = vsel %vm592, %v318, 0
      %v621 = vsel %vm592, %v319, 0
      %v624 = vsel %vm592, %v320, 0
      %v627 = vsel %vm592, %v321, 0
      %v630 = vsel %vm592, %v322, 0
      %v633 = vsel %vm592, %v323, 0
      %v636 = vsel %vm592, %v324, 0
      %v639 = vsel %vm592, %v325, 0
      %vm641 = vcmask 1043456
      %v643 = vsel %vm641, %v327, 0
      %645 = vmatprep.subr.bf16.mxu0 0
      %646 = vmatpush1.bf16.msra.mxu0 %v643
      %647 = vmatprep.subr.bf16.mxu0 0
      %648 = vmatpush1.bf16.msra.mxu0 0
      %649 = vmatprep.subr.bf16.mxu0 0
      %650 = vmatpush1.bf16.msra.mxu0 0
      %651 = vmatprep.subr.bf16.mxu0 0
      %652 = vmatpush1.bf16.msra.mxu0 0
      %653 = vmatprep.subr.bf16.mxu0 0
      %654 = vmatpush1.bf16.msra.mxu0 0
      %655 = vmatprep.subr.bf16.mxu0 0
      %656 = vmatpush1.bf16.msra.mxu0 0
      %657 = vmatprep.subr.bf16.mxu0 0
      %658 = vmatpush1.bf16.msra.mxu0 0
      %659 = vmatprep.subr.bf16.mxu0 0
      %660 = vmatpush1.bf16.msra.mxu0 0
      %661 = vmatprep.subr.bf16.mxu0 0
      %662 = vmatpush1.bf16.msra.mxu0 0
      %663 = vmatprep.subr.bf16.mxu0 0
      %664 = vmatpush1.bf16.msra.mxu0 0
      %665 = vmatprep.subr.bf16.mxu0 0
      %666 = vmatpush1.bf16.msra.mxu0 0
      %667 = vmatprep.subr.bf16.mxu0 0
      %668 = vmatpush1.bf16.msra.mxu0 0
      %669 = vmatprep.subr.bf16.mxu0 0
      %670 = vmatpush1.bf16.msra.mxu0 0
      %671 = vmatprep.subr.bf16.mxu0 0
      %672 = vmatpush1.bf16.msra.mxu0 0
      %673 = vmatprep.subr.bf16.mxu0 0
      %674 = vmatpush1.bf16.msra.mxu0 0
      %675 = vmatprep.subr.bf16.mxu0 0
      %676 = vmatpush1.bf16.msra.mxu0 0
      %677 = vmatprep.mubr.bf16.mxu0 0
      %678 = vmatmul.mubr.bf16.gmra.mrb[0].mxu0 %v594
      %v679 = vpop.f32.mrb[0].mxu0
      %v680 = vadd.f32 %v466, %v679
      %v681 = vpop.f32.mrb[0].mxu0
      %v682 = vpop.f32.mrb[0].mxu0
      %v683 = vadd.f32 %v469, %v682
      %v684 = vpop.f32.mrb[0].mxu0
      %685 = vmatprep.mubr.bf16.mxu0 0
      %686 = vmatmul.mubr.bf16.gmra.mrb[0].mxu0 %v597
      %v687 = vpop.f32.mrb[0].mxu0
      %v688 = vadd.f32 %v474, %v687
      %v689 = vpop.f32.mrb[0].mxu0
      %v690 = vpop.f32.mrb[0].mxu0
      %v691 = vadd.f32 %v477, %v690
      %v692 = vpop.f32.mrb[0].mxu0
      %693 = vmatprep.mubr.bf16.mxu0 0
      %694 = vmatmul.mubr.bf16.gmra.mrb[0].mxu0 %v600
      %v695 = vpop.f32.mrb[0].mxu0
      %v696 = vadd.f32 %v482, %v695
      %v697 = vpop.f32.mrb[0].mxu0
      %v698 = vpop.f32.mrb[0].mxu0
      %v699 = vadd.f32 %v485, %v698
      %v700 = vpop.f32.mrb[0].mxu0
      %701 = vmatprep.mubr.bf16.mxu0 0
      %702 = vmatmul.mubr.bf16.gmra.mrb[0].mxu0 %v603
      %v703 = vpop.f32.mrb[0].mxu0
      %v704 = vadd.f32 %v490, %v703
      %v705 = vpop.f32.mrb[0].mxu0
      %v706 = vpop.f32.mrb[0].mxu0
      %v707 = vadd.f32 %v493, %v706
      %v708 = vpop.f32.mrb[0].mxu0
      %709 = vmatprep.mubr.bf16.mxu0 0
      %710 = vmatmul.mubr.bf16.gmra.mrb[0].mxu0 %v606
      %v711 = vpop.f32.mrb[0].mxu0
      %v712 = vadd.f32 %v498, %v711
      %v713 = vpop.f32.mrb[0].mxu0
      %v714 = vpop.f32.mrb[0].mxu0
      %v715 = vadd.f32 %v501, %v714
      %v716 = vpop.f32.mrb[0].mxu0
      %717 = vmatprep.mubr.bf16.mxu0 0
      %718 = vmatmul.mubr.bf16.gmra.mrb[0].mxu0 %v609
      %v719 = vpop.f32.mrb[0].mxu0
      %v720 = vadd.f32 %v506, %v719
      %v721 = vpop.f32.mrb[0].mxu0
      %v722 = vpop.f32.mrb[0].mxu0
      %v723 = vadd.f32 %v509, %v722
      %v724 = vpop.f32.mrb[0].mxu0
      %725 = vmatprep.mubr.bf16.mxu0 0
      %726 = vmatmul.mubr.bf16.gmra.mrb[0].mxu0 %v612
      %v727 = vpop.f32.mrb[0].mxu0
      %v728 = vadd.f32 %v514, %v727
      %v729 = vpop.f32.mrb[0].mxu0
      %v730 = vpop.f32.mrb[0].mxu0
      %v731 = vadd.f32 %v517, %v730
      %v732 = vpop.f32.mrb[0].mxu0
      %733 = vmatprep.mubr.bf16.mxu0 0
      %734 = vmatmul.mubr.bf16.gmra.mrb[0].mxu0 %v615
      %v735 = vpop.f32.mrb[0].mxu0
      %v736 = vadd.f32 %v522, %v735
      %v737 = vpop.f32.mrb[0].mxu0
      %v738 = vpop.f32.mrb[0].mxu0
      %v739 = vadd.f32 %v525, %v738
      %v740 = vpop.f32.mrb[0].mxu0
      %741 = vmatprep.mubr.bf16.mxu0 0
      %742 = vmatmul.mubr.bf16.gmra.mrb[0].mxu0 %v618
      %v743 = vpop.f32.mrb[0].mxu0
      %v744 = vadd.f32 %v530, %v743
      %v745 = vpop.f32.mrb[0].mxu0
      %v746 = vpop.f32.mrb[0].mxu0
      %v747 = vadd.f32 %v533, %v746
      %v748 = vpop.f32.mrb[0].mxu0
      %749 = vmatprep.mubr.bf16.mxu0 0
      %750 = vmatmul.mubr.bf16.gmra.mrb[0].mxu0 %v621
      %v751 = vpop.f32.mrb[0].mxu0
      %v752 = vadd.f32 %v538, %v751
      %v753 = vpop.f32.mrb[0].mxu0
      %v754 = vpop.f32.mrb[0].mxu0
      %v755 = vadd.f32 %v541, %v754
      %v756 = vpop.f32.mrb[0].mxu0
      %757 = vmatprep.mubr.bf16.mxu0 0
      %758 = vmatmul.mubr.bf16.gmra.mrb[0].mxu0 %v624
      %v759 = vpop.f32.mrb[0].mxu0
      %v760 = vadd.f32 %v546, %v759
      %v761 = vpop.f32.mrb[0].mxu0
      %v762 = vpop.f32.mrb[0].mxu0
      %v763 = vadd.f32 %v549, %v762
      %v764 = vpop.f32.mrb[0].mxu0
      %765 = vmatprep.mubr.bf16.mxu0 0
      %766 = vmatmul.mubr.bf16.gmra.mrb[0].mxu0 %v627
      %v767 = vpop.f32.mrb[0].mxu0
      %v768 = vadd.f32 %v554, %v767
      %v769 = vpop.f32.mrb[0].mxu0
      %v770 = vpop.f32.mrb[0].mxu0
      %v771 = vadd.f32 %v557, %v770
      %v772 = vpop.f32.mrb[0].mxu0
      %773 = vmatprep.mubr.bf16.mxu0 0
      %774 = vmatmul.mubr.bf16.gmra.mrb[0].mxu0 %v630
      %v775 = vpop.f32.mrb[0].mxu0
      %v776 = vadd.f32 %v562, %v775
      %v777 = vpop.f32.mrb[0].mxu0
      %v778 = vpop.f32.mrb[0].mxu0
      %v779 = vadd.f32 %v565, %v778
      %v780 = vpop.f32.mrb[0].mxu0
      %781 = vmatprep.mubr.bf16.mxu0 0
      %782 = vmatmul.mubr.bf16.gmra.mrb[0].mxu0 %v633
      %v783 = vpop.f32.mrb[0].mxu0
      %v784 = vadd.f32 %v570, %v783
      %v785 = vpop.f32.mrb[0].mxu0
      %v786 = vpop.f32.mrb[0].mxu0
      %v787 = vadd.f32 %v573, %v786
      %v788 = vpop.f32.mrb[0].mxu0
      %789 = vmatprep.mubr.bf16.mxu0 0
      %790 = vmatmul.mubr.bf16.gmra.mrb[0].mxu0 %v636
      %v791 = vpop.f32.mrb[0].mxu0
      %v792 = vadd.f32 %v578, %v791
      %v793 = vpop.f32.mrb[0].mxu0
      %v794 = vpop.f32.mrb[0].mxu0
      %v795 = vadd.f32 %v581, %v794
      %v796 = vpop.f32.mrb[0].mxu0
      %797 = vmatprep.mubr.bf16.mxu0 0
      %798 = vmatmul.mubr.bf16.gmra.mrb[0].mxu0 %v639
      %v799 = vpop.f32.mrb[0].mxu0
      %v800 = vadd.f32 %v586, %v799
      %v801 = vpop.f32.mrb[0].mxu0
      %v802 = vpop.f32.mrb[0].mxu0
      %v803 = vadd.f32 %v589, %v802
      %v804 = vpop.f32.mrb[0].mxu0
      %805 = vdwg.mxu0
      %v806 = vld [vmem:[%s4] sm:$0x1]
      %v808 = vlaneseq
      %v809 = vshrl.u32 %v808, 7
      %v810 = vsub.s32 0, %v809
      %v811 = vrot.slane %v806, %v810
      %v813 = vmul.f32 %v680, %v811
      %v814 = vmul.f32 %v683, %v811
      %v815 = vmul.f32 %v688, %v811
      %v816 = vmul.f32 %v691, %v811
      %v817 = vmul.f32 %v696, %v811
      %v818 = vmul.f32 %v699, %v811
      %v819 = vmul.f32 %v704, %v811
      %v820 = vmul.f32 %v707, %v811
      %v821 = vmul.f32 %v712, %v811
      %v822 = vmul.f32 %v715, %v811
      %v823 = vmul.f32 %v720, %v811
      %v824 = vmul.f32 %v723, %v811
      %v825 = vmul.f32 %v728, %v811
      %v826 = vmul.f32 %v731, %v811
      %v827 = vmul.f32 %v736, %v811
      %v828 = vmul.f32 %v739, %v811
      %v829 = vmul.f32 %v744, %v811
      %v830 = vmul.f32 %v747, %v811
      %v831 = vmul.f32 %v752, %v811
      %v832 = vmul.f32 %v755, %v811
      %v833 = vmul.f32 %v760, %v811
      %v834 = vmul.f32 %v763, %v811
      %v835 = vmul.f32 %v768, %v811
      %v836 = vmul.f32 %v771, %v811
      %v837 = vmul.f32 %v776, %v811
      %v838 = vmul.f32 %v779, %v811
      %v839 = vmul.f32 %v784, %v811
      %v840 = vmul.f32 %v787, %v811
      %v841 = vmul.f32 %v792, %v811
      %v842 = vmul.f32 %v795, %v811
      %v843 = vmul.f32 %v800, %v811
      %v844 = vmul.f32 %v803, %v811
      %v845 = vld [vmem:[%s5] sm:$0x1]
      %v847 = vlaneseq
      %v848 = vshrl.u32 %v847, 7
      %v849 = vsub.s32 0, %v848
      %v850 = vrot.slane %v845, %v849
      %v852 = vadd.f32 %v813, %v850
      %v853 = vadd.f32 %v814, %v850
      %v854 = vadd.f32 %v815, %v850
      %v855 = vadd.f32 %v816, %v850
      %v856 = vadd.f32 %v817, %v850
      %v857 = vadd.f32 %v818, %v850
      %v858 = vadd.f32 %v819, %v850
      %v859 = vadd.f32 %v820, %v850
      %v860 = vadd.f32 %v821, %v850
      %v861 = vadd.f32 %v822, %v850
      %v862 = vadd.f32 %v823, %v850
      %v863 = vadd.f32 %v824, %v850
      %v864 = vadd.f32 %v825, %v850
      %v865 = vadd.f32 %v826, %v850
      %v866 = vadd.f32 %v827, %v850
      %v867 = vadd.f32 %v828, %v850
      %v868 = vadd.f32 %v829, %v850
      %v869 = vadd.f32 %v830, %v850
      %v870 = vadd.f32 %v831, %v850
      %v871 = vadd.f32 %v832, %v850
      %v872 = vadd.f32 %v833, %v850
      %v873 = vadd.f32 %v834, %v850
      %v874 = vadd.f32 %v835, %v850
      %v875 = vadd.f32 %v836, %v850
      %v876 = vadd.f32 %v837, %v850
      %v877 = vadd.f32 %v838, %v850
      %v878 = vadd.f32 %v839, %v850
      %v879 = vadd.f32 %v840, %v850
      %v880 = vadd.f32 %v841, %v850
      %v881 = vadd.f32 %v842, %v850
      %v882 = vadd.f32 %v843, %v850
      %v883 = vadd.f32 %v844, %v850
      %v884 = vsub.f32 0.0, %v852
      %v885 = vsub.f32 0.0, %v853
      %v886 = vsub.f32 0.0, %v854
      %v887 = vsub.f32 0.0, %v855
      %v888 = vsub.f32 0.0, %v856
      %v889 = vsub.f32 0.0, %v857
      %v890 = vsub.f32 0.0, %v858
      %v891 = vsub.f32 0.0, %v859
      %v892 = vsub.f32 0.0, %v860
      %v893 = vsub.f32 0.0, %v861
      %v894 = vsub.f32 0.0, %v862
      %v895 = vsub.f32 0.0, %v863
      %v896 = vsub.f32 0.0, %v864
      %v897 = vsub.f32 0.0, %v865
      %v898 = vsub.f32 0.0, %v866
      %v899 = vsub.f32 0.0, %v867
      %v900 = vsub.f32 0.0, %v868
      %v901 = vsub.f32 0.0, %v869
      %v902 = vsub.f32 0.0, %v870
      %v903 = vsub.f32 0.0, %v871
      %v904 = vsub.f32 0.0, %v872
      %v905 = vsub.f32 0.0, %v873
      %v906 = vsub.f32 0.0, %v874
      %v907 = vsub.f32 0.0, %v875
      %v908 = vsub.f32 0.0, %v876
      %v909 = vsub.f32 0.0, %v877
      %v910 = vsub.f32 0.0, %v878
      %v911 = vsub.f32 0.0, %v879
      %v912 = vsub.f32 0.0, %v880
      %v913 = vsub.f32 0.0, %v881
      %v914 = vsub.f32 0.0, %v882
      %v915 = vsub.f32 0.0, %v883
      %v916 = vmul.f32 %v884, 1.442695
      %v917 = vpow.pop %v916
      %v918 = vmul.f32 %v885, 1.442695
      %v919 = vpow.pop %v918
      %v920 = vmul.f32 %v886, 1.442695
      %v921 = vpow.pop %v920
      %v922 = vmul.f32 %v887, 1.442695
      %v923 = vpow.pop %v922
      %v924 = vmul.f32 %v888, 1.442695
      %v925 = vpow.pop %v924
      %v926 = vmul.f32 %v889, 1.442695
      %v927 = vpow.pop %v926
      %v928 = vmul.f32 %v890, 1.442695
      %v929 = vpow.pop %v928
      %v930 = vmul.f32 %v891, 1.442695
      %v931 = vpow.pop %v930
      %v932 = vmul.f32 %v892, 1.442695
      %v933 = vpow.pop %v932
      %v934 = vmul.f32 %v893, 1.442695
      %v935 = vpow.pop %v934
      %v936 = vmul.f32 %v894, 1.442695
      %v937 = vpow.pop %v936
      %v938 = vmul.f32 %v895, 1.442695
      %v939 = vpow.pop %v938
      %v940 = vmul.f32 %v896, 1.442695
      %v941 = vpow.pop %v940
      %v942 = vmul.f32 %v897, 1.442695
      %v943 = vpow.pop %v942
      %v944 = vmul.f32 %v898, 1.442695
      %v945 = vpow.pop %v944
      %v946 = vmul.f32 %v899, 1.442695
      %v947 = vpow.pop %v946
      %v948 = vmul.f32 %v900, 1.442695
      %v949 = vpow.pop %v948
      %v950 = vmul.f32 %v901, 1.442695
      %v951 = vpow.pop %v950
      %v952 = vmul.f32 %v902, 1.442695
      %v953 = vpow.pop %v952
      %v954 = vmul.f32 %v903, 1.442695
      %v955 = vpow.pop %v954
      %v956 = vmul.f32 %v904, 1.442695
      %v957 = vpow.pop %v956
      %v958 = vmul.f32 %v905, 1.442695
      %v959 = vpow.pop %v958
      %v960 = vmul.f32 %v906, 1.442695
      %v961 = vpow.pop %v960
      %v962 = vmul.f32 %v907, 1.442695
      %v963 = vpow.pop %v962
      %v964 = vmul.f32 %v908, 1.442695
      %v965 = vpow.pop %v964
      %v966 = vmul.f32 %v909, 1.442695
      %v967 = vpow.pop %v966
      %v968 = vmul.f32 %v910, 1.442695
      %v969 = vpow.pop %v968
      %v970 = vmul.f32 %v911, 1.442695
      %v971 = vpow.pop %v970
      %v972 = vmul.f32 %v912, 1.442695
      %v973 = vpow.pop %v972
      %v974 = vmul.f32 %v913, 1.442695
      %v975 = vpow.pop %v974
      %v976 = vmul.f32 %v914, 1.442695
      %v977 = vpow.pop %v976
      %v978 = vmul.f32 %v915, 1.442695
      %v979 = vpow.pop %v978
      %v980 = vadd.f32 %v917, 1.0
      %v981 = vadd.f32 %v919, 1.0
      %v982 = vadd.f32 %v921, 1.0
      %v983 = vadd.f32 %v923, 1.0
      %v984 = vadd.f32 %v925, 1.0
      %v985 = vadd.f32 %v927, 1.0
      %v986 = vadd.f32 %v929, 1.0
      %v987 = vadd.f32 %v931, 1.0
      %v988 = vadd.f32 %v933, 1.0
      %v989 = vadd.f32 %v935, 1.0
      %v990 = vadd.f32 %v937, 1.0
      %v991 = vadd.f32 %v939, 1.0
      %v992 = vadd.f32 %v941, 1.0
      %v993 = vadd.f32 %v943, 1.0
      %v994 = vadd.f32 %v945, 1.0
      %v995 = vadd.f32 %v947, 1.0
      %v996 = vadd.f32 %v949, 1.0
      %v997 = vadd.f32 %v951, 1.0
      %v998 = vadd.f32 %v953, 1.0
      %v999 = vadd.f32 %v955, 1.0
      %v1000 = vadd.f32 %v957, 1.0
      %v1001 = vadd.f32 %v959, 1.0
      %v1002 = vadd.f32 %v961, 1.0
      %v1003 = vadd.f32 %v963, 1.0
      %v1004 = vadd.f32 %v965, 1.0
      %v1005 = vadd.f32 %v967, 1.0
      %v1006 = vadd.f32 %v969, 1.0
      %v1007 = vadd.f32 %v971, 1.0
      %v1008 = vadd.f32 %v973, 1.0
      %v1009 = vadd.f32 %v975, 1.0
      %v1010 = vadd.f32 %v977, 1.0
      %v1011 = vadd.f32 %v979, 1.0
      %v1012 = vrcp.pop %v980
      %v1013 = vrcp.pop %v981
      %v1014 = vrcp.pop %v982
      %v1015 = vrcp.pop %v983
      %v1016 = vrcp.pop %v984
      %v1017 = vrcp.pop %v985
      %v1018 = vrcp.pop %v986
      %v1019 = vrcp.pop %v987
      %v1020 = vrcp.pop %v988
      %v1021 = vrcp.pop %v989
      %v1022 = vrcp.pop %v990
      %v1023 = vrcp.pop %v991
      %v1024 = vrcp.pop %v992
      %v1025 = vrcp.pop %v993
      %v1026 = vrcp.pop %v994
      %v1027 = vrcp.pop %v995
      %v1028 = vrcp.pop %v996
      %v1029 = vrcp.pop %v997
      %v1030 = vrcp.pop %v998
      %v1031 = vrcp.pop %v999
      %v1032 = vrcp.pop %v1000
      %v1033 = vrcp.pop %v1001
      %v1034 = vrcp.pop %v1002
      %v1035 = vrcp.pop %v1003
      %v1036 = vrcp.pop %v1004
      %v1037 = vrcp.pop %v1005
      %v1038 = vrcp.pop %v1006
      %v1039 = vrcp.pop %v1007
      %v1040 = vrcp.pop %v1008
      %v1041 = vrcp.pop %v1009
      %v1042 = vrcp.pop %v1010
      %v1043 = vrcp.pop %v1011
      %v1044 = vmul.f32 %v852, %v1012
      %v1045 = vmul.f32 %v853, %v1013
      %v1046 = vmul.f32 %v854, %v1014
      %v1047 = vmul.f32 %v855, %v1015
      %v1048 = vmul.f32 %v856, %v1016
      %v1049 = vmul.f32 %v857, %v1017
      %v1050 = vmul.f32 %v858, %v1018
      %v1051 = vmul.f32 %v859, %v1019
      %v1052 = vmul.f32 %v860, %v1020
      %v1053 = vmul.f32 %v861, %v1021
      %v1054 = vmul.f32 %v862, %v1022
      %v1055 = vmul.f32 %v863, %v1023
      %v1056 = vmul.f32 %v864, %v1024
      %v1057 = vmul.f32 %v865, %v1025
      %v1058 = vmul.f32 %v866, %v1026
      %v1059 = vmul.f32 %v867, %v1027
      %v1060 = vmul.f32 %v868, %v1028
      %v1061 = vmul.f32 %v869, %v1029
      %v1062 = vmul.f32 %v870, %v1030
      %v1063 = vmul.f32 %v871, %v1031
      %v1064 = vmul.f32 %v872, %v1032
      %v1065 = vmul.f32 %v873, %v1033
      %v1066 = vmul.f32 %v874, %v1034
      %v1067 = vmul.f32 %v875, %v1035
      %v1068 = vmul.f32 %v876, %v1036
      %v1069 = vmul.f32 %v877, %v1037
      %v1070 = vmul.f32 %v878, %v1038
      %v1071 = vmul.f32 %v879, %v1039
      %v1072 = vmul.f32 %v880, %v1040
      %v1073 = vmul.f32 %v881, %v1041
      %v1074 = vmul.f32 %v882, %v1042
      %v1075 = vmul.f32 %v883, %v1043
      %1076 = vst.msk [vmem:[%s275] sm:$0xff] %vm592, %v1044
      %1077 = vst.msk [vmem:[%s275 + $0x8] sm:$0xff] %vm592, %v1045
      %1078 = vst.msk [vmem:[%s275 + $0x10] sm:$0xff] %vm592, %v1046
      %1079 = vst.msk [vmem:[%s275 + $0x18] sm:$0xff] %vm592, %v1047
      %1080 = vst.msk [vmem:[%s275 + $0x20] sm:$0xff] %vm592, %v1048
      %1081 = vst.msk [vmem:[%s275 + $0x28] sm:$0xff] %vm592, %v1049
      %1082 = vst.msk [vmem:[%s275 + $0x30] sm:$0xff] %vm592, %v1050
      %1083 = vst.msk [vmem:[%s275 + $0x38] sm:$0xff] %vm592, %v1051
      %1084 = vst.msk [vmem:[%s275 + $0x40] sm:$0xff] %vm592, %v1052
      %1085 = vst.msk [vmem:[%s275 + $0x48] sm:$0xff] %vm592, %v1053
      %1086 = vst.msk [vmem:[%s275 + $0x50] sm:$0xff] %vm592, %v1054
      %1087 = vst.msk [vmem:[%s275 + $0x58] sm:$0xff] %vm592, %v1055
      %1088 = vst.msk [vmem:[%s275 + $0x60] sm:$0xff] %vm592, %v1056
      %1089 = vst.msk [vmem:[%s275 + $0x68] sm:$0xff] %vm592, %v1057
      %1090 = vst.msk [vmem:[%s275 + $0x70] sm:$0xff] %vm592, %v1058
      %1091 = vst.msk [vmem:[%s275 + $0x78] sm:$0xff] %vm592, %v1059
      %1092 = vst.msk [vmem:[%s275 + $0x80] sm:$0xff] %vm592, %v1060
      %1093 = vst.msk [vmem:[%s275 + $0x88] sm:$0xff] %vm592, %v1061
      %1094 = vst.msk [vmem:[%s275 + $0x90] sm:$0xff] %vm592, %v1062
      %1095 = vst.msk [vmem:[%s275 + $0x98] sm:$0xff] %vm592, %v1063
      %1096 = vst.msk [vmem:[%s275 + $0xa0] sm:$0xff] %vm592, %v1064
      %1097 = vst.msk [vmem:[%s275 + $0xa8] sm:$0xff] %vm592, %v1065
      %1098 = vst.msk [vmem:[%s275 + $0xb0] sm:$0xff] %vm592, %v1066
      %1099 = vst.msk [vmem:[%s275 + $0xb8] sm:$0xff] %vm592, %v1067
      %1100 = vst.msk [vmem:[%s275 + $0xc0] sm:$0xff] %vm592, %v1068
      %1101 = vst.msk [vmem:[%s275 + $0xc8] sm:$0xff] %vm592, %v1069
      %1102 = vst.msk [vmem:[%s275 + $0xd0] sm:$0xff] %vm592, %v1070
      %1103 = vst.msk [vmem:[%s275 + $0xd8] sm:$0xff] %vm592, %v1071
      %1104 = vst.msk [vmem:[%s275 + $0xe0] sm:$0xff] %vm592, %v1072
      %1105 = vst.msk [vmem:[%s275 + $0xe8] sm:$0xff] %vm592, %v1073
      %1106 = vst.msk [vmem:[%s275 + $0xf0] sm:$0xff] %vm592, %v1074
      %1107 = vst.msk [vmem:[%s275 + $0xf8] sm:$0xff] %vm592, %v1075
      %s1108 = smul.u32 32, %s17
      %p1109 = scmp.lt.s32.totalorder %s1108, 63
      %s1110 = scalar_select %p1109, %s1108, 63
      %s1111 = smul.addr %s1110, 8
      %s1112 = scalar_lea.vmem %s6, %s1111
      // Predicated region
      $region45: #{_lambda_.9} parent=43 // pred_check
        %p1113 = pneg %p171
      $region46: #{_lambda_.9} parent=43 // pred_check_branch
        %1115 = sbr.rel (%p1113) target = $region48
      $region47: #{_lambda_.9} parent=43 // pred_region
        %s1116 = smul.u32 32, %s17
      $region48: #{_lambda_.9} parent=43 // pred_fallthru
        _
    $region44: #{_lambda_.9} parent=5 // pred_fallthru
      _
    %p1117 = scmp.le.s32.totalorder 2, %s12
    // Predicated region
    $region49: #{_lambda_.9} parent=5 // pred_check
      %p1118 = pneg %p1117
    $region50: #{_lambda_.9} parent=5 // pred_check_branch
      %1120 = sbr.rel (%p1118) target = $region52
    $region51: #{_lambda_.9} parent=5 // pred_region
      %s1121 = ssub.s32 %s12, 2
      // Predicated region
      $region53: #{_lambda_.9} parent=51 // pred_check
        %p1122 = pneg %p177
      $region54: #{_lambda_.9} parent=51 // pred_check_branch
        %1124 = sbr.rel (%p1122) target = $region56
      $region55: #{_lambda_.9} parent=51 // pred_region
        %s1125 = smul.u32 32, %s18
        %p1126 = scmp.lt.s32.totalorder %s1125, 63
        %s1127 = scalar_select %p1126, %s1125, 63
        %s1128 = smul.addr %s1127, 8
        %s1129 = scalar_lea.vmem %s6, %s1128
      $region56: #{_lambda_.9} parent=51 // pred_fallthru
        _
    $region52: #{_lambda_.9} parent=5 // pred_fallthru
      _
  $region6: #{_lambda_.9} parent=0 // loop_footer
    %s16 = sadd.s32 1, %s12
  $region7: #{_lambda_.9} parent=0 // loop_footer_branch
    %11 = sbr.rel target = $region3
  $region8: #{_lambda_.9} parent=0 // loop_exit
    _

</llo_original>
